<compile_context>
chip_gen: v7x
topology: tpu7x:2x2x1
jax: 0.10.0
libtpu: 0.0.40
codegen_flags: <defaults>
</compile_context>

<pallas_src>
import functools

import jax
import jax.numpy as jnp
from jax.experimental import pallas as pl
from jax.experimental.pallas import tpu as pltpu


def _fourier_kernel(x_ref, bt_ref, bias_ref, out_ref, *, mapping_size):
    # x_ref:    (tm, num_inputs)      f32
    # bt_ref:   (num_inputs, M)       f32   (B pre-transposed in the wrapper)
    # bias_ref: (1, M)                f32
    # out_ref:  (tm, 2*M)             out dtype
    #
    # Projection on the MXU (vector-extended slot), freeing the VALU for sin/cos.
    # precision=HIGHEST is required: default MXU precision truncates operands to bf16,
    # and a ~4e-3 relative phase error becomes a large absolute error after sin/cos.
    acc = (
        jnp.dot(
            x_ref[...],
            bt_ref[...],
            preferred_element_type=jnp.float32,
            precision=jax.lax.Precision.HIGHEST,
        )
        + bias_ref[...]
    )
    # Direct split stores; mapping_size is a multiple of 128 -> unmasked lane-dense vst.
    out_ref[:, :mapping_size] = jnp.sin(acc).astype(out_ref.dtype)
    out_ref[:, mapping_size:] = jnp.cos(acc).astype(out_ref.dtype)
    # TODO(synk): if profiling still shows VALU as the binding slot (v7x / bf16-out v6e),
    # share the sin/cos range reduction with a hand-rolled sincos (one reduction, two polys).


def _round_up(x, m):
    return ((x + m - 1) // m) * m


def fourier_feature_embedding(x, B, b, *, tm=1024, out_dtype=None):
    """Random Fourier feature embedding.

    x: (N, num_inputs) ; B: (mapping_size, num_inputs) ; b: (mapping_size,)
    Returns (N, 2*mapping_size) = [sin(x @ B.T + b), cos(x @ B.T + b)].

    out_dtype defaults to x.dtype (PyTorch parity).  Pass jnp.bfloat16 when the
    downstream consumer is bf16 — it halves the dominant HBM writeback.
    """
    N, num_inputs = x.shape
    mapping_size = B.shape[0]
    assert mapping_size % 128 == 0, "mapping_size should be a multiple of 128 lanes"
    if out_dtype is None:
        out_dtype = x.dtype
    out_itemsize = jnp.dtype(out_dtype).itemsize

    # --- Row-tile selection -------------------------------------------------------
    # Per-row VMEM footprint: double-buffered out + x tiles, plus f32 acc/sin/cos temps.
    row_bytes = (
        2 * (2 * mapping_size * out_itemsize + num_inputs * 4)
        + 3 * mapping_size * 4
    )
    vmem_row_budget = 12 << 20  # keep per-step footprint v5e/v7x-safe
    tm_cap = max(8, min(tm, 1024, (vmem_row_budget // row_bytes) // 8 * 8))
    tm_eff = max(8, _round_up(min(tm_cap, _round_up(N, 8)), 8))
    steps = pl.cdiv(N, tm_eff)
    if N > 8 and (steps < 2 or steps % 2 == 1):
        # v7x shards the "parallel" axis across 2 TensorCores: an even step count keeps
        # both cores busy (odd counts leave one TC idle for the tail).
        target = max(2, steps + (steps % 2))
        tm_eff = max(8, _round_up(pl.cdiv(N, target), 8))
        steps = pl.cdiv(N, tm_eff)
    n_pad = steps * tm_eff

    # Pad only the tiny input; the big output is written at its true shape (Pallas masks
    # the ragged last output block), so there is no post-slice copy of the (N, 2M) tensor.
    x32 = x.astype(jnp.float32)
    if n_pad != N:
        x32 = jnp.pad(x32, ((0, n_pad - N), (0, 0)))

    bt = B.T.astype(jnp.float32)                            # (num_inputs, mapping_size)
    bias = b.reshape(1, mapping_size).astype(jnp.float32)   # (1, mapping_size)

    kernel = functools.partial(_fourier_kernel, mapping_size=mapping_size)

    cost = pl.CostEstimate(
        flops=2 * n_pad * num_inputs * mapping_size,
        transcendentals=2 * n_pad * mapping_size,
        bytes_accessed=(
            n_pad * num_inputs * 4
            + num_inputs * mapping_size * 4
            + mapping_size * 4
            + N * 2 * mapping_size * out_itemsize
        ),
    )

    # Explicit scoped-VMEM budget from the actual per-step footprint (+50% headroom).
    footprint = (
        2 * (tm_eff * 2 * mapping_size * out_itemsize
             + tm_eff * num_inputs * 4
             + num_inputs * mapping_size * 4
             + mapping_size * 4)
        + 3 * tm_eff * mapping_size * 4
    )
    vmem_limit = min(32 << 20, max(16 << 20, int(1.5 * footprint)))

    out = pl.pallas_call(
        kernel,
        out_shape=jax.ShapeDtypeStruct((N, 2 * mapping_size), out_dtype),
        grid_spec=pltpu.PrefetchScalarGridSpec(
            num_scalar_prefetch=0,
            grid=(steps,),
            in_specs=[
                pl.BlockSpec((tm_eff, num_inputs), lambda i: (i, 0)),
                pl.BlockSpec((num_inputs, mapping_size), lambda i: (0, 0)),
                pl.BlockSpec((1, mapping_size), lambda i: (0, 0)),
            ],
            out_specs=pl.BlockSpec((tm_eff, 2 * mapping_size), lambda i: (i, 0)),
        ),
        compiler_params=pltpu.CompilerParams(
            dimension_semantics=("parallel",),
            vmem_limit_bytes=vmem_limit,
        ),
        cost_estimate=cost,
    )(x32, bt, bias)

    return out


if __name__ == "__main__":
    # Module hyperparameters (small, consistent with the PINN usage).
    num_inputs = 4        # (x, y, z, t) collocation coordinates
    mapping_size = 256
    sigma = 5.0
    N = 200               # deliberately NOT a tile multiple -> exercises the ragged path

    key = jax.random.PRNGKey(0)
    k_x, k_B, k_b = jax.random.split(key, 3)

    # Deterministic "buffers" matching torch.randn(...)*sigma and 2*pi*torch.rand(...).
    x = jax.random.normal(k_x, (N, num_inputs), dtype=jnp.float32)
    B = jax.random.normal(k_B, (mapping_size, num_inputs), dtype=jnp.float32) * sigma
    b = 2.0 * jnp.pi * jax.random.uniform(k_b, (mapping_size,), dtype=jnp.float32)

    # Default path: output dtype matches input (f32), PyTorch-parity semantics.
    out = jax.block_until_ready(fourier_feature_embedding(x, B, b))

    # Pure-JAX reference (HIGHEST precision matmul, same as in-kernel).
    x_proj_ref = jnp.dot(x, B.T, precision=jax.lax.Precision.HIGHEST) + b
    ref = jnp.concatenate([jnp.sin(x_proj_ref), jnp.cos(x_proj_ref)], axis=-1)
    assert out.shape == (N, 2 * mapping_size)
    assert out.dtype == jnp.float32
    assert jnp.allclose(out, ref, atol=1e-4, rtol=1e-4), "f32 mismatch vs reference"

    # Recommended bandwidth-saving path: bf16 output (f32 phase/trig inside the kernel).
    out_bf16 = jax.block_until_ready(
        fourier_feature_embedding(x, B, b, out_dtype=jnp.bfloat16)
    )
    assert out_bf16.dtype == jnp.bfloat16
    assert jnp.allclose(out_bf16.astype(jnp.float32), ref, atol=2e-2, rtol=2e-2), \
        "bf16 mismatch vs reference"

    print("KERNEL_OK")
</pallas_src>

<mosaic_0001>
module attributes {stable_mosaic.version = 11 : i64} {
  func.func @_fourier_kernel(%arg0: i32, %arg1: memref<104x4xf32, #tpu.memory_space<vmem>>, %arg2: memref<4x256xf32, #tpu.memory_space<vmem>>, %arg3: memref<1x256xf32, #tpu.memory_space<vmem>>, %arg4: memref<104x512xf32, #tpu.memory_space<vmem>>) attributes {dimension_semantics = [#tpu.dimension_semantics<parallel>], iteration_bounds = array<i64: 2>, scalar_prefetch = 0 : i64, scratch_operands = 0 : i64, tpu.core_type = #tpu.core_type<tc>, window_params = [{transform_indices = @transform_0, window_bounds = array<i64: 104, 4>}, {pipeline_mode = #tpu.pipeline_mode<synchronous>, transform_indices = @transform_1, window_bounds = array<i64: 4, 256>}, {pipeline_mode = #tpu.pipeline_mode<synchronous>, transform_indices = @transform_2, window_bounds = array<i64: 1, 256>}, {transform_indices = @transform_3, window_bounds = array<i64: 104, 512>}]} {
    %c0 = arith.constant 0 : index
    %c0_0 = arith.constant 0 : index
    %0 = vector.load %arg1[%c0, %c0_0] : memref<104x4xf32, #tpu.memory_space<vmem>>, vector<104x4xf32>
    %c0_1 = arith.constant 0 : index
    %c0_2 = arith.constant 0 : index
    %1 = vector.load %arg2[%c0_1, %c0_2] : memref<4x256xf32, #tpu.memory_space<vmem>>, vector<4x256xf32>
    %cst = arith.constant dense<0.000000e+00> : vector<104x256xf32>
    %2 = tpu.matmul %0, %1, %cst {dimension_numbers = #tpu.dot_dimension_numbers<[1], [0], [0], [1], [0, 0, 1, 1], [], []>, precision = #tpu.contract_precision<fp32>} : vector<104x4xf32>, vector<4x256xf32>, vector<104x256xf32> -> vector<104x256xf32>
    %c0_3 = arith.constant 0 : index
    %c0_4 = arith.constant 0 : index
    %3 = vector.load %arg3[%c0_3, %c0_4] : memref<1x256xf32, #tpu.memory_space<vmem>>, vector<1x256xf32>
    %4 = vector.broadcast %3 : vector<1x256xf32> to vector<104x256xf32>
    %5 = arith.addf %2, %4 : vector<104x256xf32>
    %6 = math.sin %5 : vector<104x256xf32>
    %c0_5 = arith.constant 0 : index
    %c0_6 = arith.constant 0 : index
    %7 = vector.load %arg4[%c0_5, %c0_6] : memref<104x512xf32, #tpu.memory_space<vmem>>, vector<104x256xf32>
    tpu.vector_store %arg4[%c0_5, %c0_6], %6 {strides = array<i32>} : memref<104x512xf32, #tpu.memory_space<vmem>>, vector<104x256xf32>,
    %8 = math.cos %5 : vector<104x256xf32>
    %c0_7 = arith.constant 0 : index
    %c256 = arith.constant 256 : index
    %9 = vector.load %arg4[%c0_7, %c256] : memref<104x512xf32, #tpu.memory_space<vmem>>, vector<104x256xf32>
    tpu.vector_store %arg4[%c0_7, %c256], %8 {strides = array<i32>} : memref<104x512xf32, #tpu.memory_space<vmem>>, vector<104x256xf32>,
    return
  }
  func.func @transform_0(%arg0: i32) -> (i32, i32) {
    %c0_i32 = arith.constant 0 : i32
    %c0_i32_0 = arith.constant 0 : i32
    return %arg0, %c0_i32 : i32, i32
  }
  func.func @transform_1(%arg0: i32) -> (i32, i32) {
    %c0_i32 = arith.constant 0 : i32
    %c0_i32_0 = arith.constant 0 : i32
    %c0_i32_1 = arith.constant 0 : i32
    return %c0_i32, %c0_i32_0 : i32, i32
  }
  func.func @transform_2(%arg0: i32) -> (i32, i32) {
    %c0_i32 = arith.constant 0 : i32
    %c0_i32_0 = arith.constant 0 : i32
    %c0_i32_1 = arith.constant 0 : i32
    return %c0_i32, %c0_i32_0 : i32, i32
  }
  func.func @transform_3(%arg0: i32) -> (i32, i32) {
    %c0_i32 = arith.constant 0 : i32
    %c0_i32_0 = arith.constant 0 : i32
    return %arg0, %c0_i32 : i32, i32
  }
}

</mosaic_0001>

<llo_original>
// kernel: tpu_custom_call.1
$region0: #{tpu_custom_call.1}
  #allocation0 [shape = 'u32[]', space=smem, size = 0x4, offset = 0x4, fixed_abs, tag = 'smem constant byte address 0x4 - core index']
  #allocation1 [shape = 'u32[144,128]{1,0:T(1,128)}', space=vmem, size = 0x12000, scoped, tag = 'internal scratch']
  %s0 = inlined_call_operand.vmem [shape: f32[208,4], index: 0, kind: input, shape index: {}]
  %s1 = inlined_call_operand.vmem [shape: f32[4,256], index: 1, kind: input, shape index: {}]
  %s2 = inlined_call_operand.vmem [shape: f32[1,256], index: 2, kind: input, shape index: {}]
  %s3 = inlined_call_operand.hbm [shape: f32[200,512], index: 3, kind: output, shape index: {}]
  %s4 = sld [smem:[#allocation0]]
  $region45: #{tpu_custom_call.1} parent=0
    _
  %s6 = ssub.s32 1, %s4
  %s7 = scalar_select 0, %s6, %s4
  $region1: #{tpu_custom_call.1} parent=0
    #allocation2 [shape = 'u8[425984]{0}', space=vmem, size = 0x68000, scoped, tag = 'output window, operand 0']
    #allocation3 [shape = 's32[2]{0}', space=sflag, size = 0x8, scoped, tag = 'scoped memory for tpu_custom_call.1']
    %8 = vsyncpa [#allocation3], 0
    %s9 = scalar_lea.sflag [#allocation3], 1
    %10 = vsyncpa %s9, 0
    loop: start=0, step=1, limit=4
    $region2: #{tpu_custom_call.1} parent=1 // loop_pre_header
      _
    $region3: #{tpu_custom_call.1} parent=1 // loop_header
      %s12 = sphi 0, %s16
      %p13 = scmp.ge.s32.totalorder %s12, 4
      %s22 = sphi 0, %s24
      %s25 = sphi 0, %s22
      %s26 = sphi 0, %s25
      %s42 = sphi 0, %s26
      %s46 = sphi 0, %s46
      %s48 = sphi 0, %s46
      %s49 = sphi 0, %s48
      %s63 = sphi 0, %s49
      %s67 = sphi 0, %s67
      %s69 = sphi 0, %s67
      %s70 = sphi 0, %s69
      %s84 = sphi 0, %s70
      %s90 = sphi 0, %s92
      %s93 = sphi 0, %s90
      %s94 = sphi 0, %s93
      %s110 = sphi 0, %s94
    $region4: #{tpu_custom_call.1} parent=1 // loop_header_branch
      %15 = sbr.rel (%p13) target = $region8
    $region5: #{tpu_custom_call.1} parent=1 // loop_body
      %s17 = ssub.s32 %s12, 1
      %s18 = ssub.s32 %s12, 2
      %s19 = sadd.s32 %s12, 1
      %s20 = ssub.s32 %s12, %s19
      %p21 = scmp.eq.s32.totalorder %s20, 0
      %s23 = sadd.s32 %s22, 1
      %s24 = scalar_select %p21, %s22, %s23
      %p27 = pneg %p21
      %p28 = scmp.eq.s32.totalorder %s12, 1
      %p29 = por %p27, %p28
      %p30 = scmp.ne.s32.totalorder %s22, %s25
      %p31 = scmp.eq.s32.totalorder %s12, 0
      %p32 = por %p30, %p31
      %p33 = scmp.ne.s32.totalorder %s22, %s25
      %p34 = scmp.eq.s32.totalorder %s17, 1
      %p35 = por %p33, %p34
      %p36 = scmp.ne.s32.totalorder %s25, %s26
      %p37 = scmp.eq.s32.totalorder %s17, 0
      %p38 = por %p36, %p37
      %p39 = scmp.ne.s32.totalorder %s25, %s26
      %p40 = scmp.eq.s32.totalorder %s18, 1
      %p41 = por %p39, %p40
      %p43 = scmp.ne.s32.totalorder %s26, %s42
      %p44 = scmp.eq.s32.totalorder %s18, 0
      %p45 = por %p43, %p44
      %s47 = sadd.s32 %s46, 1
      %p50 = scmp.eq.s32.totalorder %s12, 1
      %p51 = scmp.ne.s32.totalorder %s46, %s48
      %p52 = scmp.eq.s32.totalorder %s12, 0
      %p53 = por %p51, %p52
      %p54 = scmp.ne.s32.totalorder %s46, %s48
      %p55 = scmp.eq.s32.totalorder %s17, 1
      %p56 = por %p54, %p55
      %p57 = scmp.ne.s32.totalorder %s48, %s49
      %p58 = scmp.eq.s32.totalorder %s17, 0
      %p59 = por %p57, %p58
      %p60 = scmp.ne.s32.totalorder %s48, %s49
      %p61 = scmp.eq.s32.totalorder %s18, 1
      %p62 = por %p60, %p61
      %p64 = scmp.ne.s32.totalorder %s49, %s63
      %p65 = scmp.eq.s32.totalorder %s18, 0
      %p66 = por %p64, %p65
      %s68 = sadd.s32 %s67, 1
      %p71 = scmp.eq.s32.totalorder %s12, 1
      %p72 = scmp.ne.s32.totalorder %s67, %s69
      %p73 = scmp.eq.s32.totalorder %s12, 0
      %p74 = por %p72, %p73
      %p75 = scmp.ne.s32.totalorder %s67, %s69
      %p76 = scmp.eq.s32.totalorder %s17, 1
      %p77 = por %p75, %p76
      %p78 = scmp.ne.s32.totalorder %s69, %s70
      %p79 = scmp.eq.s32.totalorder %s17, 0
      %p80 = por %p78, %p79
      %p81 = scmp.ne.s32.totalorder %s69, %s70
      %p82 = scmp.eq.s32.totalorder %s18, 1
      %p83 = por %p81, %p82
      %p85 = scmp.ne.s32.totalorder %s70, %s84
      %p86 = scmp.eq.s32.totalorder %s18, 0
      %p87 = por %p85, %p86
      %s88 = ssub.s32 %s12, %s19
      %p89 = scmp.eq.s32.totalorder %s88, 0
      %s91 = sadd.s32 %s90, 1
      %s92 = scalar_select %p89, %s90, %s91
      %p95 = pneg %p89
      %p96 = scmp.eq.s32.totalorder %s12, 1
      %p97 = por %p95, %p96
      %p98 = scmp.ne.s32.totalorder %s90, %s93
      %p99 = scmp.eq.s32.totalorder %s12, 0
      %p100 = por %p98, %p99
      %p101 = scmp.ne.s32.totalorder %s90, %s93
      %p102 = scmp.eq.s32.totalorder %s17, 1
      %p103 = por %p101, %p102
      %p104 = scmp.ne.s32.totalorder %s93, %s94
      %p105 = scmp.eq.s32.totalorder %s17, 0
      %p106 = por %p104, %p105
      %p107 = scmp.ne.s32.totalorder %s93, %s94
      %p108 = scmp.eq.s32.totalorder %s18, 1
      %p109 = por %p107, %p108
      %p111 = scmp.ne.s32.totalorder %s94, %s110
      %p112 = scmp.eq.s32.totalorder %s18, 0
      %p113 = por %p111, %p112
      %p114 = scmp.le.s32.totalorder 1, %s12
      %p115 = scmp.lt.s32.totalorder %s12, 3
      %p116 = pnand %p114, %p115
      %p117 = pneg %p116
      // Predicated region
      $region9: #{tpu_custom_call.1} parent=5 // pred_check
        _
      $region10: #{tpu_custom_call.1} parent=5 // pred_check_branch
        %119 = sbr.rel (%p116) target = $region12
      $region11: #{tpu_custom_call.1} parent=5 // pred_region
        %s120 = ssub.s32 %s12, 1
        // Predicated region
        $region13: #{tpu_custom_call.1} parent=11 // pred_check
          %p121 = pneg %p59
        $region14: #{tpu_custom_call.1} parent=11 // pred_check_branch
          %123 = sbr.rel (%p121) target = $region16
        $region15: #{tpu_custom_call.1} parent=11 // pred_region
          _
        $region16: #{tpu_custom_call.1} parent=11 // pred_fallthru
          _
        // Predicated region
        $region17: #{tpu_custom_call.1} parent=11 // pred_check
          %p124 = pneg %p80
        $region18: #{tpu_custom_call.1} parent=11 // pred_check_branch
          %126 = sbr.rel (%p124) target = $region20
        $region19: #{tpu_custom_call.1} parent=11 // pred_region
          _
        $region20: #{tpu_custom_call.1} parent=11 // pred_fallthru
          _
      $region12: #{tpu_custom_call.1} parent=5 // pred_fallthru
        _
      %p127 = scmp.lt.s32.totalorder %s12, 2
      // Predicated region
      $region21: #{tpu_custom_call.1} parent=5 // pred_check
        %p128 = pneg %p127
      $region22: #{tpu_custom_call.1} parent=5 // pred_check_branch
        %130 = sbr.rel (%p128) target = $region24
      $region23: #{tpu_custom_call.1} parent=5 // pred_region
        // Predicated region
        $region25: #{tpu_custom_call.1} parent=23 // pred_check
          %p131 = pneg %p32
        $region26: #{tpu_custom_call.1} parent=23 // pred_check_branch
          %133 = sbr.rel (%p131) target = $region28
        $region27: #{tpu_custom_call.1} parent=23 // pred_region
          %s134 = smul.u32 13, %s12
          %p135 = scmp.lt.s32.totalorder %s134, 25
          %s136 = scalar_select %p135, %s134, 25
          %s137 = smul.addr %s136, 8
          %s138 = scalar_lea.vmem %s0, %s137
          %s139 = smul.u32 13, %s12
        $region28: #{tpu_custom_call.1} parent=23 // pred_fallthru
          _
      $region24: #{tpu_custom_call.1} parent=5 // pred_fallthru
        _
      %p140 = scmp.le.s32.totalorder 1, %s12
      %p141 = scmp.lt.s32.totalorder %s12, 3
      %p142 = pnand %p140, %p141
      %p143 = pneg %p142
      // Predicated region
      $region29: #{tpu_custom_call.1} parent=5 // pred_check
        _
      $region30: #{tpu_custom_call.1} parent=5 // pred_check_branch
        %145 = sbr.rel (%p142) target = $region32
      $region31: #{tpu_custom_call.1} parent=5 // pred_region
        %s146 = ssub.s32 %s12, 1
        %s147 = smul.u32 13, %s17
        %p148 = scmp.lt.s32.totalorder %s147, 25
        %s149 = scalar_select %p148, %s147, 25
        %s150 = smul.addr %s149, 8
        %s151 = scalar_lea.vmem %s0, %s150
        %p152 = pneg %p38
        %p153 = pneg %p35
        %p154 = pneg %p59
        %p155 = pneg %p56
        %p156 = pneg %p80
        %p157 = pneg %p77
        %p158 = pneg %p106
        %p159 = pneg %p103
        %s160 = sand.u32 %s93, 1
        %s161 = scalar_lea.sflag [#allocation3], %s160
        %s162 = sand.u32 %s93, 1
        %s163 = smul.addr %s162, 416
        %s164 = scalar_lea.vmem [#allocation2], %s163
        %s165 = smul.u32 13, %s17
        %p166 = scmp.lt.s32.totalorder %s165, 25
        %s167 = scalar_select %p166, %s165, 25
        %s168 = smul.addr %s167, 8
        %s169 = scalar_lea.vmem %s0, %s168
        %s170 = smul.u32 13, %s17
        %s171 = smul.u32 13, %s17
        %s172 = ssub.s32 25, %s171
        %p173 = scmp.lt.s32.totalorder %s172, 13
        %s174 = scalar_select %p173, %s172, 13
        %s175 = smul.u32 128, %s174
        %s176 = smul.u32 %s175, 4
        %v177 = vld [vmem:[%s169] sm:$0xff]
        %v178 = vld [vmem:[%s169 + $0x8] sm:$0xff]
        %v179 = vld [vmem:[%s169 + $0x10] sm:$0xff]
        %v180 = vld [vmem:[%s169 + $0x18] sm:$0xff]
        %v181 = vld [vmem:[%s169 + $0x20] sm:$0xff]
        %v182 = vld [vmem:[%s169 + $0x28] sm:$0xff]
        %v183 = vld [vmem:[%s169 + $0x30] sm:$0xff]
        %v184 = vld [vmem:[%s169 + $0x38] sm:$0xff]
        %v185 = vld [vmem:[%s169 + $0x40] sm:$0xff]
        %v186 = vld [vmem:[%s169 + $0x48] sm:$0xff]
        %v187 = vld [vmem:[%s169 + $0x50] sm:$0xff]
        %v188 = vld [vmem:[%s169 + $0x58] sm:$0xff]
        %v189 = vld [vmem:[%s169 + $0x60] sm:$0xff]
        %v190 = vld [vmem:[%s1] sm:$0xff]
        %v191 = vld [vmem:[%s2] sm:$0x3]
        %v193 = vlaneseq
        %v194 = vshrl.u32 %v193, 7
        %v195 = vsub.s32 0, %v194
        %v196 = vrot.slane %v191, %v195
        %v197 = vlaneseq
        %v198 = vshrl.u32 %v197, 7
        %v199 = vsub.s32 1, %v198
        %v200 = vrot.slane %v191, %v199
        %v204 = vcombine.high %v190, %v190
        %vm205 = vcmask 31744
        %v207 = vsel %vm205, %v177, 0
        %v210 = vsel %vm205, %v178, 0
        %v213 = vsel %vm205, %v179, 0
        %v216 = vsel %vm205, %v180, 0
        %v219 = vsel %vm205, %v181, 0
        %v222 = vsel %vm205, %v182, 0
        %v225 = vsel %vm205, %v183, 0
        %v228 = vsel %vm205, %v184, 0
        %v231 = vsel %vm205, %v185, 0
        %v234 = vsel %vm205, %v186, 0
        %v237 = vsel %vm205, %v187, 0
        %v240 = vsel %vm205, %v188, 0
        %v243 = vsel %vm205, %v189, 0
        %vm245 = vcmask 1043456
        %v246 = vsel %vm245, %v190, 0
        %v248 = vsel %vm245, %v204, 0
        %v250 = vand.u32 %v248, 4294901760
        %251 = vmatprep.subr.mxu0 %v250
        %v252 = vand.u32 %v246, 4294901760
        %253 = vmatpush1.msra.mxu0 %v252
        %254 = vmatprep.subr.mxu0 0.0
        %255 = vmatpush1.msra.mxu0 0.0
        %256 = vmatprep.subr.mxu0 0.0
        %257 = vmatpush1.msra.mxu0 0.0
        %258 = vmatprep.subr.mxu0 0.0
        %259 = vmatpush1.msra.mxu0 0.0
        %260 = vmatprep.subr.mxu0 0.0
        %261 = vmatpush1.msra.mxu0 0.0
        %262 = vmatprep.subr.mxu0 0.0
        %263 = vmatpush1.msra.mxu0 0.0
        %264 = vmatprep.subr.mxu0 0.0
        %265 = vmatpush1.msra.mxu0 0.0
        %266 = vmatprep.subr.mxu0 0.0
        %267 = vmatpush1.msra.mxu0 0.0
        %268 = vmatprep.subr.mxu0 0.0
        %269 = vmatpush1.msra.mxu0 0.0
        %270 = vmatprep.subr.mxu0 0.0
        %271 = vmatpush1.msra.mxu0 0.0
        %272 = vmatprep.subr.mxu0 0.0
        %273 = vmatpush1.msra.mxu0 0.0
        %274 = vmatprep.subr.mxu0 0.0
        %275 = vmatpush1.msra.mxu0 0.0
        %276 = vmatprep.subr.mxu0 0.0
        %277 = vmatpush1.msra.mxu0 0.0
        %278 = vmatprep.subr.mxu0 0.0
        %279 = vmatpush1.msra.mxu0 0.0
        %280 = vmatprep.subr.mxu0 0.0
        %281 = vmatpush1.msra.mxu0 0.0
        %282 = vmatprep.subr.mxu0 0.0
        %283 = vmatpush1.msra.mxu0 0.0
        %284 = vmatprep.subr.mxu0 0.0
        %285 = vmatpush1.msra.mxu0 0.0
        %286 = vmatprep.subr.mxu0 0.0
        %287 = vmatpush1.msra.mxu0 0.0
        %288 = vmatprep.subr.mxu0 0.0
        %289 = vmatpush1.msra.mxu0 0.0
        %290 = vmatprep.subr.mxu0 0.0
        %291 = vmatpush1.msra.mxu0 0.0
        %292 = vmatprep.subr.mxu0 0.0
        %293 = vmatpush1.msra.mxu0 0.0
        %294 = vmatprep.subr.mxu0 0.0
        %295 = vmatpush1.msra.mxu0 0.0
        %296 = vmatprep.subr.mxu0 0.0
        %297 = vmatpush1.msra.mxu0 0.0
        %298 = vmatprep.subr.mxu0 0.0
        %299 = vmatpush1.msra.mxu0 0.0
        %300 = vmatprep.subr.mxu0 0.0
        %301 = vmatpush1.msra.mxu0 0.0
        %302 = vmatprep.subr.mxu0 0.0
        %303 = vmatpush1.msra.mxu0 0.0
        %304 = vmatprep.subr.mxu0 0.0
        %305 = vmatpush1.msra.mxu0 0.0
        %306 = vmatprep.subr.mxu0 0.0
        %307 = vmatpush1.msra.mxu0 0.0
        %308 = vmatprep.subr.mxu0 0.0
        %309 = vmatpush1.msra.mxu0 0.0
        %310 = vmatprep.subr.mxu0 0.0
        %311 = vmatpush1.msra.mxu0 0.0
        %312 = vmatprep.subr.mxu0 0.0
        %313 = vmatpush1.msra.mxu0 0.0
        %314 = vmatprep.subr.mxu0 0.0
        %315 = vmatpush1.msra.mxu0 0.0
        %316 = vmatprep.mubr.f32.mxu0 0.0
        %v317 = vand.u32 %v207, 4294901760
        %v318 = vsub.f32 %v207, %v317
        %v319 = vand.u32 %v318, 4294901760
        %v320 = vsub.f32 %v318, %v319
        %v321 = vand.u32 %v320, 4294901760
        %322 = vmatmul.mubr.f32.gmra.mrb[0].mxu0 %v321
        %v323 = vpop.f32.mrb[0].mxu0
        %v324 = vadd.f32 %v196, %v323
        %v325 = vpop.f32.mrb[0].mxu0
        %v326 = vadd.f32 %v200, %v325
        %327 = vmatprep.mubr.f32.mxu0 0.0
        %v328 = vand.u32 %v210, 4294901760
        %v329 = vsub.f32 %v210, %v328
        %v330 = vand.u32 %v329, 4294901760
        %v331 = vsub.f32 %v329, %v330
        %v332 = vand.u32 %v331, 4294901760
        %333 = vmatmul.mubr.f32.gmra.mrb[0].mxu0 %v332
        %v334 = vpop.f32.mrb[0].mxu0
        %v335 = vadd.f32 %v196, %v334
        %v336 = vpop.f32.mrb[0].mxu0
        %v337 = vadd.f32 %v200, %v336
        %338 = vmatprep.mubr.f32.mxu0 0.0
        %v339 = vand.u32 %v213, 4294901760
        %v340 = vsub.f32 %v213, %v339
        %v341 = vand.u32 %v340, 4294901760
        %v342 = vsub.f32 %v340, %v341
        %v343 = vand.u32 %v342, 4294901760
        %344 = vmatmul.mubr.f32.gmra.mrb[0].mxu0 %v343
        %v345 = vpop.f32.mrb[0].mxu0
        %v346 = vadd.f32 %v196, %v345
        %v347 = vpop.f32.mrb[0].mxu0
        %v348 = vadd.f32 %v200, %v347
        %349 = vmatprep.mubr.f32.mxu0 0.0
        %v350 = vand.u32 %v216, 4294901760
        %v351 = vsub.f32 %v216, %v350
        %v352 = vand.u32 %v351, 4294901760
        %v353 = vsub.f32 %v351, %v352
        %v354 = vand.u32 %v353, 4294901760
        %355 = vmatmul.mubr.f32.gmra.mrb[0].mxu0 %v354
        %v356 = vpop.f32.mrb[0].mxu0
        %v357 = vadd.f32 %v196, %v356
        %v358 = vpop.f32.mrb[0].mxu0
        %v359 = vadd.f32 %v200, %v358
        %360 = vmatprep.mubr.f32.mxu0 0.0
        %v361 = vand.u32 %v219, 4294901760
        %v362 = vsub.f32 %v219, %v361
        %v363 = vand.u32 %v362, 4294901760
        %v364 = vsub.f32 %v362, %v363
        %v365 = vand.u32 %v364, 4294901760
        %366 = vmatmul.mubr.f32.gmra.mrb[0].mxu0 %v365
        %v367 = vpop.f32.mrb[0].mxu0
        %v368 = vadd.f32 %v196, %v367
        %v369 = vpop.f32.mrb[0].mxu0
        %v370 = vadd.f32 %v200, %v369
        %371 = vmatprep.mubr.f32.mxu0 0.0
        %v372 = vand.u32 %v222, 4294901760
        %v373 = vsub.f32 %v222, %v372
        %v374 = vand.u32 %v373, 4294901760
        %v375 = vsub.f32 %v373, %v374
        %v376 = vand.u32 %v375, 4294901760
        %377 = vmatmul.mubr.f32.gmra.mrb[0].mxu0 %v376
        %v378 = vpop.f32.mrb[0].mxu0
        %v379 = vadd.f32 %v196, %v378
        %v380 = vpop.f32.mrb[0].mxu0
        %v381 = vadd.f32 %v200, %v380
        %382 = vmatprep.mubr.f32.mxu0 0.0
        %v383 = vand.u32 %v225, 4294901760
        %v384 = vsub.f32 %v225, %v383
        %v385 = vand.u32 %v384, 4294901760
        %v386 = vsub.f32 %v384, %v385
        %v387 = vand.u32 %v386, 4294901760
        %388 = vmatmul.mubr.f32.gmra.mrb[0].mxu0 %v387
        %v389 = vpop.f32.mrb[0].mxu0
        %v390 = vadd.f32 %v196, %v389
        %v391 = vpop.f32.mrb[0].mxu0
        %v392 = vadd.f32 %v200, %v391
        %393 = vmatprep.mubr.f32.mxu0 0.0
        %v394 = vand.u32 %v228, 4294901760
        %v395 = vsub.f32 %v228, %v394
        %v396 = vand.u32 %v395, 4294901760
        %v397 = vsub.f32 %v395, %v396
        %v398 = vand.u32 %v397, 4294901760
        %399 = vmatmul.mubr.f32.gmra.mrb[0].mxu0 %v398
        %v400 = vpop.f32.mrb[0].mxu0
        %v401 = vadd.f32 %v196, %v400
        %v402 = vpop.f32.mrb[0].mxu0
        %v403 = vadd.f32 %v200, %v402
        %404 = vmatprep.mubr.f32.mxu0 0.0
        %v405 = vand.u32 %v231, 4294901760
        %v406 = vsub.f32 %v231, %v405
        %v407 = vand.u32 %v406, 4294901760
        %v408 = vsub.f32 %v406, %v407
        %v409 = vand.u32 %v408, 4294901760
        %410 = vmatmul.mubr.f32.gmra.mrb[0].mxu0 %v409
        %v411 = vpop.f32.mrb[0].mxu0
        %v412 = vadd.f32 %v196, %v411
        %v413 = vpop.f32.mrb[0].mxu0
        %v414 = vadd.f32 %v200, %v413
        %415 = vmatprep.mubr.f32.mxu0 0.0
        %v416 = vand.u32 %v234, 4294901760
        %v417 = vsub.f32 %v234, %v416
        %v418 = vand.u32 %v417, 4294901760
        %v419 = vsub.f32 %v417, %v418
        %v420 = vand.u32 %v419, 4294901760
        %421 = vmatmul.mubr.f32.gmra.mrb[0].mxu0 %v420
        %v422 = vpop.f32.mrb[0].mxu0
        %v423 = vadd.f32 %v196, %v422
        %v424 = vpop.f32.mrb[0].mxu0
        %v425 = vadd.f32 %v200, %v424
        %426 = vmatprep.mubr.f32.mxu0 0.0
        %v427 = vand.u32 %v237, 4294901760
        %v428 = vsub.f32 %v237, %v427
        %v429 = vand.u32 %v428, 4294901760
        %v430 = vsub.f32 %v428, %v429
        %v431 = vand.u32 %v430, 4294901760
        %432 = vmatmul.mubr.f32.gmra.mrb[0].mxu0 %v431
        %v433 = vpop.f32.mrb[0].mxu0
        %v434 = vadd.f32 %v196, %v433
        %v435 = vpop.f32.mrb[0].mxu0
        %v436 = vadd.f32 %v200, %v435
        %437 = vmatprep.mubr.f32.mxu0 0.0
        %v438 = vand.u32 %v240, 4294901760
        %v439 = vsub.f32 %v240, %v438
        %v440 = vand.u32 %v439, 4294901760
        %v441 = vsub.f32 %v439, %v440
        %v442 = vand.u32 %v441, 4294901760
        %443 = vmatmul.mubr.f32.gmra.mrb[0].mxu0 %v442
        %v444 = vpop.f32.mrb[0].mxu0
        %v445 = vadd.f32 %v196, %v444
        %v446 = vpop.f32.mrb[0].mxu0
        %v447 = vadd.f32 %v200, %v446
        %448 = vmatprep.mubr.f32.mxu0 0.0
        %v449 = vand.u32 %v243, 4294901760
        %v450 = vsub.f32 %v243, %v449
        %v451 = vand.u32 %v450, 4294901760
        %v452 = vsub.f32 %v450, %v451
        %v453 = vand.u32 %v452, 4294901760
        %454 = vmatmul.mubr.f32.gmra.mrb[0].mxu0 %v453
        %v455 = vpop.f32.mrb[0].mxu0
        %v456 = vadd.f32 %v196, %v455
        %v457 = vpop.f32.mrb[0].mxu0
        %v458 = vadd.f32 %v200, %v457
        %459 = vdwg.mxu0
        %v460 = vand.u32 %v248, 4294901760
        %v461 = vsub.f32 %v248, %v460
        %v462 = vand.u32 %v461, 4294901760
        %v463 = vsub.f32 %v461, %v462
        %v464 = vand.u32 %v463, 4294901760
        %465 = vmatprep.subr.mxu0 %v464
        %v466 = vand.u32 %v246, 4294901760
        %v467 = vsub.f32 %v246, %v466
        %v468 = vand.u32 %v467, 4294901760
        %v469 = vsub.f32 %v467, %v468
        %v470 = vand.u32 %v469, 4294901760
        %471 = vmatpush1.msra.mxu0 %v470
        %472 = vmatprep.subr.mxu0 0.0
        %473 = vmatpush1.msra.mxu0 0.0
        %474 = vmatprep.subr.mxu0 0.0
        %475 = vmatpush1.msra.mxu0 0.0
        %476 = vmatprep.subr.mxu0 0.0
        %477 = vmatpush1.msra.mxu0 0.0
        %478 = vmatprep.subr.mxu0 0.0
        %479 = vmatpush1.msra.mxu0 0.0
        %480 = vmatprep.subr.mxu0 0.0
        %481 = vmatpush1.msra.mxu0 0.0
        %482 = vmatprep.subr.mxu0 0.0
        %483 = vmatpush1.msra.mxu0 0.0
        %484 = vmatprep.subr.mxu0 0.0
        %485 = vmatpush1.msra.mxu0 0.0
        %486 = vmatprep.subr.mxu0 0.0
        %487 = vmatpush1.msra.mxu0 0.0
        %488 = vmatprep.subr.mxu0 0.0
        %489 = vmatpush1.msra.mxu0 0.0
        %490 = vmatprep.subr.mxu0 0.0
        %491 = vmatpush1.msra.mxu0 0.0
        %492 = vmatprep.subr.mxu0 0.0
        %493 = vmatpush1.msra.mxu0 0.0
        %494 = vmatprep.subr.mxu0 0.0
        %495 = vmatpush1.msra.mxu0 0.0
        %496 = vmatprep.subr.mxu0 0.0
        %497 = vmatpush1.msra.mxu0 0.0
        %498 = vmatprep.subr.mxu0 0.0
        %499 = vmatpush1.msra.mxu0 0.0
        %500 = vmatprep.subr.mxu0 0.0
        %501 = vmatpush1.msra.mxu0 0.0
        %502 = vmatprep.subr.mxu0 0.0
        %503 = vmatpush1.msra.mxu0 0.0
        %504 = vmatprep.subr.mxu0 0.0
        %505 = vmatpush1.msra.mxu0 0.0
        %506 = vmatprep.subr.mxu0 0.0
        %507 = vmatpush1.msra.mxu0 0.0
        %508 = vmatprep.subr.mxu0 0.0
        %509 = vmatpush1.msra.mxu0 0.0
        %510 = vmatprep.subr.mxu0 0.0
        %511 = vmatpush1.msra.mxu0 0.0
        %512 = vmatprep.subr.mxu0 0.0
        %513 = vmatpush1.msra.mxu0 0.0
        %514 = vmatprep.subr.mxu0 0.0
        %515 = vmatpush1.msra.mxu0 0.0
        %516 = vmatprep.subr.mxu0 0.0
        %517 = vmatpush1.msra.mxu0 0.0
        %518 = vmatprep.subr.mxu0 0.0
        %519 = vmatpush1.msra.mxu0 0.0
        %520 = vmatprep.subr.mxu0 0.0
        %521 = vmatpush1.msra.mxu0 0.0
        %522 = vmatprep.subr.mxu0 0.0
        %523 = vmatpush1.msra.mxu0 0.0
        %524 = vmatprep.subr.mxu0 0.0
        %525 = vmatpush1.msra.mxu0 0.0
        %526 = vmatprep.subr.mxu0 0.0
        %527 = vmatpush1.msra.mxu0 0.0
        %528 = vmatprep.subr.mxu0 0.0
        %529 = vmatpush1.msra.mxu0 0.0
        %530 = vmatprep.subr.mxu0 0.0
        %531 = vmatpush1.msra.mxu0 0.0
        %532 = vmatprep.subr.mxu0 0.0
        %533 = vmatpush1.msra.mxu0 0.0
        %534 = vmatprep.mubr.f32.mxu0 0.0
        %v535 = vand.u32 %v207, 4294901760
        %536 = vmatmul.mubr.f32.gmra.mrb[0].mxu0 %v535
        %v537 = vpop.f32.mrb[0].mxu0
        %v538 = vadd.f32 %v324, %v537
        %v539 = vpop.f32.mrb[0].mxu0
        %v540 = vadd.f32 %v326, %v539
        %541 = vmatprep.mubr.f32.mxu0 0.0
        %v542 = vand.u32 %v210, 4294901760
        %543 = vmatmul.mubr.f32.gmra.mrb[0].mxu0 %v542
        %v544 = vpop.f32.mrb[0].mxu0
        %v545 = vadd.f32 %v335, %v544
        %v546 = vpop.f32.mrb[0].mxu0
        %v547 = vadd.f32 %v337, %v546
        %548 = vmatprep.mubr.f32.mxu0 0.0
        %v549 = vand.u32 %v213, 4294901760
        %550 = vmatmul.mubr.f32.gmra.mrb[0].mxu0 %v549
        %v551 = vpop.f32.mrb[0].mxu0
        %v552 = vadd.f32 %v346, %v551
        %v553 = vpop.f32.mrb[0].mxu0
        %v554 = vadd.f32 %v348, %v553
        %555 = vmatprep.mubr.f32.mxu0 0.0
        %v556 = vand.u32 %v216, 4294901760
        %557 = vmatmul.mubr.f32.gmra.mrb[0].mxu0 %v556
        %v558 = vpop.f32.mrb[0].mxu0
        %v559 = vadd.f32 %v357, %v558
        %v560 = vpop.f32.mrb[0].mxu0
        %v561 = vadd.f32 %v359, %v560
        %562 = vmatprep.mubr.f32.mxu0 0.0
        %v563 = vand.u32 %v219, 4294901760
        %564 = vmatmul.mubr.f32.gmra.mrb[0].mxu0 %v563
        %v565 = vpop.f32.mrb[0].mxu0
        %v566 = vadd.f32 %v368, %v565
        %v567 = vpop.f32.mrb[0].mxu0
        %v568 = vadd.f32 %v370, %v567
        %569 = vmatprep.mubr.f32.mxu0 0.0
        %v570 = vand.u32 %v222, 4294901760
        %571 = vmatmul.mubr.f32.gmra.mrb[0].mxu0 %v570
        %v572 = vpop.f32.mrb[0].mxu0
        %v573 = vadd.f32 %v379, %v572
        %v574 = vpop.f32.mrb[0].mxu0
        %v575 = vadd.f32 %v381, %v574
        %576 = vmatprep.mubr.f32.mxu0 0.0
        %v577 = vand.u32 %v225, 4294901760
        %578 = vmatmul.mubr.f32.gmra.mrb[0].mxu0 %v577
        %v579 = vpop.f32.mrb[0].mxu0
        %v580 = vadd.f32 %v390, %v579
        %v581 = vpop.f32.mrb[0].mxu0
        %v582 = vadd.f32 %v392, %v581
        %583 = vmatprep.mubr.f32.mxu0 0.0
        %v584 = vand.u32 %v228, 4294901760
        %585 = vmatmul.mubr.f32.gmra.mrb[0].mxu0 %v584
        %v586 = vpop.f32.mrb[0].mxu0
        %v587 = vadd.f32 %v401, %v586
        %v588 = vpop.f32.mrb[0].mxu0
        %v589 = vadd.f32 %v403, %v588
        %590 = vmatprep.mubr.f32.mxu0 0.0
        %v591 = vand.u32 %v231, 4294901760
        %592 = vmatmul.mubr.f32.gmra.mrb[0].mxu0 %v591
        %v593 = vpop.f32.mrb[0].mxu0
        %v594 = vadd.f32 %v412, %v593
        %v595 = vpop.f32.mrb[0].mxu0
        %v596 = vadd.f32 %v414, %v595
        %597 = vmatprep.mubr.f32.mxu0 0.0
        %v598 = vand.u32 %v234, 4294901760
        %599 = vmatmul.mubr.f32.gmra.mrb[0].mxu0 %v598
        %v600 = vpop.f32.mrb[0].mxu0
        %v601 = vadd.f32 %v423, %v600
        %v602 = vpop.f32.mrb[0].mxu0
        %v603 = vadd.f32 %v425, %v602
        %604 = vmatprep.mubr.f32.mxu0 0.0
        %v605 = vand.u32 %v237, 4294901760
        %606 = vmatmul.mubr.f32.gmra.mrb[0].mxu0 %v605
        %v607 = vpop.f32.mrb[0].mxu0
        %v608 = vadd.f32 %v434, %v607
        %v609 = vpop.f32.mrb[0].mxu0
        %v610 = vadd.f32 %v436, %v609
        %611 = vmatprep.mubr.f32.mxu0 0.0
        %v612 = vand.u32 %v240, 4294901760
        %613 = vmatmul.mubr.f32.gmra.mrb[0].mxu0 %v612
        %v614 = vpop.f32.mrb[0].mxu0
        %v615 = vadd.f32 %v445, %v614
        %v616 = vpop.f32.mrb[0].mxu0
        %v617 = vadd.f32 %v447, %v616
        %618 = vmatprep.mubr.f32.mxu0 0.0
        %v619 = vand.u32 %v243, 4294901760
        %620 = vmatmul.mubr.f32.gmra.mrb[0].mxu0 %v619
        %v621 = vpop.f32.mrb[0].mxu0
        %v622 = vadd.f32 %v456, %v621
        %v623 = vpop.f32.mrb[0].mxu0
        %v624 = vadd.f32 %v458, %v623
        %625 = vdwg.mxu0
        %v626 = vand.u32 %v248, 4294901760
        %v627 = vsub.f32 %v248, %v626
        %628 = vmatprep.subr.mxu0 %v627
        %v629 = vand.u32 %v246, 4294901760
        %v630 = vsub.f32 %v246, %v629
        %631 = vmatpush1.msra.mxu0 %v630
        %632 = vmatprep.subr.mxu0 0.0
        %633 = vmatpush1.msra.mxu0 0.0
        %634 = vmatprep.subr.mxu0 0.0
        %635 = vmatpush1.msra.mxu0 0.0
        %636 = vmatprep.subr.mxu0 0.0
        %637 = vmatpush1.msra.mxu0 0.0
        %638 = vmatprep.subr.mxu0 0.0
        %639 = vmatpush1.msra.mxu0 0.0
        %640 = vmatprep.subr.mxu0 0.0
        %641 = vmatpush1.msra.mxu0 0.0
        %642 = vmatprep.subr.mxu0 0.0
        %643 = vmatpush1.msra.mxu0 0.0
        %644 = vmatprep.subr.mxu0 0.0
        %645 = vmatpush1.msra.mxu0 0.0
        %646 = vmatprep.subr.mxu0 0.0
        %647 = vmatpush1.msra.mxu0 0.0
        %648 = vmatprep.subr.mxu0 0.0
        %649 = vmatpush1.msra.mxu0 0.0
        %650 = vmatprep.subr.mxu0 0.0
        %651 = vmatpush1.msra.mxu0 0.0
        %652 = vmatprep.subr.mxu0 0.0
        %653 = vmatpush1.msra.mxu0 0.0
        %654 = vmatprep.subr.mxu0 0.0
        %655 = vmatpush1.msra.mxu0 0.0
        %656 = vmatprep.subr.mxu0 0.0
        %657 = vmatpush1.msra.mxu0 0.0
        %658 = vmatprep.subr.mxu0 0.0
        %659 = vmatpush1.msra.mxu0 0.0
        %660 = vmatprep.subr.mxu0 0.0
        %661 = vmatpush1.msra.mxu0 0.0
        %662 = vmatprep.subr.mxu0 0.0
        %663 = vmatpush1.msra.mxu0 0.0
        %664 = vmatprep.subr.mxu0 0.0
        %665 = vmatpush1.msra.mxu0 0.0
        %666 = vmatprep.subr.mxu0 0.0
        %667 = vmatpush1.msra.mxu0 0.0
        %668 = vmatprep.subr.mxu0 0.0
        %669 = vmatpush1.msra.mxu0 0.0
        %670 = vmatprep.subr.mxu0 0.0
        %671 = vmatpush1.msra.mxu0 0.0
        %672 = vmatprep.subr.mxu0 0.0
        %673 = vmatpush1.msra.mxu0 0.0
        %674 = vmatprep.subr.mxu0 0.0
        %675 = vmatpush1.msra.mxu0 0.0
        %676 = vmatprep.subr.mxu0 0.0
        %677 = vmatpush1.msra.mxu0 0.0
        %678 = vmatprep.subr.mxu0 0.0
        %679 = vmatpush1.msra.mxu0 0.0
        %680 = vmatprep.subr.mxu0 0.0
        %681 = vmatpush1.msra.mxu0 0.0
        %682 = vmatprep.subr.mxu0 0.0
        %683 = vmatpush1.msra.mxu0 0.0
        %684 = vmatprep.subr.mxu0 0.0
        %685 = vmatpush1.msra.mxu0 0.0
        %686 = vmatprep.subr.mxu0 0.0
        %687 = vmatpush1.msra.mxu0 0.0
        %688 = vmatprep.subr.mxu0 0.0
        %689 = vmatpush1.msra.mxu0 0.0
        %690 = vmatprep.subr.mxu0 0.0
        %691 = vmatpush1.msra.mxu0 0.0
        %692 = vmatprep.subr.mxu0 0.0
        %693 = vmatpush1.msra.mxu0 0.0
        %694 = vmatprep.mubr.f32.mxu0 0.0
        %v695 = vand.u32 %v207, 4294901760
        %v696 = vsub.f32 %v207, %v695
        %697 = vmatmul.mubr.f32.gmra.mrb[0].mxu0 %v696
        %v698 = vpop.f32.mrb[0].mxu0
        %v699 = vadd.f32 %v538, %v698
        %v700 = vpop.f32.mrb[0].mxu0
        %v701 = vadd.f32 %v540, %v700
        %702 = vmatprep.mubr.f32.mxu0 0.0
        %v703 = vand.u32 %v210, 4294901760
        %v704 = vsub.f32 %v210, %v703
        %705 = vmatmul.mubr.f32.gmra.mrb[0].mxu0 %v704
        %v706 = vpop.f32.mrb[0].mxu0
        %v707 = vadd.f32 %v545, %v706
        %v708 = vpop.f32.mrb[0].mxu0
        %v709 = vadd.f32 %v547, %v708
        %710 = vmatprep.mubr.f32.mxu0 0.0
        %v711 = vand.u32 %v213, 4294901760
        %v712 = vsub.f32 %v213, %v711
        %713 = vmatmul.mubr.f32.gmra.mrb[0].mxu0 %v712
        %v714 = vpop.f32.mrb[0].mxu0
        %v715 = vadd.f32 %v552, %v714
        %v716 = vpop.f32.mrb[0].mxu0
        %v717 = vadd.f32 %v554, %v716
        %718 = vmatprep.mubr.f32.mxu0 0.0
        %v719 = vand.u32 %v216, 4294901760
        %v720 = vsub.f32 %v216, %v719
        %721 = vmatmul.mubr.f32.gmra.mrb[0].mxu0 %v720
        %v722 = vpop.f32.mrb[0].mxu0
        %v723 = vadd.f32 %v559, %v722
        %v724 = vpop.f32.mrb[0].mxu0
        %v725 = vadd.f32 %v561, %v724
        %726 = vmatprep.mubr.f32.mxu0 0.0
        %v727 = vand.u32 %v219, 4294901760
        %v728 = vsub.f32 %v219, %v727
        %729 = vmatmul.mubr.f32.gmra.mrb[0].mxu0 %v728
        %v730 = vpop.f32.mrb[0].mxu0
        %v731 = vadd.f32 %v566, %v730
        %v732 = vpop.f32.mrb[0].mxu0
        %v733 = vadd.f32 %v568, %v732
        %734 = vmatprep.mubr.f32.mxu0 0.0
        %v735 = vand.u32 %v222, 4294901760
        %v736 = vsub.f32 %v222, %v735
        %737 = vmatmul.mubr.f32.gmra.mrb[0].mxu0 %v736
        %v738 = vpop.f32.mrb[0].mxu0
        %v739 = vadd.f32 %v573, %v738
        %v740 = vpop.f32.mrb[0].mxu0
        %v741 = vadd.f32 %v575, %v740
        %742 = vmatprep.mubr.f32.mxu0 0.0
        %v743 = vand.u32 %v225, 4294901760
        %v744 = vsub.f32 %v225, %v743
        %745 = vmatmul.mubr.f32.gmra.mrb[0].mxu0 %v744
        %v746 = vpop.f32.mrb[0].mxu0
        %v747 = vadd.f32 %v580, %v746
        %v748 = vpop.f32.mrb[0].mxu0
        %v749 = vadd.f32 %v582, %v748
        %750 = vmatprep.mubr.f32.mxu0 0.0
        %v751 = vand.u32 %v228, 4294901760
        %v752 = vsub.f32 %v228, %v751
        %753 = vmatmul.mubr.f32.gmra.mrb[0].mxu0 %v752
        %v754 = vpop.f32.mrb[0].mxu0
        %v755 = vadd.f32 %v587, %v754
        %v756 = vpop.f32.mrb[0].mxu0
        %v757 = vadd.f32 %v589, %v756
        %758 = vmatprep.mubr.f32.mxu0 0.0
        %v759 = vand.u32 %v231, 4294901760
        %v760 = vsub.f32 %v231, %v759
        %761 = vmatmul.mubr.f32.gmra.mrb[0].mxu0 %v760
        %v762 = vpop.f32.mrb[0].mxu0
        %v763 = vadd.f32 %v594, %v762
        %v764 = vpop.f32.mrb[0].mxu0
        %v765 = vadd.f32 %v596, %v764
        %766 = vmatprep.mubr.f32.mxu0 0.0
        %v767 = vand.u32 %v234, 4294901760
        %v768 = vsub.f32 %v234, %v767
        %769 = vmatmul.mubr.f32.gmra.mrb[0].mxu0 %v768
        %v770 = vpop.f32.mrb[0].mxu0
        %v771 = vadd.f32 %v601, %v770
        %v772 = vpop.f32.mrb[0].mxu0
        %v773 = vadd.f32 %v603, %v772
        %774 = vmatprep.mubr.f32.mxu0 0.0
        %v775 = vand.u32 %v237, 4294901760
        %v776 = vsub.f32 %v237, %v775
        %777 = vmatmul.mubr.f32.gmra.mrb[0].mxu0 %v776
        %v778 = vpop.f32.mrb[0].mxu0
        %v779 = vadd.f32 %v608, %v778
        %v780 = vpop.f32.mrb[0].mxu0
        %v781 = vadd.f32 %v610, %v780
        %782 = vmatprep.mubr.f32.mxu0 0.0
        %v783 = vand.u32 %v240, 4294901760
        %v784 = vsub.f32 %v240, %v783
        %785 = vmatmul.mubr.f32.gmra.mrb[0].mxu0 %v784
        %v786 = vpop.f32.mrb[0].mxu0
        %v787 = vadd.f32 %v615, %v786
        %v788 = vpop.f32.mrb[0].mxu0
        %v789 = vadd.f32 %v617, %v788
        %790 = vmatprep.mubr.f32.mxu0 0.0
        %v791 = vand.u32 %v243, 4294901760
        %v792 = vsub.f32 %v243, %v791
        %793 = vmatmul.mubr.f32.gmra.mrb[0].mxu0 %v792
        %v794 = vpop.f32.mrb[0].mxu0
        %v795 = vadd.f32 %v622, %v794
        %v796 = vpop.f32.mrb[0].mxu0
        %v797 = vadd.f32 %v624, %v796
        %798 = vdwg.mxu0
        %v799 = vand.u32 %v248, 4294901760
        %800 = vmatprep.subr.mxu0 %v799
        %v801 = vand.u32 %v246, 4294901760
        %802 = vmatpush1.msra.mxu0 %v801
        %803 = vmatprep.subr.mxu0 0.0
        %804 = vmatpush1.msra.mxu0 0.0
        %805 = vmatprep.subr.mxu0 0.0
        %806 = vmatpush1.msra.mxu0 0.0
        %807 = vmatprep.subr.mxu0 0.0
        %808 = vmatpush1.msra.mxu0 0.0
        %809 = vmatprep.subr.mxu0 0.0
        %810 = vmatpush1.msra.mxu0 0.0
        %811 = vmatprep.subr.mxu0 0.0
        %812 = vmatpush1.msra.mxu0 0.0
        %813 = vmatprep.subr.mxu0 0.0
        %814 = vmatpush1.msra.mxu0 0.0
        %815 = vmatprep.subr.mxu0 0.0
        %816 = vmatpush1.msra.mxu0 0.0
        %817 = vmatprep.subr.mxu0 0.0
        %818 = vmatpush1.msra.mxu0 0.0
        %819 = vmatprep.subr.mxu0 0.0
        %820 = vmatpush1.msra.mxu0 0.0
        %821 = vmatprep.subr.mxu0 0.0
        %822 = vmatpush1.msra.mxu0 0.0
        %823 = vmatprep.subr.mxu0 0.0
        %824 = vmatpush1.msra.mxu0 0.0
        %825 = vmatprep.subr.mxu0 0.0
        %826 = vmatpush1.msra.mxu0 0.0
        %827 = vmatprep.subr.mxu0 0.0
        %828 = vmatpush1.msra.mxu0 0.0
        %829 = vmatprep.subr.mxu0 0.0
        %830 = vmatpush1.msra.mxu0 0.0
        %831 = vmatprep.subr.mxu0 0.0
        %832 = vmatpush1.msra.mxu0 0.0
        %833 = vmatprep.subr.mxu0 0.0
        %834 = vmatpush1.msra.mxu0 0.0
        %835 = vmatprep.subr.mxu0 0.0
        %836 = vmatpush1.msra.mxu0 0.0
        %837 = vmatprep.subr.mxu0 0.0
        %838 = vmatpush1.msra.mxu0 0.0
        %839 = vmatprep.subr.mxu0 0.0
        %840 = vmatpush1.msra.mxu0 0.0
        %841 = vmatprep.subr.mxu0 0.0
        %842 = vmatpush1.msra.mxu0 0.0
        %843 = vmatprep.subr.mxu0 0.0
        %844 = vmatpush1.msra.mxu0 0.0
        %845 = vmatprep.subr.mxu0 0.0
        %846 = vmatpush1.msra.mxu0 0.0
        %847 = vmatprep.subr.mxu0 0.0
        %848 = vmatpush1.msra.mxu0 0.0
        %849 = vmatprep.subr.mxu0 0.0
        %850 = vmatpush1.msra.mxu0 0.0
        %851 = vmatprep.subr.mxu0 0.0
        %852 = vmatpush1.msra.mxu0 0.0
        %853 = vmatprep.subr.mxu0 0.0
        %854 = vmatpush1.msra.mxu0 0.0
        %855 = vmatprep.subr.mxu0 0.0
        %856 = vmatpush1.msra.mxu0 0.0
        %857 = vmatprep.subr.mxu0 0.0
        %858 = vmatpush1.msra.mxu0 0.0
        %859 = vmatprep.subr.mxu0 0.0
        %860 = vmatpush1.msra.mxu0 0.0
        %861 = vmatprep.subr.mxu0 0.0
        %862 = vmatpush1.msra.mxu0 0.0
        %863 = vmatprep.subr.mxu0 0.0
        %864 = vmatpush1.msra.mxu0 0.0
        %865 = vmatprep.mubr.f32.mxu0 0.0
        %v866 = vand.u32 %v207, 4294901760
        %v867 = vsub.f32 %v207, %v866
        %v868 = vand.u32 %v867, 4294901760
        %869 = vmatmul.mubr.f32.gmra.mrb[0].mxu0 %v868
        %v870 = vpop.f32.mrb[0].mxu0
        %v871 = vadd.f32 %v699, %v870
        %v872 = vpop.f32.mrb[0].mxu0
        %v873 = vadd.f32 %v701, %v872
        %874 = vmatprep.mubr.f32.mxu0 0.0
        %v875 = vand.u32 %v210, 4294901760
        %v876 = vsub.f32 %v210, %v875
        %v877 = vand.u32 %v876, 4294901760
        %878 = vmatmul.mubr.f32.gmra.mrb[0].mxu0 %v877
        %v879 = vpop.f32.mrb[0].mxu0
        %v880 = vadd.f32 %v707, %v879
        %v881 = vpop.f32.mrb[0].mxu0
        %v882 = vadd.f32 %v709, %v881
        %883 = vmatprep.mubr.f32.mxu0 0.0
        %v884 = vand.u32 %v213, 4294901760
        %v885 = vsub.f32 %v213, %v884
        %v886 = vand.u32 %v885, 4294901760
        %887 = vmatmul.mubr.f32.gmra.mrb[0].mxu0 %v886
        %v888 = vpop.f32.mrb[0].mxu0
        %v889 = vadd.f32 %v715, %v888
        %v890 = vpop.f32.mrb[0].mxu0
        %v891 = vadd.f32 %v717, %v890
        %892 = vmatprep.mubr.f32.mxu0 0.0
        %v893 = vand.u32 %v216, 4294901760
        %v894 = vsub.f32 %v216, %v893
        %v895 = vand.u32 %v894, 4294901760
        %896 = vmatmul.mubr.f32.gmra.mrb[0].mxu0 %v895
        %v897 = vpop.f32.mrb[0].mxu0
        %v898 = vadd.f32 %v723, %v897
        %v899 = vpop.f32.mrb[0].mxu0
        %v900 = vadd.f32 %v725, %v899
        %901 = vmatprep.mubr.f32.mxu0 0.0
        %v902 = vand.u32 %v219, 4294901760
        %v903 = vsub.f32 %v219, %v902
        %v904 = vand.u32 %v903, 4294901760
        %905 = vmatmul.mubr.f32.gmra.mrb[0].mxu0 %v904
        %v906 = vpop.f32.mrb[0].mxu0
        %v907 = vadd.f32 %v731, %v906
        %v908 = vpop.f32.mrb[0].mxu0
        %v909 = vadd.f32 %v733, %v908
        %910 = vmatprep.mubr.f32.mxu0 0.0
        %v911 = vand.u32 %v222, 4294901760
        %v912 = vsub.f32 %v222, %v911
        %v913 = vand.u32 %v912, 4294901760
        %914 = vmatmul.mubr.f32.gmra.mrb[0].mxu0 %v913
        %v915 = vpop.f32.mrb[0].mxu0
        %v916 = vadd.f32 %v739, %v915
        %v917 = vpop.f32.mrb[0].mxu0
        %v918 = vadd.f32 %v741, %v917
        %919 = vmatprep.mubr.f32.mxu0 0.0
        %v920 = vand.u32 %v225, 4294901760
        %v921 = vsub.f32 %v225, %v920
        %v922 = vand.u32 %v921, 4294901760
        %923 = vmatmul.mubr.f32.gmra.mrb[0].mxu0 %v922
        %v924 = vpop.f32.mrb[0].mxu0
        %v925 = vadd.f32 %v747, %v924
        %v926 = vpop.f32.mrb[0].mxu0
        %v927 = vadd.f32 %v749, %v926
        %928 = vmatprep.mubr.f32.mxu0 0.0
        %v929 = vand.u32 %v228, 4294901760
        %v930 = vsub.f32 %v228, %v929
        %v931 = vand.u32 %v930, 4294901760
        %932 = vmatmul.mubr.f32.gmra.mrb[0].mxu0 %v931
        %v933 = vpop.f32.mrb[0].mxu0
        %v934 = vadd.f32 %v755, %v933
        %v935 = vpop.f32.mrb[0].mxu0
        %v936 = vadd.f32 %v757, %v935
        %937 = vmatprep.mubr.f32.mxu0 0.0
        %v938 = vand.u32 %v231, 4294901760
        %v939 = vsub.f32 %v231, %v938
        %v940 = vand.u32 %v939, 4294901760
        %941 = vmatmul.mubr.f32.gmra.mrb[0].mxu0 %v940
        %v942 = vpop.f32.mrb[0].mxu0
        %v943 = vadd.f32 %v763, %v942
        %v944 = vpop.f32.mrb[0].mxu0
        %v945 = vadd.f32 %v765, %v944
        %946 = vmatprep.mubr.f32.mxu0 0.0
        %v947 = vand.u32 %v234, 4294901760
        %v948 = vsub.f32 %v234, %v947
        %v949 = vand.u32 %v948, 4294901760
        %950 = vmatmul.mubr.f32.gmra.mrb[0].mxu0 %v949
        %v951 = vpop.f32.mrb[0].mxu0
        %v952 = vadd.f32 %v771, %v951
        %v953 = vpop.f32.mrb[0].mxu0
        %v954 = vadd.f32 %v773, %v953
        %955 = vmatprep.mubr.f32.mxu0 0.0
        %v956 = vand.u32 %v237, 4294901760
        %v957 = vsub.f32 %v237, %v956
        %v958 = vand.u32 %v957, 4294901760
        %959 = vmatmul.mubr.f32.gmra.mrb[0].mxu0 %v958
        %v960 = vpop.f32.mrb[0].mxu0
        %v961 = vadd.f32 %v779, %v960
        %v962 = vpop.f32.mrb[0].mxu0
        %v963 = vadd.f32 %v781, %v962
        %964 = vmatprep.mubr.f32.mxu0 0.0
        %v965 = vand.u32 %v240, 4294901760
        %v966 = vsub.f32 %v240, %v965
        %v967 = vand.u32 %v966, 4294901760
        %968 = vmatmul.mubr.f32.gmra.mrb[0].mxu0 %v967
        %v969 = vpop.f32.mrb[0].mxu0
        %v970 = vadd.f32 %v787, %v969
        %v971 = vpop.f32.mrb[0].mxu0
        %v972 = vadd.f32 %v789, %v971
        %973 = vmatprep.mubr.f32.mxu0 0.0
        %v974 = vand.u32 %v243, 4294901760
        %v975 = vsub.f32 %v243, %v974
        %v976 = vand.u32 %v975, 4294901760
        %977 = vmatmul.mubr.f32.gmra.mrb[0].mxu0 %v976
        %v978 = vpop.f32.mrb[0].mxu0
        %v979 = vadd.f32 %v795, %v978
        %v980 = vpop.f32.mrb[0].mxu0
        %v981 = vadd.f32 %v797, %v980
        %982 = vdwg.mxu0
        %v983 = vand.u32 %v248, 4294901760
        %v984 = vsub.f32 %v248, %v983
        %v985 = vand.u32 %v984, 4294901760
        %986 = vmatprep.subr.mxu0 %v985
        %v987 = vand.u32 %v246, 4294901760
        %v988 = vsub.f32 %v246, %v987
        %v989 = vand.u32 %v988, 4294901760
        %990 = vmatpush1.msra.mxu0 %v989
        %991 = vmatprep.subr.mxu0 0.0
        %992 = vmatpush1.msra.mxu0 0.0
        %993 = vmatprep.subr.mxu0 0.0
        %994 = vmatpush1.msra.mxu0 0.0
        %995 = vmatprep.subr.mxu0 0.0
        %996 = vmatpush1.msra.mxu0 0.0
        %997 = vmatprep.subr.mxu0 0.0
        %998 = vmatpush1.msra.mxu0 0.0
        %999 = vmatprep.subr.mxu0 0.0
        %1000 = vmatpush1.msra.mxu0 0.0
        %1001 = vmatprep.subr.mxu0 0.0
        %1002 = vmatpush1.msra.mxu0 0.0
        %1003 = vmatprep.subr.mxu0 0.0
        %1004 = vmatpush1.msra.mxu0 0.0
        %1005 = vmatprep.subr.mxu0 0.0
        %1006 = vmatpush1.msra.mxu0 0.0
        %1007 = vmatprep.subr.mxu0 0.0
        %1008 = vmatpush1.msra.mxu0 0.0
        %1009 = vmatprep.subr.mxu0 0.0
        %1010 = vmatpush1.msra.mxu0 0.0
        %1011 = vmatprep.subr.mxu0 0.0
        %1012 = vmatpush1.msra.mxu0 0.0
        %1013 = vmatprep.subr.mxu0 0.0
        %1014 = vmatpush1.msra.mxu0 0.0
        %1015 = vmatprep.subr.mxu0 0.0
        %1016 = vmatpush1.msra.mxu0 0.0
        %1017 = vmatprep.subr.mxu0 0.0
        %1018 = vmatpush1.msra.mxu0 0.0
        %1019 = vmatprep.subr.mxu0 0.0
        %1020 = vmatpush1.msra.mxu0 0.0
        %1021 = vmatprep.subr.mxu0 0.0
        %1022 = vmatpush1.msra.mxu0 0.0
        %1023 = vmatprep.subr.mxu0 0.0
        %1024 = vmatpush1.msra.mxu0 0.0
        %1025 = vmatprep.subr.mxu0 0.0
        %1026 = vmatpush1.msra.mxu0 0.0
        %1027 = vmatprep.subr.mxu0 0.0
        %1028 = vmatpush1.msra.mxu0 0.0
        %1029 = vmatprep.subr.mxu0 0.0
        %1030 = vmatpush1.msra.mxu0 0.0
        %1031 = vmatprep.subr.mxu0 0.0
        %1032 = vmatpush1.msra.mxu0 0.0
        %1033 = vmatprep.subr.mxu0 0.0
        %1034 = vmatpush1.msra.mxu0 0.0
        %1035 = vmatprep.subr.mxu0 0.0
        %1036 = vmatpush1.msra.mxu0 0.0
        %1037 = vmatprep.subr.mxu0 0.0
        %1038 = vmatpush1.msra.mxu0 0.0
        %1039 = vmatprep.subr.mxu0 0.0
        %1040 = vmatpush1.msra.mxu0 0.0
        %1041 = vmatprep.subr.mxu0 0.0
        %1042 = vmatpush1.msra.mxu0 0.0
        %1043 = vmatprep.subr.mxu0 0.0
        %1044 = vmatpush1.msra.mxu0 0.0
        %1045 = vmatprep.subr.mxu0 0.0
        %1046 = vmatpush1.msra.mxu0 0.0
        %1047 = vmatprep.subr.mxu0 0.0
        %1048 = vmatpush1.msra.mxu0 0.0
        %1049 = vmatprep.subr.mxu0 0.0
        %1050 = vmatpush1.msra.mxu0 0.0
        %1051 = vmatprep.subr.mxu0 0.0
        %1052 = vmatpush1.msra.mxu0 0.0
        %1053 = vmatprep.mubr.f32.mxu0 0.0
        %v1054 = vand.u32 %v207, 4294901760
        %1055 = vmatmul.mubr.f32.gmra.mrb[0].mxu0 %v1054
        %v1056 = vpop.f32.mrb[0].mxu0
        %v1057 = vadd.f32 %v871, %v1056
        %v1058 = vpop.f32.mrb[0].mxu0
        %v1059 = vadd.f32 %v873, %v1058
        %1060 = vmatprep.mubr.f32.mxu0 0.0
        %v1061 = vand.u32 %v210, 4294901760
        %1062 = vmatmul.mubr.f32.gmra.mrb[0].mxu0 %v1061
        %v1063 = vpop.f32.mrb[0].mxu0
        %v1064 = vadd.f32 %v880, %v1063
        %v1065 = vpop.f32.mrb[0].mxu0
        %v1066 = vadd.f32 %v882, %v1065
        %1067 = vmatprep.mubr.f32.mxu0 0.0
        %v1068 = vand.u32 %v213, 4294901760
        %1069 = vmatmul.mubr.f32.gmra.mrb[0].mxu0 %v1068
        %v1070 = vpop.f32.mrb[0].mxu0
        %v1071 = vadd.f32 %v889, %v1070
        %v1072 = vpop.f32.mrb[0].mxu0
        %v1073 = vadd.f32 %v891, %v1072
        %1074 = vmatprep.mubr.f32.mxu0 0.0
        %v1075 = vand.u32 %v216, 4294901760
        %1076 = vmatmul.mubr.f32.gmra.mrb[0].mxu0 %v1075
        %v1077 = vpop.f32.mrb[0].mxu0
        %v1078 = vadd.f32 %v898, %v1077
        %v1079 = vpop.f32.mrb[0].mxu0
        %v1080 = vadd.f32 %v900, %v1079
        %1081 = vmatprep.mubr.f32.mxu0 0.0
        %v1082 = vand.u32 %v219, 4294901760
        %1083 = vmatmul.mubr.f32.gmra.mrb[0].mxu0 %v1082
        %v1084 = vpop.f32.mrb[0].mxu0
        %v1085 = vadd.f32 %v907, %v1084
        %v1086 = vpop.f32.mrb[0].mxu0
        %v1087 = vadd.f32 %v909, %v1086
        %1088 = vmatprep.mubr.f32.mxu0 0.0
        %v1089 = vand.u32 %v222, 4294901760
        %1090 = vmatmul.mubr.f32.gmra.mrb[0].mxu0 %v1089
        %v1091 = vpop.f32.mrb[0].mxu0
        %v1092 = vadd.f32 %v916, %v1091
        %v1093 = vpop.f32.mrb[0].mxu0
        %v1094 = vadd.f32 %v918, %v1093
        %1095 = vmatprep.mubr.f32.mxu0 0.0
        %v1096 = vand.u32 %v225, 4294901760
        %1097 = vmatmul.mubr.f32.gmra.mrb[0].mxu0 %v1096
        %v1098 = vpop.f32.mrb[0].mxu0
        %v1099 = vadd.f32 %v925, %v1098
        %v1100 = vpop.f32.mrb[0].mxu0
        %v1101 = vadd.f32 %v927, %v1100
        %1102 = vmatprep.mubr.f32.mxu0 0.0
        %v1103 = vand.u32 %v228, 4294901760
        %1104 = vmatmul.mubr.f32.gmra.mrb[0].mxu0 %v1103
        %v1105 = vpop.f32.mrb[0].mxu0
        %v1106 = vadd.f32 %v934, %v1105
        %v1107 = vpop.f32.mrb[0].mxu0
        %v1108 = vadd.f32 %v936, %v1107
        %1109 = vmatprep.mubr.f32.mxu0 0.0
        %v1110 = vand.u32 %v231, 4294901760
        %1111 = vmatmul.mubr.f32.gmra.mrb[0].mxu0 %v1110
        %v1112 = vpop.f32.mrb[0].mxu0
        %v1113 = vadd.f32 %v943, %v1112
        %v1114 = vpop.f32.mrb[0].mxu0
        %v1115 = vadd.f32 %v945, %v1114
        %1116 = vmatprep.mubr.f32.mxu0 0.0
        %v1117 = vand.u32 %v234, 4294901760
        %1118 = vmatmul.mubr.f32.gmra.mrb[0].mxu0 %v1117
        %v1119 = vpop.f32.mrb[0].mxu0
        %v1120 = vadd.f32 %v952, %v1119
        %v1121 = vpop.f32.mrb[0].mxu0
        %v1122 = vadd.f32 %v954, %v1121
        %1123 = vmatprep.mubr.f32.mxu0 0.0
        %v1124 = vand.u32 %v237, 4294901760
        %1125 = vmatmul.mubr.f32.gmra.mrb[0].mxu0 %v1124
        %v1126 = vpop.f32.mrb[0].mxu0
        %v1127 = vadd.f32 %v961, %v1126
        %v1128 = vpop.f32.mrb[0].mxu0
        %v1129 = vadd.f32 %v963, %v1128
        %1130 = vmatprep.mubr.f32.mxu0 0.0
        %v1131 = vand.u32 %v240, 4294901760
        %1132 = vmatmul.mubr.f32.gmra.mrb[0].mxu0 %v1131
        %v1133 = vpop.f32.mrb[0].mxu0
        %v1134 = vadd.f32 %v970, %v1133
        %v1135 = vpop.f32.mrb[0].mxu0
        %v1136 = vadd.f32 %v972, %v1135
        %1137 = vmatprep.mubr.f32.mxu0 0.0
        %v1138 = vand.u32 %v243, 4294901760
        %1139 = vmatmul.mubr.f32.gmra.mrb[0].mxu0 %v1138
        %v1140 = vpop.f32.mrb[0].mxu0
        %v1141 = vadd.f32 %v979, %v1140
        %v1142 = vpop.f32.mrb[0].mxu0
        %v1143 = vadd.f32 %v981, %v1142
        %1144 = vdwg.mxu0
        %v1145 = vand.u32 %v248, 4294901760
        %1146 = vmatprep.subr.mxu0 %v1145
        %v1147 = vand.u32 %v246, 4294901760
        %1148 = vmatpush1.msra.mxu0 %v1147
        %1149 = vmatprep.subr.mxu0 0.0
        %1150 = vmatpush1.msra.mxu0 0.0
        %1151 = vmatprep.subr.mxu0 0.0
        %1152 = vmatpush1.msra.mxu0 0.0
        %1153 = vmatprep.subr.mxu0 0.0
        %1154 = vmatpush1.msra.mxu0 0.0
        %1155 = vmatprep.subr.mxu0 0.0
        %1156 = vmatpush1.msra.mxu0 0.0
        %1157 = vmatprep.subr.mxu0 0.0
        %1158 = vmatpush1.msra.mxu0 0.0
        %1159 = vmatprep.subr.mxu0 0.0
        %1160 = vmatpush1.msra.mxu0 0.0
        %1161 = vmatprep.subr.mxu0 0.0
        %1162 = vmatpush1.msra.mxu0 0.0
        %1163 = vmatprep.subr.mxu0 0.0
        %1164 = vmatpush1.msra.mxu0 0.0
        %1165 = vmatprep.subr.mxu0 0.0
        %1166 = vmatpush1.msra.mxu0 0.0
        %1167 = vmatprep.subr.mxu0 0.0
        %1168 = vmatpush1.msra.mxu0 0.0
        %1169 = vmatprep.subr.mxu0 0.0
        %1170 = vmatpush1.msra.mxu0 0.0
        %1171 = vmatprep.subr.mxu0 0.0
        %1172 = vmatpush1.msra.mxu0 0.0
        %1173 = vmatprep.subr.mxu0 0.0
        %1174 = vmatpush1.msra.mxu0 0.0
        %1175 = vmatprep.subr.mxu0 0.0
        %1176 = vmatpush1.msra.mxu0 0.0
        %1177 = vmatprep.subr.mxu0 0.0
        %1178 = vmatpush1.msra.mxu0 0.0
        %1179 = vmatprep.subr.mxu0 0.0
        %1180 = vmatpush1.msra.mxu0 0.0
        %1181 = vmatprep.subr.mxu0 0.0
        %1182 = vmatpush1.msra.mxu0 0.0
        %1183 = vmatprep.subr.mxu0 0.0
        %1184 = vmatpush1.msra.mxu0 0.0
        %1185 = vmatprep.subr.mxu0 0.0
        %1186 = vmatpush1.msra.mxu0 0.0
        %1187 = vmatprep.subr.mxu0 0.0
        %1188 = vmatpush1.msra.mxu0 0.0
        %1189 = vmatprep.subr.mxu0 0.0
        %1190 = vmatpush1.msra.mxu0 0.0
        %1191 = vmatprep.subr.mxu0 0.0
        %1192 = vmatpush1.msra.mxu0 0.0
        %1193 = vmatprep.subr.mxu0 0.0
        %1194 = vmatpush1.msra.mxu0 0.0
        %1195 = vmatprep.subr.mxu0 0.0
        %1196 = vmatpush1.msra.mxu0 0.0
        %1197 = vmatprep.subr.mxu0 0.0
        %1198 = vmatpush1.msra.mxu0 0.0
        %1199 = vmatprep.subr.mxu0 0.0
        %1200 = vmatpush1.msra.mxu0 0.0
        %1201 = vmatprep.subr.mxu0 0.0
        %1202 = vmatpush1.msra.mxu0 0.0
        %1203 = vmatprep.subr.mxu0 0.0
        %1204 = vmatpush1.msra.mxu0 0.0
        %1205 = vmatprep.subr.mxu0 0.0
        %1206 = vmatpush1.msra.mxu0 0.0
        %1207 = vmatprep.subr.mxu0 0.0
        %1208 = vmatpush1.msra.mxu0 0.0
        %1209 = vmatprep.subr.mxu0 0.0
        %1210 = vmatpush1.msra.mxu0 0.0
        %1211 = vmatprep.mubr.f32.mxu0 0.0
        %v1212 = vand.u32 %v207, 4294901760
        %1213 = vmatmul.mubr.f32.gmra.mrb[0].mxu0 %v1212
        %v1214 = vpop.f32.mrb[0].mxu0
        %v1215 = vadd.f32 %v1057, %v1214
        %v1216 = vpop.f32.mrb[0].mxu0
        %v1217 = vadd.f32 %v1059, %v1216
        %1218 = vmatprep.mubr.f32.mxu0 0.0
        %v1219 = vand.u32 %v210, 4294901760
        %1220 = vmatmul.mubr.f32.gmra.mrb[0].mxu0 %v1219
        %v1221 = vpop.f32.mrb[0].mxu0
        %v1222 = vadd.f32 %v1064, %v1221
        %v1223 = vpop.f32.mrb[0].mxu0
        %v1224 = vadd.f32 %v1066, %v1223
        %1225 = vmatprep.mubr.f32.mxu0 0.0
        %v1226 = vand.u32 %v213, 4294901760
        %1227 = vmatmul.mubr.f32.gmra.mrb[0].mxu0 %v1226
        %v1228 = vpop.f32.mrb[0].mxu0
        %v1229 = vadd.f32 %v1071, %v1228
        %v1230 = vpop.f32.mrb[0].mxu0
        %v1231 = vadd.f32 %v1073, %v1230
        %1232 = vmatprep.mubr.f32.mxu0 0.0
        %v1233 = vand.u32 %v216, 4294901760
        %1234 = vmatmul.mubr.f32.gmra.mrb[0].mxu0 %v1233
        %v1235 = vpop.f32.mrb[0].mxu0
        %v1236 = vadd.f32 %v1078, %v1235
        %v1237 = vpop.f32.mrb[0].mxu0
        %v1238 = vadd.f32 %v1080, %v1237
        %1239 = vmatprep.mubr.f32.mxu0 0.0
        %v1240 = vand.u32 %v219, 4294901760
        %1241 = vmatmul.mubr.f32.gmra.mrb[0].mxu0 %v1240
        %v1242 = vpop.f32.mrb[0].mxu0
        %v1243 = vadd.f32 %v1085, %v1242
        %v1244 = vpop.f32.mrb[0].mxu0
        %v1245 = vadd.f32 %v1087, %v1244
        %1246 = vmatprep.mubr.f32.mxu0 0.0
        %v1247 = vand.u32 %v222, 4294901760
        %1248 = vmatmul.mubr.f32.gmra.mrb[0].mxu0 %v1247
        %v1249 = vpop.f32.mrb[0].mxu0
        %v1250 = vadd.f32 %v1092, %v1249
        %v1251 = vpop.f32.mrb[0].mxu0
        %v1252 = vadd.f32 %v1094, %v1251
        %1253 = vmatprep.mubr.f32.mxu0 0.0
        %v1254 = vand.u32 %v225, 4294901760
        %1255 = vmatmul.mubr.f32.gmra.mrb[0].mxu0 %v1254
        %v1256 = vpop.f32.mrb[0].mxu0
        %v1257 = vadd.f32 %v1099, %v1256
        %v1258 = vpop.f32.mrb[0].mxu0
        %v1259 = vadd.f32 %v1101, %v1258
        %1260 = vmatprep.mubr.f32.mxu0 0.0
        %v1261 = vand.u32 %v228, 4294901760
        %1262 = vmatmul.mubr.f32.gmra.mrb[0].mxu0 %v1261
        %v1263 = vpop.f32.mrb[0].mxu0
        %v1264 = vadd.f32 %v1106, %v1263
        %v1265 = vpop.f32.mrb[0].mxu0
        %v1266 = vadd.f32 %v1108, %v1265
        %1267 = vmatprep.mubr.f32.mxu0 0.0
        %v1268 = vand.u32 %v231, 4294901760
        %1269 = vmatmul.mubr.f32.gmra.mrb[0].mxu0 %v1268
        %v1270 = vpop.f32.mrb[0].mxu0
        %v1271 = vadd.f32 %v1113, %v1270
        %v1272 = vpop.f32.mrb[0].mxu0
        %v1273 = vadd.f32 %v1115, %v1272
        %1274 = vmatprep.mubr.f32.mxu0 0.0
        %v1275 = vand.u32 %v234, 4294901760
        %1276 = vmatmul.mubr.f32.gmra.mrb[0].mxu0 %v1275
        %v1277 = vpop.f32.mrb[0].mxu0
        %v1278 = vadd.f32 %v1120, %v1277
        %v1279 = vpop.f32.mrb[0].mxu0
        %v1280 = vadd.f32 %v1122, %v1279
        %1281 = vmatprep.mubr.f32.mxu0 0.0
        %v1282 = vand.u32 %v237, 4294901760
        %1283 = vmatmul.mubr.f32.gmra.mrb[0].mxu0 %v1282
        %v1284 = vpop.f32.mrb[0].mxu0
        %v1285 = vadd.f32 %v1127, %v1284
        %v1286 = vpop.f32.mrb[0].mxu0
        %v1287 = vadd.f32 %v1129, %v1286
        %1288 = vmatprep.mubr.f32.mxu0 0.0
        %v1289 = vand.u32 %v240, 4294901760
        %1290 = vmatmul.mubr.f32.gmra.mrb[0].mxu0 %v1289
        %v1291 = vpop.f32.mrb[0].mxu0
        %v1292 = vadd.f32 %v1134, %v1291
        %v1293 = vpop.f32.mrb[0].mxu0
        %v1294 = vadd.f32 %v1136, %v1293
        %1295 = vmatprep.mubr.f32.mxu0 0.0
        %v1296 = vand.u32 %v243, 4294901760
        %1297 = vmatmul.mubr.f32.gmra.mrb[0].mxu0 %v1296
        %v1298 = vpop.f32.mrb[0].mxu0
        %v1299 = vadd.f32 %v1141, %v1298
        %v1300 = vpop.f32.mrb[0].mxu0
        %v1301 = vadd.f32 %v1143, %v1300
        %1302 = vdwg.mxu0
        %v1303 = vand.u32 2147483647, %v1215
        %vm1304 = vcmp.le.f32.partialorder %v1303, 0.7853982
        %vm1305 = vcmp.lt.s32.totalorder %v1215, 0
        %v1306 = vand.u32 %v1215, 2139095040
        %v1307 = vshrl.u32 %v1306, 23
        %v1308 = vsub.s32 %v1307, 127
        %v1309 = vand.u32 2147483647, %v1215
        %v1310 = vand.u32 %v1309, 8388607
        %v1311 = vor.u32 %v1310, 8388608
        %v1312 = vsub.s32 0, %v1311
        %v1313 = vadd.s32 %v1308, 1
        %vm1314 = vcmp.gt.s32.totalorder %v1313, 0
        %v1315 = vsel %vm1314, %v1313, 0
        %v1316 = vshrl.u32 %v1315, 5
        %v1317 = vand.u32 %v1315, 31
        %v1318 = vsub.s32 32, %v1317
        %v1319 = vshrl.u32 683565275, %v1318
        %v1320 = vshll.u32 683565275, %v1317
        %v1321 = vshrl.u32 2475754826, %v1318
        %v1322 = vor.u32 %v1320, %v1321
        %v1323 = vshll.u32 2475754826, %v1317
        %v1324 = vshrl.u32 2131351028, %v1318
        %v1325 = vor.u32 %v1323, %v1324
        %v1326 = vshll.u32 2131351028, %v1317
        %v1327 = vshrl.u32 2102212464, %v1318
        %v1328 = vor.u32 %v1326, %v1327
        %v1329 = vshll.u32 2102212464, %v1317
        %v1330 = vshrl.u32 920167782, %v1318
        %v1331 = vor.u32 %v1329, %v1330
        %v1332 = vshll.u32 920167782, %v1317
        %v1333 = vshrl.u32 1326507024, %v1318
        %v1334 = vor.u32 %v1332, %v1333
        %vm1335 = vcmp.lt.s32.totalorder %v1316, 1
        %vm1336 = vcmp.lt.s32.totalorder %v1316, 2
        %vm1337 = vcmp.lt.s32.totalorder %v1316, 3
        %vm1338 = vcmp.lt.s32.totalorder %v1316, 4
        %v1339 = vsel %vm1335, %v1319, %v1322
        %v1340 = vsel %vm1338, %v1328, 2102212464
        %v1341 = vsel %vm1337, %v1325, %v1340
        %v1342 = vsel %vm1336, %v1339, %v1341
        %v1343 = vsel %vm1335, %v1322, %v1325
        %v1344 = vsel %vm1338, %v1331, 920167782
        %v1345 = vsel %vm1337, %v1328, %v1344
        %v1346 = vsel %vm1336, %v1343, %v1345
        %v1347 = vsel %vm1335, %v1325, %v1328
        %v1348 = vsel %vm1338, %v1334, 1326507024
        %v1349 = vsel %vm1337, %v1331, %v1348
        %v1350 = vsel %vm1336, %v1347, %v1349
        %v1351 = vshll.u32 %v1311, 8
        %v1352 = vmul.u32.u64.compose %v1351, %v1350
        %v1353 = vextract.low.u32 %v1352
        %v1354 = vextract.high.u32 %v1352
        %v1355 = vmul.u32.u64.compose %v1351, %v1346
        %v1356 = vextract.low.u32 %v1355
        %v1357 = vextract.high.u32 %v1355
        %v1358 = vmul.u32 %v1351, %v1342
        %v1359 = vadd.s32 %v1354, %v1356
        %vm1360 = vc.u32 %v1354, %v1356
        %v1361 = vadd.s32 %v1357, 1
        %v1362 = vsel %vm1360, %v1361, %v1357
        %v1363 = vadd.s32 %v1358, %v1362
        %v1364 = vadd.s32 %v1363, 536870912
        %v1365 = vshrl.u32 %v1364, 30
        %v1366 = vshll.u32 %v1365, 30
        %v1367 = vsub.s32 %v1363, %v1366
        %vm1368 = vcmp.lt.s32.totalorder %v1367, 0
        %v1369 = vsub.s32 0, %v1367
        %v1370 = vsel %vm1368, %v1369, %v1367
        %v1371 = vclz %v1370
        %v1372 = vsub.s32 %v1371, 2
        %vm1373 = vcmp.gt.s32.totalorder 0, %v1372
        %v1374 = vsel %vm1373, 0, %v1372
        %v1375 = vsub.s32 32, %v1374
        %v1376 = vshll.u32 %v1367, %v1374
        %v1377 = vshrl.u32 %v1359, %v1375
        %v1378 = vor.u32 %v1376, %v1377
        %v1379 = vsub.s32 4294967266, %v1374
        %v1380 = vadd.s32 %v1379, 127
        %v1381 = vshll.u32 %v1380, 23
        %v1382 = vor.u32 4788187, %v1381
        %v1383 = vand.u32 2147483647, %v1382
        %v1385 = vcvt.s32.f32 %v1378
        %v1386 = vmul.f32 %v1385, %v1383
        %v1387 = vxor.u32 %v1386, 2147483648
        %v1388 = vsel %vm1305, %v1387, %v1386
        %v1389 = vsub.s32 4, %v1365
        %v1390 = vsel %vm1305, %v1389, %v1365
        %v1391 = vsel %vm1304, %v1215, %v1388
        %v1392 = vsel %vm1304, 0, %v1390
        %v1393 = vcosq.f32.pop %v1391
        %v1394 = vsinq.f32.pop %v1391
        %vm1395 = vweird.f32 %v1215
        %v1396 = vadd.s32 %v1392, 3
        %v1397 = vand.u32 %v1396, 3
        %vm1398 = vcmp.lt.s32.totalorder %v1397, 2
        %vm1399 = vcmp.eq.s32.totalorder %v1397, 0
        %v1400 = vxor.u32 %v1394, 2147483648
        %v1401 = vsel %vm1399, %v1393, %v1400
        %vm1402 = vcmp.eq.s32.totalorder %v1397, 2
        %v1403 = vxor.u32 %v1393, 2147483648
        %v1404 = vsel %vm1402, %v1403, %v1394
        %v1405 = vsel %vm1398, %v1401, %v1404
        %v1406 = vsel %vm1395, nan, %v1405
        %v1407 = vand.u32 2147483647, %v1217
        %vm1408 = vcmp.le.f32.partialorder %v1407, 0.7853982
        %vm1409 = vcmp.lt.s32.totalorder %v1217, 0
        %v1410 = vand.u32 %v1217, 2139095040
        %v1411 = vshrl.u32 %v1410, 23
        %v1412 = vsub.s32 %v1411, 127
        %v1413 = vand.u32 2147483647, %v1217
        %v1414 = vand.u32 %v1413, 8388607
        %v1415 = vor.u32 %v1414, 8388608
        %v1416 = vsub.s32 0, %v1415
        %v1417 = vadd.s32 %v1412, 1
        %vm1418 = vcmp.gt.s32.totalorder %v1417, 0
        %v1419 = vsel %vm1418, %v1417, 0
        %v1420 = vshrl.u32 %v1419, 5
        %v1421 = vand.u32 %v1419, 31
        %v1422 = vsub.s32 32, %v1421
        %v1423 = vshrl.u32 683565275, %v1422
        %v1424 = vshll.u32 683565275, %v1421
        %v1425 = vshrl.u32 2475754826, %v1422
        %v1426 = vor.u32 %v1424, %v1425
        %v1427 = vshll.u32 2475754826, %v1421
        %v1428 = vshrl.u32 2131351028, %v1422
        %v1429 = vor.u32 %v1427, %v1428
        %v1430 = vshll.u32 2131351028, %v1421
        %v1431 = vshrl.u32 2102212464, %v1422
        %v1432 = vor.u32 %v1430, %v1431
        %v1433 = vshll.u32 2102212464, %v1421
        %v1434 = vshrl.u32 920167782, %v1422
        %v1435 = vor.u32 %v1433, %v1434
        %v1436 = vshll.u32 920167782, %v1421
        %v1437 = vshrl.u32 1326507024, %v1422
        %v1438 = vor.u32 %v1436, %v1437
        %vm1439 = vcmp.lt.s32.totalorder %v1420, 1
        %vm1440 = vcmp.lt.s32.totalorder %v1420, 2
        %vm1441 = vcmp.lt.s32.totalorder %v1420, 3
        %vm1442 = vcmp.lt.s32.totalorder %v1420, 4
        %v1443 = vsel %vm1439, %v1423, %v1426
        %v1444 = vsel %vm1442, %v1432, 2102212464
        %v1445 = vsel %vm1441, %v1429, %v1444
        %v1446 = vsel %vm1440, %v1443, %v1445
        %v1447 = vsel %vm1439, %v1426, %v1429
        %v1448 = vsel %vm1442, %v1435, 920167782
        %v1449 = vsel %vm1441, %v1432, %v1448
        %v1450 = vsel %vm1440, %v1447, %v1449
        %v1451 = vsel %vm1439, %v1429, %v1432
        %v1452 = vsel %vm1442, %v1438, 1326507024
        %v1453 = vsel %vm1441, %v1435, %v1452
        %v1454 = vsel %vm1440, %v1451, %v1453
        %v1455 = vshll.u32 %v1415, 8
        %v1456 = vmul.u32.u64.compose %v1455, %v1454
        %v1457 = vextract.low.u32 %v1456
        %v1458 = vextract.high.u32 %v1456
        %v1459 = vmul.u32.u64.compose %v1455, %v1450
        %v1460 = vextract.low.u32 %v1459
        %v1461 = vextract.high.u32 %v1459
        %v1462 = vmul.u32 %v1455, %v1446
        %v1463 = vadd.s32 %v1458, %v1460
        %vm1464 = vc.u32 %v1458, %v1460
        %v1465 = vadd.s32 %v1461, 1
        %v1466 = vsel %vm1464, %v1465, %v1461
        %v1467 = vadd.s32 %v1462, %v1466
        %v1468 = vadd.s32 %v1467, 536870912
        %v1469 = vshrl.u32 %v1468, 30
        %v1470 = vshll.u32 %v1469, 30
        %v1471 = vsub.s32 %v1467, %v1470
        %vm1472 = vcmp.lt.s32.totalorder %v1471, 0
        %v1473 = vsub.s32 0, %v1471
        %v1474 = vsel %vm1472, %v1473, %v1471
        %v1475 = vclz %v1474
        %v1476 = vsub.s32 %v1475, 2
        %vm1477 = vcmp.gt.s32.totalorder 0, %v1476
        %v1478 = vsel %vm1477, 0, %v1476
        %v1479 = vsub.s32 32, %v1478
        %v1480 = vshll.u32 %v1471, %v1478
        %v1481 = vshrl.u32 %v1463, %v1479
        %v1482 = vor.u32 %v1480, %v1481
        %v1483 = vsub.s32 4294967266, %v1478
        %v1484 = vadd.s32 %v1483, 127
        %v1485 = vshll.u32 %v1484, 23
        %v1486 = vor.u32 4788187, %v1485
        %v1487 = vand.u32 2147483647, %v1486
        %v1489 = vcvt.s32.f32 %v1482
        %v1490 = vmul.f32 %v1489, %v1487
        %v1491 = vxor.u32 %v1490, 2147483648
        %v1492 = vsel %vm1409, %v1491, %v1490
        %v1493 = vsub.s32 4, %v1469
        %v1494 = vsel %vm1409, %v1493, %v1469
        %v1495 = vsel %vm1408, %v1217, %v1492
        %v1496 = vsel %vm1408, 0, %v1494
        %v1497 = vcosq.f32.pop %v1495
        %v1498 = vsinq.f32.pop %v1495
        %vm1499 = vweird.f32 %v1217
        %v1500 = vadd.s32 %v1496, 3
        %v1501 = vand.u32 %v1500, 3
        %vm1502 = vcmp.lt.s32.totalorder %v1501, 2
        %vm1503 = vcmp.eq.s32.totalorder %v1501, 0
        %v1504 = vxor.u32 %v1498, 2147483648
        %v1505 = vsel %vm1503, %v1497, %v1504
        %vm1506 = vcmp.eq.s32.totalorder %v1501, 2
        %v1507 = vxor.u32 %v1497, 2147483648
        %v1508 = vsel %vm1506, %v1507, %v1498
        %v1509 = vsel %vm1502, %v1505, %v1508
        %v1510 = vsel %vm1499, nan, %v1509
        %v1511 = vand.u32 2147483647, %v1222
        %vm1512 = vcmp.le.f32.partialorder %v1511, 0.7853982
        %vm1513 = vcmp.lt.s32.totalorder %v1222, 0
        %v1514 = vand.u32 %v1222, 2139095040
        %v1515 = vshrl.u32 %v1514, 23
        %v1516 = vsub.s32 %v1515, 127
        %v1517 = vand.u32 2147483647, %v1222
        %v1518 = vand.u32 %v1517, 8388607
        %v1519 = vor.u32 %v1518, 8388608
        %v1520 = vsub.s32 0, %v1519
        %v1521 = vadd.s32 %v1516, 1
        %vm1522 = vcmp.gt.s32.totalorder %v1521, 0
        %v1523 = vsel %vm1522, %v1521, 0
        %v1524 = vshrl.u32 %v1523, 5
        %v1525 = vand.u32 %v1523, 31
        %v1526 = vsub.s32 32, %v1525
        %v1527 = vshrl.u32 683565275, %v1526
        %v1528 = vshll.u32 683565275, %v1525
        %v1529 = vshrl.u32 2475754826, %v1526
        %v1530 = vor.u32 %v1528, %v1529
        %v1531 = vshll.u32 2475754826, %v1525
        %v1532 = vshrl.u32 2131351028, %v1526
        %v1533 = vor.u32 %v1531, %v1532
        %v1534 = vshll.u32 2131351028, %v1525
        %v1535 = vshrl.u32 2102212464, %v1526
        %v1536 = vor.u32 %v1534, %v1535
        %v1537 = vshll.u32 2102212464, %v1525
        %v1538 = vshrl.u32 920167782, %v1526
        %v1539 = vor.u32 %v1537, %v1538
        %v1540 = vshll.u32 920167782, %v1525
        %v1541 = vshrl.u32 1326507024, %v1526
        %v1542 = vor.u32 %v1540, %v1541
        %vm1543 = vcmp.lt.s32.totalorder %v1524, 1
        %vm1544 = vcmp.lt.s32.totalorder %v1524, 2
        %vm1545 = vcmp.lt.s32.totalorder %v1524, 3
        %vm1546 = vcmp.lt.s32.totalorder %v1524, 4
        %v1547 = vsel %vm1543, %v1527, %v1530
        %v1548 = vsel %vm1546, %v1536, 2102212464
        %v1549 = vsel %vm1545, %v1533, %v1548
        %v1550 = vsel %vm1544, %v1547, %v1549
        %v1551 = vsel %vm1543, %v1530, %v1533
        %v1552 = vsel %vm1546, %v1539, 920167782
        %v1553 = vsel %vm1545, %v1536, %v1552
        %v1554 = vsel %vm1544, %v1551, %v1553
        %v1555 = vsel %vm1543, %v1533, %v1536
        %v1556 = vsel %vm1546, %v1542, 1326507024
        %v1557 = vsel %vm1545, %v1539, %v1556
        %v1558 = vsel %vm1544, %v1555, %v1557
        %v1559 = vshll.u32 %v1519, 8
        %v1560 = vmul.u32.u64.compose %v1559, %v1558
        %v1561 = vextract.low.u32 %v1560
        %v1562 = vextract.high.u32 %v1560
        %v1563 = vmul.u32.u64.compose %v1559, %v1554
        %v1564 = vextract.low.u32 %v1563
        %v1565 = vextract.high.u32 %v1563
        %v1566 = vmul.u32 %v1559, %v1550
        %v1567 = vadd.s32 %v1562, %v1564
        %vm1568 = vc.u32 %v1562, %v1564
        %v1569 = vadd.s32 %v1565, 1
        %v1570 = vsel %vm1568, %v1569, %v1565
        %v1571 = vadd.s32 %v1566, %v1570
        %v1572 = vadd.s32 %v1571, 536870912
        %v1573 = vshrl.u32 %v1572, 30
        %v1574 = vshll.u32 %v1573, 30
        %v1575 = vsub.s32 %v1571, %v1574
        %vm1576 = vcmp.lt.s32.totalorder %v1575, 0
        %v1577 = vsub.s32 0, %v1575
        %v1578 = vsel %vm1576, %v1577, %v1575
        %v1579 = vclz %v1578
        %v1580 = vsub.s32 %v1579, 2
        %vm1581 = vcmp.gt.s32.totalorder 0, %v1580
        %v1582 = vsel %vm1581, 0, %v1580
        %v1583 = vsub.s32 32, %v1582
        %v1584 = vshll.u32 %v1575, %v1582
        %v1585 = vshrl.u32 %v1567, %v1583
        %v1586 = vor.u32 %v1584, %v1585
        %v1587 = vsub.s32 4294967266, %v1582
        %v1588 = vadd.s32 %v1587, 127
        %v1589 = vshll.u32 %v1588, 23
        %v1590 = vor.u32 4788187, %v1589
        %v1591 = vand.u32 2147483647, %v1590
        %v1593 = vcvt.s32.f32 %v1586
        %v1594 = vmul.f32 %v1593, %v1591
        %v1595 = vxor.u32 %v1594, 2147483648
        %v1596 = vsel %vm1513, %v1595, %v1594
        %v1597 = vsub.s32 4, %v1573
        %v1598 = vsel %vm1513, %v1597, %v1573
        %v1599 = vsel %vm1512, %v1222, %v1596
        %v1600 = vsel %vm1512, 0, %v1598
        %v1601 = vcosq.f32.pop %v1599
        %v1602 = vsinq.f32.pop %v1599
        %vm1603 = vweird.f32 %v1222
        %v1604 = vadd.s32 %v1600, 3
        %v1605 = vand.u32 %v1604, 3
        %vm1606 = vcmp.lt.s32.totalorder %v1605, 2
        %vm1607 = vcmp.eq.s32.totalorder %v1605, 0
        %v1608 = vxor.u32 %v1602, 2147483648
        %v1609 = vsel %vm1607, %v1601, %v1608
        %vm1610 = vcmp.eq.s32.totalorder %v1605, 2
        %v1611 = vxor.u32 %v1601, 2147483648
        %v1612 = vsel %vm1610, %v1611, %v1602
        %v1613 = vsel %vm1606, %v1609, %v1612
        %v1614 = vsel %vm1603, nan, %v1613
        %v1615 = vand.u32 2147483647, %v1224
        %vm1616 = vcmp.le.f32.partialorder %v1615, 0.7853982
        %vm1617 = vcmp.lt.s32.totalorder %v1224, 0
        %v1618 = vand.u32 %v1224, 2139095040
        %v1619 = vshrl.u32 %v1618, 23
        %v1620 = vsub.s32 %v1619, 127
        %v1621 = vand.u32 2147483647, %v1224
        %v1622 = vand.u32 %v1621, 8388607
        %v1623 = vor.u32 %v1622, 8388608
        %v1624 = vsub.s32 0, %v1623
        %v1625 = vadd.s32 %v1620, 1
        %vm1626 = vcmp.gt.s32.totalorder %v1625, 0
        %v1627 = vsel %vm1626, %v1625, 0
        %v1628 = vshrl.u32 %v1627, 5
        %v1629 = vand.u32 %v1627, 31
        %v1630 = vsub.s32 32, %v1629
        %v1631 = vshrl.u32 683565275, %v1630
        %v1632 = vshll.u32 683565275, %v1629
        %v1633 = vshrl.u32 2475754826, %v1630
        %v1634 = vor.u32 %v1632, %v1633
        %v1635 = vshll.u32 2475754826, %v1629
        %v1636 = vshrl.u32 2131351028, %v1630
        %v1637 = vor.u32 %v1635, %v1636
        %v1638 = vshll.u32 2131351028, %v1629
        %v1639 = vshrl.u32 2102212464, %v1630
        %v1640 = vor.u32 %v1638, %v1639
        %v1641 = vshll.u32 2102212464, %v1629
        %v1642 = vshrl.u32 920167782, %v1630
        %v1643 = vor.u32 %v1641, %v1642
        %v1644 = vshll.u32 920167782, %v1629
        %v1645 = vshrl.u32 1326507024, %v1630
        %v1646 = vor.u32 %v1644, %v1645
        %vm1647 = vcmp.lt.s32.totalorder %v1628, 1
        %vm1648 = vcmp.lt.s32.totalorder %v1628, 2
        %vm1649 = vcmp.lt.s32.totalorder %v1628, 3
        %vm1650 = vcmp.lt.s32.totalorder %v1628, 4
        %v1651 = vsel %vm1647, %v1631, %v1634
        %v1652 = vsel %vm1650, %v1640, 2102212464
        %v1653 = vsel %vm1649, %v1637, %v1652
        %v1654 = vsel %vm1648, %v1651, %v1653
        %v1655 = vsel %vm1647, %v1634, %v1637
        %v1656 = vsel %vm1650, %v1643, 920167782
        %v1657 = vsel %vm1649, %v1640, %v1656
        %v1658 = vsel %vm1648, %v1655, %v1657
        %v1659 = vsel %vm1647, %v1637, %v1640
        %v1660 = vsel %vm1650, %v1646, 1326507024
        %v1661 = vsel %vm1649, %v1643, %v1660
        %v1662 = vsel %vm1648, %v1659, %v1661
        %v1663 = vshll.u32 %v1623, 8
        %v1664 = vmul.u32.u64.compose %v1663, %v1662
        %v1665 = vextract.low.u32 %v1664
        %v1666 = vextract.high.u32 %v1664
        %v1667 = vmul.u32.u64.compose %v1663, %v1658
        %v1668 = vextract.low.u32 %v1667
        %v1669 = vextract.high.u32 %v1667
        %v1670 = vmul.u32 %v1663, %v1654
        %v1671 = vadd.s32 %v1666, %v1668
        %vm1672 = vc.u32 %v1666, %v1668
        %v1673 = vadd.s32 %v1669, 1
        %v1674 = vsel %vm1672, %v1673, %v1669
        %v1675 = vadd.s32 %v1670, %v1674
        %v1676 = vadd.s32 %v1675, 536870912
        %v1677 = vshrl.u32 %v1676, 30
        %v1678 = vshll.u32 %v1677, 30
        %v1679 = vsub.s32 %v1675, %v1678
        %vm1680 = vcmp.lt.s32.totalorder %v1679, 0
        %v1681 = vsub.s32 0, %v1679
        %v1682 = vsel %vm1680, %v1681, %v1679
        %v1683 = vclz %v1682
        %v1684 = vsub.s32 %v1683, 2
        %vm1685 = vcmp.gt.s32.totalorder 0, %v1684
        %v1686 = vsel %vm1685, 0, %v1684
        %v1687 = vsub.s32 32, %v1686
        %v1688 = vshll.u32 %v1679, %v1686
        %v1689 = vshrl.u32 %v1671, %v1687
        %v1690 = vor.u32 %v1688, %v1689
        %v1691 = vsub.s32 4294967266, %v1686
        %v1692 = vadd.s32 %v1691, 127
        %v1693 = vshll.u32 %v1692, 23
        %v1694 = vor.u32 4788187, %v1693
        %v1695 = vand.u32 2147483647, %v1694
        %v1697 = vcvt.s32.f32 %v1690
        %v1698 = vmul.f32 %v1697, %v1695
        %v1699 = vxor.u32 %v1698, 2147483648
        %v1700 = vsel %vm1617, %v1699, %v1698
        %v1701 = vsub.s32 4, %v1677
        %v1702 = vsel %vm1617, %v1701, %v1677
        %v1703 = vsel %vm1616, %v1224, %v1700
        %v1704 = vsel %vm1616, 0, %v1702
        %v1705 = vcosq.f32.pop %v1703
        %v1706 = vsinq.f32.pop %v1703
        %vm1707 = vweird.f32 %v1224
        %v1708 = vadd.s32 %v1704, 3
        %v1709 = vand.u32 %v1708, 3
        %vm1710 = vcmp.lt.s32.totalorder %v1709, 2
        %vm1711 = vcmp.eq.s32.totalorder %v1709, 0
        %v1712 = vxor.u32 %v1706, 2147483648
        %v1713 = vsel %vm1711, %v1705, %v1712
        %vm1714 = vcmp.eq.s32.totalorder %v1709, 2
        %v1715 = vxor.u32 %v1705, 2147483648
        %v1716 = vsel %vm1714, %v1715, %v1706
        %v1717 = vsel %vm1710, %v1713, %v1716
        %v1718 = vsel %vm1707, nan, %v1717
        %v1719 = vand.u32 2147483647, %v1229
        %vm1720 = vcmp.le.f32.partialorder %v1719, 0.7853982
        %vm1721 = vcmp.lt.s32.totalorder %v1229, 0
        %v1722 = vand.u32 %v1229, 2139095040
        %v1723 = vshrl.u32 %v1722, 23
        %v1724 = vsub.s32 %v1723, 127
        %v1725 = vand.u32 2147483647, %v1229
        %v1726 = vand.u32 %v1725, 8388607
        %v1727 = vor.u32 %v1726, 8388608
        %v1728 = vsub.s32 0, %v1727
        %v1729 = vadd.s32 %v1724, 1
        %vm1730 = vcmp.gt.s32.totalorder %v1729, 0
        %v1731 = vsel %vm1730, %v1729, 0
        %v1732 = vshrl.u32 %v1731, 5
        %v1733 = vand.u32 %v1731, 31
        %v1734 = vsub.s32 32, %v1733
        %v1735 = vshrl.u32 683565275, %v1734
        %v1736 = vshll.u32 683565275, %v1733
        %v1737 = vshrl.u32 2475754826, %v1734
        %v1738 = vor.u32 %v1736, %v1737
        %v1739 = vshll.u32 2475754826, %v1733
        %v1740 = vshrl.u32 2131351028, %v1734
        %v1741 = vor.u32 %v1739, %v1740
        %v1742 = vshll.u32 2131351028, %v1733
        %v1743 = vshrl.u32 2102212464, %v1734
        %v1744 = vor.u32 %v1742, %v1743
        %v1745 = vshll.u32 2102212464, %v1733
        %v1746 = vshrl.u32 920167782, %v1734
        %v1747 = vor.u32 %v1745, %v1746
        %v1748 = vshll.u32 920167782, %v1733
        %v1749 = vshrl.u32 1326507024, %v1734
        %v1750 = vor.u32 %v1748, %v1749
        %vm1751 = vcmp.lt.s32.totalorder %v1732, 1
        %vm1752 = vcmp.lt.s32.totalorder %v1732, 2
        %vm1753 = vcmp.lt.s32.totalorder %v1732, 3
        %vm1754 = vcmp.lt.s32.totalorder %v1732, 4
        %v1755 = vsel %vm1751, %v1735, %v1738
        %v1756 = vsel %vm1754, %v1744, 2102212464
        %v1757 = vsel %vm1753, %v1741, %v1756
        %v1758 = vsel %vm1752, %v1755, %v1757
        %v1759 = vsel %vm1751, %v1738, %v1741
        %v1760 = vsel %vm1754, %v1747, 920167782
        %v1761 = vsel %vm1753, %v1744, %v1760
        %v1762 = vsel %vm1752, %v1759, %v1761
        %v1763 = vsel %vm1751, %v1741, %v1744
        %v1764 = vsel %vm1754, %v1750, 1326507024
        %v1765 = vsel %vm1753, %v1747, %v1764
        %v1766 = vsel %vm1752, %v1763, %v1765
        %v1767 = vshll.u32 %v1727, 8
        %v1768 = vmul.u32.u64.compose %v1767, %v1766
        %v1769 = vextract.low.u32 %v1768
        %v1770 = vextract.high.u32 %v1768
        %v1771 = vmul.u32.u64.compose %v1767, %v1762
        %v1772 = vextract.low.u32 %v1771
        %v1773 = vextract.high.u32 %v1771
        %v1774 = vmul.u32 %v1767, %v1758
        %v1775 = vadd.s32 %v1770, %v1772
        %vm1776 = vc.u32 %v1770, %v1772
        %v1777 = vadd.s32 %v1773, 1
        %v1778 = vsel %vm1776, %v1777, %v1773
        %v1779 = vadd.s32 %v1774, %v1778
        %v1780 = vadd.s32 %v1779, 536870912
        %v1781 = vshrl.u32 %v1780, 30
        %v1782 = vshll.u32 %v1781, 30
        %v1783 = vsub.s32 %v1779, %v1782
        %vm1784 = vcmp.lt.s32.totalorder %v1783, 0
        %v1785 = vsub.s32 0, %v1783
        %v1786 = vsel %vm1784, %v1785, %v1783
        %v1787 = vclz %v1786
        %v1788 = vsub.s32 %v1787, 2
        %vm1789 = vcmp.gt.s32.totalorder 0, %v1788
        %v1790 = vsel %vm1789, 0, %v1788
        %v1791 = vsub.s32 32, %v1790
        %v1792 = vshll.u32 %v1783, %v1790
        %v1793 = vshrl.u32 %v1775, %v1791
        %v1794 = vor.u32 %v1792, %v1793
        %v1795 = vsub.s32 4294967266, %v1790
        %v1796 = vadd.s32 %v1795, 127
        %v1797 = vshll.u32 %v1796, 23
        %v1798 = vor.u32 4788187, %v1797
        %v1799 = vand.u32 2147483647, %v1798
        %v1801 = vcvt.s32.f32 %v1794
        %v1802 = vmul.f32 %v1801, %v1799
        %v1803 = vxor.u32 %v1802, 2147483648
        %v1804 = vsel %vm1721, %v1803, %v1802
        %v1805 = vsub.s32 4, %v1781
        %v1806 = vsel %vm1721, %v1805, %v1781
        %v1807 = vsel %vm1720, %v1229, %v1804
        %v1808 = vsel %vm1720, 0, %v1806
        %v1809 = vcosq.f32.pop %v1807
        %v1810 = vsinq.f32.pop %v1807
        %vm1811 = vweird.f32 %v1229
        %v1812 = vadd.s32 %v1808, 3
        %v1813 = vand.u32 %v1812, 3
        %vm1814 = vcmp.lt.s32.totalorder %v1813, 2
        %vm1815 = vcmp.eq.s32.totalorder %v1813, 0
        %v1816 = vxor.u32 %v1810, 2147483648
        %v1817 = vsel %vm1815, %v1809, %v1816
        %vm1818 = vcmp.eq.s32.totalorder %v1813, 2
        %v1819 = vxor.u32 %v1809, 2147483648
        %v1820 = vsel %vm1818, %v1819, %v1810
        %v1821 = vsel %vm1814, %v1817, %v1820
        %v1822 = vsel %vm1811, nan, %v1821
        %v1823 = vand.u32 2147483647, %v1231
        %vm1824 = vcmp.le.f32.partialorder %v1823, 0.7853982
        %vm1825 = vcmp.lt.s32.totalorder %v1231, 0
        %v1826 = vand.u32 %v1231, 2139095040
        %v1827 = vshrl.u32 %v1826, 23
        %v1828 = vsub.s32 %v1827, 127
        %v1829 = vand.u32 2147483647, %v1231
        %v1830 = vand.u32 %v1829, 8388607
        %v1831 = vor.u32 %v1830, 8388608
        %v1832 = vsub.s32 0, %v1831
        %v1833 = vadd.s32 %v1828, 1
        %vm1834 = vcmp.gt.s32.totalorder %v1833, 0
        %v1835 = vsel %vm1834, %v1833, 0
        %v1836 = vshrl.u32 %v1835, 5
        %v1837 = vand.u32 %v1835, 31
        %v1838 = vsub.s32 32, %v1837
        %v1839 = vshrl.u32 683565275, %v1838
        %v1840 = vshll.u32 683565275, %v1837
        %v1841 = vshrl.u32 2475754826, %v1838
        %v1842 = vor.u32 %v1840, %v1841
        %v1843 = vshll.u32 2475754826, %v1837
        %v1844 = vshrl.u32 2131351028, %v1838
        %v1845 = vor.u32 %v1843, %v1844
        %v1846 = vshll.u32 2131351028, %v1837
        %v1847 = vshrl.u32 2102212464, %v1838
        %v1848 = vor.u32 %v1846, %v1847
        %v1849 = vshll.u32 2102212464, %v1837
        %v1850 = vshrl.u32 920167782, %v1838
        %v1851 = vor.u32 %v1849, %v1850
        %v1852 = vshll.u32 920167782, %v1837
        %v1853 = vshrl.u32 1326507024, %v1838
        %v1854 = vor.u32 %v1852, %v1853
        %vm1855 = vcmp.lt.s32.totalorder %v1836, 1
        %vm1856 = vcmp.lt.s32.totalorder %v1836, 2
        %vm1857 = vcmp.lt.s32.totalorder %v1836, 3
        %vm1858 = vcmp.lt.s32.totalorder %v1836, 4
        %v1859 = vsel %vm1855, %v1839, %v1842
        %v1860 = vsel %vm1858, %v1848, 2102212464
        %v1861 = vsel %vm1857, %v1845, %v1860
        %v1862 = vsel %vm1856, %v1859, %v1861
        %v1863 = vsel %vm1855, %v1842, %v1845
        %v1864 = vsel %vm1858, %v1851, 920167782
        %v1865 = vsel %vm1857, %v1848, %v1864
        %v1866 = vsel %vm1856, %v1863, %v1865
        %v1867 = vsel %vm1855, %v1845, %v1848
        %v1868 = vsel %vm1858, %v1854, 1326507024
        %v1869 = vsel %vm1857, %v1851, %v1868
        %v1870 = vsel %vm1856, %v1867, %v1869
        %v1871 = vshll.u32 %v1831, 8
        %v1872 = vmul.u32.u64.compose %v1871, %v1870
        %v1873 = vextract.low.u32 %v1872
        %v1874 = vextract.high.u32 %v1872
        %v1875 = vmul.u32.u64.compose %v1871, %v1866
        %v1876 = vextract.low.u32 %v1875
        %v1877 = vextract.high.u32 %v1875
        %v1878 = vmul.u32 %v1871, %v1862
        %v1879 = vadd.s32 %v1874, %v1876
        %vm1880 = vc.u32 %v1874, %v1876
        %v1881 = vadd.s32 %v1877, 1
        %v1882 = vsel %vm1880, %v1881, %v1877
        %v1883 = vadd.s32 %v1878, %v1882
        %v1884 = vadd.s32 %v1883, 536870912
        %v1885 = vshrl.u32 %v1884, 30
        %v1886 = vshll.u32 %v1885, 30
        %v1887 = vsub.s32 %v1883, %v1886
        %vm1888 = vcmp.lt.s32.totalorder %v1887, 0
        %v1889 = vsub.s32 0, %v1887
        %v1890 = vsel %vm1888, %v1889, %v1887
        %v1891 = vclz %v1890
        %v1892 = vsub.s32 %v1891, 2
        %vm1893 = vcmp.gt.s32.totalorder 0, %v1892
        %v1894 = vsel %vm1893, 0, %v1892
        %v1895 = vsub.s32 32, %v1894
        %v1896 = vshll.u32 %v1887, %v1894
        %v1897 = vshrl.u32 %v1879, %v1895
        %v1898 = vor.u32 %v1896, %v1897
        %v1899 = vsub.s32 4294967266, %v1894
        %v1900 = vadd.s32 %v1899, 127
        %v1901 = vshll.u32 %v1900, 23
        %v1902 = vor.u32 4788187, %v1901
        %v1903 = vand.u32 2147483647, %v1902
        %v1905 = vcvt.s32.f32 %v1898
        %v1906 = vmul.f32 %v1905, %v1903
        %v1907 = vxor.u32 %v1906, 2147483648
        %v1908 = vsel %vm1825, %v1907, %v1906
        %v1909 = vsub.s32 4, %v1885
        %v1910 = vsel %vm1825, %v1909, %v1885
        %v1911 = vsel %vm1824, %v1231, %v1908
        %v1912 = vsel %vm1824, 0, %v1910
        %v1913 = vcosq.f32.pop %v1911
        %v1914 = vsinq.f32.pop %v1911
        %vm1915 = vweird.f32 %v1231
        %v1916 = vadd.s32 %v1912, 3
        %v1917 = vand.u32 %v1916, 3
        %vm1918 = vcmp.lt.s32.totalorder %v1917, 2
        %vm1919 = vcmp.eq.s32.totalorder %v1917, 0
        %v1920 = vxor.u32 %v1914, 2147483648
        %v1921 = vsel %vm1919, %v1913, %v1920
        %vm1922 = vcmp.eq.s32.totalorder %v1917, 2
        %v1923 = vxor.u32 %v1913, 2147483648
        %v1924 = vsel %vm1922, %v1923, %v1914
        %v1925 = vsel %vm1918, %v1921, %v1924
        %v1926 = vsel %vm1915, nan, %v1925
        %v1927 = vand.u32 2147483647, %v1236
        %vm1928 = vcmp.le.f32.partialorder %v1927, 0.7853982
        %vm1929 = vcmp.lt.s32.totalorder %v1236, 0
        %v1930 = vand.u32 %v1236, 2139095040
        %v1931 = vshrl.u32 %v1930, 23
        %v1932 = vsub.s32 %v1931, 127
        %v1933 = vand.u32 2147483647, %v1236
        %v1934 = vand.u32 %v1933, 8388607
        %v1935 = vor.u32 %v1934, 8388608
        %v1936 = vsub.s32 0, %v1935
        %v1937 = vadd.s32 %v1932, 1
        %vm1938 = vcmp.gt.s32.totalorder %v1937, 0
        %v1939 = vsel %vm1938, %v1937, 0
        %v1940 = vshrl.u32 %v1939, 5
        %v1941 = vand.u32 %v1939, 31
        %v1942 = vsub.s32 32, %v1941
        %v1943 = vshrl.u32 683565275, %v1942
        %v1944 = vshll.u32 683565275, %v1941
        %v1945 = vshrl.u32 2475754826, %v1942
        %v1946 = vor.u32 %v1944, %v1945
        %v1947 = vshll.u32 2475754826, %v1941
        %v1948 = vshrl.u32 2131351028, %v1942
        %v1949 = vor.u32 %v1947, %v1948
        %v1950 = vshll.u32 2131351028, %v1941
        %v1951 = vshrl.u32 2102212464, %v1942
        %v1952 = vor.u32 %v1950, %v1951
        %v1953 = vshll.u32 2102212464, %v1941
        %v1954 = vshrl.u32 920167782, %v1942
        %v1955 = vor.u32 %v1953, %v1954
        %v1956 = vshll.u32 920167782, %v1941
        %v1957 = vshrl.u32 1326507024, %v1942
        %v1958 = vor.u32 %v1956, %v1957
        %vm1959 = vcmp.lt.s32.totalorder %v1940, 1
        %vm1960 = vcmp.lt.s32.totalorder %v1940, 2
        %vm1961 = vcmp.lt.s32.totalorder %v1940, 3
        %vm1962 = vcmp.lt.s32.totalorder %v1940, 4
        %v1963 = vsel %vm1959, %v1943, %v1946
        %v1964 = vsel %vm1962, %v1952, 2102212464
        %v1965 = vsel %vm1961, %v1949, %v1964
        %v1966 = vsel %vm1960, %v1963, %v1965
        %v1967 = vsel %vm1959, %v1946, %v1949
        %v1968 = vsel %vm1962, %v1955, 920167782
        %v1969 = vsel %vm1961, %v1952, %v1968
        %v1970 = vsel %vm1960, %v1967, %v1969
        %v1971 = vsel %vm1959, %v1949, %v1952
        %v1972 = vsel %vm1962, %v1958, 1326507024
        %v1973 = vsel %vm1961, %v1955, %v1972
        %v1974 = vsel %vm1960, %v1971, %v1973
        %v1975 = vshll.u32 %v1935, 8
        %v1976 = vmul.u32.u64.compose %v1975, %v1974
        %v1977 = vextract.low.u32 %v1976
        %v1978 = vextract.high.u32 %v1976
        %v1979 = vmul.u32.u64.compose %v1975, %v1970
        %v1980 = vextract.low.u32 %v1979
        %v1981 = vextract.high.u32 %v1979
        %v1982 = vmul.u32 %v1975, %v1966
        %v1983 = vadd.s32 %v1978, %v1980
        %vm1984 = vc.u32 %v1978, %v1980
        %v1985 = vadd.s32 %v1981, 1
        %v1986 = vsel %vm1984, %v1985, %v1981
        %v1987 = vadd.s32 %v1982, %v1986
        %v1988 = vadd.s32 %v1987, 536870912
        %v1989 = vshrl.u32 %v1988, 30
        %v1990 = vshll.u32 %v1989, 30
        %v1991 = vsub.s32 %v1987, %v1990
        %vm1992 = vcmp.lt.s32.totalorder %v1991, 0
        %v1993 = vsub.s32 0, %v1991
        %v1994 = vsel %vm1992, %v1993, %v1991
        %v1995 = vclz %v1994
        %v1996 = vsub.s32 %v1995, 2
        %vm1997 = vcmp.gt.s32.totalorder 0, %v1996
        %v1998 = vsel %vm1997, 0, %v1996
        %v1999 = vsub.s32 32, %v1998
        %v2000 = vshll.u32 %v1991, %v1998
        %v2001 = vshrl.u32 %v1983, %v1999
        %v2002 = vor.u32 %v2000, %v2001
        %v2003 = vsub.s32 4294967266, %v1998
        %v2004 = vadd.s32 %v2003, 127
        %v2005 = vshll.u32 %v2004, 23
        %v2006 = vor.u32 4788187, %v2005
        %v2007 = vand.u32 2147483647, %v2006
        %v2009 = vcvt.s32.f32 %v2002
        %v2010 = vmul.f32 %v2009, %v2007
        %v2011 = vxor.u32 %v2010, 2147483648
        %v2012 = vsel %vm1929, %v2011, %v2010
        %v2013 = vsub.s32 4, %v1989
        %v2014 = vsel %vm1929, %v2013, %v1989
        %v2015 = vsel %vm1928, %v1236, %v2012
        %v2016 = vsel %vm1928, 0, %v2014
        %v2017 = vcosq.f32.pop %v2015
        %v2018 = vsinq.f32.pop %v2015
        %vm2019 = vweird.f32 %v1236
        %v2020 = vadd.s32 %v2016, 3
        %v2021 = vand.u32 %v2020, 3
        %vm2022 = vcmp.lt.s32.totalorder %v2021, 2
        %vm2023 = vcmp.eq.s32.totalorder %v2021, 0
        %v2024 = vxor.u32 %v2018, 2147483648
        %v2025 = vsel %vm2023, %v2017, %v2024
        %vm2026 = vcmp.eq.s32.totalorder %v2021, 2
        %v2027 = vxor.u32 %v2017, 2147483648
        %v2028 = vsel %vm2026, %v2027, %v2018
        %v2029 = vsel %vm2022, %v2025, %v2028
        %v2030 = vsel %vm2019, nan, %v2029
        %v2031 = vand.u32 2147483647, %v1238
        %vm2032 = vcmp.le.f32.partialorder %v2031, 0.7853982
        %vm2033 = vcmp.lt.s32.totalorder %v1238, 0
        %v2034 = vand.u32 %v1238, 2139095040
        %v2035 = vshrl.u32 %v2034, 23
        %v2036 = vsub.s32 %v2035, 127
        %v2037 = vand.u32 2147483647, %v1238
        %v2038 = vand.u32 %v2037, 8388607
        %v2039 = vor.u32 %v2038, 8388608
        %v2040 = vsub.s32 0, %v2039
        %v2041 = vadd.s32 %v2036, 1
        %vm2042 = vcmp.gt.s32.totalorder %v2041, 0
        %v2043 = vsel %vm2042, %v2041, 0
        %v2044 = vshrl.u32 %v2043, 5
        %v2045 = vand.u32 %v2043, 31
        %v2046 = vsub.s32 32, %v2045
        %v2047 = vshrl.u32 683565275, %v2046
        %v2048 = vshll.u32 683565275, %v2045
        %v2049 = vshrl.u32 2475754826, %v2046
        %v2050 = vor.u32 %v2048, %v2049
        %v2051 = vshll.u32 2475754826, %v2045
        %v2052 = vshrl.u32 2131351028, %v2046
        %v2053 = vor.u32 %v2051, %v2052
        %v2054 = vshll.u32 2131351028, %v2045
        %v2055 = vshrl.u32 2102212464, %v2046
        %v2056 = vor.u32 %v2054, %v2055
        %v2057 = vshll.u32 2102212464, %v2045
        %v2058 = vshrl.u32 920167782, %v2046
        %v2059 = vor.u32 %v2057, %v2058
        %v2060 = vshll.u32 920167782, %v2045
        %v2061 = vshrl.u32 1326507024, %v2046
        %v2062 = vor.u32 %v2060, %v2061
        %vm2063 = vcmp.lt.s32.totalorder %v2044, 1
        %vm2064 = vcmp.lt.s32.totalorder %v2044, 2
        %vm2065 = vcmp.lt.s32.totalorder %v2044, 3
        %vm2066 = vcmp.lt.s32.totalorder %v2044, 4
        %v2067 = vsel %vm2063, %v2047, %v2050
        %v2068 = vsel %vm2066, %v2056, 2102212464
        %v2069 = vsel %vm2065, %v2053, %v2068
        %v2070 = vsel %vm2064, %v2067, %v2069
        %v2071 = vsel %vm2063, %v2050, %v2053
        %v2072 = vsel %vm2066, %v2059, 920167782
        %v2073 = vsel %vm2065, %v2056, %v2072
        %v2074 = vsel %vm2064, %v2071, %v2073
        %v2075 = vsel %vm2063, %v2053, %v2056
        %v2076 = vsel %vm2066, %v2062, 1326507024
        %v2077 = vsel %vm2065, %v2059, %v2076
        %v2078 = vsel %vm2064, %v2075, %v2077
        %v2079 = vshll.u32 %v2039, 8
        %v2080 = vmul.u32.u64.compose %v2079, %v2078
        %v2081 = vextract.low.u32 %v2080
        %v2082 = vextract.high.u32 %v2080
        %v2083 = vmul.u32.u64.compose %v2079, %v2074
        %v2084 = vextract.low.u32 %v2083
        %v2085 = vextract.high.u32 %v2083
        %v2086 = vmul.u32 %v2079, %v2070
        %v2087 = vadd.s32 %v2082, %v2084
        %vm2088 = vc.u32 %v2082, %v2084
        %v2089 = vadd.s32 %v2085, 1
        %v2090 = vsel %vm2088, %v2089, %v2085
        %v2091 = vadd.s32 %v2086, %v2090
        %v2092 = vadd.s32 %v2091, 536870912
        %v2093 = vshrl.u32 %v2092, 30
        %v2094 = vshll.u32 %v2093, 30
        %v2095 = vsub.s32 %v2091, %v2094
        %vm2096 = vcmp.lt.s32.totalorder %v2095, 0
        %v2097 = vsub.s32 0, %v2095
        %v2098 = vsel %vm2096, %v2097, %v2095
        %v2099 = vclz %v2098
        %v2100 = vsub.s32 %v2099, 2
        %vm2101 = vcmp.gt.s32.totalorder 0, %v2100
        %v2102 = vsel %vm2101, 0, %v2100
        %v2103 = vsub.s32 32, %v2102
        %v2104 = vshll.u32 %v2095, %v2102
        %v2105 = vshrl.u32 %v2087, %v2103
        %v2106 = vor.u32 %v2104, %v2105
        %v2107 = vsub.s32 4294967266, %v2102
        %v2108 = vadd.s32 %v2107, 127
        %v2109 = vshll.u32 %v2108, 23
        %v2110 = vor.u32 4788187, %v2109
        %v2111 = vand.u32 2147483647, %v2110
        %v2113 = vcvt.s32.f32 %v2106
        %v2114 = vmul.f32 %v2113, %v2111
        %v2115 = vxor.u32 %v2114, 2147483648
        %v2116 = vsel %vm2033, %v2115, %v2114
        %v2117 = vsub.s32 4, %v2093
        %v2118 = vsel %vm2033, %v2117, %v2093
        %v2119 = vsel %vm2032, %v1238, %v2116
        %v2120 = vsel %vm2032, 0, %v2118
        %v2121 = vcosq.f32.pop %v2119
        %v2122 = vsinq.f32.pop %v2119
        %vm2123 = vweird.f32 %v1238
        %v2124 = vadd.s32 %v2120, 3
        %v2125 = vand.u32 %v2124, 3
        %vm2126 = vcmp.lt.s32.totalorder %v2125, 2
        %vm2127 = vcmp.eq.s32.totalorder %v2125, 0
        %v2128 = vxor.u32 %v2122, 2147483648
        %v2129 = vsel %vm2127, %v2121, %v2128
        %vm2130 = vcmp.eq.s32.totalorder %v2125, 2
        %v2131 = vxor.u32 %v2121, 2147483648
        %v2132 = vsel %vm2130, %v2131, %v2122
        %v2133 = vsel %vm2126, %v2129, %v2132
        %v2134 = vsel %vm2123, nan, %v2133
        %v2135 = vand.u32 2147483647, %v1243
        %vm2136 = vcmp.le.f32.partialorder %v2135, 0.7853982
        %vm2137 = vcmp.lt.s32.totalorder %v1243, 0
        %v2138 = vand.u32 %v1243, 2139095040
        %v2139 = vshrl.u32 %v2138, 23
        %v2140 = vsub.s32 %v2139, 127
        %v2141 = vand.u32 2147483647, %v1243
        %v2142 = vand.u32 %v2141, 8388607
        %v2143 = vor.u32 %v2142, 8388608
        %v2144 = vsub.s32 0, %v2143
        %v2145 = vadd.s32 %v2140, 1
        %vm2146 = vcmp.gt.s32.totalorder %v2145, 0
        %v2147 = vsel %vm2146, %v2145, 0
        %v2148 = vshrl.u32 %v2147, 5
        %v2149 = vand.u32 %v2147, 31
        %v2150 = vsub.s32 32, %v2149
        %v2151 = vshrl.u32 683565275, %v2150
        %v2152 = vshll.u32 683565275, %v2149
        %v2153 = vshrl.u32 2475754826, %v2150
        %v2154 = vor.u32 %v2152, %v2153
        %v2155 = vshll.u32 2475754826, %v2149
        %v2156 = vshrl.u32 2131351028, %v2150
        %v2157 = vor.u32 %v2155, %v2156
        %v2158 = vshll.u32 2131351028, %v2149
        %v2159 = vshrl.u32 2102212464, %v2150
        %v2160 = vor.u32 %v2158, %v2159
        %v2161 = vshll.u32 2102212464, %v2149
        %v2162 = vshrl.u32 920167782, %v2150
        %v2163 = vor.u32 %v2161, %v2162
        %v2164 = vshll.u32 920167782, %v2149
        %v2165 = vshrl.u32 1326507024, %v2150
        %v2166 = vor.u32 %v2164, %v2165
        %vm2167 = vcmp.lt.s32.totalorder %v2148, 1
        %vm2168 = vcmp.lt.s32.totalorder %v2148, 2
        %vm2169 = vcmp.lt.s32.totalorder %v2148, 3
        %vm2170 = vcmp.lt.s32.totalorder %v2148, 4
        %v2171 = vsel %vm2167, %v2151, %v2154
        %v2172 = vsel %vm2170, %v2160, 2102212464
        %v2173 = vsel %vm2169, %v2157, %v2172
        %v2174 = vsel %vm2168, %v2171, %v2173
        %v2175 = vsel %vm2167, %v2154, %v2157
        %v2176 = vsel %vm2170, %v2163, 920167782
        %v2177 = vsel %vm2169, %v2160, %v2176
        %v2178 = vsel %vm2168, %v2175, %v2177
        %v2179 = vsel %vm2167, %v2157, %v2160
        %v2180 = vsel %vm2170, %v2166, 1326507024
        %v2181 = vsel %vm2169, %v2163, %v2180
        %v2182 = vsel %vm2168, %v2179, %v2181
        %v2183 = vshll.u32 %v2143, 8
        %v2184 = vmul.u32.u64.compose %v2183, %v2182
        %v2185 = vextract.low.u32 %v2184
        %v2186 = vextract.high.u32 %v2184
        %v2187 = vmul.u32.u64.compose %v2183, %v2178
        %v2188 = vextract.low.u32 %v2187
        %v2189 = vextract.high.u32 %v2187
        %v2190 = vmul.u32 %v2183, %v2174
        %v2191 = vadd.s32 %v2186, %v2188
        %vm2192 = vc.u32 %v2186, %v2188
        %v2193 = vadd.s32 %v2189, 1
        %v2194 = vsel %vm2192, %v2193, %v2189
        %v2195 = vadd.s32 %v2190, %v2194
        %v2196 = vadd.s32 %v2195, 536870912
        %v2197 = vshrl.u32 %v2196, 30
        %v2198 = vshll.u32 %v2197, 30
        %v2199 = vsub.s32 %v2195, %v2198
        %vm2200 = vcmp.lt.s32.totalorder %v2199, 0
        %v2201 = vsub.s32 0, %v2199
        %v2202 = vsel %vm2200, %v2201, %v2199
        %v2203 = vclz %v2202
        %v2204 = vsub.s32 %v2203, 2
        %vm2205 = vcmp.gt.s32.totalorder 0, %v2204
        %v2206 = vsel %vm2205, 0, %v2204
        %v2207 = vsub.s32 32, %v2206
        %v2208 = vshll.u32 %v2199, %v2206
        %v2209 = vshrl.u32 %v2191, %v2207
        %v2210 = vor.u32 %v2208, %v2209
        %v2211 = vsub.s32 4294967266, %v2206
        %v2212 = vadd.s32 %v2211, 127
        %v2213 = vshll.u32 %v2212, 23
        %v2214 = vor.u32 4788187, %v2213
        %v2215 = vand.u32 2147483647, %v2214
        %v2217 = vcvt.s32.f32 %v2210
        %v2218 = vmul.f32 %v2217, %v2215
        %v2219 = vxor.u32 %v2218, 2147483648
        %v2220 = vsel %vm2137, %v2219, %v2218
        %v2221 = vsub.s32 4, %v2197
        %v2222 = vsel %vm2137, %v2221, %v2197
        %v2223 = vsel %vm2136, %v1243, %v2220
        %v2224 = vsel %vm2136, 0, %v2222
        %v2225 = vcosq.f32.pop %v2223
        %v2226 = vsinq.f32.pop %v2223
        %vm2227 = vweird.f32 %v1243
        %v2228 = vadd.s32 %v2224, 3
        %v2229 = vand.u32 %v2228, 3
        %vm2230 = vcmp.lt.s32.totalorder %v2229, 2
        %vm2231 = vcmp.eq.s32.totalorder %v2229, 0
        %v2232 = vxor.u32 %v2226, 2147483648
        %v2233 = vsel %vm2231, %v2225, %v2232
        %vm2234 = vcmp.eq.s32.totalorder %v2229, 2
        %v2235 = vxor.u32 %v2225, 2147483648
        %v2236 = vsel %vm2234, %v2235, %v2226
        %v2237 = vsel %vm2230, %v2233, %v2236
        %v2238 = vsel %vm2227, nan, %v2237
        %v2239 = vand.u32 2147483647, %v1245
        %vm2240 = vcmp.le.f32.partialorder %v2239, 0.7853982
        %vm2241 = vcmp.lt.s32.totalorder %v1245, 0
        %v2242 = vand.u32 %v1245, 2139095040
        %v2243 = vshrl.u32 %v2242, 23
        %v2244 = vsub.s32 %v2243, 127
        %v2245 = vand.u32 2147483647, %v1245
        %v2246 = vand.u32 %v2245, 8388607
        %v2247 = vor.u32 %v2246, 8388608
        %v2248 = vsub.s32 0, %v2247
        %v2249 = vadd.s32 %v2244, 1
        %vm2250 = vcmp.gt.s32.totalorder %v2249, 0
        %v2251 = vsel %vm2250, %v2249, 0
        %v2252 = vshrl.u32 %v2251, 5
        %v2253 = vand.u32 %v2251, 31
        %v2254 = vsub.s32 32, %v2253
        %v2255 = vshrl.u32 683565275, %v2254
        %v2256 = vshll.u32 683565275, %v2253
        %v2257 = vshrl.u32 2475754826, %v2254
        %v2258 = vor.u32 %v2256, %v2257
        %v2259 = vshll.u32 2475754826, %v2253
        %v2260 = vshrl.u32 2131351028, %v2254
        %v2261 = vor.u32 %v2259, %v2260
        %v2262 = vshll.u32 2131351028, %v2253
        %v2263 = vshrl.u32 2102212464, %v2254
        %v2264 = vor.u32 %v2262, %v2263
        %v2265 = vshll.u32 2102212464, %v2253
        %v2266 = vshrl.u32 920167782, %v2254
        %v2267 = vor.u32 %v2265, %v2266
        %v2268 = vshll.u32 920167782, %v2253
        %v2269 = vshrl.u32 1326507024, %v2254
        %v2270 = vor.u32 %v2268, %v2269
        %vm2271 = vcmp.lt.s32.totalorder %v2252, 1
        %vm2272 = vcmp.lt.s32.totalorder %v2252, 2
        %vm2273 = vcmp.lt.s32.totalorder %v2252, 3
        %vm2274 = vcmp.lt.s32.totalorder %v2252, 4
        %v2275 = vsel %vm2271, %v2255, %v2258
        %v2276 = vsel %vm2274, %v2264, 2102212464
        %v2277 = vsel %vm2273, %v2261, %v2276
        %v2278 = vsel %vm2272, %v2275, %v2277
        %v2279 = vsel %vm2271, %v2258, %v2261
        %v2280 = vsel %vm2274, %v2267, 920167782
        %v2281 = vsel %vm2273, %v2264, %v2280
        %v2282 = vsel %vm2272, %v2279, %v2281
        %v2283 = vsel %vm2271, %v2261, %v2264
        %v2284 = vsel %vm2274, %v2270, 1326507024
        %v2285 = vsel %vm2273, %v2267, %v2284
        %v2286 = vsel %vm2272, %v2283, %v2285
        %v2287 = vshll.u32 %v2247, 8
        %v2288 = vmul.u32.u64.compose %v2287, %v2286
        %v2289 = vextract.low.u32 %v2288
        %v2290 = vextract.high.u32 %v2288
        %v2291 = vmul.u32.u64.compose %v2287, %v2282
        %v2292 = vextract.low.u32 %v2291
        %v2293 = vextract.high.u32 %v2291
        %v2294 = vmul.u32 %v2287, %v2278
        %v2295 = vadd.s32 %v2290, %v2292
        %vm2296 = vc.u32 %v2290, %v2292
        %v2297 = vadd.s32 %v2293, 1
        %v2298 = vsel %vm2296, %v2297, %v2293
        %v2299 = vadd.s32 %v2294, %v2298
        %v2300 = vadd.s32 %v2299, 536870912
        %v2301 = vshrl.u32 %v2300, 30
        %v2302 = vshll.u32 %v2301, 30
        %v2303 = vsub.s32 %v2299, %v2302
        %vm2304 = vcmp.lt.s32.totalorder %v2303, 0
        %v2305 = vsub.s32 0, %v2303
        %v2306 = vsel %vm2304, %v2305, %v2303
        %v2307 = vclz %v2306
        %v2308 = vsub.s32 %v2307, 2
        %vm2309 = vcmp.gt.s32.totalorder 0, %v2308
        %v2310 = vsel %vm2309, 0, %v2308
        %v2311 = vsub.s32 32, %v2310
        %v2312 = vshll.u32 %v2303, %v2310
        %v2313 = vshrl.u32 %v2295, %v2311
        %v2314 = vor.u32 %v2312, %v2313
        %v2315 = vsub.s32 4294967266, %v2310
        %v2316 = vadd.s32 %v2315, 127
        %v2317 = vshll.u32 %v2316, 23
        %v2318 = vor.u32 4788187, %v2317
        %v2319 = vand.u32 2147483647, %v2318
        %v2321 = vcvt.s32.f32 %v2314
        %v2322 = vmul.f32 %v2321, %v2319
        %v2323 = vxor.u32 %v2322, 2147483648
        %v2324 = vsel %vm2241, %v2323, %v2322
        %v2325 = vsub.s32 4, %v2301
        %v2326 = vsel %vm2241, %v2325, %v2301
        %v2327 = vsel %vm2240, %v1245, %v2324
        %v2328 = vsel %vm2240, 0, %v2326
        %v2329 = vcosq.f32.pop %v2327
        %v2330 = vsinq.f32.pop %v2327
        %vm2331 = vweird.f32 %v1245
        %v2332 = vadd.s32 %v2328, 3
        %v2333 = vand.u32 %v2332, 3
        %vm2334 = vcmp.lt.s32.totalorder %v2333, 2
        %vm2335 = vcmp.eq.s32.totalorder %v2333, 0
        %v2336 = vxor.u32 %v2330, 2147483648
        %v2337 = vsel %vm2335, %v2329, %v2336
        %vm2338 = vcmp.eq.s32.totalorder %v2333, 2
        %v2339 = vxor.u32 %v2329, 2147483648
        %v2340 = vsel %vm2338, %v2339, %v2330
        %v2341 = vsel %vm2334, %v2337, %v2340
        %v2342 = vsel %vm2331, nan, %v2341
        %v2343 = vand.u32 2147483647, %v1250
        %vm2344 = vcmp.le.f32.partialorder %v2343, 0.7853982
        %vm2345 = vcmp.lt.s32.totalorder %v1250, 0
        %v2346 = vand.u32 %v1250, 2139095040
        %v2347 = vshrl.u32 %v2346, 23
        %v2348 = vsub.s32 %v2347, 127
        %v2349 = vand.u32 2147483647, %v1250
        %v2350 = vand.u32 %v2349, 8388607
        %v2351 = vor.u32 %v2350, 8388608
        %v2352 = vsub.s32 0, %v2351
        %v2353 = vadd.s32 %v2348, 1
        %vm2354 = vcmp.gt.s32.totalorder %v2353, 0
        %v2355 = vsel %vm2354, %v2353, 0
        %v2356 = vshrl.u32 %v2355, 5
        %v2357 = vand.u32 %v2355, 31
        %v2358 = vsub.s32 32, %v2357
        %v2359 = vshrl.u32 683565275, %v2358
        %v2360 = vshll.u32 683565275, %v2357
        %v2361 = vshrl.u32 2475754826, %v2358
        %v2362 = vor.u32 %v2360, %v2361
        %v2363 = vshll.u32 2475754826, %v2357
        %v2364 = vshrl.u32 2131351028, %v2358
        %v2365 = vor.u32 %v2363, %v2364
        %v2366 = vshll.u32 2131351028, %v2357
        %v2367 = vshrl.u32 2102212464, %v2358
        %v2368 = vor.u32 %v2366, %v2367
        %v2369 = vshll.u32 2102212464, %v2357
        %v2370 = vshrl.u32 920167782, %v2358
        %v2371 = vor.u32 %v2369, %v2370
        %v2372 = vshll.u32 920167782, %v2357
        %v2373 = vshrl.u32 1326507024, %v2358
        %v2374 = vor.u32 %v2372, %v2373
        %vm2375 = vcmp.lt.s32.totalorder %v2356, 1
        %vm2376 = vcmp.lt.s32.totalorder %v2356, 2
        %vm2377 = vcmp.lt.s32.totalorder %v2356, 3
        %vm2378 = vcmp.lt.s32.totalorder %v2356, 4
        %v2379 = vsel %vm2375, %v2359, %v2362
        %v2380 = vsel %vm2378, %v2368, 2102212464
        %v2381 = vsel %vm2377, %v2365, %v2380
        %v2382 = vsel %vm2376, %v2379, %v2381
        %v2383 = vsel %vm2375, %v2362, %v2365
        %v2384 = vsel %vm2378, %v2371, 920167782
        %v2385 = vsel %vm2377, %v2368, %v2384
        %v2386 = vsel %vm2376, %v2383, %v2385
        %v2387 = vsel %vm2375, %v2365, %v2368
        %v2388 = vsel %vm2378, %v2374, 1326507024
        %v2389 = vsel %vm2377, %v2371, %v2388
        %v2390 = vsel %vm2376, %v2387, %v2389
        %v2391 = vshll.u32 %v2351, 8
        %v2392 = vmul.u32.u64.compose %v2391, %v2390
        %v2393 = vextract.low.u32 %v2392
        %v2394 = vextract.high.u32 %v2392
        %v2395 = vmul.u32.u64.compose %v2391, %v2386
        %v2396 = vextract.low.u32 %v2395
        %v2397 = vextract.high.u32 %v2395
        %v2398 = vmul.u32 %v2391, %v2382
        %v2399 = vadd.s32 %v2394, %v2396
        %vm2400 = vc.u32 %v2394, %v2396
        %v2401 = vadd.s32 %v2397, 1
        %v2402 = vsel %vm2400, %v2401, %v2397
        %v2403 = vadd.s32 %v2398, %v2402
        %v2404 = vadd.s32 %v2403, 536870912
        %v2405 = vshrl.u32 %v2404, 30
        %v2406 = vshll.u32 %v2405, 30
        %v2407 = vsub.s32 %v2403, %v2406
        %vm2408 = vcmp.lt.s32.totalorder %v2407, 0
        %v2409 = vsub.s32 0, %v2407
        %v2410 = vsel %vm2408, %v2409, %v2407
        %v2411 = vclz %v2410
        %v2412 = vsub.s32 %v2411, 2
        %vm2413 = vcmp.gt.s32.totalorder 0, %v2412
        %v2414 = vsel %vm2413, 0, %v2412
        %v2415 = vsub.s32 32, %v2414
        %v2416 = vshll.u32 %v2407, %v2414
        %v2417 = vshrl.u32 %v2399, %v2415
        %v2418 = vor.u32 %v2416, %v2417
        %v2419 = vsub.s32 4294967266, %v2414
        %v2420 = vadd.s32 %v2419, 127
        %v2421 = vshll.u32 %v2420, 23
        %v2422 = vor.u32 4788187, %v2421
        %v2423 = vand.u32 2147483647, %v2422
        %v2425 = vcvt.s32.f32 %v2418
        %v2426 = vmul.f32 %v2425, %v2423
        %v2427 = vxor.u32 %v2426, 2147483648
        %v2428 = vsel %vm2345, %v2427, %v2426
        %v2429 = vsub.s32 4, %v2405
        %v2430 = vsel %vm2345, %v2429, %v2405
        %v2431 = vsel %vm2344, %v1250, %v2428
        %v2432 = vsel %vm2344, 0, %v2430
        %v2433 = vcosq.f32.pop %v2431
        %v2434 = vsinq.f32.pop %v2431
        %vm2435 = vweird.f32 %v1250
        %v2436 = vadd.s32 %v2432, 3
        %v2437 = vand.u32 %v2436, 3
        %vm2438 = vcmp.lt.s32.totalorder %v2437, 2
        %vm2439 = vcmp.eq.s32.totalorder %v2437, 0
        %v2440 = vxor.u32 %v2434, 2147483648
        %v2441 = vsel %vm2439, %v2433, %v2440
        %vm2442 = vcmp.eq.s32.totalorder %v2437, 2
        %v2443 = vxor.u32 %v2433, 2147483648
        %v2444 = vsel %vm2442, %v2443, %v2434
        %v2445 = vsel %vm2438, %v2441, %v2444
        %v2446 = vsel %vm2435, nan, %v2445
        %v2447 = vand.u32 2147483647, %v1252
        %vm2448 = vcmp.le.f32.partialorder %v2447, 0.7853982
        %vm2449 = vcmp.lt.s32.totalorder %v1252, 0
        %v2450 = vand.u32 %v1252, 2139095040
        %v2451 = vshrl.u32 %v2450, 23
        %v2452 = vsub.s32 %v2451, 127
        %v2453 = vand.u32 2147483647, %v1252
        %v2454 = vand.u32 %v2453, 8388607
        %v2455 = vor.u32 %v2454, 8388608
        %v2456 = vsub.s32 0, %v2455
        %v2457 = vadd.s32 %v2452, 1
        %vm2458 = vcmp.gt.s32.totalorder %v2457, 0
        %v2459 = vsel %vm2458, %v2457, 0
        %v2460 = vshrl.u32 %v2459, 5
        %v2461 = vand.u32 %v2459, 31
        %v2462 = vsub.s32 32, %v2461
        %v2463 = vshrl.u32 683565275, %v2462
        %v2464 = vshll.u32 683565275, %v2461
        %v2465 = vshrl.u32 2475754826, %v2462
        %v2466 = vor.u32 %v2464, %v2465
        %v2467 = vshll.u32 2475754826, %v2461
        %v2468 = vshrl.u32 2131351028, %v2462
        %v2469 = vor.u32 %v2467, %v2468
        %v2470 = vshll.u32 2131351028, %v2461
        %v2471 = vshrl.u32 2102212464, %v2462
        %v2472 = vor.u32 %v2470, %v2471
        %v2473 = vshll.u32 2102212464, %v2461
        %v2474 = vshrl.u32 920167782, %v2462
        %v2475 = vor.u32 %v2473, %v2474
        %v2476 = vshll.u32 920167782, %v2461
        %v2477 = vshrl.u32 1326507024, %v2462
        %v2478 = vor.u32 %v2476, %v2477
        %vm2479 = vcmp.lt.s32.totalorder %v2460, 1
        %vm2480 = vcmp.lt.s32.totalorder %v2460, 2
        %vm2481 = vcmp.lt.s32.totalorder %v2460, 3
        %vm2482 = vcmp.lt.s32.totalorder %v2460, 4
        %v2483 = vsel %vm2479, %v2463, %v2466
        %v2484 = vsel %vm2482, %v2472, 2102212464
        %v2485 = vsel %vm2481, %v2469, %v2484
        %v2486 = vsel %vm2480, %v2483, %v2485
        %v2487 = vsel %vm2479, %v2466, %v2469
        %v2488 = vsel %vm2482, %v2475, 920167782
        %v2489 = vsel %vm2481, %v2472, %v2488
        %v2490 = vsel %vm2480, %v2487, %v2489
        %v2491 = vsel %vm2479, %v2469, %v2472
        %v2492 = vsel %vm2482, %v2478, 1326507024
        %v2493 = vsel %vm2481, %v2475, %v2492
        %v2494 = vsel %vm2480, %v2491, %v2493
        %v2495 = vshll.u32 %v2455, 8
        %v2496 = vmul.u32.u64.compose %v2495, %v2494
        %v2497 = vextract.low.u32 %v2496
        %v2498 = vextract.high.u32 %v2496
        %v2499 = vmul.u32.u64.compose %v2495, %v2490
        %v2500 = vextract.low.u32 %v2499
        %v2501 = vextract.high.u32 %v2499
        %v2502 = vmul.u32 %v2495, %v2486
        %v2503 = vadd.s32 %v2498, %v2500
        %vm2504 = vc.u32 %v2498, %v2500
        %v2505 = vadd.s32 %v2501, 1
        %v2506 = vsel %vm2504, %v2505, %v2501
        %v2507 = vadd.s32 %v2502, %v2506
        %v2508 = vadd.s32 %v2507, 536870912
        %v2509 = vshrl.u32 %v2508, 30
        %v2510 = vshll.u32 %v2509, 30
        %v2511 = vsub.s32 %v2507, %v2510
        %vm2512 = vcmp.lt.s32.totalorder %v2511, 0
        %v2513 = vsub.s32 0, %v2511
        %v2514 = vsel %vm2512, %v2513, %v2511
        %v2515 = vclz %v2514
        %v2516 = vsub.s32 %v2515, 2
        %vm2517 = vcmp.gt.s32.totalorder 0, %v2516
        %v2518 = vsel %vm2517, 0, %v2516
        %v2519 = vsub.s32 32, %v2518
        %v2520 = vshll.u32 %v2511, %v2518
        %v2521 = vshrl.u32 %v2503, %v2519
        %v2522 = vor.u32 %v2520, %v2521
        %v2523 = vsub.s32 4294967266, %v2518
        %v2524 = vadd.s32 %v2523, 127
        %v2525 = vshll.u32 %v2524, 23
        %v2526 = vor.u32 4788187, %v2525
        %v2527 = vand.u32 2147483647, %v2526
        %v2529 = vcvt.s32.f32 %v2522
        %v2530 = vmul.f32 %v2529, %v2527
        %v2531 = vxor.u32 %v2530, 2147483648
        %v2532 = vsel %vm2449, %v2531, %v2530
        %v2533 = vsub.s32 4, %v2509
        %v2534 = vsel %vm2449, %v2533, %v2509
        %v2535 = vsel %vm2448, %v1252, %v2532
        %v2536 = vsel %vm2448, 0, %v2534
        %v2537 = vcosq.f32.pop %v2535
        %v2538 = vsinq.f32.pop %v2535
        %vm2539 = vweird.f32 %v1252
        %v2540 = vadd.s32 %v2536, 3
        %v2541 = vand.u32 %v2540, 3
        %vm2542 = vcmp.lt.s32.totalorder %v2541, 2
        %vm2543 = vcmp.eq.s32.totalorder %v2541, 0
        %v2544 = vxor.u32 %v2538, 2147483648
        %v2545 = vsel %vm2543, %v2537, %v2544
        %vm2546 = vcmp.eq.s32.totalorder %v2541, 2
        %v2547 = vxor.u32 %v2537, 2147483648
        %v2548 = vsel %vm2546, %v2547, %v2538
        %v2549 = vsel %vm2542, %v2545, %v2548
        %v2550 = vsel %vm2539, nan, %v2549
        %v2551 = vand.u32 2147483647, %v1257
        %vm2552 = vcmp.le.f32.partialorder %v2551, 0.7853982
        %vm2553 = vcmp.lt.s32.totalorder %v1257, 0
        %v2554 = vand.u32 %v1257, 2139095040
        %v2555 = vshrl.u32 %v2554, 23
        %v2556 = vsub.s32 %v2555, 127
        %v2557 = vand.u32 2147483647, %v1257
        %v2558 = vand.u32 %v2557, 8388607
        %v2559 = vor.u32 %v2558, 8388608
        %v2560 = vsub.s32 0, %v2559
        %v2561 = vadd.s32 %v2556, 1
        %vm2562 = vcmp.gt.s32.totalorder %v2561, 0
        %v2563 = vsel %vm2562, %v2561, 0
        %v2564 = vshrl.u32 %v2563, 5
        %v2565 = vand.u32 %v2563, 31
        %v2566 = vsub.s32 32, %v2565
        %v2567 = vshrl.u32 683565275, %v2566
        %v2568 = vshll.u32 683565275, %v2565
        %v2569 = vshrl.u32 2475754826, %v2566
        %v2570 = vor.u32 %v2568, %v2569
        %v2571 = vshll.u32 2475754826, %v2565
        %v2572 = vshrl.u32 2131351028, %v2566
        %v2573 = vor.u32 %v2571, %v2572
        %v2574 = vshll.u32 2131351028, %v2565
        %v2575 = vshrl.u32 2102212464, %v2566
        %v2576 = vor.u32 %v2574, %v2575
        %v2577 = vshll.u32 2102212464, %v2565
        %v2578 = vshrl.u32 920167782, %v2566
        %v2579 = vor.u32 %v2577, %v2578
        %v2580 = vshll.u32 920167782, %v2565
        %v2581 = vshrl.u32 1326507024, %v2566
        %v2582 = vor.u32 %v2580, %v2581
        %vm2583 = vcmp.lt.s32.totalorder %v2564, 1
        %vm2584 = vcmp.lt.s32.totalorder %v2564, 2
        %vm2585 = vcmp.lt.s32.totalorder %v2564, 3
        %vm2586 = vcmp.lt.s32.totalorder %v2564, 4
        %v2587 = vsel %vm2583, %v2567, %v2570
        %v2588 = vsel %vm2586, %v2576, 2102212464
        %v2589 = vsel %vm2585, %v2573, %v2588
        %v2590 = vsel %vm2584, %v2587, %v2589
        %v2591 = vsel %vm2583, %v2570, %v2573
        %v2592 = vsel %vm2586, %v2579, 920167782
        %v2593 = vsel %vm2585, %v2576, %v2592
        %v2594 = vsel %vm2584, %v2591, %v2593
        %v2595 = vsel %vm2583, %v2573, %v2576
        %v2596 = vsel %vm2586, %v2582, 1326507024
        %v2597 = vsel %vm2585, %v2579, %v2596
        %v2598 = vsel %vm2584, %v2595, %v2597
        %v2599 = vshll.u32 %v2559, 8
        %v2600 = vmul.u32.u64.compose %v2599, %v2598
        %v2601 = vextract.low.u32 %v2600
        %v2602 = vextract.high.u32 %v2600
        %v2603 = vmul.u32.u64.compose %v2599, %v2594
        %v2604 = vextract.low.u32 %v2603
        %v2605 = vextract.high.u32 %v2603
        %v2606 = vmul.u32 %v2599, %v2590
        %v2607 = vadd.s32 %v2602, %v2604
        %vm2608 = vc.u32 %v2602, %v2604
        %v2609 = vadd.s32 %v2605, 1
        %v2610 = vsel %vm2608, %v2609, %v2605
        %v2611 = vadd.s32 %v2606, %v2610
        %v2612 = vadd.s32 %v2611, 536870912
        %v2613 = vshrl.u32 %v2612, 30
        %v2614 = vshll.u32 %v2613, 30
        %v2615 = vsub.s32 %v2611, %v2614
        %vm2616 = vcmp.lt.s32.totalorder %v2615, 0
        %v2617 = vsub.s32 0, %v2615
        %v2618 = vsel %vm2616, %v2617, %v2615
        %v2619 = vclz %v2618
        %v2620 = vsub.s32 %v2619, 2
        %vm2621 = vcmp.gt.s32.totalorder 0, %v2620
        %v2622 = vsel %vm2621, 0, %v2620
        %v2623 = vsub.s32 32, %v2622
        %v2624 = vshll.u32 %v2615, %v2622
        %v2625 = vshrl.u32 %v2607, %v2623
        %v2626 = vor.u32 %v2624, %v2625
        %v2627 = vsub.s32 4294967266, %v2622
        %v2628 = vadd.s32 %v2627, 127
        %v2629 = vshll.u32 %v2628, 23
        %v2630 = vor.u32 4788187, %v2629
        %v2631 = vand.u32 2147483647, %v2630
        %v2633 = vcvt.s32.f32 %v2626
        %v2634 = vmul.f32 %v2633, %v2631
        %v2635 = vxor.u32 %v2634, 2147483648
        %v2636 = vsel %vm2553, %v2635, %v2634
        %v2637 = vsub.s32 4, %v2613
        %v2638 = vsel %vm2553, %v2637, %v2613
        %v2639 = vsel %vm2552, %v1257, %v2636
        %v2640 = vsel %vm2552, 0, %v2638
        %v2641 = vcosq.f32.pop %v2639
        %v2642 = vsinq.f32.pop %v2639
        %vm2643 = vweird.f32 %v1257
        %v2644 = vadd.s32 %v2640, 3
        %v2645 = vand.u32 %v2644, 3
        %vm2646 = vcmp.lt.s32.totalorder %v2645, 2
        %vm2647 = vcmp.eq.s32.totalorder %v2645, 0
        %v2648 = vxor.u32 %v2642, 2147483648
        %v2649 = vsel %vm2647, %v2641, %v2648
        %vm2650 = vcmp.eq.s32.totalorder %v2645, 2
        %v2651 = vxor.u32 %v2641, 2147483648
        %v2652 = vsel %vm2650, %v2651, %v2642
        %v2653 = vsel %vm2646, %v2649, %v2652
        %v2654 = vsel %vm2643, nan, %v2653
        %v2655 = vand.u32 2147483647, %v1259
        %vm2656 = vcmp.le.f32.partialorder %v2655, 0.7853982
        %vm2657 = vcmp.lt.s32.totalorder %v1259, 0
        %v2658 = vand.u32 %v1259, 2139095040
        %v2659 = vshrl.u32 %v2658, 23
        %v2660 = vsub.s32 %v2659, 127
        %v2661 = vand.u32 2147483647, %v1259
        %v2662 = vand.u32 %v2661, 8388607
        %v2663 = vor.u32 %v2662, 8388608
        %v2664 = vsub.s32 0, %v2663
        %v2665 = vadd.s32 %v2660, 1
        %vm2666 = vcmp.gt.s32.totalorder %v2665, 0
        %v2667 = vsel %vm2666, %v2665, 0
        %v2668 = vshrl.u32 %v2667, 5
        %v2669 = vand.u32 %v2667, 31
        %v2670 = vsub.s32 32, %v2669
        %v2671 = vshrl.u32 683565275, %v2670
        %v2672 = vshll.u32 683565275, %v2669
        %v2673 = vshrl.u32 2475754826, %v2670
        %v2674 = vor.u32 %v2672, %v2673
        %v2675 = vshll.u32 2475754826, %v2669
        %v2676 = vshrl.u32 2131351028, %v2670
        %v2677 = vor.u32 %v2675, %v2676
        %v2678 = vshll.u32 2131351028, %v2669
        %v2679 = vshrl.u32 2102212464, %v2670
        %v2680 = vor.u32 %v2678, %v2679
        %v2681 = vshll.u32 2102212464, %v2669
        %v2682 = vshrl.u32 920167782, %v2670
        %v2683 = vor.u32 %v2681, %v2682
        %v2684 = vshll.u32 920167782, %v2669
        %v2685 = vshrl.u32 1326507024, %v2670
        %v2686 = vor.u32 %v2684, %v2685
        %vm2687 = vcmp.lt.s32.totalorder %v2668, 1
        %vm2688 = vcmp.lt.s32.totalorder %v2668, 2
        %vm2689 = vcmp.lt.s32.totalorder %v2668, 3
        %vm2690 = vcmp.lt.s32.totalorder %v2668, 4
        %v2691 = vsel %vm2687, %v2671, %v2674
        %v2692 = vsel %vm2690, %v2680, 2102212464
        %v2693 = vsel %vm2689, %v2677, %v2692
        %v2694 = vsel %vm2688, %v2691, %v2693
        %v2695 = vsel %vm2687, %v2674, %v2677
        %v2696 = vsel %vm2690, %v2683, 920167782
        %v2697 = vsel %vm2689, %v2680, %v2696
        %v2698 = vsel %vm2688, %v2695, %v2697
        %v2699 = vsel %vm2687, %v2677, %v2680
        %v2700 = vsel %vm2690, %v2686, 1326507024
        %v2701 = vsel %vm2689, %v2683, %v2700
        %v2702 = vsel %vm2688, %v2699, %v2701
        %v2703 = vshll.u32 %v2663, 8
        %v2704 = vmul.u32.u64.compose %v2703, %v2702
        %v2705 = vextract.low.u32 %v2704
        %v2706 = vextract.high.u32 %v2704
        %v2707 = vmul.u32.u64.compose %v2703, %v2698
        %v2708 = vextract.low.u32 %v2707
        %v2709 = vextract.high.u32 %v2707
        %v2710 = vmul.u32 %v2703, %v2694
        %v2711 = vadd.s32 %v2706, %v2708
        %vm2712 = vc.u32 %v2706, %v2708
        %v2713 = vadd.s32 %v2709, 1
        %v2714 = vsel %vm2712, %v2713, %v2709
        %v2715 = vadd.s32 %v2710, %v2714
        %v2716 = vadd.s32 %v2715, 536870912
        %v2717 = vshrl.u32 %v2716, 30
        %v2718 = vshll.u32 %v2717, 30
        %v2719 = vsub.s32 %v2715, %v2718
        %vm2720 = vcmp.lt.s32.totalorder %v2719, 0
        %v2721 = vsub.s32 0, %v2719
        %v2722 = vsel %vm2720, %v2721, %v2719
        %v2723 = vclz %v2722
        %v2724 = vsub.s32 %v2723, 2
        %vm2725 = vcmp.gt.s32.totalorder 0, %v2724
        %v2726 = vsel %vm2725, 0, %v2724
        %v2727 = vsub.s32 32, %v2726
        %v2728 = vshll.u32 %v2719, %v2726
        %v2729 = vshrl.u32 %v2711, %v2727
        %v2730 = vor.u32 %v2728, %v2729
        %v2731 = vsub.s32 4294967266, %v2726
        %v2732 = vadd.s32 %v2731, 127
        %v2733 = vshll.u32 %v2732, 23
        %v2734 = vor.u32 4788187, %v2733
        %v2735 = vand.u32 2147483647, %v2734
        %v2737 = vcvt.s32.f32 %v2730
        %v2738 = vmul.f32 %v2737, %v2735
        %v2739 = vxor.u32 %v2738, 2147483648
        %v2740 = vsel %vm2657, %v2739, %v2738
        %v2741 = vsub.s32 4, %v2717
        %v2742 = vsel %vm2657, %v2741, %v2717
        %v2743 = vsel %vm2656, %v1259, %v2740
        %v2744 = vsel %vm2656, 0, %v2742
        %v2745 = vcosq.f32.pop %v2743
        %v2746 = vsinq.f32.pop %v2743
        %vm2747 = vweird.f32 %v1259
        %v2748 = vadd.s32 %v2744, 3
        %v2749 = vand.u32 %v2748, 3
        %vm2750 = vcmp.lt.s32.totalorder %v2749, 2
        %vm2751 = vcmp.eq.s32.totalorder %v2749, 0
        %v2752 = vxor.u32 %v2746, 2147483648
        %v2753 = vsel %vm2751, %v2745, %v2752
        %vm2754 = vcmp.eq.s32.totalorder %v2749, 2
        %v2755 = vxor.u32 %v2745, 2147483648
        %v2756 = vsel %vm2754, %v2755, %v2746
        %v2757 = vsel %vm2750, %v2753, %v2756
        %v2758 = vsel %vm2747, nan, %v2757
        %v2759 = vand.u32 2147483647, %v1264
        %vm2760 = vcmp.le.f32.partialorder %v2759, 0.7853982
        %vm2761 = vcmp.lt.s32.totalorder %v1264, 0
        %v2762 = vand.u32 %v1264, 2139095040
        %v2763 = vshrl.u32 %v2762, 23
        %v2764 = vsub.s32 %v2763, 127
        %v2765 = vand.u32 2147483647, %v1264
        %v2766 = vand.u32 %v2765, 8388607
        %v2767 = vor.u32 %v2766, 8388608
        %v2768 = vsub.s32 0, %v2767
        %v2769 = vadd.s32 %v2764, 1
        %vm2770 = vcmp.gt.s32.totalorder %v2769, 0
        %v2771 = vsel %vm2770, %v2769, 0
        %v2772 = vshrl.u32 %v2771, 5
        %v2773 = vand.u32 %v2771, 31
        %v2774 = vsub.s32 32, %v2773
        %v2775 = vshrl.u32 683565275, %v2774
        %v2776 = vshll.u32 683565275, %v2773
        %v2777 = vshrl.u32 2475754826, %v2774
        %v2778 = vor.u32 %v2776, %v2777
        %v2779 = vshll.u32 2475754826, %v2773
        %v2780 = vshrl.u32 2131351028, %v2774
        %v2781 = vor.u32 %v2779, %v2780
        %v2782 = vshll.u32 2131351028, %v2773
        %v2783 = vshrl.u32 2102212464, %v2774
        %v2784 = vor.u32 %v2782, %v2783
        %v2785 = vshll.u32 2102212464, %v2773
        %v2786 = vshrl.u32 920167782, %v2774
        %v2787 = vor.u32 %v2785, %v2786
        %v2788 = vshll.u32 920167782, %v2773
        %v2789 = vshrl.u32 1326507024, %v2774
        %v2790 = vor.u32 %v2788, %v2789
        %vm2791 = vcmp.lt.s32.totalorder %v2772, 1
        %vm2792 = vcmp.lt.s32.totalorder %v2772, 2
        %vm2793 = vcmp.lt.s32.totalorder %v2772, 3
        %vm2794 = vcmp.lt.s32.totalorder %v2772, 4
        %v2795 = vsel %vm2791, %v2775, %v2778
        %v2796 = vsel %vm2794, %v2784, 2102212464
        %v2797 = vsel %vm2793, %v2781, %v2796
        %v2798 = vsel %vm2792, %v2795, %v2797
        %v2799 = vsel %vm2791, %v2778, %v2781
        %v2800 = vsel %vm2794, %v2787, 920167782
        %v2801 = vsel %vm2793, %v2784, %v2800
        %v2802 = vsel %vm2792, %v2799, %v2801
        %v2803 = vsel %vm2791, %v2781, %v2784
        %v2804 = vsel %vm2794, %v2790, 1326507024
        %v2805 = vsel %vm2793, %v2787, %v2804
        %v2806 = vsel %vm2792, %v2803, %v2805
        %v2807 = vshll.u32 %v2767, 8
        %v2808 = vmul.u32.u64.compose %v2807, %v2806
        %v2809 = vextract.low.u32 %v2808
        %v2810 = vextract.high.u32 %v2808
        %v2811 = vmul.u32.u64.compose %v2807, %v2802
        %v2812 = vextract.low.u32 %v2811
        %v2813 = vextract.high.u32 %v2811
        %v2814 = vmul.u32 %v2807, %v2798
        %v2815 = vadd.s32 %v2810, %v2812
        %vm2816 = vc.u32 %v2810, %v2812
        %v2817 = vadd.s32 %v2813, 1
        %v2818 = vsel %vm2816, %v2817, %v2813
        %v2819 = vadd.s32 %v2814, %v2818
        %v2820 = vadd.s32 %v2819, 536870912
        %v2821 = vshrl.u32 %v2820, 30
        %v2822 = vshll.u32 %v2821, 30
        %v2823 = vsub.s32 %v2819, %v2822
        %vm2824 = vcmp.lt.s32.totalorder %v2823, 0
        %v2825 = vsub.s32 0, %v2823
        %v2826 = vsel %vm2824, %v2825, %v2823
        %v2827 = vclz %v2826
        %v2828 = vsub.s32 %v2827, 2
        %vm2829 = vcmp.gt.s32.totalorder 0, %v2828
        %v2830 = vsel %vm2829, 0, %v2828
        %v2831 = vsub.s32 32, %v2830
        %v2832 = vshll.u32 %v2823, %v2830
        %v2833 = vshrl.u32 %v2815, %v2831
        %v2834 = vor.u32 %v2832, %v2833
        %v2835 = vsub.s32 4294967266, %v2830
        %v2836 = vadd.s32 %v2835, 127
        %v2837 = vshll.u32 %v2836, 23
        %v2838 = vor.u32 4788187, %v2837
        %v2839 = vand.u32 2147483647, %v2838
        %v2841 = vcvt.s32.f32 %v2834
        %v2842 = vmul.f32 %v2841, %v2839
        %v2843 = vxor.u32 %v2842, 2147483648
        %v2844 = vsel %vm2761, %v2843, %v2842
        %v2845 = vsub.s32 4, %v2821
        %v2846 = vsel %vm2761, %v2845, %v2821
        %v2847 = vsel %vm2760, %v1264, %v2844
        %v2848 = vsel %vm2760, 0, %v2846
        %v2849 = vcosq.f32.pop %v2847
        %v2850 = vsinq.f32.pop %v2847
        %vm2851 = vweird.f32 %v1264
        %v2852 = vadd.s32 %v2848, 3
        %v2853 = vand.u32 %v2852, 3
        %vm2854 = vcmp.lt.s32.totalorder %v2853, 2
        %vm2855 = vcmp.eq.s32.totalorder %v2853, 0
        %v2856 = vxor.u32 %v2850, 2147483648
        %v2857 = vsel %vm2855, %v2849, %v2856
        %vm2858 = vcmp.eq.s32.totalorder %v2853, 2
        %v2859 = vxor.u32 %v2849, 2147483648
        %v2860 = vsel %vm2858, %v2859, %v2850
        %v2861 = vsel %vm2854, %v2857, %v2860
        %v2862 = vsel %vm2851, nan, %v2861
        %v2863 = vand.u32 2147483647, %v1266
        %vm2864 = vcmp.le.f32.partialorder %v2863, 0.7853982
        %vm2865 = vcmp.lt.s32.totalorder %v1266, 0
        %v2866 = vand.u32 %v1266, 2139095040
        %v2867 = vshrl.u32 %v2866, 23
        %v2868 = vsub.s32 %v2867, 127
        %v2869 = vand.u32 2147483647, %v1266
        %v2870 = vand.u32 %v2869, 8388607
        %v2871 = vor.u32 %v2870, 8388608
        %v2872 = vsub.s32 0, %v2871
        %v2873 = vadd.s32 %v2868, 1
        %vm2874 = vcmp.gt.s32.totalorder %v2873, 0
        %v2875 = vsel %vm2874, %v2873, 0
        %v2876 = vshrl.u32 %v2875, 5
        %v2877 = vand.u32 %v2875, 31
        %v2878 = vsub.s32 32, %v2877
        %v2879 = vshrl.u32 683565275, %v2878
        %v2880 = vshll.u32 683565275, %v2877
        %v2881 = vshrl.u32 2475754826, %v2878
        %v2882 = vor.u32 %v2880, %v2881
        %v2883 = vshll.u32 2475754826, %v2877
        %v2884 = vshrl.u32 2131351028, %v2878
        %v2885 = vor.u32 %v2883, %v2884
        %v2886 = vshll.u32 2131351028, %v2877
        %v2887 = vshrl.u32 2102212464, %v2878
        %v2888 = vor.u32 %v2886, %v2887
        %v2889 = vshll.u32 2102212464, %v2877
        %v2890 = vshrl.u32 920167782, %v2878
        %v2891 = vor.u32 %v2889, %v2890
        %v2892 = vshll.u32 920167782, %v2877
        %v2893 = vshrl.u32 1326507024, %v2878
        %v2894 = vor.u32 %v2892, %v2893
        %vm2895 = vcmp.lt.s32.totalorder %v2876, 1
        %vm2896 = vcmp.lt.s32.totalorder %v2876, 2
        %vm2897 = vcmp.lt.s32.totalorder %v2876, 3
        %vm2898 = vcmp.lt.s32.totalorder %v2876, 4
        %v2899 = vsel %vm2895, %v2879, %v2882
        %v2900 = vsel %vm2898, %v2888, 2102212464
        %v2901 = vsel %vm2897, %v2885, %v2900
        %v2902 = vsel %vm2896, %v2899, %v2901
        %v2903 = vsel %vm2895, %v2882, %v2885
        %v2904 = vsel %vm2898, %v2891, 920167782
        %v2905 = vsel %vm2897, %v2888, %v2904
        %v2906 = vsel %vm2896, %v2903, %v2905
        %v2907 = vsel %vm2895, %v2885, %v2888
        %v2908 = vsel %vm2898, %v2894, 1326507024
        %v2909 = vsel %vm2897, %v2891, %v2908
        %v2910 = vsel %vm2896, %v2907, %v2909
        %v2911 = vshll.u32 %v2871, 8
        %v2912 = vmul.u32.u64.compose %v2911, %v2910
        %v2913 = vextract.low.u32 %v2912
        %v2914 = vextract.high.u32 %v2912
        %v2915 = vmul.u32.u64.compose %v2911, %v2906
        %v2916 = vextract.low.u32 %v2915
        %v2917 = vextract.high.u32 %v2915
        %v2918 = vmul.u32 %v2911, %v2902
        %v2919 = vadd.s32 %v2914, %v2916
        %vm2920 = vc.u32 %v2914, %v2916
        %v2921 = vadd.s32 %v2917, 1
        %v2922 = vsel %vm2920, %v2921, %v2917
        %v2923 = vadd.s32 %v2918, %v2922
        %v2924 = vadd.s32 %v2923, 536870912
        %v2925 = vshrl.u32 %v2924, 30
        %v2926 = vshll.u32 %v2925, 30
        %v2927 = vsub.s32 %v2923, %v2926
        %vm2928 = vcmp.lt.s32.totalorder %v2927, 0
        %v2929 = vsub.s32 0, %v2927
        %v2930 = vsel %vm2928, %v2929, %v2927
        %v2931 = vclz %v2930
        %v2932 = vsub.s32 %v2931, 2
        %vm2933 = vcmp.gt.s32.totalorder 0, %v2932
        %v2934 = vsel %vm2933, 0, %v2932
        %v2935 = vsub.s32 32, %v2934
        %v2936 = vshll.u32 %v2927, %v2934
        %v2937 = vshrl.u32 %v2919, %v2935
        %v2938 = vor.u32 %v2936, %v2937
        %v2939 = vsub.s32 4294967266, %v2934
        %v2940 = vadd.s32 %v2939, 127
        %v2941 = vshll.u32 %v2940, 23
        %v2942 = vor.u32 4788187, %v2941
        %v2943 = vand.u32 2147483647, %v2942
        %v2945 = vcvt.s32.f32 %v2938
        %v2946 = vmul.f32 %v2945, %v2943
        %v2947 = vxor.u32 %v2946, 2147483648
        %v2948 = vsel %vm2865, %v2947, %v2946
        %v2949 = vsub.s32 4, %v2925
        %v2950 = vsel %vm2865, %v2949, %v2925
        %v2951 = vsel %vm2864, %v1266, %v2948
        %v2952 = vsel %vm2864, 0, %v2950
        %v2953 = vcosq.f32.pop %v2951
        %v2954 = vsinq.f32.pop %v2951
        %vm2955 = vweird.f32 %v1266
        %v2956 = vadd.s32 %v2952, 3
        %v2957 = vand.u32 %v2956, 3
        %vm2958 = vcmp.lt.s32.totalorder %v2957, 2
        %vm2959 = vcmp.eq.s32.totalorder %v2957, 0
        %v2960 = vxor.u32 %v2954, 2147483648
        %v2961 = vsel %vm2959, %v2953, %v2960
        %vm2962 = vcmp.eq.s32.totalorder %v2957, 2
        %v2963 = vxor.u32 %v2953, 2147483648
        %v2964 = vsel %vm2962, %v2963, %v2954
        %v2965 = vsel %vm2958, %v2961, %v2964
        %v2966 = vsel %vm2955, nan, %v2965
        %v2967 = vand.u32 2147483647, %v1271
        %vm2968 = vcmp.le.f32.partialorder %v2967, 0.7853982
        %vm2969 = vcmp.lt.s32.totalorder %v1271, 0
        %v2970 = vand.u32 %v1271, 2139095040
        %v2971 = vshrl.u32 %v2970, 23
        %v2972 = vsub.s32 %v2971, 127
        %v2973 = vand.u32 2147483647, %v1271
        %v2974 = vand.u32 %v2973, 8388607
        %v2975 = vor.u32 %v2974, 8388608
        %v2976 = vsub.s32 0, %v2975
        %v2977 = vadd.s32 %v2972, 1
        %vm2978 = vcmp.gt.s32.totalorder %v2977, 0
        %v2979 = vsel %vm2978, %v2977, 0
        %v2980 = vshrl.u32 %v2979, 5
        %v2981 = vand.u32 %v2979, 31
        %v2982 = vsub.s32 32, %v2981
        %v2983 = vshrl.u32 683565275, %v2982
        %v2984 = vshll.u32 683565275, %v2981
        %v2985 = vshrl.u32 2475754826, %v2982
        %v2986 = vor.u32 %v2984, %v2985
        %v2987 = vshll.u32 2475754826, %v2981
        %v2988 = vshrl.u32 2131351028, %v2982
        %v2989 = vor.u32 %v2987, %v2988
        %v2990 = vshll.u32 2131351028, %v2981
        %v2991 = vshrl.u32 2102212464, %v2982
        %v2992 = vor.u32 %v2990, %v2991
        %v2993 = vshll.u32 2102212464, %v2981
        %v2994 = vshrl.u32 920167782, %v2982
        %v2995 = vor.u32 %v2993, %v2994
        %v2996 = vshll.u32 920167782, %v2981
        %v2997 = vshrl.u32 1326507024, %v2982
        %v2998 = vor.u32 %v2996, %v2997
        %vm2999 = vcmp.lt.s32.totalorder %v2980, 1
        %vm3000 = vcmp.lt.s32.totalorder %v2980, 2
        %vm3001 = vcmp.lt.s32.totalorder %v2980, 3
        %vm3002 = vcmp.lt.s32.totalorder %v2980, 4
        %v3003 = vsel %vm2999, %v2983, %v2986
        %v3004 = vsel %vm3002, %v2992, 2102212464
        %v3005 = vsel %vm3001, %v2989, %v3004
        %v3006 = vsel %vm3000, %v3003, %v3005
        %v3007 = vsel %vm2999, %v2986, %v2989
        %v3008 = vsel %vm3002, %v2995, 920167782
        %v3009 = vsel %vm3001, %v2992, %v3008
        %v3010 = vsel %vm3000, %v3007, %v3009
        %v3011 = vsel %vm2999, %v2989, %v2992
        %v3012 = vsel %vm3002, %v2998, 1326507024
        %v3013 = vsel %vm3001, %v2995, %v3012
        %v3014 = vsel %vm3000, %v3011, %v3013
        %v3015 = vshll.u32 %v2975, 8
        %v3016 = vmul.u32.u64.compose %v3015, %v3014
        %v3017 = vextract.low.u32 %v3016
        %v3018 = vextract.high.u32 %v3016
        %v3019 = vmul.u32.u64.compose %v3015, %v3010
        %v3020 = vextract.low.u32 %v3019
        %v3021 = vextract.high.u32 %v3019
        %v3022 = vmul.u32 %v3015, %v3006
        %v3023 = vadd.s32 %v3018, %v3020
        %vm3024 = vc.u32 %v3018, %v3020
        %v3025 = vadd.s32 %v3021, 1
        %v3026 = vsel %vm3024, %v3025, %v3021
        %v3027 = vadd.s32 %v3022, %v3026
        %v3028 = vadd.s32 %v3027, 536870912
        %v3029 = vshrl.u32 %v3028, 30
        %v3030 = vshll.u32 %v3029, 30
        %v3031 = vsub.s32 %v3027, %v3030
        %vm3032 = vcmp.lt.s32.totalorder %v3031, 0
        %v3033 = vsub.s32 0, %v3031
        %v3034 = vsel %vm3032, %v3033, %v3031
        %v3035 = vclz %v3034
        %v3036 = vsub.s32 %v3035, 2
        %vm3037 = vcmp.gt.s32.totalorder 0, %v3036
        %v3038 = vsel %vm3037, 0, %v3036
        %v3039 = vsub.s32 32, %v3038
        %v3040 = vshll.u32 %v3031, %v3038
        %v3041 = vshrl.u32 %v3023, %v3039
        %v3042 = vor.u32 %v3040, %v3041
        %v3043 = vsub.s32 4294967266, %v3038
        %v3044 = vadd.s32 %v3043, 127
        %v3045 = vshll.u32 %v3044, 23
        %v3046 = vor.u32 4788187, %v3045
        %v3047 = vand.u32 2147483647, %v3046
        %v3049 = vcvt.s32.f32 %v3042
        %v3050 = vmul.f32 %v3049, %v3047
        %v3051 = vxor.u32 %v3050, 2147483648
        %v3052 = vsel %vm2969, %v3051, %v3050
        %v3053 = vsub.s32 4, %v3029
        %v3054 = vsel %vm2969, %v3053, %v3029
        %v3055 = vsel %vm2968, %v1271, %v3052
        %v3056 = vsel %vm2968, 0, %v3054
        %v3057 = vcosq.f32.pop %v3055
        %v3058 = vsinq.f32.pop %v3055
        %vm3059 = vweird.f32 %v1271
        %v3060 = vadd.s32 %v3056, 3
        %v3061 = vand.u32 %v3060, 3
        %vm3062 = vcmp.lt.s32.totalorder %v3061, 2
        %vm3063 = vcmp.eq.s32.totalorder %v3061, 0
        %v3064 = vxor.u32 %v3058, 2147483648
        %v3065 = vsel %vm3063, %v3057, %v3064
        %vm3066 = vcmp.eq.s32.totalorder %v3061, 2
        %v3067 = vxor.u32 %v3057, 2147483648
        %v3068 = vsel %vm3066, %v3067, %v3058
        %v3069 = vsel %vm3062, %v3065, %v3068
        %v3070 = vsel %vm3059, nan, %v3069
        %v3071 = vand.u32 2147483647, %v1273
        %vm3072 = vcmp.le.f32.partialorder %v3071, 0.7853982
        %vm3073 = vcmp.lt.s32.totalorder %v1273, 0
        %v3074 = vand.u32 %v1273, 2139095040
        %v3075 = vshrl.u32 %v3074, 23
        %v3076 = vsub.s32 %v3075, 127
        %v3077 = vand.u32 2147483647, %v1273
        %v3078 = vand.u32 %v3077, 8388607
        %v3079 = vor.u32 %v3078, 8388608
        %v3080 = vsub.s32 0, %v3079
        %v3081 = vadd.s32 %v3076, 1
        %vm3082 = vcmp.gt.s32.totalorder %v3081, 0
        %v3083 = vsel %vm3082, %v3081, 0
        %v3084 = vshrl.u32 %v3083, 5
        %v3085 = vand.u32 %v3083, 31
        %v3086 = vsub.s32 32, %v3085
        %v3087 = vshrl.u32 683565275, %v3086
        %v3088 = vshll.u32 683565275, %v3085
        %v3089 = vshrl.u32 2475754826, %v3086
        %v3090 = vor.u32 %v3088, %v3089
        %v3091 = vshll.u32 2475754826, %v3085
        %v3092 = vshrl.u32 2131351028, %v3086
        %v3093 = vor.u32 %v3091, %v3092
        %v3094 = vshll.u32 2131351028, %v3085
        %v3095 = vshrl.u32 2102212464, %v3086
        %v3096 = vor.u32 %v3094, %v3095
        %v3097 = vshll.u32 2102212464, %v3085
        %v3098 = vshrl.u32 920167782, %v3086
        %v3099 = vor.u32 %v3097, %v3098
        %v3100 = vshll.u32 920167782, %v3085
        %v3101 = vshrl.u32 1326507024, %v3086
        %v3102 = vor.u32 %v3100, %v3101
        %vm3103 = vcmp.lt.s32.totalorder %v3084, 1
        %vm3104 = vcmp.lt.s32.totalorder %v3084, 2
        %vm3105 = vcmp.lt.s32.totalorder %v3084, 3
        %vm3106 = vcmp.lt.s32.totalorder %v3084, 4
        %v3107 = vsel %vm3103, %v3087, %v3090
        %v3108 = vsel %vm3106, %v3096, 2102212464
        %v3109 = vsel %vm3105, %v3093, %v3108
        %v3110 = vsel %vm3104, %v3107, %v3109
        %v3111 = vsel %vm3103, %v3090, %v3093
        %v3112 = vsel %vm3106, %v3099, 920167782
        %v3113 = vsel %vm3105, %v3096, %v3112
        %v3114 = vsel %vm3104, %v3111, %v3113
        %v3115 = vsel %vm3103, %v3093, %v3096
        %v3116 = vsel %vm3106, %v3102, 1326507024
        %v3117 = vsel %vm3105, %v3099, %v3116
        %v3118 = vsel %vm3104, %v3115, %v3117
        %v3119 = vshll.u32 %v3079, 8
        %v3120 = vmul.u32.u64.compose %v3119, %v3118
        %v3121 = vextract.low.u32 %v3120
        %v3122 = vextract.high.u32 %v3120
        %v3123 = vmul.u32.u64.compose %v3119, %v3114
        %v3124 = vextract.low.u32 %v3123
        %v3125 = vextract.high.u32 %v3123
        %v3126 = vmul.u32 %v3119, %v3110
        %v3127 = vadd.s32 %v3122, %v3124
        %vm3128 = vc.u32 %v3122, %v3124
        %v3129 = vadd.s32 %v3125, 1
        %v3130 = vsel %vm3128, %v3129, %v3125
        %v3131 = vadd.s32 %v3126, %v3130
        %v3132 = vadd.s32 %v3131, 536870912
        %v3133 = vshrl.u32 %v3132, 30
        %v3134 = vshll.u32 %v3133, 30
        %v3135 = vsub.s32 %v3131, %v3134
        %vm3136 = vcmp.lt.s32.totalorder %v3135, 0
        %v3137 = vsub.s32 0, %v3135
        %v3138 = vsel %vm3136, %v3137, %v3135
        %v3139 = vclz %v3138
        %v3140 = vsub.s32 %v3139, 2
        %vm3141 = vcmp.gt.s32.totalorder 0, %v3140
        %v3142 = vsel %vm3141, 0, %v3140
        %v3143 = vsub.s32 32, %v3142
        %v3144 = vshll.u32 %v3135, %v3142
        %v3145 = vshrl.u32 %v3127, %v3143
        %v3146 = vor.u32 %v3144, %v3145
        %v3147 = vsub.s32 4294967266, %v3142
        %v3148 = vadd.s32 %v3147, 127
        %v3149 = vshll.u32 %v3148, 23
        %v3150 = vor.u32 4788187, %v3149
        %v3151 = vand.u32 2147483647, %v3150
        %v3153 = vcvt.s32.f32 %v3146
        %v3154 = vmul.f32 %v3153, %v3151
        %v3155 = vxor.u32 %v3154, 2147483648
        %v3156 = vsel %vm3073, %v3155, %v3154
        %v3157 = vsub.s32 4, %v3133
        %v3158 = vsel %vm3073, %v3157, %v3133
        %v3159 = vsel %vm3072, %v1273, %v3156
        %v3160 = vsel %vm3072, 0, %v3158
        %v3161 = vcosq.f32.pop %v3159
        %v3162 = vsinq.f32.pop %v3159
        %vm3163 = vweird.f32 %v1273
        %v3164 = vadd.s32 %v3160, 3
        %v3165 = vand.u32 %v3164, 3
        %vm3166 = vcmp.lt.s32.totalorder %v3165, 2
        %vm3167 = vcmp.eq.s32.totalorder %v3165, 0
        %v3168 = vxor.u32 %v3162, 2147483648
        %v3169 = vsel %vm3167, %v3161, %v3168
        %vm3170 = vcmp.eq.s32.totalorder %v3165, 2
        %v3171 = vxor.u32 %v3161, 2147483648
        %v3172 = vsel %vm3170, %v3171, %v3162
        %v3173 = vsel %vm3166, %v3169, %v3172
        %v3174 = vsel %vm3163, nan, %v3173
        %v3175 = vand.u32 2147483647, %v1278
        %vm3176 = vcmp.le.f32.partialorder %v3175, 0.7853982
        %vm3177 = vcmp.lt.s32.totalorder %v1278, 0
        %v3178 = vand.u32 %v1278, 2139095040
        %v3179 = vshrl.u32 %v3178, 23
        %v3180 = vsub.s32 %v3179, 127
        %v3181 = vand.u32 2147483647, %v1278
        %v3182 = vand.u32 %v3181, 8388607
        %v3183 = vor.u32 %v3182, 8388608
        %v3184 = vsub.s32 0, %v3183
        %v3185 = vadd.s32 %v3180, 1
        %vm3186 = vcmp.gt.s32.totalorder %v3185, 0
        %v3187 = vsel %vm3186, %v3185, 0
        %v3188 = vshrl.u32 %v3187, 5
        %v3189 = vand.u32 %v3187, 31
        %v3190 = vsub.s32 32, %v3189
        %v3191 = vshrl.u32 683565275, %v3190
        %v3192 = vshll.u32 683565275, %v3189
        %v3193 = vshrl.u32 2475754826, %v3190
        %v3194 = vor.u32 %v3192, %v3193
        %v3195 = vshll.u32 2475754826, %v3189
        %v3196 = vshrl.u32 2131351028, %v3190
        %v3197 = vor.u32 %v3195, %v3196
        %v3198 = vshll.u32 2131351028, %v3189
        %v3199 = vshrl.u32 2102212464, %v3190
        %v3200 = vor.u32 %v3198, %v3199
        %v3201 = vshll.u32 2102212464, %v3189
        %v3202 = vshrl.u32 920167782, %v3190
        %v3203 = vor.u32 %v3201, %v3202
        %v3204 = vshll.u32 920167782, %v3189
        %v3205 = vshrl.u32 1326507024, %v3190
        %v3206 = vor.u32 %v3204, %v3205
        %vm3207 = vcmp.lt.s32.totalorder %v3188, 1
        %vm3208 = vcmp.lt.s32.totalorder %v3188, 2
        %vm3209 = vcmp.lt.s32.totalorder %v3188, 3
        %vm3210 = vcmp.lt.s32.totalorder %v3188, 4
        %v3211 = vsel %vm3207, %v3191, %v3194
        %v3212 = vsel %vm3210, %v3200, 2102212464
        %v3213 = vsel %vm3209, %v3197, %v3212
        %v3214 = vsel %vm3208, %v3211, %v3213
        %v3215 = vsel %vm3207, %v3194, %v3197
        %v3216 = vsel %vm3210, %v3203, 920167782
        %v3217 = vsel %vm3209, %v3200, %v3216
        %v3218 = vsel %vm3208, %v3215, %v3217
        %v3219 = vsel %vm3207, %v3197, %v3200
        %v3220 = vsel %vm3210, %v3206, 1326507024
        %v3221 = vsel %vm3209, %v3203, %v3220
        %v3222 = vsel %vm3208, %v3219, %v3221
        %v3223 = vshll.u32 %v3183, 8
        %v3224 = vmul.u32.u64.compose %v3223, %v3222
        %v3225 = vextract.low.u32 %v3224
        %v3226 = vextract.high.u32 %v3224
        %v3227 = vmul.u32.u64.compose %v3223, %v3218
        %v3228 = vextract.low.u32 %v3227
        %v3229 = vextract.high.u32 %v3227
        %v3230 = vmul.u32 %v3223, %v3214
        %v3231 = vadd.s32 %v3226, %v3228
        %vm3232 = vc.u32 %v3226, %v3228
        %v3233 = vadd.s32 %v3229, 1
        %v3234 = vsel %vm3232, %v3233, %v3229
        %v3235 = vadd.s32 %v3230, %v3234
        %v3236 = vadd.s32 %v3235, 536870912
        %v3237 = vshrl.u32 %v3236, 30
        %v3238 = vshll.u32 %v3237, 30
        %v3239 = vsub.s32 %v3235, %v3238
        %vm3240 = vcmp.lt.s32.totalorder %v3239, 0
        %v3241 = vsub.s32 0, %v3239
        %v3242 = vsel %vm3240, %v3241, %v3239
        %v3243 = vclz %v3242
        %v3244 = vsub.s32 %v3243, 2
        %vm3245 = vcmp.gt.s32.totalorder 0, %v3244
        %v3246 = vsel %vm3245, 0, %v3244
        %v3247 = vsub.s32 32, %v3246
        %v3248 = vshll.u32 %v3239, %v3246
        %v3249 = vshrl.u32 %v3231, %v3247
        %v3250 = vor.u32 %v3248, %v3249
        %v3251 = vsub.s32 4294967266, %v3246
        %v3252 = vadd.s32 %v3251, 127
        %v3253 = vshll.u32 %v3252, 23
        %v3254 = vor.u32 4788187, %v3253
        %v3255 = vand.u32 2147483647, %v3254
        %v3257 = vcvt.s32.f32 %v3250
        %v3258 = vmul.f32 %v3257, %v3255
        %v3259 = vxor.u32 %v3258, 2147483648
        %v3260 = vsel %vm3177, %v3259, %v3258
        %v3261 = vsub.s32 4, %v3237
        %v3262 = vsel %vm3177, %v3261, %v3237
        %v3263 = vsel %vm3176, %v1278, %v3260
        %v3264 = vsel %vm3176, 0, %v3262
        %v3265 = vcosq.f32.pop %v3263
        %v3266 = vsinq.f32.pop %v3263
        %vm3267 = vweird.f32 %v1278
        %v3268 = vadd.s32 %v3264, 3
        %v3269 = vand.u32 %v3268, 3
        %vm3270 = vcmp.lt.s32.totalorder %v3269, 2
        %vm3271 = vcmp.eq.s32.totalorder %v3269, 0
        %v3272 = vxor.u32 %v3266, 2147483648
        %v3273 = vsel %vm3271, %v3265, %v3272
        %vm3274 = vcmp.eq.s32.totalorder %v3269, 2
        %v3275 = vxor.u32 %v3265, 2147483648
        %v3276 = vsel %vm3274, %v3275, %v3266
        %v3277 = vsel %vm3270, %v3273, %v3276
        %v3278 = vsel %vm3267, nan, %v3277
        %v3279 = vand.u32 2147483647, %v1280
        %vm3280 = vcmp.le.f32.partialorder %v3279, 0.7853982
        %vm3281 = vcmp.lt.s32.totalorder %v1280, 0
        %v3282 = vand.u32 %v1280, 2139095040
        %v3283 = vshrl.u32 %v3282, 23
        %v3284 = vsub.s32 %v3283, 127
        %v3285 = vand.u32 2147483647, %v1280
        %v3286 = vand.u32 %v3285, 8388607
        %v3287 = vor.u32 %v3286, 8388608
        %v3288 = vsub.s32 0, %v3287
        %v3289 = vadd.s32 %v3284, 1
        %vm3290 = vcmp.gt.s32.totalorder %v3289, 0
        %v3291 = vsel %vm3290, %v3289, 0
        %v3292 = vshrl.u32 %v3291, 5
        %v3293 = vand.u32 %v3291, 31
        %v3294 = vsub.s32 32, %v3293
        %v3295 = vshrl.u32 683565275, %v3294
        %v3296 = vshll.u32 683565275, %v3293
        %v3297 = vshrl.u32 2475754826, %v3294
        %v3298 = vor.u32 %v3296, %v3297
        %v3299 = vshll.u32 2475754826, %v3293
        %v3300 = vshrl.u32 2131351028, %v3294
        %v3301 = vor.u32 %v3299, %v3300
        %v3302 = vshll.u32 2131351028, %v3293
        %v3303 = vshrl.u32 2102212464, %v3294
        %v3304 = vor.u32 %v3302, %v3303
        %v3305 = vshll.u32 2102212464, %v3293
        %v3306 = vshrl.u32 920167782, %v3294
        %v3307 = vor.u32 %v3305, %v3306
        %v3308 = vshll.u32 920167782, %v3293
        %v3309 = vshrl.u32 1326507024, %v3294
        %v3310 = vor.u32 %v3308, %v3309
        %vm3311 = vcmp.lt.s32.totalorder %v3292, 1
        %vm3312 = vcmp.lt.s32.totalorder %v3292, 2
        %vm3313 = vcmp.lt.s32.totalorder %v3292, 3
        %vm3314 = vcmp.lt.s32.totalorder %v3292, 4
        %v3315 = vsel %vm3311, %v3295, %v3298
        %v3316 = vsel %vm3314, %v3304, 2102212464
        %v3317 = vsel %vm3313, %v3301, %v3316
        %v3318 = vsel %vm3312, %v3315, %v3317
        %v3319 = vsel %vm3311, %v3298, %v3301
        %v3320 = vsel %vm3314, %v3307, 920167782
        %v3321 = vsel %vm3313, %v3304, %v3320
        %v3322 = vsel %vm3312, %v3319, %v3321
        %v3323 = vsel %vm3311, %v3301, %v3304
        %v3324 = vsel %vm3314, %v3310, 1326507024
        %v3325 = vsel %vm3313, %v3307, %v3324
        %v3326 = vsel %vm3312, %v3323, %v3325
        %v3327 = vshll.u32 %v3287, 8
        %v3328 = vmul.u32.u64.compose %v3327, %v3326
        %v3329 = vextract.low.u32 %v3328
        %v3330 = vextract.high.u32 %v3328
        %v3331 = vmul.u32.u64.compose %v3327, %v3322
        %v3332 = vextract.low.u32 %v3331
        %v3333 = vextract.high.u32 %v3331
        %v3334 = vmul.u32 %v3327, %v3318
        %v3335 = vadd.s32 %v3330, %v3332
        %vm3336 = vc.u32 %v3330, %v3332
        %v3337 = vadd.s32 %v3333, 1
        %v3338 = vsel %vm3336, %v3337, %v3333
        %v3339 = vadd.s32 %v3334, %v3338
        %v3340 = vadd.s32 %v3339, 536870912
        %v3341 = vshrl.u32 %v3340, 30
        %v3342 = vshll.u32 %v3341, 30
        %v3343 = vsub.s32 %v3339, %v3342
        %vm3344 = vcmp.lt.s32.totalorder %v3343, 0
        %v3345 = vsub.s32 0, %v3343
        %v3346 = vsel %vm3344, %v3345, %v3343
        %v3347 = vclz %v3346
        %v3348 = vsub.s32 %v3347, 2
        %vm3349 = vcmp.gt.s32.totalorder 0, %v3348
        %v3350 = vsel %vm3349, 0, %v3348
        %v3351 = vsub.s32 32, %v3350
        %v3352 = vshll.u32 %v3343, %v3350
        %v3353 = vshrl.u32 %v3335, %v3351
        %v3354 = vor.u32 %v3352, %v3353
        %v3355 = vsub.s32 4294967266, %v3350
        %v3356 = vadd.s32 %v3355, 127
        %v3357 = vshll.u32 %v3356, 23
        %v3358 = vor.u32 4788187, %v3357
        %v3359 = vand.u32 2147483647, %v3358
        %v3361 = vcvt.s32.f32 %v3354
        %v3362 = vmul.f32 %v3361, %v3359
        %v3363 = vxor.u32 %v3362, 2147483648
        %v3364 = vsel %vm3281, %v3363, %v3362
        %v3365 = vsub.s32 4, %v3341
        %v3366 = vsel %vm3281, %v3365, %v3341
        %v3367 = vsel %vm3280, %v1280, %v3364
        %v3368 = vsel %vm3280, 0, %v3366
        %v3369 = vcosq.f32.pop %v3367
        %v3370 = vsinq.f32.pop %v3367
        %vm3371 = vweird.f32 %v1280
        %v3372 = vadd.s32 %v3368, 3
        %v3373 = vand.u32 %v3372, 3
        %vm3374 = vcmp.lt.s32.totalorder %v3373, 2
        %vm3375 = vcmp.eq.s32.totalorder %v3373, 0
        %v3376 = vxor.u32 %v3370, 2147483648
        %v3377 = vsel %vm3375, %v3369, %v3376
        %vm3378 = vcmp.eq.s32.totalorder %v3373, 2
        %v3379 = vxor.u32 %v3369, 2147483648
        %v3380 = vsel %vm3378, %v3379, %v3370
        %v3381 = vsel %vm3374, %v3377, %v3380
        %v3382 = vsel %vm3371, nan, %v3381
        %v3383 = vand.u32 2147483647, %v1285
        %vm3384 = vcmp.le.f32.partialorder %v3383, 0.7853982
        %vm3385 = vcmp.lt.s32.totalorder %v1285, 0
        %v3386 = vand.u32 %v1285, 2139095040
        %v3387 = vshrl.u32 %v3386, 23
        %v3388 = vsub.s32 %v3387, 127
        %v3389 = vand.u32 2147483647, %v1285
        %v3390 = vand.u32 %v3389, 8388607
        %v3391 = vor.u32 %v3390, 8388608
        %v3392 = vsub.s32 0, %v3391
        %v3393 = vadd.s32 %v3388, 1
        %vm3394 = vcmp.gt.s32.totalorder %v3393, 0
        %v3395 = vsel %vm3394, %v3393, 0
        %v3396 = vshrl.u32 %v3395, 5
        %v3397 = vand.u32 %v3395, 31
        %v3398 = vsub.s32 32, %v3397
        %v3399 = vshrl.u32 683565275, %v3398
        %v3400 = vshll.u32 683565275, %v3397
        %v3401 = vshrl.u32 2475754826, %v3398
        %v3402 = vor.u32 %v3400, %v3401
        %v3403 = vshll.u32 2475754826, %v3397
        %v3404 = vshrl.u32 2131351028, %v3398
        %v3405 = vor.u32 %v3403, %v3404
        %v3406 = vshll.u32 2131351028, %v3397
        %v3407 = vshrl.u32 2102212464, %v3398
        %v3408 = vor.u32 %v3406, %v3407
        %v3409 = vshll.u32 2102212464, %v3397
        %v3410 = vshrl.u32 920167782, %v3398
        %v3411 = vor.u32 %v3409, %v3410
        %v3412 = vshll.u32 920167782, %v3397
        %v3413 = vshrl.u32 1326507024, %v3398
        %v3414 = vor.u32 %v3412, %v3413
        %vm3415 = vcmp.lt.s32.totalorder %v3396, 1
        %vm3416 = vcmp.lt.s32.totalorder %v3396, 2
        %vm3417 = vcmp.lt.s32.totalorder %v3396, 3
        %vm3418 = vcmp.lt.s32.totalorder %v3396, 4
        %v3419 = vsel %vm3415, %v3399, %v3402
        %v3420 = vsel %vm3418, %v3408, 2102212464
        %v3421 = vsel %vm3417, %v3405, %v3420
        %v3422 = vsel %vm3416, %v3419, %v3421
        %v3423 = vsel %vm3415, %v3402, %v3405
        %v3424 = vsel %vm3418, %v3411, 920167782
        %v3425 = vsel %vm3417, %v3408, %v3424
        %v3426 = vsel %vm3416, %v3423, %v3425
        %v3427 = vsel %vm3415, %v3405, %v3408
        %v3428 = vsel %vm3418, %v3414, 1326507024
        %v3429 = vsel %vm3417, %v3411, %v3428
        %v3430 = vsel %vm3416, %v3427, %v3429
        %v3431 = vshll.u32 %v3391, 8
        %v3432 = vmul.u32.u64.compose %v3431, %v3430
        %v3433 = vextract.low.u32 %v3432
        %v3434 = vextract.high.u32 %v3432
        %v3435 = vmul.u32.u64.compose %v3431, %v3426
        %v3436 = vextract.low.u32 %v3435
        %v3437 = vextract.high.u32 %v3435
        %v3438 = vmul.u32 %v3431, %v3422
        %v3439 = vadd.s32 %v3434, %v3436
        %vm3440 = vc.u32 %v3434, %v3436
        %v3441 = vadd.s32 %v3437, 1
        %v3442 = vsel %vm3440, %v3441, %v3437
        %v3443 = vadd.s32 %v3438, %v3442
        %v3444 = vadd.s32 %v3443, 536870912
        %v3445 = vshrl.u32 %v3444, 30
        %v3446 = vshll.u32 %v3445, 30
        %v3447 = vsub.s32 %v3443, %v3446
        %vm3448 = vcmp.lt.s32.totalorder %v3447, 0
        %v3449 = vsub.s32 0, %v3447
        %v3450 = vsel %vm3448, %v3449, %v3447
        %v3451 = vclz %v3450
        %v3452 = vsub.s32 %v3451, 2
        %vm3453 = vcmp.gt.s32.totalorder 0, %v3452
        %v3454 = vsel %vm3453, 0, %v3452
        %v3455 = vsub.s32 32, %v3454
        %v3456 = vshll.u32 %v3447, %v3454
        %v3457 = vshrl.u32 %v3439, %v3455
        %v3458 = vor.u32 %v3456, %v3457
        %v3459 = vsub.s32 4294967266, %v3454
        %v3460 = vadd.s32 %v3459, 127
        %v3461 = vshll.u32 %v3460, 23
        %v3462 = vor.u32 4788187, %v3461
        %v3463 = vand.u32 2147483647, %v3462
        %v3465 = vcvt.s32.f32 %v3458
        %v3466 = vmul.f32 %v3465, %v3463
        %v3467 = vxor.u32 %v3466, 2147483648
        %v3468 = vsel %vm3385, %v3467, %v3466
        %v3469 = vsub.s32 4, %v3445
        %v3470 = vsel %vm3385, %v3469, %v3445
        %v3471 = vsel %vm3384, %v1285, %v3468
        %v3472 = vsel %vm3384, 0, %v3470
        %v3473 = vcosq.f32.pop %v3471
        %v3474 = vsinq.f32.pop %v3471
        %vm3475 = vweird.f32 %v1285
        %v3476 = vadd.s32 %v3472, 3
        %v3477 = vand.u32 %v3476, 3
        %vm3478 = vcmp.lt.s32.totalorder %v3477, 2
        %vm3479 = vcmp.eq.s32.totalorder %v3477, 0
        %v3480 = vxor.u32 %v3474, 2147483648
        %v3481 = vsel %vm3479, %v3473, %v3480
        %vm3482 = vcmp.eq.s32.totalorder %v3477, 2
        %v3483 = vxor.u32 %v3473, 2147483648
        %v3484 = vsel %vm3482, %v3483, %v3474
        %v3485 = vsel %vm3478, %v3481, %v3484
        %v3486 = vsel %vm3475, nan, %v3485
        %v3487 = vand.u32 2147483647, %v1287
        %vm3488 = vcmp.le.f32.partialorder %v3487, 0.7853982
        %vm3489 = vcmp.lt.s32.totalorder %v1287, 0
        %v3490 = vand.u32 %v1287, 2139095040
        %v3491 = vshrl.u32 %v3490, 23
        %v3492 = vsub.s32 %v3491, 127
        %v3493 = vand.u32 2147483647, %v1287
        %v3494 = vand.u32 %v3493, 8388607
        %v3495 = vor.u32 %v3494, 8388608
        %v3496 = vsub.s32 0, %v3495
        %v3497 = vadd.s32 %v3492, 1
        %vm3498 = vcmp.gt.s32.totalorder %v3497, 0
        %v3499 = vsel %vm3498, %v3497, 0
        %v3500 = vshrl.u32 %v3499, 5
        %v3501 = vand.u32 %v3499, 31
        %v3502 = vsub.s32 32, %v3501
        %v3503 = vshrl.u32 683565275, %v3502
        %v3504 = vshll.u32 683565275, %v3501
        %v3505 = vshrl.u32 2475754826, %v3502
        %v3506 = vor.u32 %v3504, %v3505
        %v3507 = vshll.u32 2475754826, %v3501
        %v3508 = vshrl.u32 2131351028, %v3502
        %v3509 = vor.u32 %v3507, %v3508
        %v3510 = vshll.u32 2131351028, %v3501
        %v3511 = vshrl.u32 2102212464, %v3502
        %v3512 = vor.u32 %v3510, %v3511
        %v3513 = vshll.u32 2102212464, %v3501
        %v3514 = vshrl.u32 920167782, %v3502
        %v3515 = vor.u32 %v3513, %v3514
        %v3516 = vshll.u32 920167782, %v3501
        %v3517 = vshrl.u32 1326507024, %v3502
        %v3518 = vor.u32 %v3516, %v3517
        %vm3519 = vcmp.lt.s32.totalorder %v3500, 1
        %vm3520 = vcmp.lt.s32.totalorder %v3500, 2
        %vm3521 = vcmp.lt.s32.totalorder %v3500, 3
        %vm3522 = vcmp.lt.s32.totalorder %v3500, 4
        %v3523 = vsel %vm3519, %v3503, %v3506
        %v3524 = vsel %vm3522, %v3512, 2102212464
        %v3525 = vsel %vm3521, %v3509, %v3524
        %v3526 = vsel %vm3520, %v3523, %v3525
        %v3527 = vsel %vm3519, %v3506, %v3509
        %v3528 = vsel %vm3522, %v3515, 920167782
        %v3529 = vsel %vm3521, %v3512, %v3528
        %v3530 = vsel %vm3520, %v3527, %v3529
        %v3531 = vsel %vm3519, %v3509, %v3512
        %v3532 = vsel %vm3522, %v3518, 1326507024
        %v3533 = vsel %vm3521, %v3515, %v3532
        %v3534 = vsel %vm3520, %v3531, %v3533
        %v3535 = vshll.u32 %v3495, 8
        %v3536 = vmul.u32.u64.compose %v3535, %v3534
        %v3537 = vextract.low.u32 %v3536
        %v3538 = vextract.high.u32 %v3536
        %v3539 = vmul.u32.u64.compose %v3535, %v3530
        %v3540 = vextract.low.u32 %v3539
        %v3541 = vextract.high.u32 %v3539
        %v3542 = vmul.u32 %v3535, %v3526
        %v3543 = vadd.s32 %v3538, %v3540
        %vm3544 = vc.u32 %v3538, %v3540
        %v3545 = vadd.s32 %v3541, 1
        %v3546 = vsel %vm3544, %v3545, %v3541
        %v3547 = vadd.s32 %v3542, %v3546
        %v3548 = vadd.s32 %v3547, 536870912
        %v3549 = vshrl.u32 %v3548, 30
        %v3550 = vshll.u32 %v3549, 30
        %v3551 = vsub.s32 %v3547, %v3550
        %vm3552 = vcmp.lt.s32.totalorder %v3551, 0
        %v3553 = vsub.s32 0, %v3551
        %v3554 = vsel %vm3552, %v3553, %v3551
        %v3555 = vclz %v3554
        %v3556 = vsub.s32 %v3555, 2
        %vm3557 = vcmp.gt.s32.totalorder 0, %v3556
        %v3558 = vsel %vm3557, 0, %v3556
        %v3559 = vsub.s32 32, %v3558
        %v3560 = vshll.u32 %v3551, %v3558
        %v3561 = vshrl.u32 %v3543, %v3559
        %v3562 = vor.u32 %v3560, %v3561
        %v3563 = vsub.s32 4294967266, %v3558
        %v3564 = vadd.s32 %v3563, 127
        %v3565 = vshll.u32 %v3564, 23
        %v3566 = vor.u32 4788187, %v3565
        %v3567 = vand.u32 2147483647, %v3566
        %v3569 = vcvt.s32.f32 %v3562
        %v3570 = vmul.f32 %v3569, %v3567
        %v3571 = vxor.u32 %v3570, 2147483648
        %v3572 = vsel %vm3489, %v3571, %v3570
        %v3573 = vsub.s32 4, %v3549
        %v3574 = vsel %vm3489, %v3573, %v3549
        %v3575 = vsel %vm3488, %v1287, %v3572
        %v3576 = vsel %vm3488, 0, %v3574
        %v3577 = vcosq.f32.pop %v3575
        %v3578 = vsinq.f32.pop %v3575
        %vm3579 = vweird.f32 %v1287
        %v3580 = vadd.s32 %v3576, 3
        %v3581 = vand.u32 %v3580, 3
        %vm3582 = vcmp.lt.s32.totalorder %v3581, 2
        %vm3583 = vcmp.eq.s32.totalorder %v3581, 0
        %v3584 = vxor.u32 %v3578, 2147483648
        %v3585 = vsel %vm3583, %v3577, %v3584
        %vm3586 = vcmp.eq.s32.totalorder %v3581, 2
        %v3587 = vxor.u32 %v3577, 2147483648
        %v3588 = vsel %vm3586, %v3587, %v3578
        %v3589 = vsel %vm3582, %v3585, %v3588
        %v3590 = vsel %vm3579, nan, %v3589
        %v3591 = vand.u32 2147483647, %v1292
        %vm3592 = vcmp.le.f32.partialorder %v3591, 0.7853982
        %vm3593 = vcmp.lt.s32.totalorder %v1292, 0
        %v3594 = vand.u32 %v1292, 2139095040
        %v3595 = vshrl.u32 %v3594, 23
        %v3596 = vsub.s32 %v3595, 127
        %v3597 = vand.u32 2147483647, %v1292
        %v3598 = vand.u32 %v3597, 8388607
        %v3599 = vor.u32 %v3598, 8388608
        %v3600 = vsub.s32 0, %v3599
        %v3601 = vadd.s32 %v3596, 1
        %vm3602 = vcmp.gt.s32.totalorder %v3601, 0
        %v3603 = vsel %vm3602, %v3601, 0
        %v3604 = vshrl.u32 %v3603, 5
        %v3605 = vand.u32 %v3603, 31
        %v3606 = vsub.s32 32, %v3605
        %v3607 = vshrl.u32 683565275, %v3606
        %v3608 = vshll.u32 683565275, %v3605
        %v3609 = vshrl.u32 2475754826, %v3606
        %v3610 = vor.u32 %v3608, %v3609
        %v3611 = vshll.u32 2475754826, %v3605
        %v3612 = vshrl.u32 2131351028, %v3606
        %v3613 = vor.u32 %v3611, %v3612
        %v3614 = vshll.u32 2131351028, %v3605
        %v3615 = vshrl.u32 2102212464, %v3606
        %v3616 = vor.u32 %v3614, %v3615
        %v3617 = vshll.u32 2102212464, %v3605
        %v3618 = vshrl.u32 920167782, %v3606
        %v3619 = vor.u32 %v3617, %v3618
        %v3620 = vshll.u32 920167782, %v3605
        %v3621 = vshrl.u32 1326507024, %v3606
        %v3622 = vor.u32 %v3620, %v3621
        %vm3623 = vcmp.lt.s32.totalorder %v3604, 1
        %vm3624 = vcmp.lt.s32.totalorder %v3604, 2
        %vm3625 = vcmp.lt.s32.totalorder %v3604, 3
        %vm3626 = vcmp.lt.s32.totalorder %v3604, 4
        %v3627 = vsel %vm3623, %v3607, %v3610
        %v3628 = vsel %vm3626, %v3616, 2102212464
        %v3629 = vsel %vm3625, %v3613, %v3628
        %v3630 = vsel %vm3624, %v3627, %v3629
        %v3631 = vsel %vm3623, %v3610, %v3613
        %v3632 = vsel %vm3626, %v3619, 920167782
        %v3633 = vsel %vm3625, %v3616, %v3632
        %v3634 = vsel %vm3624, %v3631, %v3633
        %v3635 = vsel %vm3623, %v3613, %v3616
        %v3636 = vsel %vm3626, %v3622, 1326507024
        %v3637 = vsel %vm3625, %v3619, %v3636
        %v3638 = vsel %vm3624, %v3635, %v3637
        %v3639 = vshll.u32 %v3599, 8
        %v3640 = vmul.u32.u64.compose %v3639, %v3638
        %v3641 = vextract.low.u32 %v3640
        %v3642 = vextract.high.u32 %v3640
        %v3643 = vmul.u32.u64.compose %v3639, %v3634
        %v3644 = vextract.low.u32 %v3643
        %v3645 = vextract.high.u32 %v3643
        %v3646 = vmul.u32 %v3639, %v3630
        %v3647 = vadd.s32 %v3642, %v3644
        %vm3648 = vc.u32 %v3642, %v3644
        %v3649 = vadd.s32 %v3645, 1
        %v3650 = vsel %vm3648, %v3649, %v3645
        %v3651 = vadd.s32 %v3646, %v3650
        %v3652 = vadd.s32 %v3651, 536870912
        %v3653 = vshrl.u32 %v3652, 30
        %v3654 = vshll.u32 %v3653, 30
        %v3655 = vsub.s32 %v3651, %v3654
        %vm3656 = vcmp.lt.s32.totalorder %v3655, 0
        %v3657 = vsub.s32 0, %v3655
        %v3658 = vsel %vm3656, %v3657, %v3655
        %v3659 = vclz %v3658
        %v3660 = vsub.s32 %v3659, 2
        %vm3661 = vcmp.gt.s32.totalorder 0, %v3660
        %v3662 = vsel %vm3661, 0, %v3660
        %v3663 = vsub.s32 32, %v3662
        %v3664 = vshll.u32 %v3655, %v3662
        %v3665 = vshrl.u32 %v3647, %v3663
        %v3666 = vor.u32 %v3664, %v3665
        %v3667 = vsub.s32 4294967266, %v3662
        %v3668 = vadd.s32 %v3667, 127
        %v3669 = vshll.u32 %v3668, 23
        %v3670 = vor.u32 4788187, %v3669
        %v3671 = vand.u32 2147483647, %v3670
        %v3673 = vcvt.s32.f32 %v3666
        %v3674 = vmul.f32 %v3673, %v3671
        %v3675 = vxor.u32 %v3674, 2147483648
        %v3676 = vsel %vm3593, %v3675, %v3674
        %v3677 = vsub.s32 4, %v3653
        %v3678 = vsel %vm3593, %v3677, %v3653
        %v3679 = vsel %vm3592, %v1292, %v3676
        %v3680 = vsel %vm3592, 0, %v3678
        %v3681 = vcosq.f32.pop %v3679
        %v3682 = vsinq.f32.pop %v3679
        %vm3683 = vweird.f32 %v1292
        %v3684 = vadd.s32 %v3680, 3
        %v3685 = vand.u32 %v3684, 3
        %vm3686 = vcmp.lt.s32.totalorder %v3685, 2
        %vm3687 = vcmp.eq.s32.totalorder %v3685, 0
        %v3688 = vxor.u32 %v3682, 2147483648
        %v3689 = vsel %vm3687, %v3681, %v3688
        %vm3690 = vcmp.eq.s32.totalorder %v3685, 2
        %v3691 = vxor.u32 %v3681, 2147483648
        %v3692 = vsel %vm3690, %v3691, %v3682
        %v3693 = vsel %vm3686, %v3689, %v3692
        %v3694 = vsel %vm3683, nan, %v3693
        %v3695 = vand.u32 2147483647, %v1294
        %vm3696 = vcmp.le.f32.partialorder %v3695, 0.7853982
        %vm3697 = vcmp.lt.s32.totalorder %v1294, 0
        %v3698 = vand.u32 %v1294, 2139095040
        %v3699 = vshrl.u32 %v3698, 23
        %v3700 = vsub.s32 %v3699, 127
        %v3701 = vand.u32 2147483647, %v1294
        %v3702 = vand.u32 %v3701, 8388607
        %v3703 = vor.u32 %v3702, 8388608
        %v3704 = vsub.s32 0, %v3703
        %v3705 = vadd.s32 %v3700, 1
        %vm3706 = vcmp.gt.s32.totalorder %v3705, 0
        %v3707 = vsel %vm3706, %v3705, 0
        %v3708 = vshrl.u32 %v3707, 5
        %v3709 = vand.u32 %v3707, 31
        %v3710 = vsub.s32 32, %v3709
        %v3711 = vshrl.u32 683565275, %v3710
        %v3712 = vshll.u32 683565275, %v3709
        %v3713 = vshrl.u32 2475754826, %v3710
        %v3714 = vor.u32 %v3712, %v3713
        %v3715 = vshll.u32 2475754826, %v3709
        %v3716 = vshrl.u32 2131351028, %v3710
        %v3717 = vor.u32 %v3715, %v3716
        %v3718 = vshll.u32 2131351028, %v3709
        %v3719 = vshrl.u32 2102212464, %v3710
        %v3720 = vor.u32 %v3718, %v3719
        %v3721 = vshll.u32 2102212464, %v3709
        %v3722 = vshrl.u32 920167782, %v3710
        %v3723 = vor.u32 %v3721, %v3722
        %v3724 = vshll.u32 920167782, %v3709
        %v3725 = vshrl.u32 1326507024, %v3710
        %v3726 = vor.u32 %v3724, %v3725
        %vm3727 = vcmp.lt.s32.totalorder %v3708, 1
        %vm3728 = vcmp.lt.s32.totalorder %v3708, 2
        %vm3729 = vcmp.lt.s32.totalorder %v3708, 3
        %vm3730 = vcmp.lt.s32.totalorder %v3708, 4
        %v3731 = vsel %vm3727, %v3711, %v3714
        %v3732 = vsel %vm3730, %v3720, 2102212464
        %v3733 = vsel %vm3729, %v3717, %v3732
        %v3734 = vsel %vm3728, %v3731, %v3733
        %v3735 = vsel %vm3727, %v3714, %v3717
        %v3736 = vsel %vm3730, %v3723, 920167782
        %v3737 = vsel %vm3729, %v3720, %v3736
        %v3738 = vsel %vm3728, %v3735, %v3737
        %v3739 = vsel %vm3727, %v3717, %v3720
        %v3740 = vsel %vm3730, %v3726, 1326507024
        %v3741 = vsel %vm3729, %v3723, %v3740
        %v3742 = vsel %vm3728, %v3739, %v3741
        %v3743 = vshll.u32 %v3703, 8
        %v3744 = vmul.u32.u64.compose %v3743, %v3742
        %v3745 = vextract.low.u32 %v3744
        %v3746 = vextract.high.u32 %v3744
        %v3747 = vmul.u32.u64.compose %v3743, %v3738
        %v3748 = vextract.low.u32 %v3747
        %v3749 = vextract.high.u32 %v3747
        %v3750 = vmul.u32 %v3743, %v3734
        %v3751 = vadd.s32 %v3746, %v3748
        %vm3752 = vc.u32 %v3746, %v3748
        %v3753 = vadd.s32 %v3749, 1
        %v3754 = vsel %vm3752, %v3753, %v3749
        %v3755 = vadd.s32 %v3750, %v3754
        %v3756 = vadd.s32 %v3755, 536870912
        %v3757 = vshrl.u32 %v3756, 30
        %v3758 = vshll.u32 %v3757, 30
        %v3759 = vsub.s32 %v3755, %v3758
        %vm3760 = vcmp.lt.s32.totalorder %v3759, 0
        %v3761 = vsub.s32 0, %v3759
        %v3762 = vsel %vm3760, %v3761, %v3759
        %v3763 = vclz %v3762
        %v3764 = vsub.s32 %v3763, 2
        %vm3765 = vcmp.gt.s32.totalorder 0, %v3764
        %v3766 = vsel %vm3765, 0, %v3764
        %v3767 = vsub.s32 32, %v3766
        %v3768 = vshll.u32 %v3759, %v3766
        %v3769 = vshrl.u32 %v3751, %v3767
        %v3770 = vor.u32 %v3768, %v3769
        %v3771 = vsub.s32 4294967266, %v3766
        %v3772 = vadd.s32 %v3771, 127
        %v3773 = vshll.u32 %v3772, 23
        %v3774 = vor.u32 4788187, %v3773
        %v3775 = vand.u32 2147483647, %v3774
        %v3777 = vcvt.s32.f32 %v3770
        %v3778 = vmul.f32 %v3777, %v3775
        %v3779 = vxor.u32 %v3778, 2147483648
        %v3780 = vsel %vm3697, %v3779, %v3778
        %v3781 = vsub.s32 4, %v3757
        %v3782 = vsel %vm3697, %v3781, %v3757
        %v3783 = vsel %vm3696, %v1294, %v3780
        %v3784 = vsel %vm3696, 0, %v3782
        %v3785 = vcosq.f32.pop %v3783
        %v3786 = vsinq.f32.pop %v3783
        %vm3787 = vweird.f32 %v1294
        %v3788 = vadd.s32 %v3784, 3
        %v3789 = vand.u32 %v3788, 3
        %vm3790 = vcmp.lt.s32.totalorder %v3789, 2
        %vm3791 = vcmp.eq.s32.totalorder %v3789, 0
        %v3792 = vxor.u32 %v3786, 2147483648
        %v3793 = vsel %vm3791, %v3785, %v3792
        %vm3794 = vcmp.eq.s32.totalorder %v3789, 2
        %v3795 = vxor.u32 %v3785, 2147483648
        %v3796 = vsel %vm3794, %v3795, %v3786
        %v3797 = vsel %vm3790, %v3793, %v3796
        %v3798 = vsel %vm3787, nan, %v3797
        %v3799 = vand.u32 2147483647, %v1299
        %vm3800 = vcmp.le.f32.partialorder %v3799, 0.7853982
        %vm3801 = vcmp.lt.s32.totalorder %v1299, 0
        %v3802 = vand.u32 %v1299, 2139095040
        %v3803 = vshrl.u32 %v3802, 23
        %v3804 = vsub.s32 %v3803, 127
        %v3805 = vand.u32 2147483647, %v1299
        %v3806 = vand.u32 %v3805, 8388607
        %v3807 = vor.u32 %v3806, 8388608
        %v3808 = vsub.s32 0, %v3807
        %v3809 = vadd.s32 %v3804, 1
        %vm3810 = vcmp.gt.s32.totalorder %v3809, 0
        %v3811 = vsel %vm3810, %v3809, 0
        %v3812 = vshrl.u32 %v3811, 5
        %v3813 = vand.u32 %v3811, 31
        %v3814 = vsub.s32 32, %v3813
        %v3815 = vshrl.u32 683565275, %v3814
        %v3816 = vshll.u32 683565275, %v3813
        %v3817 = vshrl.u32 2475754826, %v3814
        %v3818 = vor.u32 %v3816, %v3817
        %v3819 = vshll.u32 2475754826, %v3813
        %v3820 = vshrl.u32 2131351028, %v3814
        %v3821 = vor.u32 %v3819, %v3820
        %v3822 = vshll.u32 2131351028, %v3813
        %v3823 = vshrl.u32 2102212464, %v3814
        %v3824 = vor.u32 %v3822, %v3823
        %v3825 = vshll.u32 2102212464, %v3813
        %v3826 = vshrl.u32 920167782, %v3814
        %v3827 = vor.u32 %v3825, %v3826
        %v3828 = vshll.u32 920167782, %v3813
        %v3829 = vshrl.u32 1326507024, %v3814
        %v3830 = vor.u32 %v3828, %v3829
        %vm3831 = vcmp.lt.s32.totalorder %v3812, 1
        %vm3832 = vcmp.lt.s32.totalorder %v3812, 2
        %vm3833 = vcmp.lt.s32.totalorder %v3812, 3
        %vm3834 = vcmp.lt.s32.totalorder %v3812, 4
        %v3835 = vsel %vm3831, %v3815, %v3818
        %v3836 = vsel %vm3834, %v3824, 2102212464
        %v3837 = vsel %vm3833, %v3821, %v3836
        %v3838 = vsel %vm3832, %v3835, %v3837
        %v3839 = vsel %vm3831, %v3818, %v3821
        %v3840 = vsel %vm3834, %v3827, 920167782
        %v3841 = vsel %vm3833, %v3824, %v3840
        %v3842 = vsel %vm3832, %v3839, %v3841
        %v3843 = vsel %vm3831, %v3821, %v3824
        %v3844 = vsel %vm3834, %v3830, 1326507024
        %v3845 = vsel %vm3833, %v3827, %v3844
        %v3846 = vsel %vm3832, %v3843, %v3845
        %v3847 = vshll.u32 %v3807, 8
        %v3848 = vmul.u32.u64.compose %v3847, %v3846
        %v3849 = vextract.low.u32 %v3848
        %v3850 = vextract.high.u32 %v3848
        %v3851 = vmul.u32.u64.compose %v3847, %v3842
        %v3852 = vextract.low.u32 %v3851
        %v3853 = vextract.high.u32 %v3851
        %v3854 = vmul.u32 %v3847, %v3838
        %v3855 = vadd.s32 %v3850, %v3852
        %vm3856 = vc.u32 %v3850, %v3852
        %v3857 = vadd.s32 %v3853, 1
        %v3858 = vsel %vm3856, %v3857, %v3853
        %v3859 = vadd.s32 %v3854, %v3858
        %v3860 = vadd.s32 %v3859, 536870912
        %v3861 = vshrl.u32 %v3860, 30
        %v3862 = vshll.u32 %v3861, 30
        %v3863 = vsub.s32 %v3859, %v3862
        %vm3864 = vcmp.lt.s32.totalorder %v3863, 0
        %v3865 = vsub.s32 0, %v3863
        %v3866 = vsel %vm3864, %v3865, %v3863
        %v3867 = vclz %v3866
        %v3868 = vsub.s32 %v3867, 2
        %vm3869 = vcmp.gt.s32.totalorder 0, %v3868
        %v3870 = vsel %vm3869, 0, %v3868
        %v3871 = vsub.s32 32, %v3870
        %v3872 = vshll.u32 %v3863, %v3870
        %v3873 = vshrl.u32 %v3855, %v3871
        %v3874 = vor.u32 %v3872, %v3873
        %v3875 = vsub.s32 4294967266, %v3870
        %v3876 = vadd.s32 %v3875, 127
        %v3877 = vshll.u32 %v3876, 23
        %v3878 = vor.u32 4788187, %v3877
        %v3879 = vand.u32 2147483647, %v3878
        %v3881 = vcvt.s32.f32 %v3874
        %v3882 = vmul.f32 %v3881, %v3879
        %v3883 = vxor.u32 %v3882, 2147483648
        %v3884 = vsel %vm3801, %v3883, %v3882
        %v3885 = vsub.s32 4, %v3861
        %v3886 = vsel %vm3801, %v3885, %v3861
        %v3887 = vsel %vm3800, %v1299, %v3884
        %v3888 = vsel %vm3800, 0, %v3886
        %v3889 = vcosq.f32.pop %v3887
        %v3890 = vsinq.f32.pop %v3887
        %vm3891 = vweird.f32 %v1299
        %v3892 = vadd.s32 %v3888, 3
        %v3893 = vand.u32 %v3892, 3
        %vm3894 = vcmp.lt.s32.totalorder %v3893, 2
        %vm3895 = vcmp.eq.s32.totalorder %v3893, 0
        %v3896 = vxor.u32 %v3890, 2147483648
        %v3897 = vsel %vm3895, %v3889, %v3896
        %vm3898 = vcmp.eq.s32.totalorder %v3893, 2
        %v3899 = vxor.u32 %v3889, 2147483648
        %v3900 = vsel %vm3898, %v3899, %v3890
        %v3901 = vsel %vm3894, %v3897, %v3900
        %v3902 = vsel %vm3891, nan, %v3901
        %v3903 = vand.u32 2147483647, %v1301
        %vm3904 = vcmp.le.f32.partialorder %v3903, 0.7853982
        %vm3905 = vcmp.lt.s32.totalorder %v1301, 0
        %v3906 = vand.u32 %v1301, 2139095040
        %v3907 = vshrl.u32 %v3906, 23
        %v3908 = vsub.s32 %v3907, 127
        %v3909 = vand.u32 2147483647, %v1301
        %v3910 = vand.u32 %v3909, 8388607
        %v3911 = vor.u32 %v3910, 8388608
        %v3912 = vsub.s32 0, %v3911
        %v3913 = vadd.s32 %v3908, 1
        %vm3914 = vcmp.gt.s32.totalorder %v3913, 0
        %v3915 = vsel %vm3914, %v3913, 0
        %v3916 = vshrl.u32 %v3915, 5
        %v3917 = vand.u32 %v3915, 31
        %v3918 = vsub.s32 32, %v3917
        %v3919 = vshrl.u32 683565275, %v3918
        %v3920 = vshll.u32 683565275, %v3917
        %v3921 = vshrl.u32 2475754826, %v3918
        %v3922 = vor.u32 %v3920, %v3921
        %v3923 = vshll.u32 2475754826, %v3917
        %v3924 = vshrl.u32 2131351028, %v3918
        %v3925 = vor.u32 %v3923, %v3924
        %v3926 = vshll.u32 2131351028, %v3917
        %v3927 = vshrl.u32 2102212464, %v3918
        %v3928 = vor.u32 %v3926, %v3927
        %v3929 = vshll.u32 2102212464, %v3917
        %v3930 = vshrl.u32 920167782, %v3918
        %v3931 = vor.u32 %v3929, %v3930
        %v3932 = vshll.u32 920167782, %v3917
        %v3933 = vshrl.u32 1326507024, %v3918
        %v3934 = vor.u32 %v3932, %v3933
        %vm3935 = vcmp.lt.s32.totalorder %v3916, 1
        %vm3936 = vcmp.lt.s32.totalorder %v3916, 2
        %vm3937 = vcmp.lt.s32.totalorder %v3916, 3
        %vm3938 = vcmp.lt.s32.totalorder %v3916, 4
        %v3939 = vsel %vm3935, %v3919, %v3922
        %v3940 = vsel %vm3938, %v3928, 2102212464
        %v3941 = vsel %vm3937, %v3925, %v3940
        %v3942 = vsel %vm3936, %v3939, %v3941
        %v3943 = vsel %vm3935, %v3922, %v3925
        %v3944 = vsel %vm3938, %v3931, 920167782
        %v3945 = vsel %vm3937, %v3928, %v3944
        %v3946 = vsel %vm3936, %v3943, %v3945
        %v3947 = vsel %vm3935, %v3925, %v3928
        %v3948 = vsel %vm3938, %v3934, 1326507024
        %v3949 = vsel %vm3937, %v3931, %v3948
        %v3950 = vsel %vm3936, %v3947, %v3949
        %v3951 = vshll.u32 %v3911, 8
        %v3952 = vmul.u32.u64.compose %v3951, %v3950
        %v3953 = vextract.low.u32 %v3952
        %v3954 = vextract.high.u32 %v3952
        %v3955 = vmul.u32.u64.compose %v3951, %v3946
        %v3956 = vextract.low.u32 %v3955
        %v3957 = vextract.high.u32 %v3955
        %v3958 = vmul.u32 %v3951, %v3942
        %v3959 = vadd.s32 %v3954, %v3956
        %vm3960 = vc.u32 %v3954, %v3956
        %v3961 = vadd.s32 %v3957, 1
        %v3962 = vsel %vm3960, %v3961, %v3957
        %v3963 = vadd.s32 %v3958, %v3962
        %v3964 = vadd.s32 %v3963, 536870912
        %v3965 = vshrl.u32 %v3964, 30
        %v3966 = vshll.u32 %v3965, 30
        %v3967 = vsub.s32 %v3963, %v3966
        %vm3968 = vcmp.lt.s32.totalorder %v3967, 0
        %v3969 = vsub.s32 0, %v3967
        %v3970 = vsel %vm3968, %v3969, %v3967
        %v3971 = vclz %v3970
        %v3972 = vsub.s32 %v3971, 2
        %vm3973 = vcmp.gt.s32.totalorder 0, %v3972
        %v3974 = vsel %vm3973, 0, %v3972
        %v3975 = vsub.s32 32, %v3974
        %v3976 = vshll.u32 %v3967, %v3974
        %v3977 = vshrl.u32 %v3959, %v3975
        %v3978 = vor.u32 %v3976, %v3977
        %v3979 = vsub.s32 4294967266, %v3974
        %v3980 = vadd.s32 %v3979, 127
        %v3981 = vshll.u32 %v3980, 23
        %v3982 = vor.u32 4788187, %v3981
        %v3983 = vand.u32 2147483647, %v3982
        %v3985 = vcvt.s32.f32 %v3978
        %v3986 = vmul.f32 %v3985, %v3983
        %v3987 = vxor.u32 %v3986, 2147483648
        %v3988 = vsel %vm3905, %v3987, %v3986
        %v3989 = vsub.s32 4, %v3965
        %v3990 = vsel %vm3905, %v3989, %v3965
        %v3991 = vsel %vm3904, %v1301, %v3988
        %v3992 = vsel %vm3904, 0, %v3990
        %v3993 = vcosq.f32.pop %v3991
        %v3994 = vsinq.f32.pop %v3991
        %vm3995 = vweird.f32 %v1301
        %v3996 = vadd.s32 %v3992, 3
        %v3997 = vand.u32 %v3996, 3
        %vm3998 = vcmp.lt.s32.totalorder %v3997, 2
        %vm3999 = vcmp.eq.s32.totalorder %v3997, 0
        %v4000 = vxor.u32 %v3994, 2147483648
        %v4001 = vsel %vm3999, %v3993, %v4000
        %vm4002 = vcmp.eq.s32.totalorder %v3997, 2
        %v4003 = vxor.u32 %v3993, 2147483648
        %v4004 = vsel %vm4002, %v4003, %v3994
        %v4005 = vsel %vm3998, %v4001, %v4004
        %v4006 = vsel %vm3995, nan, %v4005
        %4007 = vst [vmem:[%s164] sm:$0xff] %v1406
        %4008 = vst [vmem:[%s164 + $0x8] sm:$0xff] %v1510
        %4009 = vst [vmem:[%s164 + $0x20] sm:$0xff] %v1614
        %4010 = vst [vmem:[%s164 + $0x28] sm:$0xff] %v1718
        %4011 = vst [vmem:[%s164 + $0x40] sm:$0xff] %v1822
        %4012 = vst [vmem:[%s164 + $0x48] sm:$0xff] %v1926
        %4013 = vst [vmem:[%s164 + $0x60] sm:$0xff] %v2030
        %4014 = vst [vmem:[%s164 + $0x68] sm:$0xff] %v2134
        %4015 = vst [vmem:[%s164 + $0x80] sm:$0xff] %v2238
        %4016 = vst [vmem:[%s164 + $0x88] sm:$0xff] %v2342
        %4017 = vst [vmem:[%s164 + $0xa0] sm:$0xff] %v2446
        %4018 = vst [vmem:[%s164 + $0xa8] sm:$0xff] %v2550
        %4019 = vst [vmem:[%s164 + $0xc0] sm:$0xff] %v2654
        %4020 = vst [vmem:[%s164 + $0xc8] sm:$0xff] %v2758
        %4021 = vst [vmem:[%s164 + $0xe0] sm:$0xff] %v2862
        %4022 = vst [vmem:[%s164 + $0xe8] sm:$0xff] %v2966
        %4023 = vst [vmem:[%s164 + $0x100] sm:$0xff] %v3070
        %4024 = vst [vmem:[%s164 + $0x108] sm:$0xff] %v3174
        %4025 = vst [vmem:[%s164 + $0x120] sm:$0xff] %v3278
        %4026 = vst [vmem:[%s164 + $0x128] sm:$0xff] %v3382
        %4027 = vst [vmem:[%s164 + $0x140] sm:$0xff] %v3486
        %4028 = vst [vmem:[%s164 + $0x148] sm:$0xff] %v3590
        %4029 = vst [vmem:[%s164 + $0x160] sm:$0xff] %v3694
        %4030 = vst [vmem:[%s164 + $0x168] sm:$0xff] %v3798
        %4031 = vst [vmem:[%s164 + $0x180] sm:$0xff] %v3902
        %4032 = vst [vmem:[%s164 + $0x188] sm:$0xff] %v4006
        %v4033 = vand.u32 2147483647, %v1215
        %vm4034 = vcmp.le.f32.partialorder %v4033, 0.7853982
        %vm4035 = vcmp.lt.s32.totalorder %v1215, 0
        %v4036 = vand.u32 %v1215, 2139095040
        %v4037 = vshrl.u32 %v4036, 23
        %v4038 = vsub.s32 %v4037, 127
        %v4039 = vand.u32 2147483647, %v1215
        %v4040 = vand.u32 %v4039, 8388607
        %v4041 = vor.u32 %v4040, 8388608
        %v4042 = vsub.s32 0, %v4041
        %v4043 = vadd.s32 %v4038, 1
        %vm4044 = vcmp.gt.s32.totalorder %v4043, 0
        %v4045 = vsel %vm4044, %v4043, 0
        %v4046 = vshrl.u32 %v4045, 5
        %v4047 = vand.u32 %v4045, 31
        %v4048 = vsub.s32 32, %v4047
        %v4049 = vshrl.u32 683565275, %v4048
        %v4050 = vshll.u32 683565275, %v4047
        %v4051 = vshrl.u32 2475754826, %v4048
        %v4052 = vor.u32 %v4050, %v4051
        %v4053 = vshll.u32 2475754826, %v4047
        %v4054 = vshrl.u32 2131351028, %v4048
        %v4055 = vor.u32 %v4053, %v4054
        %v4056 = vshll.u32 2131351028, %v4047
        %v4057 = vshrl.u32 2102212464, %v4048
        %v4058 = vor.u32 %v4056, %v4057
        %v4059 = vshll.u32 2102212464, %v4047
        %v4060 = vshrl.u32 920167782, %v4048
        %v4061 = vor.u32 %v4059, %v4060
        %v4062 = vshll.u32 920167782, %v4047
        %v4063 = vshrl.u32 1326507024, %v4048
        %v4064 = vor.u32 %v4062, %v4063
        %vm4065 = vcmp.lt.s32.totalorder %v4046, 1
        %vm4066 = vcmp.lt.s32.totalorder %v4046, 2
        %vm4067 = vcmp.lt.s32.totalorder %v4046, 3
        %vm4068 = vcmp.lt.s32.totalorder %v4046, 4
        %v4069 = vsel %vm4065, %v4049, %v4052
        %v4070 = vsel %vm4068, %v4058, 2102212464
        %v4071 = vsel %vm4067, %v4055, %v4070
        %v4072 = vsel %vm4066, %v4069, %v4071
        %v4073 = vsel %vm4065, %v4052, %v4055
        %v4074 = vsel %vm4068, %v4061, 920167782
        %v4075 = vsel %vm4067, %v4058, %v4074
        %v4076 = vsel %vm4066, %v4073, %v4075
        %v4077 = vsel %vm4065, %v4055, %v4058
        %v4078 = vsel %vm4068, %v4064, 1326507024
        %v4079 = vsel %vm4067, %v4061, %v4078
        %v4080 = vsel %vm4066, %v4077, %v4079
        %v4081 = vshll.u32 %v4041, 8
        %v4082 = vmul.u32.u64.compose %v4081, %v4080
        %v4083 = vextract.low.u32 %v4082
        %v4084 = vextract.high.u32 %v4082
        %v4085 = vmul.u32.u64.compose %v4081, %v4076
        %v4086 = vextract.low.u32 %v4085
        %v4087 = vextract.high.u32 %v4085
        %v4088 = vmul.u32 %v4081, %v4072
        %v4089 = vadd.s32 %v4084, %v4086
        %vm4090 = vc.u32 %v4084, %v4086
        %v4091 = vadd.s32 %v4087, 1
        %v4092 = vsel %vm4090, %v4091, %v4087
        %v4093 = vadd.s32 %v4088, %v4092
        %v4094 = vadd.s32 %v4093, 536870912
        %v4095 = vshrl.u32 %v4094, 30
        %v4096 = vshll.u32 %v4095, 30
        %v4097 = vsub.s32 %v4093, %v4096
        %vm4098 = vcmp.lt.s32.totalorder %v4097, 0
        %v4099 = vsub.s32 0, %v4097
        %v4100 = vsel %vm4098, %v4099, %v4097
        %v4101 = vclz %v4100
        %v4102 = vsub.s32 %v4101, 2
        %vm4103 = vcmp.gt.s32.totalorder 0, %v4102
        %v4104 = vsel %vm4103, 0, %v4102
        %v4105 = vsub.s32 32, %v4104
        %v4106 = vshll.u32 %v4097, %v4104
        %v4107 = vshrl.u32 %v4089, %v4105
        %v4108 = vor.u32 %v4106, %v4107
        %v4109 = vsub.s32 4294967266, %v4104
        %v4110 = vadd.s32 %v4109, 127
        %v4111 = vshll.u32 %v4110, 23
        %v4112 = vor.u32 4788187, %v4111
        %v4113 = vand.u32 2147483647, %v4112
        %v4115 = vcvt.s32.f32 %v4108
        %v4116 = vmul.f32 %v4115, %v4113
        %v4117 = vxor.u32 %v4116, 2147483648
        %v4118 = vsel %vm4035, %v4117, %v4116
        %v4119 = vsub.s32 4, %v4095
        %v4120 = vsel %vm4035, %v4119, %v4095
        %v4121 = vsel %vm4034, %v1215, %v4118
        %v4122 = vsel %vm4034, 0, %v4120
        %v4123 = vcosq.f32.pop %v4121
        %v4124 = vsinq.f32.pop %v4121
        %vm4125 = vweird.f32 %v1215
        %v4126 = vand.u32 %v4122, 3
        %vm4127 = vcmp.lt.s32.totalorder %v4126, 2
        %vm4128 = vcmp.eq.s32.totalorder %v4126, 0
        %v4129 = vxor.u32 %v4124, 2147483648
        %v4130 = vsel %vm4128, %v4123, %v4129
        %vm4131 = vcmp.eq.s32.totalorder %v4126, 2
        %v4132 = vxor.u32 %v4123, 2147483648
        %v4133 = vsel %vm4131, %v4132, %v4124
        %v4134 = vsel %vm4127, %v4130, %v4133
        %v4135 = vsel %vm4125, nan, %v4134
        %v4136 = vand.u32 2147483647, %v1217
        %vm4137 = vcmp.le.f32.partialorder %v4136, 0.7853982
        %vm4138 = vcmp.lt.s32.totalorder %v1217, 0
        %v4139 = vand.u32 %v1217, 2139095040
        %v4140 = vshrl.u32 %v4139, 23
        %v4141 = vsub.s32 %v4140, 127
        %v4142 = vand.u32 2147483647, %v1217
        %v4143 = vand.u32 %v4142, 8388607
        %v4144 = vor.u32 %v4143, 8388608
        %v4145 = vsub.s32 0, %v4144
        %v4146 = vadd.s32 %v4141, 1
        %vm4147 = vcmp.gt.s32.totalorder %v4146, 0
        %v4148 = vsel %vm4147, %v4146, 0
        %v4149 = vshrl.u32 %v4148, 5
        %v4150 = vand.u32 %v4148, 31
        %v4151 = vsub.s32 32, %v4150
        %v4152 = vshrl.u32 683565275, %v4151
        %v4153 = vshll.u32 683565275, %v4150
        %v4154 = vshrl.u32 2475754826, %v4151
        %v4155 = vor.u32 %v4153, %v4154
        %v4156 = vshll.u32 2475754826, %v4150
        %v4157 = vshrl.u32 2131351028, %v4151
        %v4158 = vor.u32 %v4156, %v4157
        %v4159 = vshll.u32 2131351028, %v4150
        %v4160 = vshrl.u32 2102212464, %v4151
        %v4161 = vor.u32 %v4159, %v4160
        %v4162 = vshll.u32 2102212464, %v4150
        %v4163 = vshrl.u32 920167782, %v4151
        %v4164 = vor.u32 %v4162, %v4163
        %v4165 = vshll.u32 920167782, %v4150
        %v4166 = vshrl.u32 1326507024, %v4151
        %v4167 = vor.u32 %v4165, %v4166
        %vm4168 = vcmp.lt.s32.totalorder %v4149, 1
        %vm4169 = vcmp.lt.s32.totalorder %v4149, 2
        %vm4170 = vcmp.lt.s32.totalorder %v4149, 3
        %vm4171 = vcmp.lt.s32.totalorder %v4149, 4
        %v4172 = vsel %vm4168, %v4152, %v4155
        %v4173 = vsel %vm4171, %v4161, 2102212464
        %v4174 = vsel %vm4170, %v4158, %v4173
        %v4175 = vsel %vm4169, %v4172, %v4174
        %v4176 = vsel %vm4168, %v4155, %v4158
        %v4177 = vsel %vm4171, %v4164, 920167782
        %v4178 = vsel %vm4170, %v4161, %v4177
        %v4179 = vsel %vm4169, %v4176, %v4178
        %v4180 = vsel %vm4168, %v4158, %v4161
        %v4181 = vsel %vm4171, %v4167, 1326507024
        %v4182 = vsel %vm4170, %v4164, %v4181
        %v4183 = vsel %vm4169, %v4180, %v4182
        %v4184 = vshll.u32 %v4144, 8
        %v4185 = vmul.u32.u64.compose %v4184, %v4183
        %v4186 = vextract.low.u32 %v4185
        %v4187 = vextract.high.u32 %v4185
        %v4188 = vmul.u32.u64.compose %v4184, %v4179
        %v4189 = vextract.low.u32 %v4188
        %v4190 = vextract.high.u32 %v4188
        %v4191 = vmul.u32 %v4184, %v4175
        %v4192 = vadd.s32 %v4187, %v4189
        %vm4193 = vc.u32 %v4187, %v4189
        %v4194 = vadd.s32 %v4190, 1
        %v4195 = vsel %vm4193, %v4194, %v4190
        %v4196 = vadd.s32 %v4191, %v4195
        %v4197 = vadd.s32 %v4196, 536870912
        %v4198 = vshrl.u32 %v4197, 30
        %v4199 = vshll.u32 %v4198, 30
        %v4200 = vsub.s32 %v4196, %v4199
        %vm4201 = vcmp.lt.s32.totalorder %v4200, 0
        %v4202 = vsub.s32 0, %v4200
        %v4203 = vsel %vm4201, %v4202, %v4200
        %v4204 = vclz %v4203
        %v4205 = vsub.s32 %v4204, 2
        %vm4206 = vcmp.gt.s32.totalorder 0, %v4205
        %v4207 = vsel %vm4206, 0, %v4205
        %v4208 = vsub.s32 32, %v4207
        %v4209 = vshll.u32 %v4200, %v4207
        %v4210 = vshrl.u32 %v4192, %v4208
        %v4211 = vor.u32 %v4209, %v4210
        %v4212 = vsub.s32 4294967266, %v4207
        %v4213 = vadd.s32 %v4212, 127
        %v4214 = vshll.u32 %v4213, 23
        %v4215 = vor.u32 4788187, %v4214
        %v4216 = vand.u32 2147483647, %v4215
        %v4218 = vcvt.s32.f32 %v4211
        %v4219 = vmul.f32 %v4218, %v4216
        %v4220 = vxor.u32 %v4219, 2147483648
        %v4221 = vsel %vm4138, %v4220, %v4219
        %v4222 = vsub.s32 4, %v4198
        %v4223 = vsel %vm4138, %v4222, %v4198
        %v4224 = vsel %vm4137, %v1217, %v4221
        %v4225 = vsel %vm4137, 0, %v4223
        %v4226 = vcosq.f32.pop %v4224
        %v4227 = vsinq.f32.pop %v4224
        %vm4228 = vweird.f32 %v1217
        %v4229 = vand.u32 %v4225, 3
        %vm4230 = vcmp.lt.s32.totalorder %v4229, 2
        %vm4231 = vcmp.eq.s32.totalorder %v4229, 0
        %v4232 = vxor.u32 %v4227, 2147483648
        %v4233 = vsel %vm4231, %v4226, %v4232
        %vm4234 = vcmp.eq.s32.totalorder %v4229, 2
        %v4235 = vxor.u32 %v4226, 2147483648
        %v4236 = vsel %vm4234, %v4235, %v4227
        %v4237 = vsel %vm4230, %v4233, %v4236
        %v4238 = vsel %vm4228, nan, %v4237
        %v4239 = vand.u32 2147483647, %v1222
        %vm4240 = vcmp.le.f32.partialorder %v4239, 0.7853982
        %vm4241 = vcmp.lt.s32.totalorder %v1222, 0
        %v4242 = vand.u32 %v1222, 2139095040
        %v4243 = vshrl.u32 %v4242, 23
        %v4244 = vsub.s32 %v4243, 127
        %v4245 = vand.u32 2147483647, %v1222
        %v4246 = vand.u32 %v4245, 8388607
        %v4247 = vor.u32 %v4246, 8388608
        %v4248 = vsub.s32 0, %v4247
        %v4249 = vadd.s32 %v4244, 1
        %vm4250 = vcmp.gt.s32.totalorder %v4249, 0
        %v4251 = vsel %vm4250, %v4249, 0
        %v4252 = vshrl.u32 %v4251, 5
        %v4253 = vand.u32 %v4251, 31
        %v4254 = vsub.s32 32, %v4253
        %v4255 = vshrl.u32 683565275, %v4254
        %v4256 = vshll.u32 683565275, %v4253
        %v4257 = vshrl.u32 2475754826, %v4254
        %v4258 = vor.u32 %v4256, %v4257
        %v4259 = vshll.u32 2475754826, %v4253
        %v4260 = vshrl.u32 2131351028, %v4254
        %v4261 = vor.u32 %v4259, %v4260
        %v4262 = vshll.u32 2131351028, %v4253
        %v4263 = vshrl.u32 2102212464, %v4254
        %v4264 = vor.u32 %v4262, %v4263
        %v4265 = vshll.u32 2102212464, %v4253
        %v4266 = vshrl.u32 920167782, %v4254
        %v4267 = vor.u32 %v4265, %v4266
        %v4268 = vshll.u32 920167782, %v4253
        %v4269 = vshrl.u32 1326507024, %v4254
        %v4270 = vor.u32 %v4268, %v4269
        %vm4271 = vcmp.lt.s32.totalorder %v4252, 1
        %vm4272 = vcmp.lt.s32.totalorder %v4252, 2
        %vm4273 = vcmp.lt.s32.totalorder %v4252, 3
        %vm4274 = vcmp.lt.s32.totalorder %v4252, 4
        %v4275 = vsel %vm4271, %v4255, %v4258
        %v4276 = vsel %vm4274, %v4264, 2102212464
        %v4277 = vsel %vm4273, %v4261, %v4276
        %v4278 = vsel %vm4272, %v4275, %v4277
        %v4279 = vsel %vm4271, %v4258, %v4261
        %v4280 = vsel %vm4274, %v4267, 920167782
        %v4281 = vsel %vm4273, %v4264, %v4280
        %v4282 = vsel %vm4272, %v4279, %v4281
        %v4283 = vsel %vm4271, %v4261, %v4264
        %v4284 = vsel %vm4274, %v4270, 1326507024
        %v4285 = vsel %vm4273, %v4267, %v4284
        %v4286 = vsel %vm4272, %v4283, %v4285
        %v4287 = vshll.u32 %v4247, 8
        %v4288 = vmul.u32.u64.compose %v4287, %v4286
        %v4289 = vextract.low.u32 %v4288
        %v4290 = vextract.high.u32 %v4288
        %v4291 = vmul.u32.u64.compose %v4287, %v4282
        %v4292 = vextract.low.u32 %v4291
        %v4293 = vextract.high.u32 %v4291
        %v4294 = vmul.u32 %v4287, %v4278
        %v4295 = vadd.s32 %v4290, %v4292
        %vm4296 = vc.u32 %v4290, %v4292
        %v4297 = vadd.s32 %v4293, 1
        %v4298 = vsel %vm4296, %v4297, %v4293
        %v4299 = vadd.s32 %v4294, %v4298
        %v4300 = vadd.s32 %v4299, 536870912
        %v4301 = vshrl.u32 %v4300, 30
        %v4302 = vshll.u32 %v4301, 30
        %v4303 = vsub.s32 %v4299, %v4302
        %vm4304 = vcmp.lt.s32.totalorder %v4303, 0
        %v4305 = vsub.s32 0, %v4303
        %v4306 = vsel %vm4304, %v4305, %v4303
        %v4307 = vclz %v4306
        %v4308 = vsub.s32 %v4307, 2
        %vm4309 = vcmp.gt.s32.totalorder 0, %v4308
        %v4310 = vsel %vm4309, 0, %v4308
        %v4311 = vsub.s32 32, %v4310
        %v4312 = vshll.u32 %v4303, %v4310
        %v4313 = vshrl.u32 %v4295, %v4311
        %v4314 = vor.u32 %v4312, %v4313
        %v4315 = vsub.s32 4294967266, %v4310
        %v4316 = vadd.s32 %v4315, 127
        %v4317 = vshll.u32 %v4316, 23
        %v4318 = vor.u32 4788187, %v4317
        %v4319 = vand.u32 2147483647, %v4318
        %v4321 = vcvt.s32.f32 %v4314
        %v4322 = vmul.f32 %v4321, %v4319
        %v4323 = vxor.u32 %v4322, 2147483648
        %v4324 = vsel %vm4241, %v4323, %v4322
        %v4325 = vsub.s32 4, %v4301
        %v4326 = vsel %vm4241, %v4325, %v4301
        %v4327 = vsel %vm4240, %v1222, %v4324
        %v4328 = vsel %vm4240, 0, %v4326
        %v4329 = vcosq.f32.pop %v4327
        %v4330 = vsinq.f32.pop %v4327
        %vm4331 = vweird.f32 %v1222
        %v4332 = vand.u32 %v4328, 3
        %vm4333 = vcmp.lt.s32.totalorder %v4332, 2
        %vm4334 = vcmp.eq.s32.totalorder %v4332, 0
        %v4335 = vxor.u32 %v4330, 2147483648
        %v4336 = vsel %vm4334, %v4329, %v4335
        %vm4337 = vcmp.eq.s32.totalorder %v4332, 2
        %v4338 = vxor.u32 %v4329, 2147483648
        %v4339 = vsel %vm4337, %v4338, %v4330
        %v4340 = vsel %vm4333, %v4336, %v4339
        %v4341 = vsel %vm4331, nan, %v4340
        %v4342 = vand.u32 2147483647, %v1224
        %vm4343 = vcmp.le.f32.partialorder %v4342, 0.7853982
        %vm4344 = vcmp.lt.s32.totalorder %v1224, 0
        %v4345 = vand.u32 %v1224, 2139095040
        %v4346 = vshrl.u32 %v4345, 23
        %v4347 = vsub.s32 %v4346, 127
        %v4348 = vand.u32 2147483647, %v1224
        %v4349 = vand.u32 %v4348, 8388607
        %v4350 = vor.u32 %v4349, 8388608
        %v4351 = vsub.s32 0, %v4350
        %v4352 = vadd.s32 %v4347, 1
        %vm4353 = vcmp.gt.s32.totalorder %v4352, 0
        %v4354 = vsel %vm4353, %v4352, 0
        %v4355 = vshrl.u32 %v4354, 5
        %v4356 = vand.u32 %v4354, 31
        %v4357 = vsub.s32 32, %v4356
        %v4358 = vshrl.u32 683565275, %v4357
        %v4359 = vshll.u32 683565275, %v4356
        %v4360 = vshrl.u32 2475754826, %v4357
        %v4361 = vor.u32 %v4359, %v4360
        %v4362 = vshll.u32 2475754826, %v4356
        %v4363 = vshrl.u32 2131351028, %v4357
        %v4364 = vor.u32 %v4362, %v4363
        %v4365 = vshll.u32 2131351028, %v4356
        %v4366 = vshrl.u32 2102212464, %v4357
        %v4367 = vor.u32 %v4365, %v4366
        %v4368 = vshll.u32 2102212464, %v4356
        %v4369 = vshrl.u32 920167782, %v4357
        %v4370 = vor.u32 %v4368, %v4369
        %v4371 = vshll.u32 920167782, %v4356
        %v4372 = vshrl.u32 1326507024, %v4357
        %v4373 = vor.u32 %v4371, %v4372
        %vm4374 = vcmp.lt.s32.totalorder %v4355, 1
        %vm4375 = vcmp.lt.s32.totalorder %v4355, 2
        %vm4376 = vcmp.lt.s32.totalorder %v4355, 3
        %vm4377 = vcmp.lt.s32.totalorder %v4355, 4
        %v4378 = vsel %vm4374, %v4358, %v4361
        %v4379 = vsel %vm4377, %v4367, 2102212464
        %v4380 = vsel %vm4376, %v4364, %v4379
        %v4381 = vsel %vm4375, %v4378, %v4380
        %v4382 = vsel %vm4374, %v4361, %v4364
        %v4383 = vsel %vm4377, %v4370, 920167782
        %v4384 = vsel %vm4376, %v4367, %v4383
        %v4385 = vsel %vm4375, %v4382, %v4384
        %v4386 = vsel %vm4374, %v4364, %v4367
        %v4387 = vsel %vm4377, %v4373, 1326507024
        %v4388 = vsel %vm4376, %v4370, %v4387
        %v4389 = vsel %vm4375, %v4386, %v4388
        %v4390 = vshll.u32 %v4350, 8
        %v4391 = vmul.u32.u64.compose %v4390, %v4389
        %v4392 = vextract.low.u32 %v4391
        %v4393 = vextract.high.u32 %v4391
        %v4394 = vmul.u32.u64.compose %v4390, %v4385
        %v4395 = vextract.low.u32 %v4394
        %v4396 = vextract.high.u32 %v4394
        %v4397 = vmul.u32 %v4390, %v4381
        %v4398 = vadd.s32 %v4393, %v4395
        %vm4399 = vc.u32 %v4393, %v4395
        %v4400 = vadd.s32 %v4396, 1
        %v4401 = vsel %vm4399, %v4400, %v4396
        %v4402 = vadd.s32 %v4397, %v4401
        %v4403 = vadd.s32 %v4402, 536870912
        %v4404 = vshrl.u32 %v4403, 30
        %v4405 = vshll.u32 %v4404, 30
        %v4406 = vsub.s32 %v4402, %v4405
        %vm4407 = vcmp.lt.s32.totalorder %v4406, 0
        %v4408 = vsub.s32 0, %v4406
        %v4409 = vsel %vm4407, %v4408, %v4406
        %v4410 = vclz %v4409
        %v4411 = vsub.s32 %v4410, 2
        %vm4412 = vcmp.gt.s32.totalorder 0, %v4411
        %v4413 = vsel %vm4412, 0, %v4411
        %v4414 = vsub.s32 32, %v4413
        %v4415 = vshll.u32 %v4406, %v4413
        %v4416 = vshrl.u32 %v4398, %v4414
        %v4417 = vor.u32 %v4415, %v4416
        %v4418 = vsub.s32 4294967266, %v4413
        %v4419 = vadd.s32 %v4418, 127
        %v4420 = vshll.u32 %v4419, 23
        %v4421 = vor.u32 4788187, %v4420
        %v4422 = vand.u32 2147483647, %v4421
        %v4424 = vcvt.s32.f32 %v4417
        %v4425 = vmul.f32 %v4424, %v4422
        %v4426 = vxor.u32 %v4425, 2147483648
        %v4427 = vsel %vm4344, %v4426, %v4425
        %v4428 = vsub.s32 4, %v4404
        %v4429 = vsel %vm4344, %v4428, %v4404
        %v4430 = vsel %vm4343, %v1224, %v4427
        %v4431 = vsel %vm4343, 0, %v4429
        %v4432 = vcosq.f32.pop %v4430
        %v4433 = vsinq.f32.pop %v4430
        %vm4434 = vweird.f32 %v1224
        %v4435 = vand.u32 %v4431, 3
        %vm4436 = vcmp.lt.s32.totalorder %v4435, 2
        %vm4437 = vcmp.eq.s32.totalorder %v4435, 0
        %v4438 = vxor.u32 %v4433, 2147483648
        %v4439 = vsel %vm4437, %v4432, %v4438
        %vm4440 = vcmp.eq.s32.totalorder %v4435, 2
        %v4441 = vxor.u32 %v4432, 2147483648
        %v4442 = vsel %vm4440, %v4441, %v4433
        %v4443 = vsel %vm4436, %v4439, %v4442
        %v4444 = vsel %vm4434, nan, %v4443
        %v4445 = vand.u32 2147483647, %v1229
        %vm4446 = vcmp.le.f32.partialorder %v4445, 0.7853982
        %vm4447 = vcmp.lt.s32.totalorder %v1229, 0
        %v4448 = vand.u32 %v1229, 2139095040
        %v4449 = vshrl.u32 %v4448, 23
        %v4450 = vsub.s32 %v4449, 127
        %v4451 = vand.u32 2147483647, %v1229
        %v4452 = vand.u32 %v4451, 8388607
        %v4453 = vor.u32 %v4452, 8388608
        %v4454 = vsub.s32 0, %v4453
        %v4455 = vadd.s32 %v4450, 1
        %vm4456 = vcmp.gt.s32.totalorder %v4455, 0
        %v4457 = vsel %vm4456, %v4455, 0
        %v4458 = vshrl.u32 %v4457, 5
        %v4459 = vand.u32 %v4457, 31
        %v4460 = vsub.s32 32, %v4459
        %v4461 = vshrl.u32 683565275, %v4460
        %v4462 = vshll.u32 683565275, %v4459
        %v4463 = vshrl.u32 2475754826, %v4460
        %v4464 = vor.u32 %v4462, %v4463
        %v4465 = vshll.u32 2475754826, %v4459
        %v4466 = vshrl.u32 2131351028, %v4460
        %v4467 = vor.u32 %v4465, %v4466
        %v4468 = vshll.u32 2131351028, %v4459
        %v4469 = vshrl.u32 2102212464, %v4460
        %v4470 = vor.u32 %v4468, %v4469
        %v4471 = vshll.u32 2102212464, %v4459
        %v4472 = vshrl.u32 920167782, %v4460
        %v4473 = vor.u32 %v4471, %v4472
        %v4474 = vshll.u32 920167782, %v4459
        %v4475 = vshrl.u32 1326507024, %v4460
        %v4476 = vor.u32 %v4474, %v4475
        %vm4477 = vcmp.lt.s32.totalorder %v4458, 1
        %vm4478 = vcmp.lt.s32.totalorder %v4458, 2
        %vm4479 = vcmp.lt.s32.totalorder %v4458, 3
        %vm4480 = vcmp.lt.s32.totalorder %v4458, 4
        %v4481 = vsel %vm4477, %v4461, %v4464
        %v4482 = vsel %vm4480, %v4470, 2102212464
        %v4483 = vsel %vm4479, %v4467, %v4482
        %v4484 = vsel %vm4478, %v4481, %v4483
        %v4485 = vsel %vm4477, %v4464, %v4467
        %v4486 = vsel %vm4480, %v4473, 920167782
        %v4487 = vsel %vm4479, %v4470, %v4486
        %v4488 = vsel %vm4478, %v4485, %v4487
        %v4489 = vsel %vm4477, %v4467, %v4470
        %v4490 = vsel %vm4480, %v4476, 1326507024
        %v4491 = vsel %vm4479, %v4473, %v4490
        %v4492 = vsel %vm4478, %v4489, %v4491
        %v4493 = vshll.u32 %v4453, 8
        %v4494 = vmul.u32.u64.compose %v4493, %v4492
        %v4495 = vextract.low.u32 %v4494
        %v4496 = vextract.high.u32 %v4494
        %v4497 = vmul.u32.u64.compose %v4493, %v4488
        %v4498 = vextract.low.u32 %v4497
        %v4499 = vextract.high.u32 %v4497
        %v4500 = vmul.u32 %v4493, %v4484
        %v4501 = vadd.s32 %v4496, %v4498
        %vm4502 = vc.u32 %v4496, %v4498
        %v4503 = vadd.s32 %v4499, 1
        %v4504 = vsel %vm4502, %v4503, %v4499
        %v4505 = vadd.s32 %v4500, %v4504
        %v4506 = vadd.s32 %v4505, 536870912
        %v4507 = vshrl.u32 %v4506, 30
        %v4508 = vshll.u32 %v4507, 30
        %v4509 = vsub.s32 %v4505, %v4508
        %vm4510 = vcmp.lt.s32.totalorder %v4509, 0
        %v4511 = vsub.s32 0, %v4509
        %v4512 = vsel %vm4510, %v4511, %v4509
        %v4513 = vclz %v4512
        %v4514 = vsub.s32 %v4513, 2
        %vm4515 = vcmp.gt.s32.totalorder 0, %v4514
        %v4516 = vsel %vm4515, 0, %v4514
        %v4517 = vsub.s32 32, %v4516
        %v4518 = vshll.u32 %v4509, %v4516
        %v4519 = vshrl.u32 %v4501, %v4517
        %v4520 = vor.u32 %v4518, %v4519
        %v4521 = vsub.s32 4294967266, %v4516
        %v4522 = vadd.s32 %v4521, 127
        %v4523 = vshll.u32 %v4522, 23
        %v4524 = vor.u32 4788187, %v4523
        %v4525 = vand.u32 2147483647, %v4524
        %v4527 = vcvt.s32.f32 %v4520
        %v4528 = vmul.f32 %v4527, %v4525
        %v4529 = vxor.u32 %v4528, 2147483648
        %v4530 = vsel %vm4447, %v4529, %v4528
        %v4531 = vsub.s32 4, %v4507
        %v4532 = vsel %vm4447, %v4531, %v4507
        %v4533 = vsel %vm4446, %v1229, %v4530
        %v4534 = vsel %vm4446, 0, %v4532
        %v4535 = vcosq.f32.pop %v4533
        %v4536 = vsinq.f32.pop %v4533
        %vm4537 = vweird.f32 %v1229
        %v4538 = vand.u32 %v4534, 3
        %vm4539 = vcmp.lt.s32.totalorder %v4538, 2
        %vm4540 = vcmp.eq.s32.totalorder %v4538, 0
        %v4541 = vxor.u32 %v4536, 2147483648
        %v4542 = vsel %vm4540, %v4535, %v4541
        %vm4543 = vcmp.eq.s32.totalorder %v4538, 2
        %v4544 = vxor.u32 %v4535, 2147483648
        %v4545 = vsel %vm4543, %v4544, %v4536
        %v4546 = vsel %vm4539, %v4542, %v4545
        %v4547 = vsel %vm4537, nan, %v4546
        %v4548 = vand.u32 2147483647, %v1231
        %vm4549 = vcmp.le.f32.partialorder %v4548, 0.7853982
        %vm4550 = vcmp.lt.s32.totalorder %v1231, 0
        %v4551 = vand.u32 %v1231, 2139095040
        %v4552 = vshrl.u32 %v4551, 23
        %v4553 = vsub.s32 %v4552, 127
        %v4554 = vand.u32 2147483647, %v1231
        %v4555 = vand.u32 %v4554, 8388607
        %v4556 = vor.u32 %v4555, 8388608
        %v4557 = vsub.s32 0, %v4556
        %v4558 = vadd.s32 %v4553, 1
        %vm4559 = vcmp.gt.s32.totalorder %v4558, 0
        %v4560 = vsel %vm4559, %v4558, 0
        %v4561 = vshrl.u32 %v4560, 5
        %v4562 = vand.u32 %v4560, 31
        %v4563 = vsub.s32 32, %v4562
        %v4564 = vshrl.u32 683565275, %v4563
        %v4565 = vshll.u32 683565275, %v4562
        %v4566 = vshrl.u32 2475754826, %v4563
        %v4567 = vor.u32 %v4565, %v4566
        %v4568 = vshll.u32 2475754826, %v4562
        %v4569 = vshrl.u32 2131351028, %v4563
        %v4570 = vor.u32 %v4568, %v4569
        %v4571 = vshll.u32 2131351028, %v4562
        %v4572 = vshrl.u32 2102212464, %v4563
        %v4573 = vor.u32 %v4571, %v4572
        %v4574 = vshll.u32 2102212464, %v4562
        %v4575 = vshrl.u32 920167782, %v4563
        %v4576 = vor.u32 %v4574, %v4575
        %v4577 = vshll.u32 920167782, %v4562
        %v4578 = vshrl.u32 1326507024, %v4563
        %v4579 = vor.u32 %v4577, %v4578
        %vm4580 = vcmp.lt.s32.totalorder %v4561, 1
        %vm4581 = vcmp.lt.s32.totalorder %v4561, 2
        %vm4582 = vcmp.lt.s32.totalorder %v4561, 3
        %vm4583 = vcmp.lt.s32.totalorder %v4561, 4
        %v4584 = vsel %vm4580, %v4564, %v4567
        %v4585 = vsel %vm4583, %v4573, 2102212464
        %v4586 = vsel %vm4582, %v4570, %v4585
        %v4587 = vsel %vm4581, %v4584, %v4586
        %v4588 = vsel %vm4580, %v4567, %v4570
        %v4589 = vsel %vm4583, %v4576, 920167782
        %v4590 = vsel %vm4582, %v4573, %v4589
        %v4591 = vsel %vm4581, %v4588, %v4590
        %v4592 = vsel %vm4580, %v4570, %v4573
        %v4593 = vsel %vm4583, %v4579, 1326507024
        %v4594 = vsel %vm4582, %v4576, %v4593
        %v4595 = vsel %vm4581, %v4592, %v4594
        %v4596 = vshll.u32 %v4556, 8
        %v4597 = vmul.u32.u64.compose %v4596, %v4595
        %v4598 = vextract.low.u32 %v4597
        %v4599 = vextract.high.u32 %v4597
        %v4600 = vmul.u32.u64.compose %v4596, %v4591
        %v4601 = vextract.low.u32 %v4600
        %v4602 = vextract.high.u32 %v4600
        %v4603 = vmul.u32 %v4596, %v4587
        %v4604 = vadd.s32 %v4599, %v4601
        %vm4605 = vc.u32 %v4599, %v4601
        %v4606 = vadd.s32 %v4602, 1
        %v4607 = vsel %vm4605, %v4606, %v4602
        %v4608 = vadd.s32 %v4603, %v4607
        %v4609 = vadd.s32 %v4608, 536870912
        %v4610 = vshrl.u32 %v4609, 30
        %v4611 = vshll.u32 %v4610, 30
        %v4612 = vsub.s32 %v4608, %v4611
        %vm4613 = vcmp.lt.s32.totalorder %v4612, 0
        %v4614 = vsub.s32 0, %v4612
        %v4615 = vsel %vm4613, %v4614, %v4612
        %v4616 = vclz %v4615
        %v4617 = vsub.s32 %v4616, 2
        %vm4618 = vcmp.gt.s32.totalorder 0, %v4617
        %v4619 = vsel %vm4618, 0, %v4617
        %v4620 = vsub.s32 32, %v4619
        %v4621 = vshll.u32 %v4612, %v4619
        %v4622 = vshrl.u32 %v4604, %v4620
        %v4623 = vor.u32 %v4621, %v4622
        %v4624 = vsub.s32 4294967266, %v4619
        %v4625 = vadd.s32 %v4624, 127
        %v4626 = vshll.u32 %v4625, 23
        %v4627 = vor.u32 4788187, %v4626
        %v4628 = vand.u32 2147483647, %v4627
        %v4630 = vcvt.s32.f32 %v4623
        %v4631 = vmul.f32 %v4630, %v4628
        %v4632 = vxor.u32 %v4631, 2147483648
        %v4633 = vsel %vm4550, %v4632, %v4631
        %v4634 = vsub.s32 4, %v4610
        %v4635 = vsel %vm4550, %v4634, %v4610
        %v4636 = vsel %vm4549, %v1231, %v4633
        %v4637 = vsel %vm4549, 0, %v4635
        %v4638 = vcosq.f32.pop %v4636
        %v4639 = vsinq.f32.pop %v4636
        %vm4640 = vweird.f32 %v1231
        %v4641 = vand.u32 %v4637, 3
        %vm4642 = vcmp.lt.s32.totalorder %v4641, 2
        %vm4643 = vcmp.eq.s32.totalorder %v4641, 0
        %v4644 = vxor.u32 %v4639, 2147483648
        %v4645 = vsel %vm4643, %v4638, %v4644
        %vm4646 = vcmp.eq.s32.totalorder %v4641, 2
        %v4647 = vxor.u32 %v4638, 2147483648
        %v4648 = vsel %vm4646, %v4647, %v4639
        %v4649 = vsel %vm4642, %v4645, %v4648
        %v4650 = vsel %vm4640, nan, %v4649
        %v4651 = vand.u32 2147483647, %v1236
        %vm4652 = vcmp.le.f32.partialorder %v4651, 0.7853982
        %vm4653 = vcmp.lt.s32.totalorder %v1236, 0
        %v4654 = vand.u32 %v1236, 2139095040
        %v4655 = vshrl.u32 %v4654, 23
        %v4656 = vsub.s32 %v4655, 127
        %v4657 = vand.u32 2147483647, %v1236
        %v4658 = vand.u32 %v4657, 8388607
        %v4659 = vor.u32 %v4658, 8388608
        %v4660 = vsub.s32 0, %v4659
        %v4661 = vadd.s32 %v4656, 1
        %vm4662 = vcmp.gt.s32.totalorder %v4661, 0
        %v4663 = vsel %vm4662, %v4661, 0
        %v4664 = vshrl.u32 %v4663, 5
        %v4665 = vand.u32 %v4663, 31
        %v4666 = vsub.s32 32, %v4665
        %v4667 = vshrl.u32 683565275, %v4666
        %v4668 = vshll.u32 683565275, %v4665
        %v4669 = vshrl.u32 2475754826, %v4666
        %v4670 = vor.u32 %v4668, %v4669
        %v4671 = vshll.u32 2475754826, %v4665
        %v4672 = vshrl.u32 2131351028, %v4666
        %v4673 = vor.u32 %v4671, %v4672
        %v4674 = vshll.u32 2131351028, %v4665
        %v4675 = vshrl.u32 2102212464, %v4666
        %v4676 = vor.u32 %v4674, %v4675
        %v4677 = vshll.u32 2102212464, %v4665
        %v4678 = vshrl.u32 920167782, %v4666
        %v4679 = vor.u32 %v4677, %v4678
        %v4680 = vshll.u32 920167782, %v4665
        %v4681 = vshrl.u32 1326507024, %v4666
        %v4682 = vor.u32 %v4680, %v4681
        %vm4683 = vcmp.lt.s32.totalorder %v4664, 1
        %vm4684 = vcmp.lt.s32.totalorder %v4664, 2
        %vm4685 = vcmp.lt.s32.totalorder %v4664, 3
        %vm4686 = vcmp.lt.s32.totalorder %v4664, 4
        %v4687 = vsel %vm4683, %v4667, %v4670
        %v4688 = vsel %vm4686, %v4676, 2102212464
        %v4689 = vsel %vm4685, %v4673, %v4688
        %v4690 = vsel %vm4684, %v4687, %v4689
        %v4691 = vsel %vm4683, %v4670, %v4673
        %v4692 = vsel %vm4686, %v4679, 920167782
        %v4693 = vsel %vm4685, %v4676, %v4692
        %v4694 = vsel %vm4684, %v4691, %v4693
        %v4695 = vsel %vm4683, %v4673, %v4676
        %v4696 = vsel %vm4686, %v4682, 1326507024
        %v4697 = vsel %vm4685, %v4679, %v4696
        %v4698 = vsel %vm4684, %v4695, %v4697
        %v4699 = vshll.u32 %v4659, 8
        %v4700 = vmul.u32.u64.compose %v4699, %v4698
        %v4701 = vextract.low.u32 %v4700
        %v4702 = vextract.high.u32 %v4700
        %v4703 = vmul.u32.u64.compose %v4699, %v4694
        %v4704 = vextract.low.u32 %v4703
        %v4705 = vextract.high.u32 %v4703
        %v4706 = vmul.u32 %v4699, %v4690
        %v4707 = vadd.s32 %v4702, %v4704
        %vm4708 = vc.u32 %v4702, %v4704
        %v4709 = vadd.s32 %v4705, 1
        %v4710 = vsel %vm4708, %v4709, %v4705
        %v4711 = vadd.s32 %v4706, %v4710
        %v4712 = vadd.s32 %v4711, 536870912
        %v4713 = vshrl.u32 %v4712, 30
        %v4714 = vshll.u32 %v4713, 30
        %v4715 = vsub.s32 %v4711, %v4714
        %vm4716 = vcmp.lt.s32.totalorder %v4715, 0
        %v4717 = vsub.s32 0, %v4715
        %v4718 = vsel %vm4716, %v4717, %v4715
        %v4719 = vclz %v4718
        %v4720 = vsub.s32 %v4719, 2
        %vm4721 = vcmp.gt.s32.totalorder 0, %v4720
        %v4722 = vsel %vm4721, 0, %v4720
        %v4723 = vsub.s32 32, %v4722
        %v4724 = vshll.u32 %v4715, %v4722
        %v4725 = vshrl.u32 %v4707, %v4723
        %v4726 = vor.u32 %v4724, %v4725
        %v4727 = vsub.s32 4294967266, %v4722
        %v4728 = vadd.s32 %v4727, 127
        %v4729 = vshll.u32 %v4728, 23
        %v4730 = vor.u32 4788187, %v4729
        %v4731 = vand.u32 2147483647, %v4730
        %v4733 = vcvt.s32.f32 %v4726
        %v4734 = vmul.f32 %v4733, %v4731
        %v4735 = vxor.u32 %v4734, 2147483648
        %v4736 = vsel %vm4653, %v4735, %v4734
        %v4737 = vsub.s32 4, %v4713
        %v4738 = vsel %vm4653, %v4737, %v4713
        %v4739 = vsel %vm4652, %v1236, %v4736
        %v4740 = vsel %vm4652, 0, %v4738
        %v4741 = vcosq.f32.pop %v4739
        %v4742 = vsinq.f32.pop %v4739
        %vm4743 = vweird.f32 %v1236
        %v4744 = vand.u32 %v4740, 3
        %vm4745 = vcmp.lt.s32.totalorder %v4744, 2
        %vm4746 = vcmp.eq.s32.totalorder %v4744, 0
        %v4747 = vxor.u32 %v4742, 2147483648
        %v4748 = vsel %vm4746, %v4741, %v4747
        %vm4749 = vcmp.eq.s32.totalorder %v4744, 2
        %v4750 = vxor.u32 %v4741, 2147483648
        %v4751 = vsel %vm4749, %v4750, %v4742
        %v4752 = vsel %vm4745, %v4748, %v4751
        %v4753 = vsel %vm4743, nan, %v4752
        %v4754 = vand.u32 2147483647, %v1238
        %vm4755 = vcmp.le.f32.partialorder %v4754, 0.7853982
        %vm4756 = vcmp.lt.s32.totalorder %v1238, 0
        %v4757 = vand.u32 %v1238, 2139095040
        %v4758 = vshrl.u32 %v4757, 23
        %v4759 = vsub.s32 %v4758, 127
        %v4760 = vand.u32 2147483647, %v1238
        %v4761 = vand.u32 %v4760, 8388607
        %v4762 = vor.u32 %v4761, 8388608
        %v4763 = vsub.s32 0, %v4762
        %v4764 = vadd.s32 %v4759, 1
        %vm4765 = vcmp.gt.s32.totalorder %v4764, 0
        %v4766 = vsel %vm4765, %v4764, 0
        %v4767 = vshrl.u32 %v4766, 5
        %v4768 = vand.u32 %v4766, 31
        %v4769 = vsub.s32 32, %v4768
        %v4770 = vshrl.u32 683565275, %v4769
        %v4771 = vshll.u32 683565275, %v4768
        %v4772 = vshrl.u32 2475754826, %v4769
        %v4773 = vor.u32 %v4771, %v4772
        %v4774 = vshll.u32 2475754826, %v4768
        %v4775 = vshrl.u32 2131351028, %v4769
        %v4776 = vor.u32 %v4774, %v4775
        %v4777 = vshll.u32 2131351028, %v4768
        %v4778 = vshrl.u32 2102212464, %v4769
        %v4779 = vor.u32 %v4777, %v4778
        %v4780 = vshll.u32 2102212464, %v4768
        %v4781 = vshrl.u32 920167782, %v4769
        %v4782 = vor.u32 %v4780, %v4781
        %v4783 = vshll.u32 920167782, %v4768
        %v4784 = vshrl.u32 1326507024, %v4769
        %v4785 = vor.u32 %v4783, %v4784
        %vm4786 = vcmp.lt.s32.totalorder %v4767, 1
        %vm4787 = vcmp.lt.s32.totalorder %v4767, 2
        %vm4788 = vcmp.lt.s32.totalorder %v4767, 3
        %vm4789 = vcmp.lt.s32.totalorder %v4767, 4
        %v4790 = vsel %vm4786, %v4770, %v4773
        %v4791 = vsel %vm4789, %v4779, 2102212464
        %v4792 = vsel %vm4788, %v4776, %v4791
        %v4793 = vsel %vm4787, %v4790, %v4792
        %v4794 = vsel %vm4786, %v4773, %v4776
        %v4795 = vsel %vm4789, %v4782, 920167782
        %v4796 = vsel %vm4788, %v4779, %v4795
        %v4797 = vsel %vm4787, %v4794, %v4796
        %v4798 = vsel %vm4786, %v4776, %v4779
        %v4799 = vsel %vm4789, %v4785, 1326507024
        %v4800 = vsel %vm4788, %v4782, %v4799
        %v4801 = vsel %vm4787, %v4798, %v4800
        %v4802 = vshll.u32 %v4762, 8
        %v4803 = vmul.u32.u64.compose %v4802, %v4801
        %v4804 = vextract.low.u32 %v4803
        %v4805 = vextract.high.u32 %v4803
        %v4806 = vmul.u32.u64.compose %v4802, %v4797
        %v4807 = vextract.low.u32 %v4806
        %v4808 = vextract.high.u32 %v4806
        %v4809 = vmul.u32 %v4802, %v4793
        %v4810 = vadd.s32 %v4805, %v4807
        %vm4811 = vc.u32 %v4805, %v4807
        %v4812 = vadd.s32 %v4808, 1
        %v4813 = vsel %vm4811, %v4812, %v4808
        %v4814 = vadd.s32 %v4809, %v4813
        %v4815 = vadd.s32 %v4814, 536870912
        %v4816 = vshrl.u32 %v4815, 30
        %v4817 = vshll.u32 %v4816, 30
        %v4818 = vsub.s32 %v4814, %v4817
        %vm4819 = vcmp.lt.s32.totalorder %v4818, 0
        %v4820 = vsub.s32 0, %v4818
        %v4821 = vsel %vm4819, %v4820, %v4818
        %v4822 = vclz %v4821
        %v4823 = vsub.s32 %v4822, 2
        %vm4824 = vcmp.gt.s32.totalorder 0, %v4823
        %v4825 = vsel %vm4824, 0, %v4823
        %v4826 = vsub.s32 32, %v4825
        %v4827 = vshll.u32 %v4818, %v4825
        %v4828 = vshrl.u32 %v4810, %v4826
        %v4829 = vor.u32 %v4827, %v4828
        %v4830 = vsub.s32 4294967266, %v4825
        %v4831 = vadd.s32 %v4830, 127
        %v4832 = vshll.u32 %v4831, 23
        %v4833 = vor.u32 4788187, %v4832
        %v4834 = vand.u32 2147483647, %v4833
        %v4836 = vcvt.s32.f32 %v4829
        %v4837 = vmul.f32 %v4836, %v4834
        %v4838 = vxor.u32 %v4837, 2147483648
        %v4839 = vsel %vm4756, %v4838, %v4837
        %v4840 = vsub.s32 4, %v4816
        %v4841 = vsel %vm4756, %v4840, %v4816
        %v4842 = vsel %vm4755, %v1238, %v4839
        %v4843 = vsel %vm4755, 0, %v4841
        %v4844 = vcosq.f32.pop %v4842
        %v4845 = vsinq.f32.pop %v4842
        %vm4846 = vweird.f32 %v1238
        %v4847 = vand.u32 %v4843, 3
        %vm4848 = vcmp.lt.s32.totalorder %v4847, 2
        %vm4849 = vcmp.eq.s32.totalorder %v4847, 0
        %v4850 = vxor.u32 %v4845, 2147483648
        %v4851 = vsel %vm4849, %v4844, %v4850
        %vm4852 = vcmp.eq.s32.totalorder %v4847, 2
        %v4853 = vxor.u32 %v4844, 2147483648
        %v4854 = vsel %vm4852, %v4853, %v4845
        %v4855 = vsel %vm4848, %v4851, %v4854
        %v4856 = vsel %vm4846, nan, %v4855
        %v4857 = vand.u32 2147483647, %v1243
        %vm4858 = vcmp.le.f32.partialorder %v4857, 0.7853982
        %vm4859 = vcmp.lt.s32.totalorder %v1243, 0
        %v4860 = vand.u32 %v1243, 2139095040
        %v4861 = vshrl.u32 %v4860, 23
        %v4862 = vsub.s32 %v4861, 127
        %v4863 = vand.u32 2147483647, %v1243
        %v4864 = vand.u32 %v4863, 8388607
        %v4865 = vor.u32 %v4864, 8388608
        %v4866 = vsub.s32 0, %v4865
        %v4867 = vadd.s32 %v4862, 1
        %vm4868 = vcmp.gt.s32.totalorder %v4867, 0
        %v4869 = vsel %vm4868, %v4867, 0
        %v4870 = vshrl.u32 %v4869, 5
        %v4871 = vand.u32 %v4869, 31
        %v4872 = vsub.s32 32, %v4871
        %v4873 = vshrl.u32 683565275, %v4872
        %v4874 = vshll.u32 683565275, %v4871
        %v4875 = vshrl.u32 2475754826, %v4872
        %v4876 = vor.u32 %v4874, %v4875
        %v4877 = vshll.u32 2475754826, %v4871
        %v4878 = vshrl.u32 2131351028, %v4872
        %v4879 = vor.u32 %v4877, %v4878
        %v4880 = vshll.u32 2131351028, %v4871
        %v4881 = vshrl.u32 2102212464, %v4872
        %v4882 = vor.u32 %v4880, %v4881
        %v4883 = vshll.u32 2102212464, %v4871
        %v4884 = vshrl.u32 920167782, %v4872
        %v4885 = vor.u32 %v4883, %v4884
        %v4886 = vshll.u32 920167782, %v4871
        %v4887 = vshrl.u32 1326507024, %v4872
        %v4888 = vor.u32 %v4886, %v4887
        %vm4889 = vcmp.lt.s32.totalorder %v4870, 1
        %vm4890 = vcmp.lt.s32.totalorder %v4870, 2
        %vm4891 = vcmp.lt.s32.totalorder %v4870, 3
        %vm4892 = vcmp.lt.s32.totalorder %v4870, 4
        %v4893 = vsel %vm4889, %v4873, %v4876
        %v4894 = vsel %vm4892, %v4882, 2102212464
        %v4895 = vsel %vm4891, %v4879, %v4894
        %v4896 = vsel %vm4890, %v4893, %v4895
        %v4897 = vsel %vm4889, %v4876, %v4879
        %v4898 = vsel %vm4892, %v4885, 920167782
        %v4899 = vsel %vm4891, %v4882, %v4898
        %v4900 = vsel %vm4890, %v4897, %v4899
        %v4901 = vsel %vm4889, %v4879, %v4882
        %v4902 = vsel %vm4892, %v4888, 1326507024
        %v4903 = vsel %vm4891, %v4885, %v4902
        %v4904 = vsel %vm4890, %v4901, %v4903
        %v4905 = vshll.u32 %v4865, 8
        %v4906 = vmul.u32.u64.compose %v4905, %v4904
        %v4907 = vextract.low.u32 %v4906
        %v4908 = vextract.high.u32 %v4906
        %v4909 = vmul.u32.u64.compose %v4905, %v4900
        %v4910 = vextract.low.u32 %v4909
        %v4911 = vextract.high.u32 %v4909
        %v4912 = vmul.u32 %v4905, %v4896
        %v4913 = vadd.s32 %v4908, %v4910
        %vm4914 = vc.u32 %v4908, %v4910
        %v4915 = vadd.s32 %v4911, 1
        %v4916 = vsel %vm4914, %v4915, %v4911
        %v4917 = vadd.s32 %v4912, %v4916
        %v4918 = vadd.s32 %v4917, 536870912
        %v4919 = vshrl.u32 %v4918, 30
        %v4920 = vshll.u32 %v4919, 30
        %v4921 = vsub.s32 %v4917, %v4920
        %vm4922 = vcmp.lt.s32.totalorder %v4921, 0
        %v4923 = vsub.s32 0, %v4921
        %v4924 = vsel %vm4922, %v4923, %v4921
        %v4925 = vclz %v4924
        %v4926 = vsub.s32 %v4925, 2
        %vm4927 = vcmp.gt.s32.totalorder 0, %v4926
        %v4928 = vsel %vm4927, 0, %v4926
        %v4929 = vsub.s32 32, %v4928
        %v4930 = vshll.u32 %v4921, %v4928
        %v4931 = vshrl.u32 %v4913, %v4929
        %v4932 = vor.u32 %v4930, %v4931
        %v4933 = vsub.s32 4294967266, %v4928
        %v4934 = vadd.s32 %v4933, 127
        %v4935 = vshll.u32 %v4934, 23
        %v4936 = vor.u32 4788187, %v4935
        %v4937 = vand.u32 2147483647, %v4936
        %v4939 = vcvt.s32.f32 %v4932
        %v4940 = vmul.f32 %v4939, %v4937
        %v4941 = vxor.u32 %v4940, 2147483648
        %v4942 = vsel %vm4859, %v4941, %v4940
        %v4943 = vsub.s32 4, %v4919
        %v4944 = vsel %vm4859, %v4943, %v4919
        %v4945 = vsel %vm4858, %v1243, %v4942
        %v4946 = vsel %vm4858, 0, %v4944
        %v4947 = vcosq.f32.pop %v4945
        %v4948 = vsinq.f32.pop %v4945
        %vm4949 = vweird.f32 %v1243
        %v4950 = vand.u32 %v4946, 3
        %vm4951 = vcmp.lt.s32.totalorder %v4950, 2
        %vm4952 = vcmp.eq.s32.totalorder %v4950, 0
        %v4953 = vxor.u32 %v4948, 2147483648
        %v4954 = vsel %vm4952, %v4947, %v4953
        %vm4955 = vcmp.eq.s32.totalorder %v4950, 2
        %v4956 = vxor.u32 %v4947, 2147483648
        %v4957 = vsel %vm4955, %v4956, %v4948
        %v4958 = vsel %vm4951, %v4954, %v4957
        %v4959 = vsel %vm4949, nan, %v4958
        %v4960 = vand.u32 2147483647, %v1245
        %vm4961 = vcmp.le.f32.partialorder %v4960, 0.7853982
        %vm4962 = vcmp.lt.s32.totalorder %v1245, 0
        %v4963 = vand.u32 %v1245, 2139095040
        %v4964 = vshrl.u32 %v4963, 23
        %v4965 = vsub.s32 %v4964, 127
        %v4966 = vand.u32 2147483647, %v1245
        %v4967 = vand.u32 %v4966, 8388607
        %v4968 = vor.u32 %v4967, 8388608
        %v4969 = vsub.s32 0, %v4968
        %v4970 = vadd.s32 %v4965, 1
        %vm4971 = vcmp.gt.s32.totalorder %v4970, 0
        %v4972 = vsel %vm4971, %v4970, 0
        %v4973 = vshrl.u32 %v4972, 5
        %v4974 = vand.u32 %v4972, 31
        %v4975 = vsub.s32 32, %v4974
        %v4976 = vshrl.u32 683565275, %v4975
        %v4977 = vshll.u32 683565275, %v4974
        %v4978 = vshrl.u32 2475754826, %v4975
        %v4979 = vor.u32 %v4977, %v4978
        %v4980 = vshll.u32 2475754826, %v4974
        %v4981 = vshrl.u32 2131351028, %v4975
        %v4982 = vor.u32 %v4980, %v4981
        %v4983 = vshll.u32 2131351028, %v4974
        %v4984 = vshrl.u32 2102212464, %v4975
        %v4985 = vor.u32 %v4983, %v4984
        %v4986 = vshll.u32 2102212464, %v4974
        %v4987 = vshrl.u32 920167782, %v4975
        %v4988 = vor.u32 %v4986, %v4987
        %v4989 = vshll.u32 920167782, %v4974
        %v4990 = vshrl.u32 1326507024, %v4975
        %v4991 = vor.u32 %v4989, %v4990
        %vm4992 = vcmp.lt.s32.totalorder %v4973, 1
        %vm4993 = vcmp.lt.s32.totalorder %v4973, 2
        %vm4994 = vcmp.lt.s32.totalorder %v4973, 3
        %vm4995 = vcmp.lt.s32.totalorder %v4973, 4
        %v4996 = vsel %vm4992, %v4976, %v4979
        %v4997 = vsel %vm4995, %v4985, 2102212464
        %v4998 = vsel %vm4994, %v4982, %v4997
        %v4999 = vsel %vm4993, %v4996, %v4998
        %v5000 = vsel %vm4992, %v4979, %v4982
        %v5001 = vsel %vm4995, %v4988, 920167782
        %v5002 = vsel %vm4994, %v4985, %v5001
        %v5003 = vsel %vm4993, %v5000, %v5002
        %v5004 = vsel %vm4992, %v4982, %v4985
        %v5005 = vsel %vm4995, %v4991, 1326507024
        %v5006 = vsel %vm4994, %v4988, %v5005
        %v5007 = vsel %vm4993, %v5004, %v5006
        %v5008 = vshll.u32 %v4968, 8
        %v5009 = vmul.u32.u64.compose %v5008, %v5007
        %v5010 = vextract.low.u32 %v5009
        %v5011 = vextract.high.u32 %v5009
        %v5012 = vmul.u32.u64.compose %v5008, %v5003
        %v5013 = vextract.low.u32 %v5012
        %v5014 = vextract.high.u32 %v5012
        %v5015 = vmul.u32 %v5008, %v4999
        %v5016 = vadd.s32 %v5011, %v5013
        %vm5017 = vc.u32 %v5011, %v5013
        %v5018 = vadd.s32 %v5014, 1
        %v5019 = vsel %vm5017, %v5018, %v5014
        %v5020 = vadd.s32 %v5015, %v5019
        %v5021 = vadd.s32 %v5020, 536870912
        %v5022 = vshrl.u32 %v5021, 30
        %v5023 = vshll.u32 %v5022, 30
        %v5024 = vsub.s32 %v5020, %v5023
        %vm5025 = vcmp.lt.s32.totalorder %v5024, 0
        %v5026 = vsub.s32 0, %v5024
        %v5027 = vsel %vm5025, %v5026, %v5024
        %v5028 = vclz %v5027
        %v5029 = vsub.s32 %v5028, 2
        %vm5030 = vcmp.gt.s32.totalorder 0, %v5029
        %v5031 = vsel %vm5030, 0, %v5029
        %v5032 = vsub.s32 32, %v5031
        %v5033 = vshll.u32 %v5024, %v5031
        %v5034 = vshrl.u32 %v5016, %v5032
        %v5035 = vor.u32 %v5033, %v5034
        %v5036 = vsub.s32 4294967266, %v5031
        %v5037 = vadd.s32 %v5036, 127
        %v5038 = vshll.u32 %v5037, 23
        %v5039 = vor.u32 4788187, %v5038
        %v5040 = vand.u32 2147483647, %v5039
        %v5042 = vcvt.s32.f32 %v5035
        %v5043 = vmul.f32 %v5042, %v5040
        %v5044 = vxor.u32 %v5043, 2147483648
        %v5045 = vsel %vm4962, %v5044, %v5043
        %v5046 = vsub.s32 4, %v5022
        %v5047 = vsel %vm4962, %v5046, %v5022
        %v5048 = vsel %vm4961, %v1245, %v5045
        %v5049 = vsel %vm4961, 0, %v5047
        %v5050 = vcosq.f32.pop %v5048
        %v5051 = vsinq.f32.pop %v5048
        %vm5052 = vweird.f32 %v1245
        %v5053 = vand.u32 %v5049, 3
        %vm5054 = vcmp.lt.s32.totalorder %v5053, 2
        %vm5055 = vcmp.eq.s32.totalorder %v5053, 0
        %v5056 = vxor.u32 %v5051, 2147483648
        %v5057 = vsel %vm5055, %v5050, %v5056
        %vm5058 = vcmp.eq.s32.totalorder %v5053, 2
        %v5059 = vxor.u32 %v5050, 2147483648
        %v5060 = vsel %vm5058, %v5059, %v5051
        %v5061 = vsel %vm5054, %v5057, %v5060
        %v5062 = vsel %vm5052, nan, %v5061
        %v5063 = vand.u32 2147483647, %v1250
        %vm5064 = vcmp.le.f32.partialorder %v5063, 0.7853982
        %vm5065 = vcmp.lt.s32.totalorder %v1250, 0
        %v5066 = vand.u32 %v1250, 2139095040
        %v5067 = vshrl.u32 %v5066, 23
        %v5068 = vsub.s32 %v5067, 127
        %v5069 = vand.u32 2147483647, %v1250
        %v5070 = vand.u32 %v5069, 8388607
        %v5071 = vor.u32 %v5070, 8388608
        %v5072 = vsub.s32 0, %v5071
        %v5073 = vadd.s32 %v5068, 1
        %vm5074 = vcmp.gt.s32.totalorder %v5073, 0
        %v5075 = vsel %vm5074, %v5073, 0
        %v5076 = vshrl.u32 %v5075, 5
        %v5077 = vand.u32 %v5075, 31
        %v5078 = vsub.s32 32, %v5077
        %v5079 = vshrl.u32 683565275, %v5078
        %v5080 = vshll.u32 683565275, %v5077
        %v5081 = vshrl.u32 2475754826, %v5078
        %v5082 = vor.u32 %v5080, %v5081
        %v5083 = vshll.u32 2475754826, %v5077
        %v5084 = vshrl.u32 2131351028, %v5078
        %v5085 = vor.u32 %v5083, %v5084
        %v5086 = vshll.u32 2131351028, %v5077
        %v5087 = vshrl.u32 2102212464, %v5078
        %v5088 = vor.u32 %v5086, %v5087
        %v5089 = vshll.u32 2102212464, %v5077
        %v5090 = vshrl.u32 920167782, %v5078
        %v5091 = vor.u32 %v5089, %v5090
        %v5092 = vshll.u32 920167782, %v5077
        %v5093 = vshrl.u32 1326507024, %v5078
        %v5094 = vor.u32 %v5092, %v5093
        %vm5095 = vcmp.lt.s32.totalorder %v5076, 1
        %vm5096 = vcmp.lt.s32.totalorder %v5076, 2
        %vm5097 = vcmp.lt.s32.totalorder %v5076, 3
        %vm5098 = vcmp.lt.s32.totalorder %v5076, 4
        %v5099 = vsel %vm5095, %v5079, %v5082
        %v5100 = vsel %vm5098, %v5088, 2102212464
        %v5101 = vsel %vm5097, %v5085, %v5100
        %v5102 = vsel %vm5096, %v5099, %v5101
        %v5103 = vsel %vm5095, %v5082, %v5085
        %v5104 = vsel %vm5098, %v5091, 920167782
        %v5105 = vsel %vm5097, %v5088, %v5104
        %v5106 = vsel %vm5096, %v5103, %v5105
        %v5107 = vsel %vm5095, %v5085, %v5088
        %v5108 = vsel %vm5098, %v5094, 1326507024
        %v5109 = vsel %vm5097, %v5091, %v5108
        %v5110 = vsel %vm5096, %v5107, %v5109
        %v5111 = vshll.u32 %v5071, 8
        %v5112 = vmul.u32.u64.compose %v5111, %v5110
        %v5113 = vextract.low.u32 %v5112
        %v5114 = vextract.high.u32 %v5112
        %v5115 = vmul.u32.u64.compose %v5111, %v5106
        %v5116 = vextract.low.u32 %v5115
        %v5117 = vextract.high.u32 %v5115
        %v5118 = vmul.u32 %v5111, %v5102
        %v5119 = vadd.s32 %v5114, %v5116
        %vm5120 = vc.u32 %v5114, %v5116
        %v5121 = vadd.s32 %v5117, 1
        %v5122 = vsel %vm5120, %v5121, %v5117
        %v5123 = vadd.s32 %v5118, %v5122
        %v5124 = vadd.s32 %v5123, 536870912
        %v5125 = vshrl.u32 %v5124, 30
        %v5126 = vshll.u32 %v5125, 30
        %v5127 = vsub.s32 %v5123, %v5126
        %vm5128 = vcmp.lt.s32.totalorder %v5127, 0
        %v5129 = vsub.s32 0, %v5127
        %v5130 = vsel %vm5128, %v5129, %v5127
        %v5131 = vclz %v5130
        %v5132 = vsub.s32 %v5131, 2
        %vm5133 = vcmp.gt.s32.totalorder 0, %v5132
        %v5134 = vsel %vm5133, 0, %v5132
        %v5135 = vsub.s32 32, %v5134
        %v5136 = vshll.u32 %v5127, %v5134
        %v5137 = vshrl.u32 %v5119, %v5135
        %v5138 = vor.u32 %v5136, %v5137
        %v5139 = vsub.s32 4294967266, %v5134
        %v5140 = vadd.s32 %v5139, 127
        %v5141 = vshll.u32 %v5140, 23
        %v5142 = vor.u32 4788187, %v5141
        %v5143 = vand.u32 2147483647, %v5142
        %v5145 = vcvt.s32.f32 %v5138
        %v5146 = vmul.f32 %v5145, %v5143
        %v5147 = vxor.u32 %v5146, 2147483648
        %v5148 = vsel %vm5065, %v5147, %v5146
        %v5149 = vsub.s32 4, %v5125
        %v5150 = vsel %vm5065, %v5149, %v5125
        %v5151 = vsel %vm5064, %v1250, %v5148
        %v5152 = vsel %vm5064, 0, %v5150
        %v5153 = vcosq.f32.pop %v5151
        %v5154 = vsinq.f32.pop %v5151
        %vm5155 = vweird.f32 %v1250
        %v5156 = vand.u32 %v5152, 3
        %vm5157 = vcmp.lt.s32.totalorder %v5156, 2
        %vm5158 = vcmp.eq.s32.totalorder %v5156, 0
        %v5159 = vxor.u32 %v5154, 2147483648
        %v5160 = vsel %vm5158, %v5153, %v5159
        %vm5161 = vcmp.eq.s32.totalorder %v5156, 2
        %v5162 = vxor.u32 %v5153, 2147483648
        %v5163 = vsel %vm5161, %v5162, %v5154
        %v5164 = vsel %vm5157, %v5160, %v5163
        %v5165 = vsel %vm5155, nan, %v5164
        %v5166 = vand.u32 2147483647, %v1252
        %vm5167 = vcmp.le.f32.partialorder %v5166, 0.7853982
        %vm5168 = vcmp.lt.s32.totalorder %v1252, 0
        %v5169 = vand.u32 %v1252, 2139095040
        %v5170 = vshrl.u32 %v5169, 23
        %v5171 = vsub.s32 %v5170, 127
        %v5172 = vand.u32 2147483647, %v1252
        %v5173 = vand.u32 %v5172, 8388607
        %v5174 = vor.u32 %v5173, 8388608
        %v5175 = vsub.s32 0, %v5174
        %v5176 = vadd.s32 %v5171, 1
        %vm5177 = vcmp.gt.s32.totalorder %v5176, 0
        %v5178 = vsel %vm5177, %v5176, 0
        %v5179 = vshrl.u32 %v5178, 5
        %v5180 = vand.u32 %v5178, 31
        %v5181 = vsub.s32 32, %v5180
        %v5182 = vshrl.u32 683565275, %v5181
        %v5183 = vshll.u32 683565275, %v5180
        %v5184 = vshrl.u32 2475754826, %v5181
        %v5185 = vor.u32 %v5183, %v5184
        %v5186 = vshll.u32 2475754826, %v5180
        %v5187 = vshrl.u32 2131351028, %v5181
        %v5188 = vor.u32 %v5186, %v5187
        %v5189 = vshll.u32 2131351028, %v5180
        %v5190 = vshrl.u32 2102212464, %v5181
        %v5191 = vor.u32 %v5189, %v5190
        %v5192 = vshll.u32 2102212464, %v5180
        %v5193 = vshrl.u32 920167782, %v5181
        %v5194 = vor.u32 %v5192, %v5193
        %v5195 = vshll.u32 920167782, %v5180
        %v5196 = vshrl.u32 1326507024, %v5181
        %v5197 = vor.u32 %v5195, %v5196
        %vm5198 = vcmp.lt.s32.totalorder %v5179, 1
        %vm5199 = vcmp.lt.s32.totalorder %v5179, 2
        %vm5200 = vcmp.lt.s32.totalorder %v5179, 3
        %vm5201 = vcmp.lt.s32.totalorder %v5179, 4
        %v5202 = vsel %vm5198, %v5182, %v5185
        %v5203 = vsel %vm5201, %v5191, 2102212464
        %v5204 = vsel %vm5200, %v5188, %v5203
        %v5205 = vsel %vm5199, %v5202, %v5204
        %v5206 = vsel %vm5198, %v5185, %v5188
        %v5207 = vsel %vm5201, %v5194, 920167782
        %v5208 = vsel %vm5200, %v5191, %v5207
        %v5209 = vsel %vm5199, %v5206, %v5208
        %v5210 = vsel %vm5198, %v5188, %v5191
        %v5211 = vsel %vm5201, %v5197, 1326507024
        %v5212 = vsel %vm5200, %v5194, %v5211
        %v5213 = vsel %vm5199, %v5210, %v5212
        %v5214 = vshll.u32 %v5174, 8
        %v5215 = vmul.u32.u64.compose %v5214, %v5213
        %v5216 = vextract.low.u32 %v5215
        %v5217 = vextract.high.u32 %v5215
        %v5218 = vmul.u32.u64.compose %v5214, %v5209
        %v5219 = vextract.low.u32 %v5218
        %v5220 = vextract.high.u32 %v5218
        %v5221 = vmul.u32 %v5214, %v5205
        %v5222 = vadd.s32 %v5217, %v5219
        %vm5223 = vc.u32 %v5217, %v5219
        %v5224 = vadd.s32 %v5220, 1
        %v5225 = vsel %vm5223, %v5224, %v5220
        %v5226 = vadd.s32 %v5221, %v5225
        %v5227 = vadd.s32 %v5226, 536870912
        %v5228 = vshrl.u32 %v5227, 30
        %v5229 = vshll.u32 %v5228, 30
        %v5230 = vsub.s32 %v5226, %v5229
        %vm5231 = vcmp.lt.s32.totalorder %v5230, 0
        %v5232 = vsub.s32 0, %v5230
        %v5233 = vsel %vm5231, %v5232, %v5230
        %v5234 = vclz %v5233
        %v5235 = vsub.s32 %v5234, 2
        %vm5236 = vcmp.gt.s32.totalorder 0, %v5235
        %v5237 = vsel %vm5236, 0, %v5235
        %v5238 = vsub.s32 32, %v5237
        %v5239 = vshll.u32 %v5230, %v5237
        %v5240 = vshrl.u32 %v5222, %v5238
        %v5241 = vor.u32 %v5239, %v5240
        %v5242 = vsub.s32 4294967266, %v5237
        %v5243 = vadd.s32 %v5242, 127
        %v5244 = vshll.u32 %v5243, 23
        %v5245 = vor.u32 4788187, %v5244
        %v5246 = vand.u32 2147483647, %v5245
        %v5248 = vcvt.s32.f32 %v5241
        %v5249 = vmul.f32 %v5248, %v5246
        %v5250 = vxor.u32 %v5249, 2147483648
        %v5251 = vsel %vm5168, %v5250, %v5249
        %v5252 = vsub.s32 4, %v5228
        %v5253 = vsel %vm5168, %v5252, %v5228
        %v5254 = vsel %vm5167, %v1252, %v5251
        %v5255 = vsel %vm5167, 0, %v5253
        %v5256 = vcosq.f32.pop %v5254
        %v5257 = vsinq.f32.pop %v5254
        %vm5258 = vweird.f32 %v1252
        %v5259 = vand.u32 %v5255, 3
        %vm5260 = vcmp.lt.s32.totalorder %v5259, 2
        %vm5261 = vcmp.eq.s32.totalorder %v5259, 0
        %v5262 = vxor.u32 %v5257, 2147483648
        %v5263 = vsel %vm5261, %v5256, %v5262
        %vm5264 = vcmp.eq.s32.totalorder %v5259, 2
        %v5265 = vxor.u32 %v5256, 2147483648
        %v5266 = vsel %vm5264, %v5265, %v5257
        %v5267 = vsel %vm5260, %v5263, %v5266
        %v5268 = vsel %vm5258, nan, %v5267
        %v5269 = vand.u32 2147483647, %v1257
        %vm5270 = vcmp.le.f32.partialorder %v5269, 0.7853982
        %vm5271 = vcmp.lt.s32.totalorder %v1257, 0
        %v5272 = vand.u32 %v1257, 2139095040
        %v5273 = vshrl.u32 %v5272, 23
        %v5274 = vsub.s32 %v5273, 127
        %v5275 = vand.u32 2147483647, %v1257
        %v5276 = vand.u32 %v5275, 8388607
        %v5277 = vor.u32 %v5276, 8388608
        %v5278 = vsub.s32 0, %v5277
        %v5279 = vadd.s32 %v5274, 1
        %vm5280 = vcmp.gt.s32.totalorder %v5279, 0
        %v5281 = vsel %vm5280, %v5279, 0
        %v5282 = vshrl.u32 %v5281, 5
        %v5283 = vand.u32 %v5281, 31
        %v5284 = vsub.s32 32, %v5283
        %v5285 = vshrl.u32 683565275, %v5284
        %v5286 = vshll.u32 683565275, %v5283
        %v5287 = vshrl.u32 2475754826, %v5284
        %v5288 = vor.u32 %v5286, %v5287
        %v5289 = vshll.u32 2475754826, %v5283
        %v5290 = vshrl.u32 2131351028, %v5284
        %v5291 = vor.u32 %v5289, %v5290
        %v5292 = vshll.u32 2131351028, %v5283
        %v5293 = vshrl.u32 2102212464, %v5284
        %v5294 = vor.u32 %v5292, %v5293
        %v5295 = vshll.u32 2102212464, %v5283
        %v5296 = vshrl.u32 920167782, %v5284
        %v5297 = vor.u32 %v5295, %v5296
        %v5298 = vshll.u32 920167782, %v5283
        %v5299 = vshrl.u32 1326507024, %v5284
        %v5300 = vor.u32 %v5298, %v5299
        %vm5301 = vcmp.lt.s32.totalorder %v5282, 1
        %vm5302 = vcmp.lt.s32.totalorder %v5282, 2
        %vm5303 = vcmp.lt.s32.totalorder %v5282, 3
        %vm5304 = vcmp.lt.s32.totalorder %v5282, 4
        %v5305 = vsel %vm5301, %v5285, %v5288
        %v5306 = vsel %vm5304, %v5294, 2102212464
        %v5307 = vsel %vm5303, %v5291, %v5306
        %v5308 = vsel %vm5302, %v5305, %v5307
        %v5309 = vsel %vm5301, %v5288, %v5291
        %v5310 = vsel %vm5304, %v5297, 920167782
        %v5311 = vsel %vm5303, %v5294, %v5310
        %v5312 = vsel %vm5302, %v5309, %v5311
        %v5313 = vsel %vm5301, %v5291, %v5294
        %v5314 = vsel %vm5304, %v5300, 1326507024
        %v5315 = vsel %vm5303, %v5297, %v5314
        %v5316 = vsel %vm5302, %v5313, %v5315
        %v5317 = vshll.u32 %v5277, 8
        %v5318 = vmul.u32.u64.compose %v5317, %v5316
        %v5319 = vextract.low.u32 %v5318
        %v5320 = vextract.high.u32 %v5318
        %v5321 = vmul.u32.u64.compose %v5317, %v5312
        %v5322 = vextract.low.u32 %v5321
        %v5323 = vextract.high.u32 %v5321
        %v5324 = vmul.u32 %v5317, %v5308
        %v5325 = vadd.s32 %v5320, %v5322
        %vm5326 = vc.u32 %v5320, %v5322
        %v5327 = vadd.s32 %v5323, 1
        %v5328 = vsel %vm5326, %v5327, %v5323
        %v5329 = vadd.s32 %v5324, %v5328
        %v5330 = vadd.s32 %v5329, 536870912
        %v5331 = vshrl.u32 %v5330, 30
        %v5332 = vshll.u32 %v5331, 30
        %v5333 = vsub.s32 %v5329, %v5332
        %vm5334 = vcmp.lt.s32.totalorder %v5333, 0
        %v5335 = vsub.s32 0, %v5333
        %v5336 = vsel %vm5334, %v5335, %v5333
        %v5337 = vclz %v5336
        %v5338 = vsub.s32 %v5337, 2
        %vm5339 = vcmp.gt.s32.totalorder 0, %v5338
        %v5340 = vsel %vm5339, 0, %v5338
        %v5341 = vsub.s32 32, %v5340
        %v5342 = vshll.u32 %v5333, %v5340
        %v5343 = vshrl.u32 %v5325, %v5341
        %v5344 = vor.u32 %v5342, %v5343
        %v5345 = vsub.s32 4294967266, %v5340
        %v5346 = vadd.s32 %v5345, 127
        %v5347 = vshll.u32 %v5346, 23
        %v5348 = vor.u32 4788187, %v5347
        %v5349 = vand.u32 2147483647, %v5348
        %v5351 = vcvt.s32.f32 %v5344
        %v5352 = vmul.f32 %v5351, %v5349
        %v5353 = vxor.u32 %v5352, 2147483648
        %v5354 = vsel %vm5271, %v5353, %v5352
        %v5355 = vsub.s32 4, %v5331
        %v5356 = vsel %vm5271, %v5355, %v5331
        %v5357 = vsel %vm5270, %v1257, %v5354
        %v5358 = vsel %vm5270, 0, %v5356
        %v5359 = vcosq.f32.pop %v5357
        %v5360 = vsinq.f32.pop %v5357
        %vm5361 = vweird.f32 %v1257
        %v5362 = vand.u32 %v5358, 3
        %vm5363 = vcmp.lt.s32.totalorder %v5362, 2
        %vm5364 = vcmp.eq.s32.totalorder %v5362, 0
        %v5365 = vxor.u32 %v5360, 2147483648
        %v5366 = vsel %vm5364, %v5359, %v5365
        %vm5367 = vcmp.eq.s32.totalorder %v5362, 2
        %v5368 = vxor.u32 %v5359, 2147483648
        %v5369 = vsel %vm5367, %v5368, %v5360
        %v5370 = vsel %vm5363, %v5366, %v5369
        %v5371 = vsel %vm5361, nan, %v5370
        %v5372 = vand.u32 2147483647, %v1259
        %vm5373 = vcmp.le.f32.partialorder %v5372, 0.7853982
        %vm5374 = vcmp.lt.s32.totalorder %v1259, 0
        %v5375 = vand.u32 %v1259, 2139095040
        %v5376 = vshrl.u32 %v5375, 23
        %v5377 = vsub.s32 %v5376, 127
        %v5378 = vand.u32 2147483647, %v1259
        %v5379 = vand.u32 %v5378, 8388607
        %v5380 = vor.u32 %v5379, 8388608
        %v5381 = vsub.s32 0, %v5380
        %v5382 = vadd.s32 %v5377, 1
        %vm5383 = vcmp.gt.s32.totalorder %v5382, 0
        %v5384 = vsel %vm5383, %v5382, 0
        %v5385 = vshrl.u32 %v5384, 5
        %v5386 = vand.u32 %v5384, 31
        %v5387 = vsub.s32 32, %v5386
        %v5388 = vshrl.u32 683565275, %v5387
        %v5389 = vshll.u32 683565275, %v5386
        %v5390 = vshrl.u32 2475754826, %v5387
        %v5391 = vor.u32 %v5389, %v5390
        %v5392 = vshll.u32 2475754826, %v5386
        %v5393 = vshrl.u32 2131351028, %v5387
        %v5394 = vor.u32 %v5392, %v5393
        %v5395 = vshll.u32 2131351028, %v5386
        %v5396 = vshrl.u32 2102212464, %v5387
        %v5397 = vor.u32 %v5395, %v5396
        %v5398 = vshll.u32 2102212464, %v5386
        %v5399 = vshrl.u32 920167782, %v5387
        %v5400 = vor.u32 %v5398, %v5399
        %v5401 = vshll.u32 920167782, %v5386
        %v5402 = vshrl.u32 1326507024, %v5387
        %v5403 = vor.u32 %v5401, %v5402
        %vm5404 = vcmp.lt.s32.totalorder %v5385, 1
        %vm5405 = vcmp.lt.s32.totalorder %v5385, 2
        %vm5406 = vcmp.lt.s32.totalorder %v5385, 3
        %vm5407 = vcmp.lt.s32.totalorder %v5385, 4
        %v5408 = vsel %vm5404, %v5388, %v5391
        %v5409 = vsel %vm5407, %v5397, 2102212464
        %v5410 = vsel %vm5406, %v5394, %v5409
        %v5411 = vsel %vm5405, %v5408, %v5410
        %v5412 = vsel %vm5404, %v5391, %v5394
        %v5413 = vsel %vm5407, %v5400, 920167782
        %v5414 = vsel %vm5406, %v5397, %v5413
        %v5415 = vsel %vm5405, %v5412, %v5414
        %v5416 = vsel %vm5404, %v5394, %v5397
        %v5417 = vsel %vm5407, %v5403, 1326507024
        %v5418 = vsel %vm5406, %v5400, %v5417
        %v5419 = vsel %vm5405, %v5416, %v5418
        %v5420 = vshll.u32 %v5380, 8
        %v5421 = vmul.u32.u64.compose %v5420, %v5419
        %v5422 = vextract.low.u32 %v5421
        %v5423 = vextract.high.u32 %v5421
        %v5424 = vmul.u32.u64.compose %v5420, %v5415
        %v5425 = vextract.low.u32 %v5424
        %v5426 = vextract.high.u32 %v5424
        %v5427 = vmul.u32 %v5420, %v5411
        %v5428 = vadd.s32 %v5423, %v5425
        %vm5429 = vc.u32 %v5423, %v5425
        %v5430 = vadd.s32 %v5426, 1
        %v5431 = vsel %vm5429, %v5430, %v5426
        %v5432 = vadd.s32 %v5427, %v5431
        %v5433 = vadd.s32 %v5432, 536870912
        %v5434 = vshrl.u32 %v5433, 30
        %v5435 = vshll.u32 %v5434, 30
        %v5436 = vsub.s32 %v5432, %v5435
        %vm5437 = vcmp.lt.s32.totalorder %v5436, 0
        %v5438 = vsub.s32 0, %v5436
        %v5439 = vsel %vm5437, %v5438, %v5436
        %v5440 = vclz %v5439
        %v5441 = vsub.s32 %v5440, 2
        %vm5442 = vcmp.gt.s32.totalorder 0, %v5441
        %v5443 = vsel %vm5442, 0, %v5441
        %v5444 = vsub.s32 32, %v5443
        %v5445 = vshll.u32 %v5436, %v5443
        %v5446 = vshrl.u32 %v5428, %v5444
        %v5447 = vor.u32 %v5445, %v5446
        %v5448 = vsub.s32 4294967266, %v5443
        %v5449 = vadd.s32 %v5448, 127
        %v5450 = vshll.u32 %v5449, 23
        %v5451 = vor.u32 4788187, %v5450
        %v5452 = vand.u32 2147483647, %v5451
        %v5454 = vcvt.s32.f32 %v5447
        %v5455 = vmul.f32 %v5454, %v5452
        %v5456 = vxor.u32 %v5455, 2147483648
        %v5457 = vsel %vm5374, %v5456, %v5455
        %v5458 = vsub.s32 4, %v5434
        %v5459 = vsel %vm5374, %v5458, %v5434
        %v5460 = vsel %vm5373, %v1259, %v5457
        %v5461 = vsel %vm5373, 0, %v5459
        %v5462 = vcosq.f32.pop %v5460
        %v5463 = vsinq.f32.pop %v5460
        %vm5464 = vweird.f32 %v1259
        %v5465 = vand.u32 %v5461, 3
        %vm5466 = vcmp.lt.s32.totalorder %v5465, 2
        %vm5467 = vcmp.eq.s32.totalorder %v5465, 0
        %v5468 = vxor.u32 %v5463, 2147483648
        %v5469 = vsel %vm5467, %v5462, %v5468
        %vm5470 = vcmp.eq.s32.totalorder %v5465, 2
        %v5471 = vxor.u32 %v5462, 2147483648
        %v5472 = vsel %vm5470, %v5471, %v5463
        %v5473 = vsel %vm5466, %v5469, %v5472
        %v5474 = vsel %vm5464, nan, %v5473
        %v5475 = vand.u32 2147483647, %v1264
        %vm5476 = vcmp.le.f32.partialorder %v5475, 0.7853982
        %vm5477 = vcmp.lt.s32.totalorder %v1264, 0
        %v5478 = vand.u32 %v1264, 2139095040
        %v5479 = vshrl.u32 %v5478, 23
        %v5480 = vsub.s32 %v5479, 127
        %v5481 = vand.u32 2147483647, %v1264
        %v5482 = vand.u32 %v5481, 8388607
        %v5483 = vor.u32 %v5482, 8388608
        %v5484 = vsub.s32 0, %v5483
        %v5485 = vadd.s32 %v5480, 1
        %vm5486 = vcmp.gt.s32.totalorder %v5485, 0
        %v5487 = vsel %vm5486, %v5485, 0
        %v5488 = vshrl.u32 %v5487, 5
        %v5489 = vand.u32 %v5487, 31
        %v5490 = vsub.s32 32, %v5489
        %v5491 = vshrl.u32 683565275, %v5490
        %v5492 = vshll.u32 683565275, %v5489
        %v5493 = vshrl.u32 2475754826, %v5490
        %v5494 = vor.u32 %v5492, %v5493
        %v5495 = vshll.u32 2475754826, %v5489
        %v5496 = vshrl.u32 2131351028, %v5490
        %v5497 = vor.u32 %v5495, %v5496
        %v5498 = vshll.u32 2131351028, %v5489
        %v5499 = vshrl.u32 2102212464, %v5490
        %v5500 = vor.u32 %v5498, %v5499
        %v5501 = vshll.u32 2102212464, %v5489
        %v5502 = vshrl.u32 920167782, %v5490
        %v5503 = vor.u32 %v5501, %v5502
        %v5504 = vshll.u32 920167782, %v5489
        %v5505 = vshrl.u32 1326507024, %v5490
        %v5506 = vor.u32 %v5504, %v5505
        %vm5507 = vcmp.lt.s32.totalorder %v5488, 1
        %vm5508 = vcmp.lt.s32.totalorder %v5488, 2
        %vm5509 = vcmp.lt.s32.totalorder %v5488, 3
        %vm5510 = vcmp.lt.s32.totalorder %v5488, 4
        %v5511 = vsel %vm5507, %v5491, %v5494
        %v5512 = vsel %vm5510, %v5500, 2102212464
        %v5513 = vsel %vm5509, %v5497, %v5512
        %v5514 = vsel %vm5508, %v5511, %v5513
        %v5515 = vsel %vm5507, %v5494, %v5497
        %v5516 = vsel %vm5510, %v5503, 920167782
        %v5517 = vsel %vm5509, %v5500, %v5516
        %v5518 = vsel %vm5508, %v5515, %v5517
        %v5519 = vsel %vm5507, %v5497, %v5500
        %v5520 = vsel %vm5510, %v5506, 1326507024
        %v5521 = vsel %vm5509, %v5503, %v5520
        %v5522 = vsel %vm5508, %v5519, %v5521
        %v5523 = vshll.u32 %v5483, 8
        %v5524 = vmul.u32.u64.compose %v5523, %v5522
        %v5525 = vextract.low.u32 %v5524
        %v5526 = vextract.high.u32 %v5524
        %v5527 = vmul.u32.u64.compose %v5523, %v5518
        %v5528 = vextract.low.u32 %v5527
        %v5529 = vextract.high.u32 %v5527
        %v5530 = vmul.u32 %v5523, %v5514
        %v5531 = vadd.s32 %v5526, %v5528
        %vm5532 = vc.u32 %v5526, %v5528
        %v5533 = vadd.s32 %v5529, 1
        %v5534 = vsel %vm5532, %v5533, %v5529
        %v5535 = vadd.s32 %v5530, %v5534
        %v5536 = vadd.s32 %v5535, 536870912
        %v5537 = vshrl.u32 %v5536, 30
        %v5538 = vshll.u32 %v5537, 30
        %v5539 = vsub.s32 %v5535, %v5538
        %vm5540 = vcmp.lt.s32.totalorder %v5539, 0
        %v5541 = vsub.s32 0, %v5539
        %v5542 = vsel %vm5540, %v5541, %v5539
        %v5543 = vclz %v5542
        %v5544 = vsub.s32 %v5543, 2
        %vm5545 = vcmp.gt.s32.totalorder 0, %v5544
        %v5546 = vsel %vm5545, 0, %v5544
        %v5547 = vsub.s32 32, %v5546
        %v5548 = vshll.u32 %v5539, %v5546
        %v5549 = vshrl.u32 %v5531, %v5547
        %v5550 = vor.u32 %v5548, %v5549
        %v5551 = vsub.s32 4294967266, %v5546
        %v5552 = vadd.s32 %v5551, 127
        %v5553 = vshll.u32 %v5552, 23
        %v5554 = vor.u32 4788187, %v5553
        %v5555 = vand.u32 2147483647, %v5554
        %v5557 = vcvt.s32.f32 %v5550
        %v5558 = vmul.f32 %v5557, %v5555
        %v5559 = vxor.u32 %v5558, 2147483648
        %v5560 = vsel %vm5477, %v5559, %v5558
        %v5561 = vsub.s32 4, %v5537
        %v5562 = vsel %vm5477, %v5561, %v5537
        %v5563 = vsel %vm5476, %v1264, %v5560
        %v5564 = vsel %vm5476, 0, %v5562
        %v5565 = vcosq.f32.pop %v5563
        %v5566 = vsinq.f32.pop %v5563
        %vm5567 = vweird.f32 %v1264
        %v5568 = vand.u32 %v5564, 3
        %vm5569 = vcmp.lt.s32.totalorder %v5568, 2
        %vm5570 = vcmp.eq.s32.totalorder %v5568, 0
        %v5571 = vxor.u32 %v5566, 2147483648
        %v5572 = vsel %vm5570, %v5565, %v5571
        %vm5573 = vcmp.eq.s32.totalorder %v5568, 2
        %v5574 = vxor.u32 %v5565, 2147483648
        %v5575 = vsel %vm5573, %v5574, %v5566
        %v5576 = vsel %vm5569, %v5572, %v5575
        %v5577 = vsel %vm5567, nan, %v5576
        %v5578 = vand.u32 2147483647, %v1266
        %vm5579 = vcmp.le.f32.partialorder %v5578, 0.7853982
        %vm5580 = vcmp.lt.s32.totalorder %v1266, 0
        %v5581 = vand.u32 %v1266, 2139095040
        %v5582 = vshrl.u32 %v5581, 23
        %v5583 = vsub.s32 %v5582, 127
        %v5584 = vand.u32 2147483647, %v1266
        %v5585 = vand.u32 %v5584, 8388607
        %v5586 = vor.u32 %v5585, 8388608
        %v5587 = vsub.s32 0, %v5586
        %v5588 = vadd.s32 %v5583, 1
        %vm5589 = vcmp.gt.s32.totalorder %v5588, 0
        %v5590 = vsel %vm5589, %v5588, 0
        %v5591 = vshrl.u32 %v5590, 5
        %v5592 = vand.u32 %v5590, 31
        %v5593 = vsub.s32 32, %v5592
        %v5594 = vshrl.u32 683565275, %v5593
        %v5595 = vshll.u32 683565275, %v5592
        %v5596 = vshrl.u32 2475754826, %v5593
        %v5597 = vor.u32 %v5595, %v5596
        %v5598 = vshll.u32 2475754826, %v5592
        %v5599 = vshrl.u32 2131351028, %v5593
        %v5600 = vor.u32 %v5598, %v5599
        %v5601 = vshll.u32 2131351028, %v5592
        %v5602 = vshrl.u32 2102212464, %v5593
        %v5603 = vor.u32 %v5601, %v5602
        %v5604 = vshll.u32 2102212464, %v5592
        %v5605 = vshrl.u32 920167782, %v5593
        %v5606 = vor.u32 %v5604, %v5605
        %v5607 = vshll.u32 920167782, %v5592
        %v5608 = vshrl.u32 1326507024, %v5593
        %v5609 = vor.u32 %v5607, %v5608
        %vm5610 = vcmp.lt.s32.totalorder %v5591, 1
        %vm5611 = vcmp.lt.s32.totalorder %v5591, 2
        %vm5612 = vcmp.lt.s32.totalorder %v5591, 3
        %vm5613 = vcmp.lt.s32.totalorder %v5591, 4
        %v5614 = vsel %vm5610, %v5594, %v5597
        %v5615 = vsel %vm5613, %v5603, 2102212464
        %v5616 = vsel %vm5612, %v5600, %v5615
        %v5617 = vsel %vm5611, %v5614, %v5616
        %v5618 = vsel %vm5610, %v5597, %v5600
        %v5619 = vsel %vm5613, %v5606, 920167782
        %v5620 = vsel %vm5612, %v5603, %v5619
        %v5621 = vsel %vm5611, %v5618, %v5620
        %v5622 = vsel %vm5610, %v5600, %v5603
        %v5623 = vsel %vm5613, %v5609, 1326507024
        %v5624 = vsel %vm5612, %v5606, %v5623
        %v5625 = vsel %vm5611, %v5622, %v5624
        %v5626 = vshll.u32 %v5586, 8
        %v5627 = vmul.u32.u64.compose %v5626, %v5625
        %v5628 = vextract.low.u32 %v5627
        %v5629 = vextract.high.u32 %v5627
        %v5630 = vmul.u32.u64.compose %v5626, %v5621
        %v5631 = vextract.low.u32 %v5630
        %v5632 = vextract.high.u32 %v5630
        %v5633 = vmul.u32 %v5626, %v5617
        %v5634 = vadd.s32 %v5629, %v5631
        %vm5635 = vc.u32 %v5629, %v5631
        %v5636 = vadd.s32 %v5632, 1
        %v5637 = vsel %vm5635, %v5636, %v5632
        %v5638 = vadd.s32 %v5633, %v5637
        %v5639 = vadd.s32 %v5638, 536870912
        %v5640 = vshrl.u32 %v5639, 30
        %v5641 = vshll.u32 %v5640, 30
        %v5642 = vsub.s32 %v5638, %v5641
        %vm5643 = vcmp.lt.s32.totalorder %v5642, 0
        %v5644 = vsub.s32 0, %v5642
        %v5645 = vsel %vm5643, %v5644, %v5642
        %v5646 = vclz %v5645
        %v5647 = vsub.s32 %v5646, 2
        %vm5648 = vcmp.gt.s32.totalorder 0, %v5647
        %v5649 = vsel %vm5648, 0, %v5647
        %v5650 = vsub.s32 32, %v5649
        %v5651 = vshll.u32 %v5642, %v5649
        %v5652 = vshrl.u32 %v5634, %v5650
        %v5653 = vor.u32 %v5651, %v5652
        %v5654 = vsub.s32 4294967266, %v5649
        %v5655 = vadd.s32 %v5654, 127
        %v5656 = vshll.u32 %v5655, 23
        %v5657 = vor.u32 4788187, %v5656
        %v5658 = vand.u32 2147483647, %v5657
        %v5660 = vcvt.s32.f32 %v5653
        %v5661 = vmul.f32 %v5660, %v5658
        %v5662 = vxor.u32 %v5661, 2147483648
        %v5663 = vsel %vm5580, %v5662, %v5661
        %v5664 = vsub.s32 4, %v5640
        %v5665 = vsel %vm5580, %v5664, %v5640
        %v5666 = vsel %vm5579, %v1266, %v5663
        %v5667 = vsel %vm5579, 0, %v5665
        %v5668 = vcosq.f32.pop %v5666
        %v5669 = vsinq.f32.pop %v5666
        %vm5670 = vweird.f32 %v1266
        %v5671 = vand.u32 %v5667, 3
        %vm5672 = vcmp.lt.s32.totalorder %v5671, 2
        %vm5673 = vcmp.eq.s32.totalorder %v5671, 0
        %v5674 = vxor.u32 %v5669, 2147483648
        %v5675 = vsel %vm5673, %v5668, %v5674
        %vm5676 = vcmp.eq.s32.totalorder %v5671, 2
        %v5677 = vxor.u32 %v5668, 2147483648
        %v5678 = vsel %vm5676, %v5677, %v5669
        %v5679 = vsel %vm5672, %v5675, %v5678
        %v5680 = vsel %vm5670, nan, %v5679
        %v5681 = vand.u32 2147483647, %v1271
        %vm5682 = vcmp.le.f32.partialorder %v5681, 0.7853982
        %vm5683 = vcmp.lt.s32.totalorder %v1271, 0
        %v5684 = vand.u32 %v1271, 2139095040
        %v5685 = vshrl.u32 %v5684, 23
        %v5686 = vsub.s32 %v5685, 127
        %v5687 = vand.u32 2147483647, %v1271
        %v5688 = vand.u32 %v5687, 8388607
        %v5689 = vor.u32 %v5688, 8388608
        %v5690 = vsub.s32 0, %v5689
        %v5691 = vadd.s32 %v5686, 1
        %vm5692 = vcmp.gt.s32.totalorder %v5691, 0
        %v5693 = vsel %vm5692, %v5691, 0
        %v5694 = vshrl.u32 %v5693, 5
        %v5695 = vand.u32 %v5693, 31
        %v5696 = vsub.s32 32, %v5695
        %v5697 = vshrl.u32 683565275, %v5696
        %v5698 = vshll.u32 683565275, %v5695
        %v5699 = vshrl.u32 2475754826, %v5696
        %v5700 = vor.u32 %v5698, %v5699
        %v5701 = vshll.u32 2475754826, %v5695
        %v5702 = vshrl.u32 2131351028, %v5696
        %v5703 = vor.u32 %v5701, %v5702
        %v5704 = vshll.u32 2131351028, %v5695
        %v5705 = vshrl.u32 2102212464, %v5696
        %v5706 = vor.u32 %v5704, %v5705
        %v5707 = vshll.u32 2102212464, %v5695
        %v5708 = vshrl.u32 920167782, %v5696
        %v5709 = vor.u32 %v5707, %v5708
        %v5710 = vshll.u32 920167782, %v5695
        %v5711 = vshrl.u32 1326507024, %v5696
        %v5712 = vor.u32 %v5710, %v5711
        %vm5713 = vcmp.lt.s32.totalorder %v5694, 1
        %vm5714 = vcmp.lt.s32.totalorder %v5694, 2
        %vm5715 = vcmp.lt.s32.totalorder %v5694, 3
        %vm5716 = vcmp.lt.s32.totalorder %v5694, 4
        %v5717 = vsel %vm5713, %v5697, %v5700
        %v5718 = vsel %vm5716, %v5706, 2102212464
        %v5719 = vsel %vm5715, %v5703, %v5718
        %v5720 = vsel %vm5714, %v5717, %v5719
        %v5721 = vsel %vm5713, %v5700, %v5703
        %v5722 = vsel %vm5716, %v5709, 920167782
        %v5723 = vsel %vm5715, %v5706, %v5722
        %v5724 = vsel %vm5714, %v5721, %v5723
        %v5725 = vsel %vm5713, %v5703, %v5706
        %v5726 = vsel %vm5716, %v5712, 1326507024
        %v5727 = vsel %vm5715, %v5709, %v5726
        %v5728 = vsel %vm5714, %v5725, %v5727
        %v5729 = vshll.u32 %v5689, 8
        %v5730 = vmul.u32.u64.compose %v5729, %v5728
        %v5731 = vextract.low.u32 %v5730
        %v5732 = vextract.high.u32 %v5730
        %v5733 = vmul.u32.u64.compose %v5729, %v5724
        %v5734 = vextract.low.u32 %v5733
        %v5735 = vextract.high.u32 %v5733
        %v5736 = vmul.u32 %v5729, %v5720
        %v5737 = vadd.s32 %v5732, %v5734
        %vm5738 = vc.u32 %v5732, %v5734
        %v5739 = vadd.s32 %v5735, 1
        %v5740 = vsel %vm5738, %v5739, %v5735
        %v5741 = vadd.s32 %v5736, %v5740
        %v5742 = vadd.s32 %v5741, 536870912
        %v5743 = vshrl.u32 %v5742, 30
        %v5744 = vshll.u32 %v5743, 30
        %v5745 = vsub.s32 %v5741, %v5744
        %vm5746 = vcmp.lt.s32.totalorder %v5745, 0
        %v5747 = vsub.s32 0, %v5745
        %v5748 = vsel %vm5746, %v5747, %v5745
        %v5749 = vclz %v5748
        %v5750 = vsub.s32 %v5749, 2
        %vm5751 = vcmp.gt.s32.totalorder 0, %v5750
        %v5752 = vsel %vm5751, 0, %v5750
        %v5753 = vsub.s32 32, %v5752
        %v5754 = vshll.u32 %v5745, %v5752
        %v5755 = vshrl.u32 %v5737, %v5753
        %v5756 = vor.u32 %v5754, %v5755
        %v5757 = vsub.s32 4294967266, %v5752
        %v5758 = vadd.s32 %v5757, 127
        %v5759 = vshll.u32 %v5758, 23
        %v5760 = vor.u32 4788187, %v5759
        %v5761 = vand.u32 2147483647, %v5760
        %v5763 = vcvt.s32.f32 %v5756
        %v5764 = vmul.f32 %v5763, %v5761
        %v5765 = vxor.u32 %v5764, 2147483648
        %v5766 = vsel %vm5683, %v5765, %v5764
        %v5767 = vsub.s32 4, %v5743
        %v5768 = vsel %vm5683, %v5767, %v5743
        %v5769 = vsel %vm5682, %v1271, %v5766
        %v5770 = vsel %vm5682, 0, %v5768
        %v5771 = vcosq.f32.pop %v5769
        %v5772 = vsinq.f32.pop %v5769
        %vm5773 = vweird.f32 %v1271
        %v5774 = vand.u32 %v5770, 3
        %vm5775 = vcmp.lt.s32.totalorder %v5774, 2
        %vm5776 = vcmp.eq.s32.totalorder %v5774, 0
        %v5777 = vxor.u32 %v5772, 2147483648
        %v5778 = vsel %vm5776, %v5771, %v5777
        %vm5779 = vcmp.eq.s32.totalorder %v5774, 2
        %v5780 = vxor.u32 %v5771, 2147483648
        %v5781 = vsel %vm5779, %v5780, %v5772
        %v5782 = vsel %vm5775, %v5778, %v5781
        %v5783 = vsel %vm5773, nan, %v5782
        %v5784 = vand.u32 2147483647, %v1273
        %vm5785 = vcmp.le.f32.partialorder %v5784, 0.7853982
        %vm5786 = vcmp.lt.s32.totalorder %v1273, 0
        %v5787 = vand.u32 %v1273, 2139095040
        %v5788 = vshrl.u32 %v5787, 23
        %v5789 = vsub.s32 %v5788, 127
        %v5790 = vand.u32 2147483647, %v1273
        %v5791 = vand.u32 %v5790, 8388607
        %v5792 = vor.u32 %v5791, 8388608
        %v5793 = vsub.s32 0, %v5792
        %v5794 = vadd.s32 %v5789, 1
        %vm5795 = vcmp.gt.s32.totalorder %v5794, 0
        %v5796 = vsel %vm5795, %v5794, 0
        %v5797 = vshrl.u32 %v5796, 5
        %v5798 = vand.u32 %v5796, 31
        %v5799 = vsub.s32 32, %v5798
        %v5800 = vshrl.u32 683565275, %v5799
        %v5801 = vshll.u32 683565275, %v5798
        %v5802 = vshrl.u32 2475754826, %v5799
        %v5803 = vor.u32 %v5801, %v5802
        %v5804 = vshll.u32 2475754826, %v5798
        %v5805 = vshrl.u32 2131351028, %v5799
        %v5806 = vor.u32 %v5804, %v5805
        %v5807 = vshll.u32 2131351028, %v5798
        %v5808 = vshrl.u32 2102212464, %v5799
        %v5809 = vor.u32 %v5807, %v5808
        %v5810 = vshll.u32 2102212464, %v5798
        %v5811 = vshrl.u32 920167782, %v5799
        %v5812 = vor.u32 %v5810, %v5811
        %v5813 = vshll.u32 920167782, %v5798
        %v5814 = vshrl.u32 1326507024, %v5799
        %v5815 = vor.u32 %v5813, %v5814
        %vm5816 = vcmp.lt.s32.totalorder %v5797, 1
        %vm5817 = vcmp.lt.s32.totalorder %v5797, 2
        %vm5818 = vcmp.lt.s32.totalorder %v5797, 3
        %vm5819 = vcmp.lt.s32.totalorder %v5797, 4
        %v5820 = vsel %vm5816, %v5800, %v5803
        %v5821 = vsel %vm5819, %v5809, 2102212464
        %v5822 = vsel %vm5818, %v5806, %v5821
        %v5823 = vsel %vm5817, %v5820, %v5822
        %v5824 = vsel %vm5816, %v5803, %v5806
        %v5825 = vsel %vm5819, %v5812, 920167782
        %v5826 = vsel %vm5818, %v5809, %v5825
        %v5827 = vsel %vm5817, %v5824, %v5826
        %v5828 = vsel %vm5816, %v5806, %v5809
        %v5829 = vsel %vm5819, %v5815, 1326507024
        %v5830 = vsel %vm5818, %v5812, %v5829
        %v5831 = vsel %vm5817, %v5828, %v5830
        %v5832 = vshll.u32 %v5792, 8
        %v5833 = vmul.u32.u64.compose %v5832, %v5831
        %v5834 = vextract.low.u32 %v5833
        %v5835 = vextract.high.u32 %v5833
        %v5836 = vmul.u32.u64.compose %v5832, %v5827
        %v5837 = vextract.low.u32 %v5836
        %v5838 = vextract.high.u32 %v5836
        %v5839 = vmul.u32 %v5832, %v5823
        %v5840 = vadd.s32 %v5835, %v5837
        %vm5841 = vc.u32 %v5835, %v5837
        %v5842 = vadd.s32 %v5838, 1
        %v5843 = vsel %vm5841, %v5842, %v5838
        %v5844 = vadd.s32 %v5839, %v5843
        %v5845 = vadd.s32 %v5844, 536870912
        %v5846 = vshrl.u32 %v5845, 30
        %v5847 = vshll.u32 %v5846, 30
        %v5848 = vsub.s32 %v5844, %v5847
        %vm5849 = vcmp.lt.s32.totalorder %v5848, 0
        %v5850 = vsub.s32 0, %v5848
        %v5851 = vsel %vm5849, %v5850, %v5848
        %v5852 = vclz %v5851
        %v5853 = vsub.s32 %v5852, 2
        %vm5854 = vcmp.gt.s32.totalorder 0, %v5853
        %v5855 = vsel %vm5854, 0, %v5853
        %v5856 = vsub.s32 32, %v5855
        %v5857 = vshll.u32 %v5848, %v5855
        %v5858 = vshrl.u32 %v5840, %v5856
        %v5859 = vor.u32 %v5857, %v5858
        %v5860 = vsub.s32 4294967266, %v5855
        %v5861 = vadd.s32 %v5860, 127
        %v5862 = vshll.u32 %v5861, 23
        %v5863 = vor.u32 4788187, %v5862
        %v5864 = vand.u32 2147483647, %v5863
        %v5866 = vcvt.s32.f32 %v5859
        %v5867 = vmul.f32 %v5866, %v5864
        %v5868 = vxor.u32 %v5867, 2147483648
        %v5869 = vsel %vm5786, %v5868, %v5867
        %v5870 = vsub.s32 4, %v5846
        %v5871 = vsel %vm5786, %v5870, %v5846
        %v5872 = vsel %vm5785, %v1273, %v5869
        %v5873 = vsel %vm5785, 0, %v5871
        %v5874 = vcosq.f32.pop %v5872
        %v5875 = vsinq.f32.pop %v5872
        %vm5876 = vweird.f32 %v1273
        %v5877 = vand.u32 %v5873, 3
        %vm5878 = vcmp.lt.s32.totalorder %v5877, 2
        %vm5879 = vcmp.eq.s32.totalorder %v5877, 0
        %v5880 = vxor.u32 %v5875, 2147483648
        %v5881 = vsel %vm5879, %v5874, %v5880
        %vm5882 = vcmp.eq.s32.totalorder %v5877, 2
        %v5883 = vxor.u32 %v5874, 2147483648
        %v5884 = vsel %vm5882, %v5883, %v5875
        %v5885 = vsel %vm5878, %v5881, %v5884
        %v5886 = vsel %vm5876, nan, %v5885
        %v5887 = vand.u32 2147483647, %v1278
        %vm5888 = vcmp.le.f32.partialorder %v5887, 0.7853982
        %vm5889 = vcmp.lt.s32.totalorder %v1278, 0
        %v5890 = vand.u32 %v1278, 2139095040
        %v5891 = vshrl.u32 %v5890, 23
        %v5892 = vsub.s32 %v5891, 127
        %v5893 = vand.u32 2147483647, %v1278
        %v5894 = vand.u32 %v5893, 8388607
        %v5895 = vor.u32 %v5894, 8388608
        %v5896 = vsub.s32 0, %v5895
        %v5897 = vadd.s32 %v5892, 1
        %vm5898 = vcmp.gt.s32.totalorder %v5897, 0
        %v5899 = vsel %vm5898, %v5897, 0
        %v5900 = vshrl.u32 %v5899, 5
        %v5901 = vand.u32 %v5899, 31
        %v5902 = vsub.s32 32, %v5901
        %v5903 = vshrl.u32 683565275, %v5902
        %v5904 = vshll.u32 683565275, %v5901
        %v5905 = vshrl.u32 2475754826, %v5902
        %v5906 = vor.u32 %v5904, %v5905
        %v5907 = vshll.u32 2475754826, %v5901
        %v5908 = vshrl.u32 2131351028, %v5902
        %v5909 = vor.u32 %v5907, %v5908
        %v5910 = vshll.u32 2131351028, %v5901
        %v5911 = vshrl.u32 2102212464, %v5902
        %v5912 = vor.u32 %v5910, %v5911
        %v5913 = vshll.u32 2102212464, %v5901
        %v5914 = vshrl.u32 920167782, %v5902
        %v5915 = vor.u32 %v5913, %v5914
        %v5916 = vshll.u32 920167782, %v5901
        %v5917 = vshrl.u32 1326507024, %v5902
        %v5918 = vor.u32 %v5916, %v5917
        %vm5919 = vcmp.lt.s32.totalorder %v5900, 1
        %vm5920 = vcmp.lt.s32.totalorder %v5900, 2
        %vm5921 = vcmp.lt.s32.totalorder %v5900, 3
        %vm5922 = vcmp.lt.s32.totalorder %v5900, 4
        %v5923 = vsel %vm5919, %v5903, %v5906
        %v5924 = vsel %vm5922, %v5912, 2102212464
        %v5925 = vsel %vm5921, %v5909, %v5924
        %v5926 = vsel %vm5920, %v5923, %v5925
        %v5927 = vsel %vm5919, %v5906, %v5909
        %v5928 = vsel %vm5922, %v5915, 920167782
        %v5929 = vsel %vm5921, %v5912, %v5928
        %v5930 = vsel %vm5920, %v5927, %v5929
        %v5931 = vsel %vm5919, %v5909, %v5912
        %v5932 = vsel %vm5922, %v5918, 1326507024
        %v5933 = vsel %vm5921, %v5915, %v5932
        %v5934 = vsel %vm5920, %v5931, %v5933
        %v5935 = vshll.u32 %v5895, 8
        %v5936 = vmul.u32.u64.compose %v5935, %v5934
        %v5937 = vextract.low.u32 %v5936
        %v5938 = vextract.high.u32 %v5936
        %v5939 = vmul.u32.u64.compose %v5935, %v5930
        %v5940 = vextract.low.u32 %v5939
        %v5941 = vextract.high.u32 %v5939
        %v5942 = vmul.u32 %v5935, %v5926
        %v5943 = vadd.s32 %v5938, %v5940
        %vm5944 = vc.u32 %v5938, %v5940
        %v5945 = vadd.s32 %v5941, 1
        %v5946 = vsel %vm5944, %v5945, %v5941
        %v5947 = vadd.s32 %v5942, %v5946
        %v5948 = vadd.s32 %v5947, 536870912
        %v5949 = vshrl.u32 %v5948, 30
        %v5950 = vshll.u32 %v5949, 30
        %v5951 = vsub.s32 %v5947, %v5950
        %vm5952 = vcmp.lt.s32.totalorder %v5951, 0
        %v5953 = vsub.s32 0, %v5951
        %v5954 = vsel %vm5952, %v5953, %v5951
        %v5955 = vclz %v5954
        %v5956 = vsub.s32 %v5955, 2
        %vm5957 = vcmp.gt.s32.totalorder 0, %v5956
        %v5958 = vsel %vm5957, 0, %v5956
        %v5959 = vsub.s32 32, %v5958
        %v5960 = vshll.u32 %v5951, %v5958
        %v5961 = vshrl.u32 %v5943, %v5959
        %v5962 = vor.u32 %v5960, %v5961
        %v5963 = vsub.s32 4294967266, %v5958
        %v5964 = vadd.s32 %v5963, 127
        %v5965 = vshll.u32 %v5964, 23
        %v5966 = vor.u32 4788187, %v5965
        %v5967 = vand.u32 2147483647, %v5966
        %v5969 = vcvt.s32.f32 %v5962
        %v5970 = vmul.f32 %v5969, %v5967
        %v5971 = vxor.u32 %v5970, 2147483648
        %v5972 = vsel %vm5889, %v5971, %v5970
        %v5973 = vsub.s32 4, %v5949
        %v5974 = vsel %vm5889, %v5973, %v5949
        %v5975 = vsel %vm5888, %v1278, %v5972
        %v5976 = vsel %vm5888, 0, %v5974
        %v5977 = vcosq.f32.pop %v5975
        %v5978 = vsinq.f32.pop %v5975
        %vm5979 = vweird.f32 %v1278
        %v5980 = vand.u32 %v5976, 3
        %vm5981 = vcmp.lt.s32.totalorder %v5980, 2
        %vm5982 = vcmp.eq.s32.totalorder %v5980, 0
        %v5983 = vxor.u32 %v5978, 2147483648
        %v5984 = vsel %vm5982, %v5977, %v5983
        %vm5985 = vcmp.eq.s32.totalorder %v5980, 2
        %v5986 = vxor.u32 %v5977, 2147483648
        %v5987 = vsel %vm5985, %v5986, %v5978
        %v5988 = vsel %vm5981, %v5984, %v5987
        %v5989 = vsel %vm5979, nan, %v5988
        %v5990 = vand.u32 2147483647, %v1280
        %vm5991 = vcmp.le.f32.partialorder %v5990, 0.7853982
        %vm5992 = vcmp.lt.s32.totalorder %v1280, 0
        %v5993 = vand.u32 %v1280, 2139095040
        %v5994 = vshrl.u32 %v5993, 23
        %v5995 = vsub.s32 %v5994, 127
        %v5996 = vand.u32 2147483647, %v1280
        %v5997 = vand.u32 %v5996, 8388607
        %v5998 = vor.u32 %v5997, 8388608
        %v5999 = vsub.s32 0, %v5998
        %v6000 = vadd.s32 %v5995, 1
        %vm6001 = vcmp.gt.s32.totalorder %v6000, 0
        %v6002 = vsel %vm6001, %v6000, 0
        %v6003 = vshrl.u32 %v6002, 5
        %v6004 = vand.u32 %v6002, 31
        %v6005 = vsub.s32 32, %v6004
        %v6006 = vshrl.u32 683565275, %v6005
        %v6007 = vshll.u32 683565275, %v6004
        %v6008 = vshrl.u32 2475754826, %v6005
        %v6009 = vor.u32 %v6007, %v6008
        %v6010 = vshll.u32 2475754826, %v6004
        %v6011 = vshrl.u32 2131351028, %v6005
        %v6012 = vor.u32 %v6010, %v6011
        %v6013 = vshll.u32 2131351028, %v6004
        %v6014 = vshrl.u32 2102212464, %v6005
        %v6015 = vor.u32 %v6013, %v6014
        %v6016 = vshll.u32 2102212464, %v6004
        %v6017 = vshrl.u32 920167782, %v6005
        %v6018 = vor.u32 %v6016, %v6017
        %v6019 = vshll.u32 920167782, %v6004
        %v6020 = vshrl.u32 1326507024, %v6005
        %v6021 = vor.u32 %v6019, %v6020
        %vm6022 = vcmp.lt.s32.totalorder %v6003, 1
        %vm6023 = vcmp.lt.s32.totalorder %v6003, 2
        %vm6024 = vcmp.lt.s32.totalorder %v6003, 3
        %vm6025 = vcmp.lt.s32.totalorder %v6003, 4
        %v6026 = vsel %vm6022, %v6006, %v6009
        %v6027 = vsel %vm6025, %v6015, 2102212464
        %v6028 = vsel %vm6024, %v6012, %v6027
        %v6029 = vsel %vm6023, %v6026, %v6028
        %v6030 = vsel %vm6022, %v6009, %v6012
        %v6031 = vsel %vm6025, %v6018, 920167782
        %v6032 = vsel %vm6024, %v6015, %v6031
        %v6033 = vsel %vm6023, %v6030, %v6032
        %v6034 = vsel %vm6022, %v6012, %v6015
        %v6035 = vsel %vm6025, %v6021, 1326507024
        %v6036 = vsel %vm6024, %v6018, %v6035
        %v6037 = vsel %vm6023, %v6034, %v6036
        %v6038 = vshll.u32 %v5998, 8
        %v6039 = vmul.u32.u64.compose %v6038, %v6037
        %v6040 = vextract.low.u32 %v6039
        %v6041 = vextract.high.u32 %v6039
        %v6042 = vmul.u32.u64.compose %v6038, %v6033
        %v6043 = vextract.low.u32 %v6042
        %v6044 = vextract.high.u32 %v6042
        %v6045 = vmul.u32 %v6038, %v6029
        %v6046 = vadd.s32 %v6041, %v6043
        %vm6047 = vc.u32 %v6041, %v6043
        %v6048 = vadd.s32 %v6044, 1
        %v6049 = vsel %vm6047, %v6048, %v6044
        %v6050 = vadd.s32 %v6045, %v6049
        %v6051 = vadd.s32 %v6050, 536870912
        %v6052 = vshrl.u32 %v6051, 30
        %v6053 = vshll.u32 %v6052, 30
        %v6054 = vsub.s32 %v6050, %v6053
        %vm6055 = vcmp.lt.s32.totalorder %v6054, 0
        %v6056 = vsub.s32 0, %v6054
        %v6057 = vsel %vm6055, %v6056, %v6054
        %v6058 = vclz %v6057
        %v6059 = vsub.s32 %v6058, 2
        %vm6060 = vcmp.gt.s32.totalorder 0, %v6059
        %v6061 = vsel %vm6060, 0, %v6059
        %v6062 = vsub.s32 32, %v6061
        %v6063 = vshll.u32 %v6054, %v6061
        %v6064 = vshrl.u32 %v6046, %v6062
        %v6065 = vor.u32 %v6063, %v6064
        %v6066 = vsub.s32 4294967266, %v6061
        %v6067 = vadd.s32 %v6066, 127
        %v6068 = vshll.u32 %v6067, 23
        %v6069 = vor.u32 4788187, %v6068
        %v6070 = vand.u32 2147483647, %v6069
        %v6072 = vcvt.s32.f32 %v6065
        %v6073 = vmul.f32 %v6072, %v6070
        %v6074 = vxor.u32 %v6073, 2147483648
        %v6075 = vsel %vm5992, %v6074, %v6073
        %v6076 = vsub.s32 4, %v6052
        %v6077 = vsel %vm5992, %v6076, %v6052
        %v6078 = vsel %vm5991, %v1280, %v6075
        %v6079 = vsel %vm5991, 0, %v6077
        %v6080 = vcosq.f32.pop %v6078
        %v6081 = vsinq.f32.pop %v6078
        %vm6082 = vweird.f32 %v1280
        %v6083 = vand.u32 %v6079, 3
        %vm6084 = vcmp.lt.s32.totalorder %v6083, 2
        %vm6085 = vcmp.eq.s32.totalorder %v6083, 0
        %v6086 = vxor.u32 %v6081, 2147483648
        %v6087 = vsel %vm6085, %v6080, %v6086
        %vm6088 = vcmp.eq.s32.totalorder %v6083, 2
        %v6089 = vxor.u32 %v6080, 2147483648
        %v6090 = vsel %vm6088, %v6089, %v6081
        %v6091 = vsel %vm6084, %v6087, %v6090
        %v6092 = vsel %vm6082, nan, %v6091
        %v6093 = vand.u32 2147483647, %v1285
        %vm6094 = vcmp.le.f32.partialorder %v6093, 0.7853982
        %vm6095 = vcmp.lt.s32.totalorder %v1285, 0
        %v6096 = vand.u32 %v1285, 2139095040
        %v6097 = vshrl.u32 %v6096, 23
        %v6098 = vsub.s32 %v6097, 127
        %v6099 = vand.u32 2147483647, %v1285
        %v6100 = vand.u32 %v6099, 8388607
        %v6101 = vor.u32 %v6100, 8388608
        %v6102 = vsub.s32 0, %v6101
        %v6103 = vadd.s32 %v6098, 1
        %vm6104 = vcmp.gt.s32.totalorder %v6103, 0
        %v6105 = vsel %vm6104, %v6103, 0
        %v6106 = vshrl.u32 %v6105, 5
        %v6107 = vand.u32 %v6105, 31
        %v6108 = vsub.s32 32, %v6107
        %v6109 = vshrl.u32 683565275, %v6108
        %v6110 = vshll.u32 683565275, %v6107
        %v6111 = vshrl.u32 2475754826, %v6108
        %v6112 = vor.u32 %v6110, %v6111
        %v6113 = vshll.u32 2475754826, %v6107
        %v6114 = vshrl.u32 2131351028, %v6108
        %v6115 = vor.u32 %v6113, %v6114
        %v6116 = vshll.u32 2131351028, %v6107
        %v6117 = vshrl.u32 2102212464, %v6108
        %v6118 = vor.u32 %v6116, %v6117
        %v6119 = vshll.u32 2102212464, %v6107
        %v6120 = vshrl.u32 920167782, %v6108
        %v6121 = vor.u32 %v6119, %v6120
        %v6122 = vshll.u32 920167782, %v6107
        %v6123 = vshrl.u32 1326507024, %v6108
        %v6124 = vor.u32 %v6122, %v6123
        %vm6125 = vcmp.lt.s32.totalorder %v6106, 1
        %vm6126 = vcmp.lt.s32.totalorder %v6106, 2
        %vm6127 = vcmp.lt.s32.totalorder %v6106, 3
        %vm6128 = vcmp.lt.s32.totalorder %v6106, 4
        %v6129 = vsel %vm6125, %v6109, %v6112
        %v6130 = vsel %vm6128, %v6118, 2102212464
        %v6131 = vsel %vm6127, %v6115, %v6130
        %v6132 = vsel %vm6126, %v6129, %v6131
        %v6133 = vsel %vm6125, %v6112, %v6115
        %v6134 = vsel %vm6128, %v6121, 920167782
        %v6135 = vsel %vm6127, %v6118, %v6134
        %v6136 = vsel %vm6126, %v6133, %v6135
        %v6137 = vsel %vm6125, %v6115, %v6118
        %v6138 = vsel %vm6128, %v6124, 1326507024
        %v6139 = vsel %vm6127, %v6121, %v6138
        %v6140 = vsel %vm6126, %v6137, %v6139
        %v6141 = vshll.u32 %v6101, 8
        %v6142 = vmul.u32.u64.compose %v6141, %v6140
        %v6143 = vextract.low.u32 %v6142
        %v6144 = vextract.high.u32 %v6142
        %v6145 = vmul.u32.u64.compose %v6141, %v6136
        %v6146 = vextract.low.u32 %v6145
        %v6147 = vextract.high.u32 %v6145
        %v6148 = vmul.u32 %v6141, %v6132
        %v6149 = vadd.s32 %v6144, %v6146
        %vm6150 = vc.u32 %v6144, %v6146
        %v6151 = vadd.s32 %v6147, 1
        %v6152 = vsel %vm6150, %v6151, %v6147
        %v6153 = vadd.s32 %v6148, %v6152
        %v6154 = vadd.s32 %v6153, 536870912
        %v6155 = vshrl.u32 %v6154, 30
        %v6156 = vshll.u32 %v6155, 30
        %v6157 = vsub.s32 %v6153, %v6156
        %vm6158 = vcmp.lt.s32.totalorder %v6157, 0
        %v6159 = vsub.s32 0, %v6157
        %v6160 = vsel %vm6158, %v6159, %v6157
        %v6161 = vclz %v6160
        %v6162 = vsub.s32 %v6161, 2
        %vm6163 = vcmp.gt.s32.totalorder 0, %v6162
        %v6164 = vsel %vm6163, 0, %v6162
        %v6165 = vsub.s32 32, %v6164
        %v6166 = vshll.u32 %v6157, %v6164
        %v6167 = vshrl.u32 %v6149, %v6165
        %v6168 = vor.u32 %v6166, %v6167
        %v6169 = vsub.s32 4294967266, %v6164
        %v6170 = vadd.s32 %v6169, 127
        %v6171 = vshll.u32 %v6170, 23
        %v6172 = vor.u32 4788187, %v6171
        %v6173 = vand.u32 2147483647, %v6172
        %v6175 = vcvt.s32.f32 %v6168
        %v6176 = vmul.f32 %v6175, %v6173
        %v6177 = vxor.u32 %v6176, 2147483648
        %v6178 = vsel %vm6095, %v6177, %v6176
        %v6179 = vsub.s32 4, %v6155
        %v6180 = vsel %vm6095, %v6179, %v6155
        %v6181 = vsel %vm6094, %v1285, %v6178
        %v6182 = vsel %vm6094, 0, %v6180
        %v6183 = vcosq.f32.pop %v6181
        %v6184 = vsinq.f32.pop %v6181
        %vm6185 = vweird.f32 %v1285
        %v6186 = vand.u32 %v6182, 3
        %vm6187 = vcmp.lt.s32.totalorder %v6186, 2
        %vm6188 = vcmp.eq.s32.totalorder %v6186, 0
        %v6189 = vxor.u32 %v6184, 2147483648
        %v6190 = vsel %vm6188, %v6183, %v6189
        %vm6191 = vcmp.eq.s32.totalorder %v6186, 2
        %v6192 = vxor.u32 %v6183, 2147483648
        %v6193 = vsel %vm6191, %v6192, %v6184
        %v6194 = vsel %vm6187, %v6190, %v6193
        %v6195 = vsel %vm6185, nan, %v6194
        %v6196 = vand.u32 2147483647, %v1287
        %vm6197 = vcmp.le.f32.partialorder %v6196, 0.7853982
        %vm6198 = vcmp.lt.s32.totalorder %v1287, 0
        %v6199 = vand.u32 %v1287, 2139095040
        %v6200 = vshrl.u32 %v6199, 23
        %v6201 = vsub.s32 %v6200, 127
        %v6202 = vand.u32 2147483647, %v1287
        %v6203 = vand.u32 %v6202, 8388607
        %v6204 = vor.u32 %v6203, 8388608
        %v6205 = vsub.s32 0, %v6204
        %v6206 = vadd.s32 %v6201, 1
        %vm6207 = vcmp.gt.s32.totalorder %v6206, 0
        %v6208 = vsel %vm6207, %v6206, 0
        %v6209 = vshrl.u32 %v6208, 5
        %v6210 = vand.u32 %v6208, 31
        %v6211 = vsub.s32 32, %v6210
        %v6212 = vshrl.u32 683565275, %v6211
        %v6213 = vshll.u32 683565275, %v6210
        %v6214 = vshrl.u32 2475754826, %v6211
        %v6215 = vor.u32 %v6213, %v6214
        %v6216 = vshll.u32 2475754826, %v6210
        %v6217 = vshrl.u32 2131351028, %v6211
        %v6218 = vor.u32 %v6216, %v6217
        %v6219 = vshll.u32 2131351028, %v6210
        %v6220 = vshrl.u32 2102212464, %v6211
        %v6221 = vor.u32 %v6219, %v6220
        %v6222 = vshll.u32 2102212464, %v6210
        %v6223 = vshrl.u32 920167782, %v6211
        %v6224 = vor.u32 %v6222, %v6223
        %v6225 = vshll.u32 920167782, %v6210
        %v6226 = vshrl.u32 1326507024, %v6211
        %v6227 = vor.u32 %v6225, %v6226
        %vm6228 = vcmp.lt.s32.totalorder %v6209, 1
        %vm6229 = vcmp.lt.s32.totalorder %v6209, 2
        %vm6230 = vcmp.lt.s32.totalorder %v6209, 3
        %vm6231 = vcmp.lt.s32.totalorder %v6209, 4
        %v6232 = vsel %vm6228, %v6212, %v6215
        %v6233 = vsel %vm6231, %v6221, 2102212464
        %v6234 = vsel %vm6230, %v6218, %v6233
        %v6235 = vsel %vm6229, %v6232, %v6234
        %v6236 = vsel %vm6228, %v6215, %v6218
        %v6237 = vsel %vm6231, %v6224, 920167782
        %v6238 = vsel %vm6230, %v6221, %v6237
        %v6239 = vsel %vm6229, %v6236, %v6238
        %v6240 = vsel %vm6228, %v6218, %v6221
        %v6241 = vsel %vm6231, %v6227, 1326507024
        %v6242 = vsel %vm6230, %v6224, %v6241
        %v6243 = vsel %vm6229, %v6240, %v6242
        %v6244 = vshll.u32 %v6204, 8
        %v6245 = vmul.u32.u64.compose %v6244, %v6243
        %v6246 = vextract.low.u32 %v6245
        %v6247 = vextract.high.u32 %v6245
        %v6248 = vmul.u32.u64.compose %v6244, %v6239
        %v6249 = vextract.low.u32 %v6248
        %v6250 = vextract.high.u32 %v6248
        %v6251 = vmul.u32 %v6244, %v6235
        %v6252 = vadd.s32 %v6247, %v6249
        %vm6253 = vc.u32 %v6247, %v6249
        %v6254 = vadd.s32 %v6250, 1
        %v6255 = vsel %vm6253, %v6254, %v6250
        %v6256 = vadd.s32 %v6251, %v6255
        %v6257 = vadd.s32 %v6256, 536870912
        %v6258 = vshrl.u32 %v6257, 30
        %v6259 = vshll.u32 %v6258, 30
        %v6260 = vsub.s32 %v6256, %v6259
        %vm6261 = vcmp.lt.s32.totalorder %v6260, 0
        %v6262 = vsub.s32 0, %v6260
        %v6263 = vsel %vm6261, %v6262, %v6260
        %v6264 = vclz %v6263
        %v6265 = vsub.s32 %v6264, 2
        %vm6266 = vcmp.gt.s32.totalorder 0, %v6265
        %v6267 = vsel %vm6266, 0, %v6265
        %v6268 = vsub.s32 32, %v6267
        %v6269 = vshll.u32 %v6260, %v6267
        %v6270 = vshrl.u32 %v6252, %v6268
        %v6271 = vor.u32 %v6269, %v6270
        %v6272 = vsub.s32 4294967266, %v6267
        %v6273 = vadd.s32 %v6272, 127
        %v6274 = vshll.u32 %v6273, 23
        %v6275 = vor.u32 4788187, %v6274
        %v6276 = vand.u32 2147483647, %v6275
        %v6278 = vcvt.s32.f32 %v6271
        %v6279 = vmul.f32 %v6278, %v6276
        %v6280 = vxor.u32 %v6279, 2147483648
        %v6281 = vsel %vm6198, %v6280, %v6279
        %v6282 = vsub.s32 4, %v6258
        %v6283 = vsel %vm6198, %v6282, %v6258
        %v6284 = vsel %vm6197, %v1287, %v6281
        %v6285 = vsel %vm6197, 0, %v6283
        %v6286 = vcosq.f32.pop %v6284
        %v6287 = vsinq.f32.pop %v6284
        %vm6288 = vweird.f32 %v1287
        %v6289 = vand.u32 %v6285, 3
        %vm6290 = vcmp.lt.s32.totalorder %v6289, 2
        %vm6291 = vcmp.eq.s32.totalorder %v6289, 0
        %v6292 = vxor.u32 %v6287, 2147483648
        %v6293 = vsel %vm6291, %v6286, %v6292
        %vm6294 = vcmp.eq.s32.totalorder %v6289, 2
        %v6295 = vxor.u32 %v6286, 2147483648
        %v6296 = vsel %vm6294, %v6295, %v6287
        %v6297 = vsel %vm6290, %v6293, %v6296
        %v6298 = vsel %vm6288, nan, %v6297
        %v6299 = vand.u32 2147483647, %v1292
        %vm6300 = vcmp.le.f32.partialorder %v6299, 0.7853982
        %vm6301 = vcmp.lt.s32.totalorder %v1292, 0
        %v6302 = vand.u32 %v1292, 2139095040
        %v6303 = vshrl.u32 %v6302, 23
        %v6304 = vsub.s32 %v6303, 127
        %v6305 = vand.u32 2147483647, %v1292
        %v6306 = vand.u32 %v6305, 8388607
        %v6307 = vor.u32 %v6306, 8388608
        %v6308 = vsub.s32 0, %v6307
        %v6309 = vadd.s32 %v6304, 1
        %vm6310 = vcmp.gt.s32.totalorder %v6309, 0
        %v6311 = vsel %vm6310, %v6309, 0
        %v6312 = vshrl.u32 %v6311, 5
        %v6313 = vand.u32 %v6311, 31
        %v6314 = vsub.s32 32, %v6313
        %v6315 = vshrl.u32 683565275, %v6314
        %v6316 = vshll.u32 683565275, %v6313
        %v6317 = vshrl.u32 2475754826, %v6314
        %v6318 = vor.u32 %v6316, %v6317
        %v6319 = vshll.u32 2475754826, %v6313
        %v6320 = vshrl.u32 2131351028, %v6314
        %v6321 = vor.u32 %v6319, %v6320
        %v6322 = vshll.u32 2131351028, %v6313
        %v6323 = vshrl.u32 2102212464, %v6314
        %v6324 = vor.u32 %v6322, %v6323
        %v6325 = vshll.u32 2102212464, %v6313
        %v6326 = vshrl.u32 920167782, %v6314
        %v6327 = vor.u32 %v6325, %v6326
        %v6328 = vshll.u32 920167782, %v6313
        %v6329 = vshrl.u32 1326507024, %v6314
        %v6330 = vor.u32 %v6328, %v6329
        %vm6331 = vcmp.lt.s32.totalorder %v6312, 1
        %vm6332 = vcmp.lt.s32.totalorder %v6312, 2
        %vm6333 = vcmp.lt.s32.totalorder %v6312, 3
        %vm6334 = vcmp.lt.s32.totalorder %v6312, 4
        %v6335 = vsel %vm6331, %v6315, %v6318
        %v6336 = vsel %vm6334, %v6324, 2102212464
        %v6337 = vsel %vm6333, %v6321, %v6336
        %v6338 = vsel %vm6332, %v6335, %v6337
        %v6339 = vsel %vm6331, %v6318, %v6321
        %v6340 = vsel %vm6334, %v6327, 920167782
        %v6341 = vsel %vm6333, %v6324, %v6340
        %v6342 = vsel %vm6332, %v6339, %v6341
        %v6343 = vsel %vm6331, %v6321, %v6324
        %v6344 = vsel %vm6334, %v6330, 1326507024
        %v6345 = vsel %vm6333, %v6327, %v6344
        %v6346 = vsel %vm6332, %v6343, %v6345
        %v6347 = vshll.u32 %v6307, 8
        %v6348 = vmul.u32.u64.compose %v6347, %v6346
        %v6349 = vextract.low.u32 %v6348
        %v6350 = vextract.high.u32 %v6348
        %v6351 = vmul.u32.u64.compose %v6347, %v6342
        %v6352 = vextract.low.u32 %v6351
        %v6353 = vextract.high.u32 %v6351
        %v6354 = vmul.u32 %v6347, %v6338
        %v6355 = vadd.s32 %v6350, %v6352
        %vm6356 = vc.u32 %v6350, %v6352
        %v6357 = vadd.s32 %v6353, 1
        %v6358 = vsel %vm6356, %v6357, %v6353
        %v6359 = vadd.s32 %v6354, %v6358
        %v6360 = vadd.s32 %v6359, 536870912
        %v6361 = vshrl.u32 %v6360, 30
        %v6362 = vshll.u32 %v6361, 30
        %v6363 = vsub.s32 %v6359, %v6362
        %vm6364 = vcmp.lt.s32.totalorder %v6363, 0
        %v6365 = vsub.s32 0, %v6363
        %v6366 = vsel %vm6364, %v6365, %v6363
        %v6367 = vclz %v6366
        %v6368 = vsub.s32 %v6367, 2
        %vm6369 = vcmp.gt.s32.totalorder 0, %v6368
        %v6370 = vsel %vm6369, 0, %v6368
        %v6371 = vsub.s32 32, %v6370
        %v6372 = vshll.u32 %v6363, %v6370
        %v6373 = vshrl.u32 %v6355, %v6371
        %v6374 = vor.u32 %v6372, %v6373
        %v6375 = vsub.s32 4294967266, %v6370
        %v6376 = vadd.s32 %v6375, 127
        %v6377 = vshll.u32 %v6376, 23
        %v6378 = vor.u32 4788187, %v6377
        %v6379 = vand.u32 2147483647, %v6378
        %v6381 = vcvt.s32.f32 %v6374
        %v6382 = vmul.f32 %v6381, %v6379
        %v6383 = vxor.u32 %v6382, 2147483648
        %v6384 = vsel %vm6301, %v6383, %v6382
        %v6385 = vsub.s32 4, %v6361
        %v6386 = vsel %vm6301, %v6385, %v6361
        %v6387 = vsel %vm6300, %v1292, %v6384
        %v6388 = vsel %vm6300, 0, %v6386
        %v6389 = vcosq.f32.pop %v6387
        %v6390 = vsinq.f32.pop %v6387
        %vm6391 = vweird.f32 %v1292
        %v6392 = vand.u32 %v6388, 3
        %vm6393 = vcmp.lt.s32.totalorder %v6392, 2
        %vm6394 = vcmp.eq.s32.totalorder %v6392, 0
        %v6395 = vxor.u32 %v6390, 2147483648
        %v6396 = vsel %vm6394, %v6389, %v6395
        %vm6397 = vcmp.eq.s32.totalorder %v6392, 2
        %v6398 = vxor.u32 %v6389, 2147483648
        %v6399 = vsel %vm6397, %v6398, %v6390
        %v6400 = vsel %vm6393, %v6396, %v6399
        %v6401 = vsel %vm6391, nan, %v6400
        %v6402 = vand.u32 2147483647, %v1294
        %vm6403 = vcmp.le.f32.partialorder %v6402, 0.7853982
        %vm6404 = vcmp.lt.s32.totalorder %v1294, 0
        %v6405 = vand.u32 %v1294, 2139095040
        %v6406 = vshrl.u32 %v6405, 23
        %v6407 = vsub.s32 %v6406, 127
        %v6408 = vand.u32 2147483647, %v1294
        %v6409 = vand.u32 %v6408, 8388607
        %v6410 = vor.u32 %v6409, 8388608
        %v6411 = vsub.s32 0, %v6410
        %v6412 = vadd.s32 %v6407, 1
        %vm6413 = vcmp.gt.s32.totalorder %v6412, 0
        %v6414 = vsel %vm6413, %v6412, 0
        %v6415 = vshrl.u32 %v6414, 5
        %v6416 = vand.u32 %v6414, 31
        %v6417 = vsub.s32 32, %v6416
        %v6418 = vshrl.u32 683565275, %v6417
        %v6419 = vshll.u32 683565275, %v6416
        %v6420 = vshrl.u32 2475754826, %v6417
        %v6421 = vor.u32 %v6419, %v6420
        %v6422 = vshll.u32 2475754826, %v6416
        %v6423 = vshrl.u32 2131351028, %v6417
        %v6424 = vor.u32 %v6422, %v6423
        %v6425 = vshll.u32 2131351028, %v6416
        %v6426 = vshrl.u32 2102212464, %v6417
        %v6427 = vor.u32 %v6425, %v6426
        %v6428 = vshll.u32 2102212464, %v6416
        %v6429 = vshrl.u32 920167782, %v6417
        %v6430 = vor.u32 %v6428, %v6429
        %v6431 = vshll.u32 920167782, %v6416
        %v6432 = vshrl.u32 1326507024, %v6417
        %v6433 = vor.u32 %v6431, %v6432
        %vm6434 = vcmp.lt.s32.totalorder %v6415, 1
        %vm6435 = vcmp.lt.s32.totalorder %v6415, 2
        %vm6436 = vcmp.lt.s32.totalorder %v6415, 3
        %vm6437 = vcmp.lt.s32.totalorder %v6415, 4
        %v6438 = vsel %vm6434, %v6418, %v6421
        %v6439 = vsel %vm6437, %v6427, 2102212464
        %v6440 = vsel %vm6436, %v6424, %v6439
        %v6441 = vsel %vm6435, %v6438, %v6440
        %v6442 = vsel %vm6434, %v6421, %v6424
        %v6443 = vsel %vm6437, %v6430, 920167782
        %v6444 = vsel %vm6436, %v6427, %v6443
        %v6445 = vsel %vm6435, %v6442, %v6444
        %v6446 = vsel %vm6434, %v6424, %v6427
        %v6447 = vsel %vm6437, %v6433, 1326507024
        %v6448 = vsel %vm6436, %v6430, %v6447
        %v6449 = vsel %vm6435, %v6446, %v6448
        %v6450 = vshll.u32 %v6410, 8
        %v6451 = vmul.u32.u64.compose %v6450, %v6449
        %v6452 = vextract.low.u32 %v6451
        %v6453 = vextract.high.u32 %v6451
        %v6454 = vmul.u32.u64.compose %v6450, %v6445
        %v6455 = vextract.low.u32 %v6454
        %v6456 = vextract.high.u32 %v6454
        %v6457 = vmul.u32 %v6450, %v6441
        %v6458 = vadd.s32 %v6453, %v6455
        %vm6459 = vc.u32 %v6453, %v6455
        %v6460 = vadd.s32 %v6456, 1
        %v6461 = vsel %vm6459, %v6460, %v6456
        %v6462 = vadd.s32 %v6457, %v6461
        %v6463 = vadd.s32 %v6462, 536870912
        %v6464 = vshrl.u32 %v6463, 30
        %v6465 = vshll.u32 %v6464, 30
        %v6466 = vsub.s32 %v6462, %v6465
        %vm6467 = vcmp.lt.s32.totalorder %v6466, 0
        %v6468 = vsub.s32 0, %v6466
        %v6469 = vsel %vm6467, %v6468, %v6466
        %v6470 = vclz %v6469
        %v6471 = vsub.s32 %v6470, 2
        %vm6472 = vcmp.gt.s32.totalorder 0, %v6471
        %v6473 = vsel %vm6472, 0, %v6471
        %v6474 = vsub.s32 32, %v6473
        %v6475 = vshll.u32 %v6466, %v6473
        %v6476 = vshrl.u32 %v6458, %v6474
        %v6477 = vor.u32 %v6475, %v6476
        %v6478 = vsub.s32 4294967266, %v6473
        %v6479 = vadd.s32 %v6478, 127
        %v6480 = vshll.u32 %v6479, 23
        %v6481 = vor.u32 4788187, %v6480
        %v6482 = vand.u32 2147483647, %v6481
        %v6484 = vcvt.s32.f32 %v6477
        %v6485 = vmul.f32 %v6484, %v6482
        %v6486 = vxor.u32 %v6485, 2147483648
        %v6487 = vsel %vm6404, %v6486, %v6485
        %v6488 = vsub.s32 4, %v6464
        %v6489 = vsel %vm6404, %v6488, %v6464
        %v6490 = vsel %vm6403, %v1294, %v6487
        %v6491 = vsel %vm6403, 0, %v6489
        %v6492 = vcosq.f32.pop %v6490
        %v6493 = vsinq.f32.pop %v6490
        %vm6494 = vweird.f32 %v1294
        %v6495 = vand.u32 %v6491, 3
        %vm6496 = vcmp.lt.s32.totalorder %v6495, 2
        %vm6497 = vcmp.eq.s32.totalorder %v6495, 0
        %v6498 = vxor.u32 %v6493, 2147483648
        %v6499 = vsel %vm6497, %v6492, %v6498
        %vm6500 = vcmp.eq.s32.totalorder %v6495, 2
        %v6501 = vxor.u32 %v6492, 2147483648
        %v6502 = vsel %vm6500, %v6501, %v6493
        %v6503 = vsel %vm6496, %v6499, %v6502
        %v6504 = vsel %vm6494, nan, %v6503
        %v6505 = vand.u32 2147483647, %v1299
        %vm6506 = vcmp.le.f32.partialorder %v6505, 0.7853982
        %vm6507 = vcmp.lt.s32.totalorder %v1299, 0
        %v6508 = vand.u32 %v1299, 2139095040
        %v6509 = vshrl.u32 %v6508, 23
        %v6510 = vsub.s32 %v6509, 127
        %v6511 = vand.u32 2147483647, %v1299
        %v6512 = vand.u32 %v6511, 8388607
        %v6513 = vor.u32 %v6512, 8388608
        %v6514 = vsub.s32 0, %v6513
        %v6515 = vadd.s32 %v6510, 1
        %vm6516 = vcmp.gt.s32.totalorder %v6515, 0
        %v6517 = vsel %vm6516, %v6515, 0
        %v6518 = vshrl.u32 %v6517, 5
        %v6519 = vand.u32 %v6517, 31
        %v6520 = vsub.s32 32, %v6519
        %v6521 = vshrl.u32 683565275, %v6520
        %v6522 = vshll.u32 683565275, %v6519
        %v6523 = vshrl.u32 2475754826, %v6520
        %v6524 = vor.u32 %v6522, %v6523
        %v6525 = vshll.u32 2475754826, %v6519
        %v6526 = vshrl.u32 2131351028, %v6520
        %v6527 = vor.u32 %v6525, %v6526
        %v6528 = vshll.u32 2131351028, %v6519
        %v6529 = vshrl.u32 2102212464, %v6520
        %v6530 = vor.u32 %v6528, %v6529
        %v6531 = vshll.u32 2102212464, %v6519
        %v6532 = vshrl.u32 920167782, %v6520
        %v6533 = vor.u32 %v6531, %v6532
        %v6534 = vshll.u32 920167782, %v6519
        %v6535 = vshrl.u32 1326507024, %v6520
        %v6536 = vor.u32 %v6534, %v6535
        %vm6537 = vcmp.lt.s32.totalorder %v6518, 1
        %vm6538 = vcmp.lt.s32.totalorder %v6518, 2
        %vm6539 = vcmp.lt.s32.totalorder %v6518, 3
        %vm6540 = vcmp.lt.s32.totalorder %v6518, 4
        %v6541 = vsel %vm6537, %v6521, %v6524
        %v6542 = vsel %vm6540, %v6530, 2102212464
        %v6543 = vsel %vm6539, %v6527, %v6542
        %v6544 = vsel %vm6538, %v6541, %v6543
        %v6545 = vsel %vm6537, %v6524, %v6527
        %v6546 = vsel %vm6540, %v6533, 920167782
        %v6547 = vsel %vm6539, %v6530, %v6546
        %v6548 = vsel %vm6538, %v6545, %v6547
        %v6549 = vsel %vm6537, %v6527, %v6530
        %v6550 = vsel %vm6540, %v6536, 1326507024
        %v6551 = vsel %vm6539, %v6533, %v6550
        %v6552 = vsel %vm6538, %v6549, %v6551
        %v6553 = vshll.u32 %v6513, 8
        %v6554 = vmul.u32.u64.compose %v6553, %v6552
        %v6555 = vextract.low.u32 %v6554
        %v6556 = vextract.high.u32 %v6554
        %v6557 = vmul.u32.u64.compose %v6553, %v6548
        %v6558 = vextract.low.u32 %v6557
        %v6559 = vextract.high.u32 %v6557
        %v6560 = vmul.u32 %v6553, %v6544
        %v6561 = vadd.s32 %v6556, %v6558
        %vm6562 = vc.u32 %v6556, %v6558
        %v6563 = vadd.s32 %v6559, 1
        %v6564 = vsel %vm6562, %v6563, %v6559
        %v6565 = vadd.s32 %v6560, %v6564
        %v6566 = vadd.s32 %v6565, 536870912
        %v6567 = vshrl.u32 %v6566, 30
        %v6568 = vshll.u32 %v6567, 30
        %v6569 = vsub.s32 %v6565, %v6568
        %vm6570 = vcmp.lt.s32.totalorder %v6569, 0
        %v6571 = vsub.s32 0, %v6569
        %v6572 = vsel %vm6570, %v6571, %v6569
        %v6573 = vclz %v6572
        %v6574 = vsub.s32 %v6573, 2
        %vm6575 = vcmp.gt.s32.totalorder 0, %v6574
        %v6576 = vsel %vm6575, 0, %v6574
        %v6577 = vsub.s32 32, %v6576
        %v6578 = vshll.u32 %v6569, %v6576
        %v6579 = vshrl.u32 %v6561, %v6577
        %v6580 = vor.u32 %v6578, %v6579
        %v6581 = vsub.s32 4294967266, %v6576
        %v6582 = vadd.s32 %v6581, 127
        %v6583 = vshll.u32 %v6582, 23
        %v6584 = vor.u32 4788187, %v6583
        %v6585 = vand.u32 2147483647, %v6584
        %v6587 = vcvt.s32.f32 %v6580
        %v6588 = vmul.f32 %v6587, %v6585
        %v6589 = vxor.u32 %v6588, 2147483648
        %v6590 = vsel %vm6507, %v6589, %v6588
        %v6591 = vsub.s32 4, %v6567
        %v6592 = vsel %vm6507, %v6591, %v6567
        %v6593 = vsel %vm6506, %v1299, %v6590
        %v6594 = vsel %vm6506, 0, %v6592
        %v6595 = vcosq.f32.pop %v6593
        %v6596 = vsinq.f32.pop %v6593
        %vm6597 = vweird.f32 %v1299
        %v6598 = vand.u32 %v6594, 3
        %vm6599 = vcmp.lt.s32.totalorder %v6598, 2
        %vm6600 = vcmp.eq.s32.totalorder %v6598, 0
        %v6601 = vxor.u32 %v6596, 2147483648
        %v6602 = vsel %vm6600, %v6595, %v6601
        %vm6603 = vcmp.eq.s32.totalorder %v6598, 2
        %v6604 = vxor.u32 %v6595, 2147483648
        %v6605 = vsel %vm6603, %v6604, %v6596
        %v6606 = vsel %vm6599, %v6602, %v6605
        %v6607 = vsel %vm6597, nan, %v6606
        %v6608 = vand.u32 2147483647, %v1301
        %vm6609 = vcmp.le.f32.partialorder %v6608, 0.7853982
        %vm6610 = vcmp.lt.s32.totalorder %v1301, 0
        %v6611 = vand.u32 %v1301, 2139095040
        %v6612 = vshrl.u32 %v6611, 23
        %v6613 = vsub.s32 %v6612, 127
        %v6614 = vand.u32 2147483647, %v1301
        %v6615 = vand.u32 %v6614, 8388607
        %v6616 = vor.u32 %v6615, 8388608
        %v6617 = vsub.s32 0, %v6616
        %v6618 = vadd.s32 %v6613, 1
        %vm6619 = vcmp.gt.s32.totalorder %v6618, 0
        %v6620 = vsel %vm6619, %v6618, 0
        %v6621 = vshrl.u32 %v6620, 5
        %v6622 = vand.u32 %v6620, 31
        %v6623 = vsub.s32 32, %v6622
        %v6624 = vshrl.u32 683565275, %v6623
        %v6625 = vshll.u32 683565275, %v6622
        %v6626 = vshrl.u32 2475754826, %v6623
        %v6627 = vor.u32 %v6625, %v6626
        %v6628 = vshll.u32 2475754826, %v6622
        %v6629 = vshrl.u32 2131351028, %v6623
        %v6630 = vor.u32 %v6628, %v6629
        %v6631 = vshll.u32 2131351028, %v6622
        %v6632 = vshrl.u32 2102212464, %v6623
        %v6633 = vor.u32 %v6631, %v6632
        %v6634 = vshll.u32 2102212464, %v6622
        %v6635 = vshrl.u32 920167782, %v6623
        %v6636 = vor.u32 %v6634, %v6635
        %v6637 = vshll.u32 920167782, %v6622
        %v6638 = vshrl.u32 1326507024, %v6623
        %v6639 = vor.u32 %v6637, %v6638
        %vm6640 = vcmp.lt.s32.totalorder %v6621, 1
        %vm6641 = vcmp.lt.s32.totalorder %v6621, 2
        %vm6642 = vcmp.lt.s32.totalorder %v6621, 3
        %vm6643 = vcmp.lt.s32.totalorder %v6621, 4
        %v6644 = vsel %vm6640, %v6624, %v6627
        %v6645 = vsel %vm6643, %v6633, 2102212464
        %v6646 = vsel %vm6642, %v6630, %v6645
        %v6647 = vsel %vm6641, %v6644, %v6646
        %v6648 = vsel %vm6640, %v6627, %v6630
        %v6649 = vsel %vm6643, %v6636, 920167782
        %v6650 = vsel %vm6642, %v6633, %v6649
        %v6651 = vsel %vm6641, %v6648, %v6650
        %v6652 = vsel %vm6640, %v6630, %v6633
        %v6653 = vsel %vm6643, %v6639, 1326507024
        %v6654 = vsel %vm6642, %v6636, %v6653
        %v6655 = vsel %vm6641, %v6652, %v6654
        %v6656 = vshll.u32 %v6616, 8
        %v6657 = vmul.u32.u64.compose %v6656, %v6655
        %v6658 = vextract.low.u32 %v6657
        %v6659 = vextract.high.u32 %v6657
        %v6660 = vmul.u32.u64.compose %v6656, %v6651
        %v6661 = vextract.low.u32 %v6660
        %v6662 = vextract.high.u32 %v6660
        %v6663 = vmul.u32 %v6656, %v6647
        %v6664 = vadd.s32 %v6659, %v6661
        %vm6665 = vc.u32 %v6659, %v6661
        %v6666 = vadd.s32 %v6662, 1
        %v6667 = vsel %vm6665, %v6666, %v6662
        %v6668 = vadd.s32 %v6663, %v6667
        %v6669 = vadd.s32 %v6668, 536870912
        %v6670 = vshrl.u32 %v6669, 30
        %v6671 = vshll.u32 %v6670, 30
        %v6672 = vsub.s32 %v6668, %v6671
        %vm6673 = vcmp.lt.s32.totalorder %v6672, 0
        %v6674 = vsub.s32 0, %v6672
        %v6675 = vsel %vm6673, %v6674, %v6672
        %v6676 = vclz %v6675
        %v6677 = vsub.s32 %v6676, 2
        %vm6678 = vcmp.gt.s32.totalorder 0, %v6677
        %v6679 = vsel %vm6678, 0, %v6677
        %v6680 = vsub.s32 32, %v6679
        %v6681 = vshll.u32 %v6672, %v6679
        %v6682 = vshrl.u32 %v6664, %v6680
        %v6683 = vor.u32 %v6681, %v6682
        %v6684 = vsub.s32 4294967266, %v6679
        %v6685 = vadd.s32 %v6684, 127
        %v6686 = vshll.u32 %v6685, 23
        %v6687 = vor.u32 4788187, %v6686
        %v6688 = vand.u32 2147483647, %v6687
        %v6690 = vcvt.s32.f32 %v6683
        %v6691 = vmul.f32 %v6690, %v6688
        %v6692 = vxor.u32 %v6691, 2147483648
        %v6693 = vsel %vm6610, %v6692, %v6691
        %v6694 = vsub.s32 4, %v6670
        %v6695 = vsel %vm6610, %v6694, %v6670
        %v6696 = vsel %vm6609, %v1301, %v6693
        %v6697 = vsel %vm6609, 0, %v6695
        %v6698 = vcosq.f32.pop %v6696
        %v6699 = vsinq.f32.pop %v6696
        %vm6700 = vweird.f32 %v1301
        %v6701 = vand.u32 %v6697, 3
        %vm6702 = vcmp.lt.s32.totalorder %v6701, 2
        %vm6703 = vcmp.eq.s32.totalorder %v6701, 0
        %v6704 = vxor.u32 %v6699, 2147483648
        %v6705 = vsel %vm6703, %v6698, %v6704
        %vm6706 = vcmp.eq.s32.totalorder %v6701, 2
        %v6707 = vxor.u32 %v6698, 2147483648
        %v6708 = vsel %vm6706, %v6707, %v6699
        %v6709 = vsel %vm6702, %v6705, %v6708
        %v6710 = vsel %vm6700, nan, %v6709
        %6711 = vst [vmem:[%s164 + $0x10] sm:$0xff] %v4135
        %6712 = vst [vmem:[%s164 + $0x18] sm:$0xff] %v4238
        %6713 = vst [vmem:[%s164 + $0x30] sm:$0xff] %v4341
        %6714 = vst [vmem:[%s164 + $0x38] sm:$0xff] %v4444
        %6715 = vst [vmem:[%s164 + $0x50] sm:$0xff] %v4547
        %6716 = vst [vmem:[%s164 + $0x58] sm:$0xff] %v4650
        %6717 = vst [vmem:[%s164 + $0x70] sm:$0xff] %v4753
        %6718 = vst [vmem:[%s164 + $0x78] sm:$0xff] %v4856
        %6719 = vst [vmem:[%s164 + $0x90] sm:$0xff] %v4959
        %6720 = vst [vmem:[%s164 + $0x98] sm:$0xff] %v5062
        %6721 = vst [vmem:[%s164 + $0xb0] sm:$0xff] %v5165
        %6722 = vst [vmem:[%s164 + $0xb8] sm:$0xff] %v5268
        %6723 = vst [vmem:[%s164 + $0xd0] sm:$0xff] %v5371
        %6724 = vst [vmem:[%s164 + $0xd8] sm:$0xff] %v5474
        %6725 = vst [vmem:[%s164 + $0xf0] sm:$0xff] %v5577
        %6726 = vst [vmem:[%s164 + $0xf8] sm:$0xff] %v5680
        %6727 = vst [vmem:[%s164 + $0x110] sm:$0xff] %v5783
        %6728 = vst [vmem:[%s164 + $0x118] sm:$0xff] %v5886
        %6729 = vst [vmem:[%s164 + $0x130] sm:$0xff] %v5989
        %6730 = vst [vmem:[%s164 + $0x138] sm:$0xff] %v6092
        %6731 = vst [vmem:[%s164 + $0x150] sm:$0xff] %v6195
        %6732 = vst [vmem:[%s164 + $0x158] sm:$0xff] %v6298
        %6733 = vst [vmem:[%s164 + $0x170] sm:$0xff] %v6401
        %6734 = vst [vmem:[%s164 + $0x178] sm:$0xff] %v6504
        %6735 = vst [vmem:[%s164 + $0x190] sm:$0xff] %v6607
        %6736 = vst [vmem:[%s164 + $0x198] sm:$0xff] %v6710
        %s6737 = sand.u32 %s93, 1
        %s6738 = scalar_lea.sflag [#allocation3], %s6737
        %s6739 = sand.u32 %s93, 1
        %s6740 = smul.addr %s6739, 416
        %s6741 = scalar_lea.vmem [#allocation2], %s6740
        // Predicated region
        $region33: #{tpu_custom_call.1} parent=31 // pred_check
          %p6742 = pneg %p103
        $region34: #{tpu_custom_call.1} parent=31 // pred_check_branch
          %6744 = sbr.rel (%p6742) target = $region36
        $region35: #{tpu_custom_call.1} parent=31 // pred_region
          %s6745 = smul.u32 13, %s17
          %s6746 = ssub.s32 25, %s6745
          %p6747 = scmp.lt.s32.totalorder %s6746, 13
          %s6748 = scalar_select %p6747, %s6746, 13
          %s6749 = smul.u32 128, %s6748
          %s6750 = smul.u32 %s6749, 4
          %s6752 = ssub.s32 6656, %s6750
          %6753 = vsyncadd %s6738, %s6752
          %p6754 = scmp.ne.s32.totalorder 0, %s6750
          %s6755 = smul.addr %s6745, 4
          %s6756 = smul.addr %s6755, 128
          %s6757 = scalar_lea.hbm %s3, %s6756
          %s6758 = smul.u32 32, %s6748
          %s6759 = sshll.u32 %s6741, 4
          %s6760 = int_to_ptr.vmem [resolvable:$true] %s6759
          %s6761 = sshll.u32 %s6758, 4
          %6765 = dma.vmem_to_hbm [thread:$0]  (%p6754), %s6760, %s6761, %s6757, %s6738, 512, 512, 32
        $region36: #{tpu_custom_call.1} parent=31 // pred_fallthru
          _
      $region32: #{tpu_custom_call.1} parent=5 // pred_fallthru
        _
      %p6766 = scmp.le.s32.totalorder 2, %s12
      // Predicated region
      $region37: #{tpu_custom_call.1} parent=5 // pred_check
        %p6767 = pneg %p6766
      $region38: #{tpu_custom_call.1} parent=5 // pred_check_branch
        %6769 = sbr.rel (%p6767) target = $region40
      $region39: #{tpu_custom_call.1} parent=5 // pred_region
        %s6770 = ssub.s32 %s12, 2
        // Predicated region
        $region41: #{tpu_custom_call.1} parent=39 // pred_check
          %p6771 = pneg %p109
        $region42: #{tpu_custom_call.1} parent=39 // pred_check_branch
          %6773 = sbr.rel (%p6771) target = $region44
        $region43: #{tpu_custom_call.1} parent=39 // pred_region
          %s6774 = sand.u32 %s94, 1
          %s6775 = scalar_lea.sflag [#allocation3], %s6774
          %s6776 = sand.u32 %s94, 1
          %s6777 = smul.addr %s6776, 416
          %s6778 = scalar_lea.vmem [#allocation2], %s6777
          %6779 = dma.done %s6775, 6656
        $region44: #{tpu_custom_call.1} parent=39 // pred_fallthru
          _
      $region40: #{tpu_custom_call.1} parent=5 // pred_fallthru
        _
    $region6: #{tpu_custom_call.1} parent=1 // loop_footer
      %s16 = sadd.s32 1, %s12
    $region7: #{tpu_custom_call.1} parent=1 // loop_footer_branch
      %11 = sbr.rel target = $region3
    $region8: #{tpu_custom_call.1} parent=1 // loop_exit
      _
    %6780 = vsyncpa [#allocation3], 1
    %s6781 = scalar_lea.sflag [#allocation3], 1
    %6782 = vsyncpa %s6781, 1

</llo_original>
